<compile_context>
chip_gen: v7x
topology: tpu7x:2x2x1
jax: 0.10.0
libtpu: 0.0.40
codegen_flags: <defaults>
</compile_context>

<pallas_src>
import jax
import jax.numpy as jnp
from jax.experimental import pallas as pl
from jax.experimental.pallas import tpu as pltpu


IN_FEATURES = 4096   # fixed by the module (linear1: 4096 -> 2048)
HIDDEN = 2048
LANE = 128


def _round_up(n, m):
    return (n + m - 1) // m * m


def _linear_regressor_kernel(x_ref, w1_ref, b1_ref, w2_ref, b2_ref, out_ref):
    """One (batch-tile, hidden-tile) grid step.

    x_ref  : (TB, 4096)  bf16 input batch tile (re-used across hidden axis)
    w1_ref : (4096, TN)  bf16 linear1 weight slab
    b1_ref : (1, TN)     f32  linear1 bias slab
    w2_ref : (TN, Npad)  bf16 linear2 weight slab (columns padded to 128)
    b2_ref : (1, Npad)   f32  linear2 bias (padded)
    out_ref: (TB, Npad)  f32  output tile; resident across the hidden axis,
                         doubles as the linear2 accumulator.
    """
    j = pl.program_id(1)

    @pl.when(j == 0)
    def _():
        out_ref[...] = jnp.zeros_like(out_ref)

    # linear1 slab + ReLU: bf16 operands on the MXU, f32 accumulation.
    h = jnp.dot(x_ref[...], w1_ref[...], preferred_element_type=jnp.float32)
    h = jnp.maximum(h + b1_ref[...], 0.0).astype(w2_ref.dtype)

    # Partial linear2, accumulated directly into the resident f32 output tile.
    out_ref[...] += jnp.dot(h, w2_ref[...], preferred_element_type=jnp.float32)

    @pl.when(j == pl.num_programs(1) - 1)
    def _():
        out_ref[...] = jnp.maximum(out_ref[...] + b2_ref[...], 0.0)


def linear_regressor_forward(x, w1, b1, w2, b2, *, dim, tn=512, tb=None):
    """x: (B, 4096) f32.  w1: (4096, 2048), b1: (2048,), w2: (2048, 2*dim),
    b2: (2*dim,)  (weights are the transpose of PyTorch's nn.Linear storage).

    Returns res of shape (B, dim, 2) in float32.
    """
    B, K = x.shape
    assert K == IN_FEATURES, f"linear1 expects {IN_FEATURES} in-features"
    assert w1.shape == (IN_FEATURES, HIDDEN)
    assert w2.shape == (HIDDEN, 2 * dim)
    assert HIDDEN % tn == 0 and tn % LANE == 0

    if tb is None:
        if B <= 256:
            tb = B                       # single batch tile: W1 streamed once
        elif B % 256 == 0:
            tb = 256
        else:
            tb = 128
    assert B % tb == 0

    n_out = 2 * dim
    n_pad = _round_up(n_out, LANE)       # lane-dense output / W2 columns

    # bf16 operands feeding the MXU; biases and accumulation stay f32.
    x_bf = x.astype(jnp.bfloat16)
    w1_bf = w1.astype(jnp.bfloat16)
    w2_bf = w2.astype(jnp.bfloat16)
    b2_f = b2.astype(jnp.float32)
    if n_pad != n_out:
        w2_bf = jnp.pad(w2_bf, ((0, 0), (0, n_pad - n_out)))
        b2_f = jnp.pad(b2_f, (0, n_pad - n_out))
    b1_f = b1.reshape(1, HIDDEN).astype(jnp.float32)
    b2_f = b2_f.reshape(1, n_pad)

    grid = (B // tb, HIDDEN // tn)
    n_batch_tiles = B // tb

    cost = pl.CostEstimate(
        flops=2 * B * (IN_FEATURES * HIDDEN + HIDDEN * n_out),
        transcendentals=0,
        bytes_accessed=(
            x_bf.size * x_bf.dtype.itemsize
            + w1_bf.size * w1_bf.dtype.itemsize * n_batch_tiles  # per batch tile
            + w2_bf.size * w2_bf.dtype.itemsize * n_batch_tiles
            + b1_f.size * 4 + b2_f.size * 4
            + B * n_pad * 4),
    )

    # Double-buffered working set (tb=256, tn=512, n_pad=128, bf16):
    #   2*x(1 MiB) + 2*W1(4 MiB) + 2*W2(128 KiB) + 2*out(128 KiB) + biases
    #   ~= 13 MiB  -> 48 MiB limit leaves room and fits v7x's 64 MiB VMEM.
    vmem_bytes = 48 * 1024 * 1024

    out = pl.pallas_call(
        _linear_regressor_kernel,
        out_shape=jax.ShapeDtypeStruct((B, n_pad), jnp.float32),
        grid_spec=pltpu.PrefetchScalarGridSpec(
            num_scalar_prefetch=0,
            grid=grid,
            in_specs=[
                pl.BlockSpec((tb, IN_FEATURES), lambda i, j: (i, 0)),
                pl.BlockSpec((IN_FEATURES, tn), lambda i, j: (0, j)),
                pl.BlockSpec((1, tn), lambda i, j: (0, j)),
                pl.BlockSpec((tn, n_pad), lambda i, j: (j, 0)),
                pl.BlockSpec((1, n_pad), lambda i, j: (0, 0)),
            ],
            out_specs=pl.BlockSpec((tb, n_pad), lambda i, j: (i, 0)),
        ),
        compiler_params=pltpu.CompilerParams(
            dimension_semantics=("parallel", "arbitrary"),
            vmem_limit_bytes=vmem_bytes),
        cost_estimate=cost,
    )(x_bf, w1_bf, b1_f, w2_bf, b2_f)

    if n_pad != n_out:
        out = out[:, :n_out]
    return out.reshape(B, dim, 2)


def _reference(x, w1, b1, w2, b2, *, dim):
    """Pure-JAX f32 reference mirroring the PyTorch forward pass."""
    h = jnp.maximum(x @ w1 + b1.reshape(1, -1), 0.0)
    o = jnp.maximum(h @ w2 + b2.reshape(1, -1), 0.0)
    return o.reshape(-1, dim, 2)


if __name__ == "__main__":
    # Small shapes consistent with the module: linear1 fixes 4096 in-features,
    # so only batch and `dim` are free.
    B, dim = 2, 16

    key = jax.random.PRNGKey(0)
    kx, kw1, kb1, kw2, kb2 = jax.random.split(key, 5)

    x = jax.random.normal(kx, (B, IN_FEATURES), dtype=jnp.float32)

    # Deterministic parameter init, stored as (in_features, out_features) so
    # both layers are right-multiplies inside the kernel.
    w1 = jax.random.normal(kw1, (IN_FEATURES, HIDDEN),
                           dtype=jnp.float32) * (IN_FEATURES ** -0.5)
    b1 = jax.random.normal(kb1, (HIDDEN,), dtype=jnp.float32) * 0.1
    w2 = jax.random.normal(kw2, (HIDDEN, 2 * dim),
                           dtype=jnp.float32) * (HIDDEN ** -0.5)
    b2 = jax.random.normal(kb2, (2 * dim,), dtype=jnp.float32) * 0.1

    res = linear_regressor_forward(x, w1, b1, w2, b2, dim=dim)
    res = jax.block_until_ready(res)

    res_ref = _reference(x, w1, b1, w2, b2, dim=dim)
    assert res.shape == (B, dim, 2)
    # bf16 MXU operands with f32 accumulation -> relaxed tolerance vs f32 ref.
    max_err = float(jnp.max(jnp.abs(res - res_ref)))
    assert jnp.allclose(res, res_ref, atol=5e-2, rtol=5e-2), (
        "max abs err = %g" % max_err)

    print("KERNEL_OK")
</pallas_src>

<mosaic_0001>
module attributes {stable_mosaic.version = 11 : i64} {
  func.func @_linear_regressor_kernel(%arg0: i32, %arg1: i32, %arg2: memref<2x4096xbf16, #tpu.memory_space<vmem>>, %arg3: memref<4096x512xbf16, #tpu.memory_space<vmem>>, %arg4: memref<1x512xf32, #tpu.memory_space<vmem>>, %arg5: memref<512x128xbf16, #tpu.memory_space<vmem>>, %arg6: memref<1x128xf32, #tpu.memory_space<vmem>>, %arg7: memref<2x128xf32, #tpu.memory_space<vmem>>) attributes {dimension_semantics = [#tpu.dimension_semantics<parallel>, #tpu.dimension_semantics<arbitrary>], iteration_bounds = array<i64: 1, 4>, scalar_prefetch = 0 : i64, scratch_operands = 0 : i64, tpu.core_type = #tpu.core_type<tc>, window_params = [{transform_indices = @transform_0, window_bounds = array<i64: 2, 4096>}, {transform_indices = @transform_1, window_bounds = array<i64: 4096, 512>}, {transform_indices = @transform_2, window_bounds = array<i64: 1, 512>}, {transform_indices = @transform_3, window_bounds = array<i64: 512, 128>}, {pipeline_mode = #tpu.pipeline_mode<synchronous>, transform_indices = @transform_4, window_bounds = array<i64: 1, 128>}, {transform_indices = @transform_5, window_bounds = array<i64: 2, 128>}]} {
    %c0_i32 = arith.constant 0 : i32
    %0 = arith.cmpi eq, %arg1, %c0_i32 : i32
    %1 = arith.extui %0 : i1 to i32
    %c0_i32_0 = arith.constant 0 : i32
    %2 = arith.cmpi ne, %1, %c0_i32_0 : i32
    scf.if %2 {
      %cst_15 = arith.constant 0.000000e+00 : f32
      %20 = vector.broadcast %cst_15 : f32 to vector<2x128xf32>
      %c0_16 = arith.constant 0 : index
      %c0_17 = arith.constant 0 : index
      %21 = vector.load %arg7[%c0_16, %c0_17] : memref<2x128xf32, #tpu.memory_space<vmem>>, vector<2x128xf32>
      tpu.vector_store %arg7[%c0_16, %c0_17], %20 {strides = array<i32>} : memref<2x128xf32, #tpu.memory_space<vmem>>, vector<2x128xf32>,
    } else {
    }
    %c0 = arith.constant 0 : index
    %c0_1 = arith.constant 0 : index
    %3 = vector.load %arg2[%c0, %c0_1] : memref<2x4096xbf16, #tpu.memory_space<vmem>>, vector<2x4096xbf16>
    %c0_2 = arith.constant 0 : index
    %c0_3 = arith.constant 0 : index
    %4 = vector.load %arg3[%c0_2, %c0_3] : memref<4096x512xbf16, #tpu.memory_space<vmem>>, vector<4096x512xbf16>
    %cst = arith.constant dense<0.000000e+00> : vector<2x512xf32>
    %5 = tpu.matmul %3, %4, %cst {dimension_numbers = #tpu.dot_dimension_numbers<[1], [0], [0], [1], [0, 0, 1, 1], [], []>} : vector<2x4096xbf16>, vector<4096x512xbf16>, vector<2x512xf32> -> vector<2x512xf32>
    %c0_4 = arith.constant 0 : index
    %c0_5 = arith.constant 0 : index
    %6 = vector.load %arg4[%c0_4, %c0_5] : memref<1x512xf32, #tpu.memory_space<vmem>>, vector<1x512xf32>
    %7 = vector.broadcast %6 : vector<1x512xf32> to vector<2x512xf32>
    %8 = arith.addf %5, %7 : vector<2x512xf32>
    %cst_6 = arith.constant 0.000000e+00 : f32
    %9 = vector.broadcast %cst_6 : f32 to vector<2x512xf32>
    %10 = arith.maximumf %8, %9 : vector<2x512xf32>
    %11 = arith.truncf %10 : vector<2x512xf32> to vector<2x512xbf16>
    %c0_7 = arith.constant 0 : index
    %c0_8 = arith.constant 0 : index
    %12 = vector.load %arg7[%c0_7, %c0_8] : memref<2x128xf32, #tpu.memory_space<vmem>>, vector<2x128xf32>
    %c0_9 = arith.constant 0 : index
    %c0_10 = arith.constant 0 : index
    %13 = vector.load %arg5[%c0_9, %c0_10] : memref<512x128xbf16, #tpu.memory_space<vmem>>, vector<512x128xbf16>
    %cst_11 = arith.constant dense<0.000000e+00> : vector<2x128xf32>
    %14 = tpu.matmul %11, %13, %cst_11 {dimension_numbers = #tpu.dot_dimension_numbers<[1], [0], [0], [1], [0, 0, 1, 1], [], []>} : vector<2x512xbf16>, vector<512x128xbf16>, vector<2x128xf32> -> vector<2x128xf32>
    %15 = arith.addf %12, %14 : vector<2x128xf32>
    %c0_12 = arith.constant 0 : index
    %c0_13 = arith.constant 0 : index
    %16 = vector.load %arg7[%c0_12, %c0_13] : memref<2x128xf32, #tpu.memory_space<vmem>>, vector<2x128xf32>
    tpu.vector_store %arg7[%c0_12, %c0_13], %15 {strides = array<i32>} : memref<2x128xf32, #tpu.memory_space<vmem>>, vector<2x128xf32>,
    %c3_i32 = arith.constant 3 : i32
    %17 = arith.cmpi eq, %arg1, %c3_i32 : i32
    %18 = arith.extui %17 : i1 to i32
    %c0_i32_14 = arith.constant 0 : i32
    %19 = arith.cmpi ne, %18, %c0_i32_14 : i32
    scf.if %19 {
      %c0_15 = arith.constant 0 : index
      %c0_16 = arith.constant 0 : index
      %20 = vector.load %arg7[%c0_15, %c0_16] : memref<2x128xf32, #tpu.memory_space<vmem>>, vector<2x128xf32>
      %c0_17 = arith.constant 0 : index
      %c0_18 = arith.constant 0 : index
      %21 = vector.load %arg6[%c0_17, %c0_18] : memref<1x128xf32, #tpu.memory_space<vmem>>, vector<1x128xf32>
      %22 = vector.broadcast %21 : vector<1x128xf32> to vector<2x128xf32>
      %23 = arith.addf %20, %22 : vector<2x128xf32>
      %cst_19 = arith.constant 0.000000e+00 : f32
      %24 = vector.broadcast %cst_19 : f32 to vector<2x128xf32>
      %25 = arith.maximumf %23, %24 : vector<2x128xf32>
      %c0_20 = arith.constant 0 : index
      %c0_21 = arith.constant 0 : index
      %26 = vector.load %arg7[%c0_20, %c0_21] : memref<2x128xf32, #tpu.memory_space<vmem>>, vector<2x128xf32>
      tpu.vector_store %arg7[%c0_20, %c0_21], %25 {strides = array<i32>} : memref<2x128xf32, #tpu.memory_space<vmem>>, vector<2x128xf32>,
    } else {
    }
    return
  }
  func.func @transform_0(%arg0: i32, %arg1: i32) -> (i32, i32) {
    %c0_i32 = arith.constant 0 : i32
    %c0_i32_0 = arith.constant 0 : i32
    return %arg0, %c0_i32 : i32, i32
  }
  func.func @transform_1(%arg0: i32, %arg1: i32) -> (i32, i32) {
    %c0_i32 = arith.constant 0 : i32
    %c0_i32_0 = arith.constant 0 : i32
    return %c0_i32, %arg1 : i32, i32
  }
  func.func @transform_2(%arg0: i32, %arg1: i32) -> (i32, i32) {
    %c0_i32 = arith.constant 0 : i32
    %c0_i32_0 = arith.constant 0 : i32
    return %c0_i32, %arg1 : i32, i32
  }
  func.func @transform_3(%arg0: i32, %arg1: i32) -> (i32, i32) {
    %c0_i32 = arith.constant 0 : i32
    %c0_i32_0 = arith.constant 0 : i32
    return %arg1, %c0_i32 : i32, i32
  }
  func.func @transform_4(%arg0: i32, %arg1: i32) -> (i32, i32) {
    %c0_i32 = arith.constant 0 : i32
    %c0_i32_0 = arith.constant 0 : i32
    %c0_i32_1 = arith.constant 0 : i32
    return %c0_i32, %c0_i32_0 : i32, i32
  }
  func.func @transform_5(%arg0: i32, %arg1: i32) -> (i32, i32) {
    %c0_i32 = arith.constant 0 : i32
    %c0_i32_0 = arith.constant 0 : i32
    return %arg0, %c0_i32 : i32, i32
  }
}

</mosaic_0001>

<llo_original>
// kernel: tpu_custom_call.1
$region0: #{tpu_custom_call.1}
  #allocation0 [shape = 'u32[]', space=smem, size = 0x4, offset = 0x4, fixed_abs, tag = 'smem constant byte address 0x4 - core index']
  #allocation1 [shape = 'u32[144,128]{1,0:T(1,128)}', space=vmem, size = 0x12000, scoped, tag = 'internal scratch']
  %s0 = inlined_call_operand.hbm [shape: bf16[2,4096], index: 0, kind: input, shape index: {}]
  %s1 = inlined_call_operand.hbm [shape: bf16[4096,2048], index: 1, kind: input, shape index: {}]
  %s2 = inlined_call_operand.hbm [shape: f32[1,2048], index: 2, kind: input, shape index: {}]
  %s3 = inlined_call_operand.hbm [shape: bf16[2048,128], index: 3, kind: input, shape index: {}]
  %s4 = inlined_call_operand.hbm [shape: f32[1,128], index: 4, kind: input, shape index: {}]
  %s5 = inlined_call_operand.hbm [shape: f32[2,128], index: 5, kind: output, shape index: {}]
  %s6 = sld [smem:[#allocation0]]
  $region81: #{tpu_custom_call.1} parent=0
    _
  %s8 = ssub.s32 1, %s6
  %s9 = scalar_select 0, %s8, %s6
  $region1: #{tpu_custom_call.1} parent=0
    #allocation2 [shape = 'u8[16384]{0}', space=vmem, size = 0x4000, scoped, tag = 'input window, operand 0, single buffered']
    #allocation3 [shape = 's32[2]{0}', space=sflag, size = 0x8, scoped, tag = 'scoped memory for tpu_custom_call.1']
    #allocation4 [shape = 's32[2]{0}', space=sflag, size = 0x8, scoped, tag = 'scoped memory for tpu_custom_call.1']
    #allocation5 [shape = 'u8[8388608]{0}', space=vmem, size = 0x800000, scoped, tag = 'input window, operand 1']
    #allocation6 [shape = 's32[2]{0}', space=sflag, size = 0x8, scoped, tag = 'scoped memory for tpu_custom_call.1']
    #allocation7 [shape = 'u8[4096]{0}', space=vmem, size = 0x1000, scoped, tag = 'input window, operand 2']
    #allocation8 [shape = 'u8[262144]{0}', space=vmem, size = 0x40000, scoped, tag = 'input window, operand 3']
    #allocation9 [shape = 's32[2]{0}', space=sflag, size = 0x8, scoped, tag = 'scoped memory for tpu_custom_call.1']
    #allocation10 [shape = 'u8[512]{0}', space=vmem, size = 0x400, scoped, tag = 'input window, operand 4, single buffered']
    #allocation11 [shape = 'u8[1024]{0}', space=vmem, size = 0x400, scoped, tag = 'output window, operand 0, single buffered']
    %10 = vsyncpa [#allocation3], 0
    %11 = vsyncpa [#allocation6], 0
    %s12 = scalar_lea.sflag [#allocation6], 1
    %13 = vsyncpa %s12, 0
    %14 = vsyncpa [#allocation9], 0
    %s15 = scalar_lea.sflag [#allocation9], 1
    %16 = vsyncpa %s15, 0
    %17 = vsyncpa [#allocation4], 0
    loop: start=0, step=1, limit=6
    $region2: #{tpu_custom_call.1} parent=1 // loop_pre_header
      _
    $region3: #{tpu_custom_call.1} parent=1 // loop_header
      %s19 = sphi 0, %s23
      %p20 = scmp.ge.s32.totalorder %s19, 6
      %s26 = sphi 0, %s38
      %s27 = sphi 0, %s34
      %s28 = sphi 0, %s26
      %s29 = sphi 0, %s27
      %s30 = sphi 0, %s28
      %s31 = sphi 0, %s29
      %s41 = sphi 0, %s43
      %s44 = sphi 0, %s41
      %s45 = sphi 0, %s44
      %s61 = sphi 0, %s45
      %s67 = sphi 0, %s69
      %s70 = sphi 0, %s67
      %s71 = sphi 0, %s70
      %s87 = sphi 0, %s71
      %s93 = sphi 0, %s95
      %s96 = sphi 0, %s93
      %s97 = sphi 0, %s96
      %s113 = sphi 0, %s97
      %s119 = sphi 0, %s121
      %s122 = sphi 0, %s119
      %s123 = sphi 0, %s122
      %s139 = sphi 0, %s123
      %s143 = sphi 0, %s143
      %s145 = sphi 0, %s143
      %s146 = sphi 0, %s145
      %s160 = sphi 0, %s146
      %s166 = sphi 0, %s168
      %s169 = sphi 0, %s166
      %s170 = sphi 0, %s169
      %s186 = sphi 0, %s170
    $region4: #{tpu_custom_call.1} parent=1 // loop_header_branch
      %22 = sbr.rel (%p20) target = $region8
    $region5: #{tpu_custom_call.1} parent=1 // loop_body
      %s24 = ssub.s32 %s19, 1
      %s25 = ssub.s32 %s19, 2
      %s32 = sadd.s32 1, %s27
      %p33 = scmp.ge.s32.totalorder %s32, 4
      %s34 = scalar_select %p33, 0, %s32
      %s35 = sadd.s32 1, %s26
      %s36 = scalar_select %p33, %s35, %s26
      %p37 = scmp.ge.s32.totalorder %s36, 1
      %s38 = scalar_select %p37, 0, %s36
      %s39 = ssub.s32 %s26, %s38
      %p40 = scmp.eq.s32.totalorder %s39, 0
      %s42 = sadd.s32 %s41, 1
      %s43 = scalar_select %p40, %s41, %s42
      %p46 = pneg %p40
      %p47 = scmp.eq.s32.totalorder %s19, 3
      %p48 = por %p46, %p47
      %p49 = scmp.ne.s32.totalorder %s41, %s44
      %p50 = scmp.eq.s32.totalorder %s19, 0
      %p51 = por %p49, %p50
      %p52 = scmp.ne.s32.totalorder %s41, %s44
      %p53 = scmp.eq.s32.totalorder %s24, 3
      %p54 = por %p52, %p53
      %p55 = scmp.ne.s32.totalorder %s44, %s45
      %p56 = scmp.eq.s32.totalorder %s24, 0
      %p57 = por %p55, %p56
      %p58 = scmp.ne.s32.totalorder %s44, %s45
      %p59 = scmp.eq.s32.totalorder %s25, 3
      %p60 = por %p58, %p59
      %p62 = scmp.ne.s32.totalorder %s45, %s61
      %p63 = scmp.eq.s32.totalorder %s25, 0
      %p64 = por %p62, %p63
      %s65 = ssub.s32 %s27, %s34
      %p66 = scmp.eq.s32.totalorder %s65, 0
      %s68 = sadd.s32 %s67, 1
      %s69 = scalar_select %p66, %s67, %s68
      %p72 = pneg %p66
      %p73 = scmp.eq.s32.totalorder %s19, 3
      %p74 = por %p72, %p73
      %p75 = scmp.ne.s32.totalorder %s67, %s70
      %p76 = scmp.eq.s32.totalorder %s19, 0
      %p77 = por %p75, %p76
      %p78 = scmp.ne.s32.totalorder %s67, %s70
      %p79 = scmp.eq.s32.totalorder %s24, 3
      %p80 = por %p78, %p79
      %p81 = scmp.ne.s32.totalorder %s70, %s71
      %p82 = scmp.eq.s32.totalorder %s24, 0
      %p83 = por %p81, %p82
      %p84 = scmp.ne.s32.totalorder %s70, %s71
      %p85 = scmp.eq.s32.totalorder %s25, 3
      %p86 = por %p84, %p85
      %p88 = scmp.ne.s32.totalorder %s71, %s87
      %p89 = scmp.eq.s32.totalorder %s25, 0
      %p90 = por %p88, %p89
      %s91 = ssub.s32 %s27, %s34
      %p92 = scmp.eq.s32.totalorder %s91, 0
      %s94 = sadd.s32 %s93, 1
      %s95 = scalar_select %p92, %s93, %s94
      %p98 = pneg %p92
      %p99 = scmp.eq.s32.totalorder %s19, 3
      %p100 = por %p98, %p99
      %p101 = scmp.ne.s32.totalorder %s93, %s96
      %p102 = scmp.eq.s32.totalorder %s19, 0
      %p103 = por %p101, %p102
      %p104 = scmp.ne.s32.totalorder %s93, %s96
      %p105 = scmp.eq.s32.totalorder %s24, 3
      %p106 = por %p104, %p105
      %p107 = scmp.ne.s32.totalorder %s96, %s97
      %p108 = scmp.eq.s32.totalorder %s24, 0
      %p109 = por %p107, %p108
      %p110 = scmp.ne.s32.totalorder %s96, %s97
      %p111 = scmp.eq.s32.totalorder %s25, 3
      %p112 = por %p110, %p111
      %p114 = scmp.ne.s32.totalorder %s97, %s113
      %p115 = scmp.eq.s32.totalorder %s25, 0
      %p116 = por %p114, %p115
      %s117 = ssub.s32 %s27, %s34
      %p118 = scmp.eq.s32.totalorder %s117, 0
      %s120 = sadd.s32 %s119, 1
      %s121 = scalar_select %p118, %s119, %s120
      %p124 = pneg %p118
      %p125 = scmp.eq.s32.totalorder %s19, 3
      %p126 = por %p124, %p125
      %p127 = scmp.ne.s32.totalorder %s119, %s122
      %p128 = scmp.eq.s32.totalorder %s19, 0
      %p129 = por %p127, %p128
      %p130 = scmp.ne.s32.totalorder %s119, %s122
      %p131 = scmp.eq.s32.totalorder %s24, 3
      %p132 = por %p130, %p131
      %p133 = scmp.ne.s32.totalorder %s122, %s123
      %p134 = scmp.eq.s32.totalorder %s24, 0
      %p135 = por %p133, %p134
      %p136 = scmp.ne.s32.totalorder %s122, %s123
      %p137 = scmp.eq.s32.totalorder %s25, 3
      %p138 = por %p136, %p137
      %p140 = scmp.ne.s32.totalorder %s123, %s139
      %p141 = scmp.eq.s32.totalorder %s25, 0
      %p142 = por %p140, %p141
      %s144 = sadd.s32 %s143, 1
      %p147 = scmp.eq.s32.totalorder %s19, 3
      %p148 = scmp.ne.s32.totalorder %s143, %s145
      %p149 = scmp.eq.s32.totalorder %s19, 0
      %p150 = por %p148, %p149
      %p151 = scmp.ne.s32.totalorder %s143, %s145
      %p152 = scmp.eq.s32.totalorder %s24, 3
      %p153 = por %p151, %p152
      %p154 = scmp.ne.s32.totalorder %s145, %s146
      %p155 = scmp.eq.s32.totalorder %s24, 0
      %p156 = por %p154, %p155
      %p157 = scmp.ne.s32.totalorder %s145, %s146
      %p158 = scmp.eq.s32.totalorder %s25, 3
      %p159 = por %p157, %p158
      %p161 = scmp.ne.s32.totalorder %s146, %s160
      %p162 = scmp.eq.s32.totalorder %s25, 0
      %p163 = por %p161, %p162
      %s164 = ssub.s32 %s26, %s38
      %p165 = scmp.eq.s32.totalorder %s164, 0
      %s167 = sadd.s32 %s166, 1
      %s168 = scalar_select %p165, %s166, %s167
      %p171 = pneg %p165
      %p172 = scmp.eq.s32.totalorder %s19, 3
      %p173 = por %p171, %p172
      %p174 = scmp.ne.s32.totalorder %s166, %s169
      %p175 = scmp.eq.s32.totalorder %s19, 0
      %p176 = por %p174, %p175
      %p177 = scmp.ne.s32.totalorder %s166, %s169
      %p178 = scmp.eq.s32.totalorder %s24, 3
      %p179 = por %p177, %p178
      %p180 = scmp.ne.s32.totalorder %s169, %s170
      %p181 = scmp.eq.s32.totalorder %s24, 0
      %p182 = por %p180, %p181
      %p183 = scmp.ne.s32.totalorder %s169, %s170
      %p184 = scmp.eq.s32.totalorder %s25, 3
      %p185 = por %p183, %p184
      %p187 = scmp.ne.s32.totalorder %s170, %s186
      %p188 = scmp.eq.s32.totalorder %s25, 0
      %p189 = por %p187, %p188
      %p190 = scmp.le.s32.totalorder 1, %s19
      %p191 = scmp.lt.s32.totalorder %s19, 5
      %p192 = pnand %p190, %p191
      %p193 = pneg %p192
      // Predicated region
      $region9: #{tpu_custom_call.1} parent=5 // pred_check
        _
      $region10: #{tpu_custom_call.1} parent=5 // pred_check_branch
        %195 = sbr.rel (%p192) target = $region12
      $region11: #{tpu_custom_call.1} parent=5 // pred_region
        %s196 = ssub.s32 %s19, 1
        // Predicated region
        $region13: #{tpu_custom_call.1} parent=11 // pred_check
          %p197 = pneg %p57
        $region14: #{tpu_custom_call.1} parent=11 // pred_check_branch
          %199 = sbr.rel (%p197) target = $region16
        $region15: #{tpu_custom_call.1} parent=11 // pred_region
          %s201 = ssub.s32 512, 512
          %202 = vsyncadd [#allocation3], %s201
          %s203 = smul.addr %s28, 32
          %s204 = smul.addr %s203, 16
          %s205 = scalar_lea.hbm %s0, %s204
          %s207 = sshll.u32 [#allocation2], 4
          %s208 = int_to_ptr.vmem [resolvable:$true] %s207
          %210 = dma.hbm_to_vmem [thread:$0]  %s205, 512, %s208, [#allocation3]
        $region16: #{tpu_custom_call.1} parent=11 // pred_fallthru
          _
        // Predicated region
        $region17: #{tpu_custom_call.1} parent=11 // pred_check
          %p211 = pneg %p156
        $region18: #{tpu_custom_call.1} parent=11 // pred_check_branch
          %213 = sbr.rel (%p211) target = $region20
        $region19: #{tpu_custom_call.1} parent=11 // pred_region
          %s215 = ssub.s32 16, 16
          %216 = vsyncadd [#allocation9], %s215
          %s218 = sshll.u32 [#allocation10], 4
          %s219 = int_to_ptr.vmem [resolvable:$true] %s218
          %221 = dma.hbm_to_vmem [thread:$0]  %s4, 16, %s219, [#allocation9]
        $region20: #{tpu_custom_call.1} parent=11 // pred_fallthru
          _
      $region12: #{tpu_custom_call.1} parent=5 // pred_fallthru
        _
      %p222 = scmp.lt.s32.totalorder %s19, 4
      // Predicated region
      $region21: #{tpu_custom_call.1} parent=5 // pred_check
        %p223 = pneg %p222
      $region22: #{tpu_custom_call.1} parent=5 // pred_check_branch
        %225 = sbr.rel (%p223) target = $region24
      $region23: #{tpu_custom_call.1} parent=5 // pred_region
        // Predicated region
        $region25: #{tpu_custom_call.1} parent=23 // pred_check
          %p226 = pneg %p77
        $region26: #{tpu_custom_call.1} parent=23 // pred_check_branch
          %228 = sbr.rel (%p226) target = $region28
        $region27: #{tpu_custom_call.1} parent=23 // pred_region
          %s229 = sand.u32 %s19, 1
          %s230 = scalar_lea.sflag [#allocation6], %s229
          %s231 = sand.u32 %s67, 1
          %s232 = smul.addr %s231, 8192
          %s233 = scalar_lea.vmem [#allocation5], %s232
          %s234 = smul.u32 4, %s27
          %s236 = ssub.s32 131072, 131072
          %237 = vsyncadd %s230, %s236
          %s238 = smul.addr %s234, 64
          %s239 = scalar_lea.hbm %s1, %s238
          %s240 = sshll.u32 %s233, 4
          %s241 = int_to_ptr.vmem [resolvable:$true] %s240
          %246 = dma.hbm_to_vmem [thread:$0]  %s239, 131072, %s241, %s230, 1024, 256, 16
        $region28: #{tpu_custom_call.1} parent=23 // pred_fallthru
          _
        // Predicated region
        $region29: #{tpu_custom_call.1} parent=23 // pred_check
          %p247 = pneg %p103
        $region30: #{tpu_custom_call.1} parent=23 // pred_check_branch
          %249 = sbr.rel (%p247) target = $region32
        $region31: #{tpu_custom_call.1} parent=23 // pred_region
          %s250 = sand.u32 %s19, 1
          %s251 = scalar_lea.sflag [#allocation6], %s250
          %s252 = sand.u32 %s93, 1
          %s253 = smul.addr %s252, 4
          %s254 = scalar_lea.vmem [#allocation7], %s253
          %s255 = smul.u32 4, %s27
          %s257 = ssub.s32 64, 64
          %258 = vsyncadd %s251, %s257
          %s259 = smul.addr %s255, 16
          %s260 = scalar_lea.hbm %s2, %s259
          %s262 = sshll.u32 %s254, 4
          %s263 = int_to_ptr.vmem [resolvable:$true] %s262
          %265 = dma.hbm_to_vmem [thread:$0]  %s260, 64, %s263, %s251
        $region32: #{tpu_custom_call.1} parent=23 // pred_fallthru
          _
        // Predicated region
        $region33: #{tpu_custom_call.1} parent=23 // pred_check
          %p266 = pneg %p129
        $region34: #{tpu_custom_call.1} parent=23 // pred_check_branch
          %268 = sbr.rel (%p266) target = $region36
        $region35: #{tpu_custom_call.1} parent=23 // pred_region
          %s269 = sand.u32 %s19, 1
          %s270 = scalar_lea.sflag [#allocation9], %s269
          %s271 = sand.u32 %s119, 1
          %s272 = smul.addr %s271, 256
          %s273 = scalar_lea.vmem [#allocation8], %s272
          %s274 = smul.u32 64, %s27
          %s276 = ssub.s32 4096, 4096
          %277 = vsyncadd %s270, %s276
          %s278 = smul.addr %s274, 64
          %s279 = scalar_lea.hbm %s3, %s278
          %s280 = sshll.u32 %s273, 4
          %s281 = int_to_ptr.vmem [resolvable:$true] %s280
          %286 = dma.hbm_to_vmem [thread:$0]  %s279, 4096, %s281, %s270, 64, 64, 4
        $region36: #{tpu_custom_call.1} parent=23 // pred_fallthru
          _
      $region24: #{tpu_custom_call.1} parent=5 // pred_fallthru
        _
      %p287 = scmp.le.s32.totalorder 1, %s19
      %p288 = scmp.lt.s32.totalorder %s19, 5
      %p289 = pnand %p287, %p288
      %p290 = pneg %p289
      // Predicated region
      $region37: #{tpu_custom_call.1} parent=5 // pred_check
        _
      $region38: #{tpu_custom_call.1} parent=5 // pred_check_branch
        %292 = sbr.rel (%p289) target = $region40
      $region39: #{tpu_custom_call.1} parent=5 // pred_region
        %s293 = ssub.s32 %s19, 1
        // Predicated region
        $region41: #{tpu_custom_call.1} parent=39 // pred_check
          %p294 = pneg %p57
        $region42: #{tpu_custom_call.1} parent=39 // pred_check_branch
          %296 = sbr.rel (%p294) target = $region44
        $region43: #{tpu_custom_call.1} parent=39 // pred_region
          %297 = dma.done [#allocation3], 512
        $region44: #{tpu_custom_call.1} parent=39 // pred_fallthru
          _
        %s298 = sand.u32 %s24, 1
        %s299 = scalar_lea.sflag [#allocation6], %s298
        %s300 = sand.u32 %s70, 1
        %s301 = smul.addr %s300, 8192
        %s302 = scalar_lea.vmem [#allocation5], %s301
        // Predicated region
        $region45: #{tpu_custom_call.1} parent=39 // pred_check
          %p303 = pneg %p83
        $region46: #{tpu_custom_call.1} parent=39 // pred_check_branch
          %305 = sbr.rel (%p303) target = $region48
        $region47: #{tpu_custom_call.1} parent=39 // pred_region
          %306 = dma.done %s299, 131072
        $region48: #{tpu_custom_call.1} parent=39 // pred_fallthru
          _
        %s307 = sand.u32 %s24, 1
        %s308 = scalar_lea.sflag [#allocation6], %s307
        %s309 = sand.u32 %s96, 1
        %s310 = smul.addr %s309, 4
        %s311 = scalar_lea.vmem [#allocation7], %s310
        // Predicated region
        $region49: #{tpu_custom_call.1} parent=39 // pred_check
          %p312 = pneg %p109
        $region50: #{tpu_custom_call.1} parent=39 // pred_check_branch
          %314 = sbr.rel (%p312) target = $region52
        $region51: #{tpu_custom_call.1} parent=39 // pred_region
          %315 = dma.done %s308, 64
        $region52: #{tpu_custom_call.1} parent=39 // pred_fallthru
          _
        %s316 = sand.u32 %s24, 1
        %s317 = scalar_lea.sflag [#allocation9], %s316
        %s318 = sand.u32 %s122, 1
        %s319 = smul.addr %s318, 256
        %s320 = scalar_lea.vmem [#allocation8], %s319
        // Predicated region
        $region53: #{tpu_custom_call.1} parent=39 // pred_check
          %p321 = pneg %p135
        $region54: #{tpu_custom_call.1} parent=39 // pred_check_branch
          %323 = sbr.rel (%p321) target = $region56
        $region55: #{tpu_custom_call.1} parent=39 // pred_region
          %324 = dma.done %s317, 4096
        $region56: #{tpu_custom_call.1} parent=39 // pred_fallthru
          _
        // Predicated region
        $region57: #{tpu_custom_call.1} parent=39 // pred_check
          %p325 = pneg %p156
        $region58: #{tpu_custom_call.1} parent=39 // pred_check_branch
          %327 = sbr.rel (%p325) target = $region60
        $region59: #{tpu_custom_call.1} parent=39 // pred_region
          %328 = dma.done [#allocation9], 16
        $region60: #{tpu_custom_call.1} parent=39 // pred_fallthru
          _
        %p329 = pneg %p57
        %p330 = pneg %p54
        %s331 = sand.u32 %s24, 1
        %s332 = scalar_lea.sflag [#allocation6], %s331
        %s333 = sand.u32 %s70, 1
        %s334 = smul.addr %s333, 8192
        %s335 = scalar_lea.vmem [#allocation5], %s334
        %p336 = pneg %p83
        %p337 = pneg %p80
        %s338 = sand.u32 %s24, 1
        %s339 = scalar_lea.sflag [#allocation6], %s338
        %s340 = sand.u32 %s96, 1
        %s341 = smul.addr %s340, 4
        %s342 = scalar_lea.vmem [#allocation7], %s341
        %p343 = pneg %p109
        %p344 = pneg %p106
        %s345 = sand.u32 %s24, 1
        %s346 = scalar_lea.sflag [#allocation9], %s345
        %s347 = sand.u32 %s122, 1
        %s348 = smul.addr %s347, 256
        %s349 = scalar_lea.vmem [#allocation8], %s348
        %p350 = pneg %p135
        %p351 = pneg %p132
        %p352 = pneg %p156
        %p353 = pneg %p153
        %p354 = pneg %p182
        %p355 = pneg %p179
        %s356 = smul.u32 4, %s29
        %s357 = smul.u32 4, %s29
        %s358 = smul.u32 64, %s29
        %p360 = scmp.eq.s32.totalorder %s29, 0
        // Predicated region
        $region61: #{tpu_custom_call.1} parent=39 // pred_check
          %p361 = pneg %p360
        $region62: #{tpu_custom_call.1} parent=39 // pred_check_branch
          %363 = sbr.rel (%p361) target = $region64
        $region63: #{tpu_custom_call.1} parent=39 // pred_region
          %364 = vst [vmem:[#allocation11] sm:$0x3] 0.0
        $region64: #{tpu_custom_call.1} parent=39 // pred_fallthru
          _
        %v365 = vld [vmem:[#allocation2] sm:$0xff]
        %v366 = vld [vmem:[#allocation2 + $0x8] sm:$0xff]
        %v367 = vld [vmem:[#allocation2 + $0x10] sm:$0xff]
        %v368 = vld [vmem:[#allocation2 + $0x18] sm:$0xff]
        %v369 = vld [vmem:[%s302] sm:$0xff]
        %v370 = vld [vmem:[%s302 + $0x8] sm:$0xff]
        %v371 = vld [vmem:[%s302 + $0x10] sm:$0xff]
        %v372 = vld [vmem:[%s302 + $0x18] sm:$0xff]
        %v373 = vld [vmem:[%s302 + $0x20] sm:$0xff]
        %v374 = vld [vmem:[%s302 + $0x28] sm:$0xff]
        %v375 = vld [vmem:[%s302 + $0x30] sm:$0xff]
        %v376 = vld [vmem:[%s302 + $0x38] sm:$0xff]
        %v377 = vld [vmem:[%s302 + $0x40] sm:$0xff]
        %v378 = vld [vmem:[%s302 + $0x48] sm:$0xff]
        %v379 = vld [vmem:[%s302 + $0x50] sm:$0xff]
        %v380 = vld [vmem:[%s302 + $0x58] sm:$0xff]
        %v381 = vld [vmem:[%s302 + $0x60] sm:$0xff]
        %v382 = vld [vmem:[%s302 + $0x68] sm:$0xff]
        %v383 = vld [vmem:[%s302 + $0x70] sm:$0xff]
        %v384 = vld [vmem:[%s302 + $0x78] sm:$0xff]
        %v385 = vld [vmem:[%s302 + $0x80] sm:$0xff]
        %v386 = vld [vmem:[%s302 + $0x88] sm:$0xff]
        %v387 = vld [vmem:[%s302 + $0x90] sm:$0xff]
        %v388 = vld [vmem:[%s302 + $0x98] sm:$0xff]
        %v389 = vld [vmem:[%s302 + $0xa0] sm:$0xff]
        %v390 = vld [vmem:[%s302 + $0xa8] sm:$0xff]
        %v391 = vld [vmem:[%s302 + $0xb0] sm:$0xff]
        %v392 = vld [vmem:[%s302 + $0xb8] sm:$0xff]
        %v393 = vld [vmem:[%s302 + $0xc0] sm:$0xff]
        %v394 = vld [vmem:[%s302 + $0xc8] sm:$0xff]
        %v395 = vld [vmem:[%s302 + $0xd0] sm:$0xff]
        %v396 = vld [vmem:[%s302 + $0xd8] sm:$0xff]
        %v397 = vld [vmem:[%s302 + $0xe0] sm:$0xff]
        %v398 = vld [vmem:[%s302 + $0xe8] sm:$0xff]
        %v399 = vld [vmem:[%s302 + $0xf0] sm:$0xff]
        %v400 = vld [vmem:[%s302 + $0xf8] sm:$0xff]
        %v401 = vld [vmem:[%s302 + $0x100] sm:$0xff]
        %v402 = vld [vmem:[%s302 + $0x108] sm:$0xff]
        %v403 = vld [vmem:[%s302 + $0x110] sm:$0xff]
        %v404 = vld [vmem:[%s302 + $0x118] sm:$0xff]
        %v405 = vld [vmem:[%s302 + $0x120] sm:$0xff]
        %v406 = vld [vmem:[%s302 + $0x128] sm:$0xff]
        %v407 = vld [vmem:[%s302 + $0x130] sm:$0xff]
        %v408 = vld [vmem:[%s302 + $0x138] sm:$0xff]
        %v409 = vld [vmem:[%s302 + $0x140] sm:$0xff]
        %v410 = vld [vmem:[%s302 + $0x148] sm:$0xff]
        %v411 = vld [vmem:[%s302 + $0x150] sm:$0xff]
        %v412 = vld [vmem:[%s302 + $0x158] sm:$0xff]
        %v413 = vld [vmem:[%s302 + $0x160] sm:$0xff]
        %v414 = vld [vmem:[%s302 + $0x168] sm:$0xff]
        %v415 = vld [vmem:[%s302 + $0x170] sm:$0xff]
        %v416 = vld [vmem:[%s302 + $0x178] sm:$0xff]
        %v417 = vld [vmem:[%s302 + $0x180] sm:$0xff]
        %v418 = vld [vmem:[%s302 + $0x188] sm:$0xff]
        %v419 = vld [vmem:[%s302 + $0x190] sm:$0xff]
        %v420 = vld [vmem:[%s302 + $0x198] sm:$0xff]
        %v421 = vld [vmem:[%s302 + $0x1a0] sm:$0xff]
        %v422 = vld [vmem:[%s302 + $0x1a8] sm:$0xff]
        %v423 = vld [vmem:[%s302 + $0x1b0] sm:$0xff]
        %v424 = vld [vmem:[%s302 + $0x1b8] sm:$0xff]
        %v425 = vld [vmem:[%s302 + $0x1c0] sm:$0xff]
        %v426 = vld [vmem:[%s302 + $0x1c8] sm:$0xff]
        %v427 = vld [vmem:[%s302 + $0x1d0] sm:$0xff]
        %v428 = vld [vmem:[%s302 + $0x1d8] sm:$0xff]
        %v429 = vld [vmem:[%s302 + $0x1e0] sm:$0xff]
        %v430 = vld [vmem:[%s302 + $0x1e8] sm:$0xff]
        %v431 = vld [vmem:[%s302 + $0x1f0] sm:$0xff]
        %v432 = vld [vmem:[%s302 + $0x1f8] sm:$0xff]
        %v433 = vld [vmem:[%s302 + $0x200] sm:$0xff]
        %v434 = vld [vmem:[%s302 + $0x208] sm:$0xff]
        %v435 = vld [vmem:[%s302 + $0x210] sm:$0xff]
        %v436 = vld [vmem:[%s302 + $0x218] sm:$0xff]
        %v437 = vld [vmem:[%s302 + $0x220] sm:$0xff]
        %v438 = vld [vmem:[%s302 + $0x228] sm:$0xff]
        %v439 = vld [vmem:[%s302 + $0x230] sm:$0xff]
        %v440 = vld [vmem:[%s302 + $0x238] sm:$0xff]
        %v441 = vld [vmem:[%s302 + $0x240] sm:$0xff]
        %v442 = vld [vmem:[%s302 + $0x248] sm:$0xff]
        %v443 = vld [vmem:[%s302 + $0x250] sm:$0xff]
        %v444 = vld [vmem:[%s302 + $0x258] sm:$0xff]
        %v445 = vld [vmem:[%s302 + $0x260] sm:$0xff]
        %v446 = vld [vmem:[%s302 + $0x268] sm:$0xff]
        %v447 = vld [vmem:[%s302 + $0x270] sm:$0xff]
        %v448 = vld [vmem:[%s302 + $0x278] sm:$0xff]
        %v449 = vld [vmem:[%s302 + $0x280] sm:$0xff]
        %v450 = vld [vmem:[%s302 + $0x288] sm:$0xff]
        %v451 = vld [vmem:[%s302 + $0x290] sm:$0xff]
        %v452 = vld [vmem:[%s302 + $0x298] sm:$0xff]
        %v453 = vld [vmem:[%s302 + $0x2a0] sm:$0xff]
        %v454 = vld [vmem:[%s302 + $0x2a8] sm:$0xff]
        %v455 = vld [vmem:[%s302 + $0x2b0] sm:$0xff]
        %v456 = vld [vmem:[%s302 + $0x2b8] sm:$0xff]
        %v457 = vld [vmem:[%s302 + $0x2c0] sm:$0xff]
        %v458 = vld [vmem:[%s302 + $0x2c8] sm:$0xff]
        %v459 = vld [vmem:[%s302 + $0x2d0] sm:$0xff]
        %v460 = vld [vmem:[%s302 + $0x2d8] sm:$0xff]
        %v461 = vld [vmem:[%s302 + $0x2e0] sm:$0xff]
        %v462 = vld [vmem:[%s302 + $0x2e8] sm:$0xff]
        %v463 = vld [vmem:[%s302 + $0x2f0] sm:$0xff]
        %v464 = vld [vmem:[%s302 + $0x2f8] sm:$0xff]
        %v465 = vld [vmem:[%s302 + $0x300] sm:$0xff]
        %v466 = vld [vmem:[%s302 + $0x308] sm:$0xff]
        %v467 = vld [vmem:[%s302 + $0x310] sm:$0xff]
        %v468 = vld [vmem:[%s302 + $0x318] sm:$0xff]
        %v469 = vld [vmem:[%s302 + $0x320] sm:$0xff]
        %v470 = vld [vmem:[%s302 + $0x328] sm:$0xff]
        %v471 = vld [vmem:[%s302 + $0x330] sm:$0xff]
        %v472 = vld [vmem:[%s302 + $0x338] sm:$0xff]
        %v473 = vld [vmem:[%s302 + $0x340] sm:$0xff]
        %v474 = vld [vmem:[%s302 + $0x348] sm:$0xff]
        %v475 = vld [vmem:[%s302 + $0x350] sm:$0xff]
        %v476 = vld [vmem:[%s302 + $0x358] sm:$0xff]
        %v477 = vld [vmem:[%s302 + $0x360] sm:$0xff]
        %v478 = vld [vmem:[%s302 + $0x368] sm:$0xff]
        %v479 = vld [vmem:[%s302 + $0x370] sm:$0xff]
        %v480 = vld [vmem:[%s302 + $0x378] sm:$0xff]
        %v481 = vld [vmem:[%s302 + $0x380] sm:$0xff]
        %v482 = vld [vmem:[%s302 + $0x388] sm:$0xff]
        %v483 = vld [vmem:[%s302 + $0x390] sm:$0xff]
        %v484 = vld [vmem:[%s302 + $0x398] sm:$0xff]
        %v485 = vld [vmem:[%s302 + $0x3a0] sm:$0xff]
        %v486 = vld [vmem:[%s302 + $0x3a8] sm:$0xff]
        %v487 = vld [vmem:[%s302 + $0x3b0] sm:$0xff]
        %v488 = vld [vmem:[%s302 + $0x3b8] sm:$0xff]
        %v489 = vld [vmem:[%s302 + $0x3c0] sm:$0xff]
        %v490 = vld [vmem:[%s302 + $0x3c8] sm:$0xff]
        %v491 = vld [vmem:[%s302 + $0x3d0] sm:$0xff]
        %v492 = vld [vmem:[%s302 + $0x3d8] sm:$0xff]
        %v493 = vld [vmem:[%s302 + $0x3e0] sm:$0xff]
        %v494 = vld [vmem:[%s302 + $0x3e8] sm:$0xff]
        %v495 = vld [vmem:[%s302 + $0x3f0] sm:$0xff]
        %v496 = vld [vmem:[%s302 + $0x3f8] sm:$0xff]
        %v497 = vld [vmem:[%s302 + $0x400] sm:$0xff]
        %v498 = vld [vmem:[%s302 + $0x408] sm:$0xff]
        %v499 = vld [vmem:[%s302 + $0x410] sm:$0xff]
        %v500 = vld [vmem:[%s302 + $0x418] sm:$0xff]
        %v501 = vld [vmem:[%s302 + $0x420] sm:$0xff]
        %v502 = vld [vmem:[%s302 + $0x428] sm:$0xff]
        %v503 = vld [vmem:[%s302 + $0x430] sm:$0xff]
        %v504 = vld [vmem:[%s302 + $0x438] sm:$0xff]
        %v505 = vld [vmem:[%s302 + $0x440] sm:$0xff]
        %v506 = vld [vmem:[%s302 + $0x448] sm:$0xff]
        %v507 = vld [vmem:[%s302 + $0x450] sm:$0xff]
        %v508 = vld [vmem:[%s302 + $0x458] sm:$0xff]
        %v509 = vld [vmem:[%s302 + $0x460] sm:$0xff]
        %v510 = vld [vmem:[%s302 + $0x468] sm:$0xff]
        %v511 = vld [vmem:[%s302 + $0x470] sm:$0xff]
        %v512 = vld [vmem:[%s302 + $0x478] sm:$0xff]
        %v513 = vld [vmem:[%s302 + $0x480] sm:$0xff]
        %v514 = vld [vmem:[%s302 + $0x488] sm:$0xff]
        %v515 = vld [vmem:[%s302 + $0x490] sm:$0xff]
        %v516 = vld [vmem:[%s302 + $0x498] sm:$0xff]
        %v517 = vld [vmem:[%s302 + $0x4a0] sm:$0xff]
        %v518 = vld [vmem:[%s302 + $0x4a8] sm:$0xff]
        %v519 = vld [vmem:[%s302 + $0x4b0] sm:$0xff]
        %v520 = vld [vmem:[%s302 + $0x4b8] sm:$0xff]
        %v521 = vld [vmem:[%s302 + $0x4c0] sm:$0xff]
        %v522 = vld [vmem:[%s302 + $0x4c8] sm:$0xff]
        %v523 = vld [vmem:[%s302 + $0x4d0] sm:$0xff]
        %v524 = vld [vmem:[%s302 + $0x4d8] sm:$0xff]
        %v525 = vld [vmem:[%s302 + $0x4e0] sm:$0xff]
        %v526 = vld [vmem:[%s302 + $0x4e8] sm:$0xff]
        %v527 = vld [vmem:[%s302 + $0x4f0] sm:$0xff]
        %v528 = vld [vmem:[%s302 + $0x4f8] sm:$0xff]
        %v529 = vld [vmem:[%s302 + $0x500] sm:$0xff]
        %v530 = vld [vmem:[%s302 + $0x508] sm:$0xff]
        %v531 = vld [vmem:[%s302 + $0x510] sm:$0xff]
        %v532 = vld [vmem:[%s302 + $0x518] sm:$0xff]
        %v533 = vld [vmem:[%s302 + $0x520] sm:$0xff]
        %v534 = vld [vmem:[%s302 + $0x528] sm:$0xff]
        %v535 = vld [vmem:[%s302 + $0x530] sm:$0xff]
        %v536 = vld [vmem:[%s302 + $0x538] sm:$0xff]
        %v537 = vld [vmem:[%s302 + $0x540] sm:$0xff]
        %v538 = vld [vmem:[%s302 + $0x548] sm:$0xff]
        %v539 = vld [vmem:[%s302 + $0x550] sm:$0xff]
        %v540 = vld [vmem:[%s302 + $0x558] sm:$0xff]
        %v541 = vld [vmem:[%s302 + $0x560] sm:$0xff]
        %v542 = vld [vmem:[%s302 + $0x568] sm:$0xff]
        %v543 = vld [vmem:[%s302 + $0x570] sm:$0xff]
        %v544 = vld [vmem:[%s302 + $0x578] sm:$0xff]
        %v545 = vld [vmem:[%s302 + $0x580] sm:$0xff]
        %v546 = vld [vmem:[%s302 + $0x588] sm:$0xff]
        %v547 = vld [vmem:[%s302 + $0x590] sm:$0xff]
        %v548 = vld [vmem:[%s302 + $0x598] sm:$0xff]
        %v549 = vld [vmem:[%s302 + $0x5a0] sm:$0xff]
        %v550 = vld [vmem:[%s302 + $0x5a8] sm:$0xff]
        %v551 = vld [vmem:[%s302 + $0x5b0] sm:$0xff]
        %v552 = vld [vmem:[%s302 + $0x5b8] sm:$0xff]
        %v553 = vld [vmem:[%s302 + $0x5c0] sm:$0xff]
        %v554 = vld [vmem:[%s302 + $0x5c8] sm:$0xff]
        %v555 = vld [vmem:[%s302 + $0x5d0] sm:$0xff]
        %v556 = vld [vmem:[%s302 + $0x5d8] sm:$0xff]
        %v557 = vld [vmem:[%s302 + $0x5e0] sm:$0xff]
        %v558 = vld [vmem:[%s302 + $0x5e8] sm:$0xff]
        %v559 = vld [vmem:[%s302 + $0x5f0] sm:$0xff]
        %v560 = vld [vmem:[%s302 + $0x5f8] sm:$0xff]
        %v561 = vld [vmem:[%s302 + $0x600] sm:$0xff]
        %v562 = vld [vmem:[%s302 + $0x608] sm:$0xff]
        %v563 = vld [vmem:[%s302 + $0x610] sm:$0xff]
        %v564 = vld [vmem:[%s302 + $0x618] sm:$0xff]
        %v565 = vld [vmem:[%s302 + $0x620] sm:$0xff]
        %v566 = vld [vmem:[%s302 + $0x628] sm:$0xff]
        %v567 = vld [vmem:[%s302 + $0x630] sm:$0xff]
        %v568 = vld [vmem:[%s302 + $0x638] sm:$0xff]
        %v569 = vld [vmem:[%s302 + $0x640] sm:$0xff]
        %v570 = vld [vmem:[%s302 + $0x648] sm:$0xff]
        %v571 = vld [vmem:[%s302 + $0x650] sm:$0xff]
        %v572 = vld [vmem:[%s302 + $0x658] sm:$0xff]
        %v573 = vld [vmem:[%s302 + $0x660] sm:$0xff]
        %v574 = vld [vmem:[%s302 + $0x668] sm:$0xff]
        %v575 = vld [vmem:[%s302 + $0x670] sm:$0xff]
        %v576 = vld [vmem:[%s302 + $0x678] sm:$0xff]
        %v577 = vld [vmem:[%s302 + $0x680] sm:$0xff]
        %v578 = vld [vmem:[%s302 + $0x688] sm:$0xff]
        %v579 = vld [vmem:[%s302 + $0x690] sm:$0xff]
        %v580 = vld [vmem:[%s302 + $0x698] sm:$0xff]
        %v581 = vld [vmem:[%s302 + $0x6a0] sm:$0xff]
        %v582 = vld [vmem:[%s302 + $0x6a8] sm:$0xff]
        %v583 = vld [vmem:[%s302 + $0x6b0] sm:$0xff]
        %v584 = vld [vmem:[%s302 + $0x6b8] sm:$0xff]
        %v585 = vld [vmem:[%s302 + $0x6c0] sm:$0xff]
        %v586 = vld [vmem:[%s302 + $0x6c8] sm:$0xff]
        %v587 = vld [vmem:[%s302 + $0x6d0] sm:$0xff]
        %v588 = vld [vmem:[%s302 + $0x6d8] sm:$0xff]
        %v589 = vld [vmem:[%s302 + $0x6e0] sm:$0xff]
        %v590 = vld [vmem:[%s302 + $0x6e8] sm:$0xff]
        %v591 = vld [vmem:[%s302 + $0x6f0] sm:$0xff]
        %v592 = vld [vmem:[%s302 + $0x6f8] sm:$0xff]
        %v593 = vld [vmem:[%s302 + $0x700] sm:$0xff]
        %v594 = vld [vmem:[%s302 + $0x708] sm:$0xff]
        %v595 = vld [vmem:[%s302 + $0x710] sm:$0xff]
        %v596 = vld [vmem:[%s302 + $0x718] sm:$0xff]
        %v597 = vld [vmem:[%s302 + $0x720] sm:$0xff]
        %v598 = vld [vmem:[%s302 + $0x728] sm:$0xff]
        %v599 = vld [vmem:[%s302 + $0x730] sm:$0xff]
        %v600 = vld [vmem:[%s302 + $0x738] sm:$0xff]
        %v601 = vld [vmem:[%s302 + $0x740] sm:$0xff]
        %v602 = vld [vmem:[%s302 + $0x748] sm:$0xff]
        %v603 = vld [vmem:[%s302 + $0x750] sm:$0xff]
        %v604 = vld [vmem:[%s302 + $0x758] sm:$0xff]
        %v605 = vld [vmem:[%s302 + $0x760] sm:$0xff]
        %v606 = vld [vmem:[%s302 + $0x768] sm:$0xff]
        %v607 = vld [vmem:[%s302 + $0x770] sm:$0xff]
        %v608 = vld [vmem:[%s302 + $0x778] sm:$0xff]
        %v609 = vld [vmem:[%s302 + $0x780] sm:$0xff]
        %v610 = vld [vmem:[%s302 + $0x788] sm:$0xff]
        %v611 = vld [vmem:[%s302 + $0x790] sm:$0xff]
        %v612 = vld [vmem:[%s302 + $0x798] sm:$0xff]
        %v613 = vld [vmem:[%s302 + $0x7a0] sm:$0xff]
        %v614 = vld [vmem:[%s302 + $0x7a8] sm:$0xff]
        %v615 = vld [vmem:[%s302 + $0x7b0] sm:$0xff]
        %v616 = vld [vmem:[%s302 + $0x7b8] sm:$0xff]
        %v617 = vld [vmem:[%s302 + $0x7c0] sm:$0xff]
        %v618 = vld [vmem:[%s302 + $0x7c8] sm:$0xff]
        %v619 = vld [vmem:[%s302 + $0x7d0] sm:$0xff]
        %v620 = vld [vmem:[%s302 + $0x7d8] sm:$0xff]
        %v621 = vld [vmem:[%s302 + $0x7e0] sm:$0xff]
        %v622 = vld [vmem:[%s302 + $0x7e8] sm:$0xff]
        %v623 = vld [vmem:[%s302 + $0x7f0] sm:$0xff]
        %v624 = vld [vmem:[%s302 + $0x7f8] sm:$0xff]
        %v625 = vld [vmem:[%s302 + $0x800] sm:$0xff]
        %v626 = vld [vmem:[%s302 + $0x808] sm:$0xff]
        %v627 = vld [vmem:[%s302 + $0x810] sm:$0xff]
        %v628 = vld [vmem:[%s302 + $0x818] sm:$0xff]
        %v629 = vld [vmem:[%s302 + $0x820] sm:$0xff]
        %v630 = vld [vmem:[%s302 + $0x828] sm:$0xff]
        %v631 = vld [vmem:[%s302 + $0x830] sm:$0xff]
        %v632 = vld [vmem:[%s302 + $0x838] sm:$0xff]
        %v633 = vld [vmem:[%s302 + $0x840] sm:$0xff]
        %v634 = vld [vmem:[%s302 + $0x848] sm:$0xff]
        %v635 = vld [vmem:[%s302 + $0x850] sm:$0xff]
        %v636 = vld [vmem:[%s302 + $0x858] sm:$0xff]
        %v637 = vld [vmem:[%s302 + $0x860] sm:$0xff]
        %v638 = vld [vmem:[%s302 + $0x868] sm:$0xff]
        %v639 = vld [vmem:[%s302 + $0x870] sm:$0xff]
        %v640 = vld [vmem:[%s302 + $0x878] sm:$0xff]
        %v641 = vld [vmem:[%s302 + $0x880] sm:$0xff]
        %v642 = vld [vmem:[%s302 + $0x888] sm:$0xff]
        %v643 = vld [vmem:[%s302 + $0x890] sm:$0xff]
        %v644 = vld [vmem:[%s302 + $0x898] sm:$0xff]
        %v645 = vld [vmem:[%s302 + $0x8a0] sm:$0xff]
        %v646 = vld [vmem:[%s302 + $0x8a8] sm:$0xff]
        %v647 = vld [vmem:[%s302 + $0x8b0] sm:$0xff]
        %v648 = vld [vmem:[%s302 + $0x8b8] sm:$0xff]
        %v649 = vld [vmem:[%s302 + $0x8c0] sm:$0xff]
        %v650 = vld [vmem:[%s302 + $0x8c8] sm:$0xff]
        %v651 = vld [vmem:[%s302 + $0x8d0] sm:$0xff]
        %v652 = vld [vmem:[%s302 + $0x8d8] sm:$0xff]
        %v653 = vld [vmem:[%s302 + $0x8e0] sm:$0xff]
        %v654 = vld [vmem:[%s302 + $0x8e8] sm:$0xff]
        %v655 = vld [vmem:[%s302 + $0x8f0] sm:$0xff]
        %v656 = vld [vmem:[%s302 + $0x8f8] sm:$0xff]
        %v657 = vld [vmem:[%s302 + $0x900] sm:$0xff]
        %v658 = vld [vmem:[%s302 + $0x908] sm:$0xff]
        %v659 = vld [vmem:[%s302 + $0x910] sm:$0xff]
        %v660 = vld [vmem:[%s302 + $0x918] sm:$0xff]
        %v661 = vld [vmem:[%s302 + $0x920] sm:$0xff]
        %v662 = vld [vmem:[%s302 + $0x928] sm:$0xff]
        %v663 = vld [vmem:[%s302 + $0x930] sm:$0xff]
        %v664 = vld [vmem:[%s302 + $0x938] sm:$0xff]
        %v665 = vld [vmem:[%s302 + $0x940] sm:$0xff]
        %v666 = vld [vmem:[%s302 + $0x948] sm:$0xff]
        %v667 = vld [vmem:[%s302 + $0x950] sm:$0xff]
        %v668 = vld [vmem:[%s302 + $0x958] sm:$0xff]
        %v669 = vld [vmem:[%s302 + $0x960] sm:$0xff]
        %v670 = vld [vmem:[%s302 + $0x968] sm:$0xff]
        %v671 = vld [vmem:[%s302 + $0x970] sm:$0xff]
        %v672 = vld [vmem:[%s302 + $0x978] sm:$0xff]
        %v673 = vld [vmem:[%s302 + $0x980] sm:$0xff]
        %v674 = vld [vmem:[%s302 + $0x988] sm:$0xff]
        %v675 = vld [vmem:[%s302 + $0x990] sm:$0xff]
        %v676 = vld [vmem:[%s302 + $0x998] sm:$0xff]
        %v677 = vld [vmem:[%s302 + $0x9a0] sm:$0xff]
        %v678 = vld [vmem:[%s302 + $0x9a8] sm:$0xff]
        %v679 = vld [vmem:[%s302 + $0x9b0] sm:$0xff]
        %v680 = vld [vmem:[%s302 + $0x9b8] sm:$0xff]
        %v681 = vld [vmem:[%s302 + $0x9c0] sm:$0xff]
        %v682 = vld [vmem:[%s302 + $0x9c8] sm:$0xff]
        %v683 = vld [vmem:[%s302 + $0x9d0] sm:$0xff]
        %v684 = vld [vmem:[%s302 + $0x9d8] sm:$0xff]
        %v685 = vld [vmem:[%s302 + $0x9e0] sm:$0xff]
        %v686 = vld [vmem:[%s302 + $0x9e8] sm:$0xff]
        %v687 = vld [vmem:[%s302 + $0x9f0] sm:$0xff]
        %v688 = vld [vmem:[%s302 + $0x9f8] sm:$0xff]
        %v689 = vld [vmem:[%s302 + $0xa00] sm:$0xff]
        %v690 = vld [vmem:[%s302 + $0xa08] sm:$0xff]
        %v691 = vld [vmem:[%s302 + $0xa10] sm:$0xff]
        %v692 = vld [vmem:[%s302 + $0xa18] sm:$0xff]
        %v693 = vld [vmem:[%s302 + $0xa20] sm:$0xff]
        %v694 = vld [vmem:[%s302 + $0xa28] sm:$0xff]
        %v695 = vld [vmem:[%s302 + $0xa30] sm:$0xff]
        %v696 = vld [vmem:[%s302 + $0xa38] sm:$0xff]
        %v697 = vld [vmem:[%s302 + $0xa40] sm:$0xff]
        %v698 = vld [vmem:[%s302 + $0xa48] sm:$0xff]
        %v699 = vld [vmem:[%s302 + $0xa50] sm:$0xff]
        %v700 = vld [vmem:[%s302 + $0xa58] sm:$0xff]
        %v701 = vld [vmem:[%s302 + $0xa60] sm:$0xff]
        %v702 = vld [vmem:[%s302 + $0xa68] sm:$0xff]
        %v703 = vld [vmem:[%s302 + $0xa70] sm:$0xff]
        %v704 = vld [vmem:[%s302 + $0xa78] sm:$0xff]
        %v705 = vld [vmem:[%s302 + $0xa80] sm:$0xff]
        %v706 = vld [vmem:[%s302 + $0xa88] sm:$0xff]
        %v707 = vld [vmem:[%s302 + $0xa90] sm:$0xff]
        %v708 = vld [vmem:[%s302 + $0xa98] sm:$0xff]
        %v709 = vld [vmem:[%s302 + $0xaa0] sm:$0xff]
        %v710 = vld [vmem:[%s302 + $0xaa8] sm:$0xff]
        %v711 = vld [vmem:[%s302 + $0xab0] sm:$0xff]
        %v712 = vld [vmem:[%s302 + $0xab8] sm:$0xff]
        %v713 = vld [vmem:[%s302 + $0xac0] sm:$0xff]
        %v714 = vld [vmem:[%s302 + $0xac8] sm:$0xff]
        %v715 = vld [vmem:[%s302 + $0xad0] sm:$0xff]
        %v716 = vld [vmem:[%s302 + $0xad8] sm:$0xff]
        %v717 = vld [vmem:[%s302 + $0xae0] sm:$0xff]
        %v718 = vld [vmem:[%s302 + $0xae8] sm:$0xff]
        %v719 = vld [vmem:[%s302 + $0xaf0] sm:$0xff]
        %v720 = vld [vmem:[%s302 + $0xaf8] sm:$0xff]
        %v721 = vld [vmem:[%s302 + $0xb00] sm:$0xff]
        %v722 = vld [vmem:[%s302 + $0xb08] sm:$0xff]
        %v723 = vld [vmem:[%s302 + $0xb10] sm:$0xff]
        %v724 = vld [vmem:[%s302 + $0xb18] sm:$0xff]
        %v725 = vld [vmem:[%s302 + $0xb20] sm:$0xff]
        %v726 = vld [vmem:[%s302 + $0xb28] sm:$0xff]
        %v727 = vld [vmem:[%s302 + $0xb30] sm:$0xff]
        %v728 = vld [vmem:[%s302 + $0xb38] sm:$0xff]
        %v729 = vld [vmem:[%s302 + $0xb40] sm:$0xff]
        %v730 = vld [vmem:[%s302 + $0xb48] sm:$0xff]
        %v731 = vld [vmem:[%s302 + $0xb50] sm:$0xff]
        %v732 = vld [vmem:[%s302 + $0xb58] sm:$0xff]
        %v733 = vld [vmem:[%s302 + $0xb60] sm:$0xff]
        %v734 = vld [vmem:[%s302 + $0xb68] sm:$0xff]
        %v735 = vld [vmem:[%s302 + $0xb70] sm:$0xff]
        %v736 = vld [vmem:[%s302 + $0xb78] sm:$0xff]
        %v737 = vld [vmem:[%s302 + $0xb80] sm:$0xff]
        %v738 = vld [vmem:[%s302 + $0xb88] sm:$0xff]
        %v739 = vld [vmem:[%s302 + $0xb90] sm:$0xff]
        %v740 = vld [vmem:[%s302 + $0xb98] sm:$0xff]
        %v741 = vld [vmem:[%s302 + $0xba0] sm:$0xff]
        %v742 = vld [vmem:[%s302 + $0xba8] sm:$0xff]
        %v743 = vld [vmem:[%s302 + $0xbb0] sm:$0xff]
        %v744 = vld [vmem:[%s302 + $0xbb8] sm:$0xff]
        %v745 = vld [vmem:[%s302 + $0xbc0] sm:$0xff]
        %v746 = vld [vmem:[%s302 + $0xbc8] sm:$0xff]
        %v747 = vld [vmem:[%s302 + $0xbd0] sm:$0xff]
        %v748 = vld [vmem:[%s302 + $0xbd8] sm:$0xff]
        %v749 = vld [vmem:[%s302 + $0xbe0] sm:$0xff]
        %v750 = vld [vmem:[%s302 + $0xbe8] sm:$0xff]
        %v751 = vld [vmem:[%s302 + $0xbf0] sm:$0xff]
        %v752 = vld [vmem:[%s302 + $0xbf8] sm:$0xff]
        %v753 = vld [vmem:[%s302 + $0xc00] sm:$0xff]
        %v754 = vld [vmem:[%s302 + $0xc08] sm:$0xff]
        %v755 = vld [vmem:[%s302 + $0xc10] sm:$0xff]
        %v756 = vld [vmem:[%s302 + $0xc18] sm:$0xff]
        %v757 = vld [vmem:[%s302 + $0xc20] sm:$0xff]
        %v758 = vld [vmem:[%s302 + $0xc28] sm:$0xff]
        %v759 = vld [vmem:[%s302 + $0xc30] sm:$0xff]
        %v760 = vld [vmem:[%s302 + $0xc38] sm:$0xff]
        %v761 = vld [vmem:[%s302 + $0xc40] sm:$0xff]
        %v762 = vld [vmem:[%s302 + $0xc48] sm:$0xff]
        %v763 = vld [vmem:[%s302 + $0xc50] sm:$0xff]
        %v764 = vld [vmem:[%s302 + $0xc58] sm:$0xff]
        %v765 = vld [vmem:[%s302 + $0xc60] sm:$0xff]
        %v766 = vld [vmem:[%s302 + $0xc68] sm:$0xff]
        %v767 = vld [vmem:[%s302 + $0xc70] sm:$0xff]
        %v768 = vld [vmem:[%s302 + $0xc78] sm:$0xff]
        %v769 = vld [vmem:[%s302 + $0xc80] sm:$0xff]
        %v770 = vld [vmem:[%s302 + $0xc88] sm:$0xff]
        %v771 = vld [vmem:[%s302 + $0xc90] sm:$0xff]
        %v772 = vld [vmem:[%s302 + $0xc98] sm:$0xff]
        %v773 = vld [vmem:[%s302 + $0xca0] sm:$0xff]
        %v774 = vld [vmem:[%s302 + $0xca8] sm:$0xff]
        %v775 = vld [vmem:[%s302 + $0xcb0] sm:$0xff]
        %v776 = vld [vmem:[%s302 + $0xcb8] sm:$0xff]
        %v777 = vld [vmem:[%s302 + $0xcc0] sm:$0xff]
        %v778 = vld [vmem:[%s302 + $0xcc8] sm:$0xff]
        %v779 = vld [vmem:[%s302 + $0xcd0] sm:$0xff]
        %v780 = vld [vmem:[%s302 + $0xcd8] sm:$0xff]
        %v781 = vld [vmem:[%s302 + $0xce0] sm:$0xff]
        %v782 = vld [vmem:[%s302 + $0xce8] sm:$0xff]
        %v783 = vld [vmem:[%s302 + $0xcf0] sm:$0xff]
        %v784 = vld [vmem:[%s302 + $0xcf8] sm:$0xff]
        %v785 = vld [vmem:[%s302 + $0xd00] sm:$0xff]
        %v786 = vld [vmem:[%s302 + $0xd08] sm:$0xff]
        %v787 = vld [vmem:[%s302 + $0xd10] sm:$0xff]
        %v788 = vld [vmem:[%s302 + $0xd18] sm:$0xff]
        %v789 = vld [vmem:[%s302 + $0xd20] sm:$0xff]
        %v790 = vld [vmem:[%s302 + $0xd28] sm:$0xff]
        %v791 = vld [vmem:[%s302 + $0xd30] sm:$0xff]
        %v792 = vld [vmem:[%s302 + $0xd38] sm:$0xff]
        %v793 = vld [vmem:[%s302 + $0xd40] sm:$0xff]
        %v794 = vld [vmem:[%s302 + $0xd48] sm:$0xff]
        %v795 = vld [vmem:[%s302 + $0xd50] sm:$0xff]
        %v796 = vld [vmem:[%s302 + $0xd58] sm:$0xff]
        %v797 = vld [vmem:[%s302 + $0xd60] sm:$0xff]
        %v798 = vld [vmem:[%s302 + $0xd68] sm:$0xff]
        %v799 = vld [vmem:[%s302 + $0xd70] sm:$0xff]
        %v800 = vld [vmem:[%s302 + $0xd78] sm:$0xff]
        %v801 = vld [vmem:[%s302 + $0xd80] sm:$0xff]
        %v802 = vld [vmem:[%s302 + $0xd88] sm:$0xff]
        %v803 = vld [vmem:[%s302 + $0xd90] sm:$0xff]
        %v804 = vld [vmem:[%s302 + $0xd98] sm:$0xff]
        %v805 = vld [vmem:[%s302 + $0xda0] sm:$0xff]
        %v806 = vld [vmem:[%s302 + $0xda8] sm:$0xff]
        %v807 = vld [vmem:[%s302 + $0xdb0] sm:$0xff]
        %v808 = vld [vmem:[%s302 + $0xdb8] sm:$0xff]
        %v809 = vld [vmem:[%s302 + $0xdc0] sm:$0xff]
        %v810 = vld [vmem:[%s302 + $0xdc8] sm:$0xff]
        %v811 = vld [vmem:[%s302 + $0xdd0] sm:$0xff]
        %v812 = vld [vmem:[%s302 + $0xdd8] sm:$0xff]
        %v813 = vld [vmem:[%s302 + $0xde0] sm:$0xff]
        %v814 = vld [vmem:[%s302 + $0xde8] sm:$0xff]
        %v815 = vld [vmem:[%s302 + $0xdf0] sm:$0xff]
        %v816 = vld [vmem:[%s302 + $0xdf8] sm:$0xff]
        %v817 = vld [vmem:[%s302 + $0xe00] sm:$0xff]
        %v818 = vld [vmem:[%s302 + $0xe08] sm:$0xff]
        %v819 = vld [vmem:[%s302 + $0xe10] sm:$0xff]
        %v820 = vld [vmem:[%s302 + $0xe18] sm:$0xff]
        %v821 = vld [vmem:[%s302 + $0xe20] sm:$0xff]
        %v822 = vld [vmem:[%s302 + $0xe28] sm:$0xff]
        %v823 = vld [vmem:[%s302 + $0xe30] sm:$0xff]
        %v824 = vld [vmem:[%s302 + $0xe38] sm:$0xff]
        %v825 = vld [vmem:[%s302 + $0xe40] sm:$0xff]
        %v826 = vld [vmem:[%s302 + $0xe48] sm:$0xff]
        %v827 = vld [vmem:[%s302 + $0xe50] sm:$0xff]
        %v828 = vld [vmem:[%s302 + $0xe58] sm:$0xff]
        %v829 = vld [vmem:[%s302 + $0xe60] sm:$0xff]
        %v830 = vld [vmem:[%s302 + $0xe68] sm:$0xff]
        %v831 = vld [vmem:[%s302 + $0xe70] sm:$0xff]
        %v832 = vld [vmem:[%s302 + $0xe78] sm:$0xff]
        %v833 = vld [vmem:[%s302 + $0xe80] sm:$0xff]
        %v834 = vld [vmem:[%s302 + $0xe88] sm:$0xff]
        %v835 = vld [vmem:[%s302 + $0xe90] sm:$0xff]
        %v836 = vld [vmem:[%s302 + $0xe98] sm:$0xff]
        %v837 = vld [vmem:[%s302 + $0xea0] sm:$0xff]
        %v838 = vld [vmem:[%s302 + $0xea8] sm:$0xff]
        %v839 = vld [vmem:[%s302 + $0xeb0] sm:$0xff]
        %v840 = vld [vmem:[%s302 + $0xeb8] sm:$0xff]
        %v841 = vld [vmem:[%s302 + $0xec0] sm:$0xff]
        %v842 = vld [vmem:[%s302 + $0xec8] sm:$0xff]
        %v843 = vld [vmem:[%s302 + $0xed0] sm:$0xff]
        %v844 = vld [vmem:[%s302 + $0xed8] sm:$0xff]
        %v845 = vld [vmem:[%s302 + $0xee0] sm:$0xff]
        %v846 = vld [vmem:[%s302 + $0xee8] sm:$0xff]
        %v847 = vld [vmem:[%s302 + $0xef0] sm:$0xff]
        %v848 = vld [vmem:[%s302 + $0xef8] sm:$0xff]
        %v849 = vld [vmem:[%s302 + $0xf00] sm:$0xff]
        %v850 = vld [vmem:[%s302 + $0xf08] sm:$0xff]
        %v851 = vld [vmem:[%s302 + $0xf10] sm:$0xff]
        %v852 = vld [vmem:[%s302 + $0xf18] sm:$0xff]
        %v853 = vld [vmem:[%s302 + $0xf20] sm:$0xff]
        %v854 = vld [vmem:[%s302 + $0xf28] sm:$0xff]
        %v855 = vld [vmem:[%s302 + $0xf30] sm:$0xff]
        %v856 = vld [vmem:[%s302 + $0xf38] sm:$0xff]
        %v857 = vld [vmem:[%s302 + $0xf40] sm:$0xff]
        %v858 = vld [vmem:[%s302 + $0xf48] sm:$0xff]
        %v859 = vld [vmem:[%s302 + $0xf50] sm:$0xff]
        %v860 = vld [vmem:[%s302 + $0xf58] sm:$0xff]
        %v861 = vld [vmem:[%s302 + $0xf60] sm:$0xff]
        %v862 = vld [vmem:[%s302 + $0xf68] sm:$0xff]
        %v863 = vld [vmem:[%s302 + $0xf70] sm:$0xff]
        %v864 = vld [vmem:[%s302 + $0xf78] sm:$0xff]
        %v865 = vld [vmem:[%s302 + $0xf80] sm:$0xff]
        %v866 = vld [vmem:[%s302 + $0xf88] sm:$0xff]
        %v867 = vld [vmem:[%s302 + $0xf90] sm:$0xff]
        %v868 = vld [vmem:[%s302 + $0xf98] sm:$0xff]
        %v869 = vld [vmem:[%s302 + $0xfa0] sm:$0xff]
        %v870 = vld [vmem:[%s302 + $0xfa8] sm:$0xff]
        %v871 = vld [vmem:[%s302 + $0xfb0] sm:$0xff]
        %v872 = vld [vmem:[%s302 + $0xfb8] sm:$0xff]
        %v873 = vld [vmem:[%s302 + $0xfc0] sm:$0xff]
        %v874 = vld [vmem:[%s302 + $0xfc8] sm:$0xff]
        %v875 = vld [vmem:[%s302 + $0xfd0] sm:$0xff]
        %v876 = vld [vmem:[%s302 + $0xfd8] sm:$0xff]
        %v877 = vld [vmem:[%s302 + $0xfe0] sm:$0xff]
        %v878 = vld [vmem:[%s302 + $0xfe8] sm:$0xff]
        %v879 = vld [vmem:[%s302 + $0xff0] sm:$0xff]
        %v880 = vld [vmem:[%s302 + $0xff8] sm:$0xff]
        %v881 = vld [vmem:[%s302 + $0x1000] sm:$0xff]
        %v882 = vld [vmem:[%s302 + $0x1008] sm:$0xff]
        %v883 = vld [vmem:[%s302 + $0x1010] sm:$0xff]
        %v884 = vld [vmem:[%s302 + $0x1018] sm:$0xff]
        %v885 = vld [vmem:[%s302 + $0x1020] sm:$0xff]
        %v886 = vld [vmem:[%s302 + $0x1028] sm:$0xff]
        %v887 = vld [vmem:[%s302 + $0x1030] sm:$0xff]
        %v888 = vld [vmem:[%s302 + $0x1038] sm:$0xff]
        %v889 = vld [vmem:[%s302 + $0x1040] sm:$0xff]
        %v890 = vld [vmem:[%s302 + $0x1048] sm:$0xff]
        %v891 = vld [vmem:[%s302 + $0x1050] sm:$0xff]
        %v892 = vld [vmem:[%s302 + $0x1058] sm:$0xff]
        %v893 = vld [vmem:[%s302 + $0x1060] sm:$0xff]
        %v894 = vld [vmem:[%s302 + $0x1068] sm:$0xff]
        %v895 = vld [vmem:[%s302 + $0x1070] sm:$0xff]
        %v896 = vld [vmem:[%s302 + $0x1078] sm:$0xff]
        %v897 = vld [vmem:[%s302 + $0x1080] sm:$0xff]
        %v898 = vld [vmem:[%s302 + $0x1088] sm:$0xff]
        %v899 = vld [vmem:[%s302 + $0x1090] sm:$0xff]
        %v900 = vld [vmem:[%s302 + $0x1098] sm:$0xff]
        %v901 = vld [vmem:[%s302 + $0x10a0] sm:$0xff]
        %v902 = vld [vmem:[%s302 + $0x10a8] sm:$0xff]
        %v903 = vld [vmem:[%s302 + $0x10b0] sm:$0xff]
        %v904 = vld [vmem:[%s302 + $0x10b8] sm:$0xff]
        %v905 = vld [vmem:[%s302 + $0x10c0] sm:$0xff]
        %v906 = vld [vmem:[%s302 + $0x10c8] sm:$0xff]
        %v907 = vld [vmem:[%s302 + $0x10d0] sm:$0xff]
        %v908 = vld [vmem:[%s302 + $0x10d8] sm:$0xff]
        %v909 = vld [vmem:[%s302 + $0x10e0] sm:$0xff]
        %v910 = vld [vmem:[%s302 + $0x10e8] sm:$0xff]
        %v911 = vld [vmem:[%s302 + $0x10f0] sm:$0xff]
        %v912 = vld [vmem:[%s302 + $0x10f8] sm:$0xff]
        %v913 = vld [vmem:[%s302 + $0x1100] sm:$0xff]
        %v914 = vld [vmem:[%s302 + $0x1108] sm:$0xff]
        %v915 = vld [vmem:[%s302 + $0x1110] sm:$0xff]
        %v916 = vld [vmem:[%s302 + $0x1118] sm:$0xff]
        %v917 = vld [vmem:[%s302 + $0x1120] sm:$0xff]
        %v918 = vld [vmem:[%s302 + $0x1128] sm:$0xff]
        %v919 = vld [vmem:[%s302 + $0x1130] sm:$0xff]
        %v920 = vld [vmem:[%s302 + $0x1138] sm:$0xff]
        %v921 = vld [vmem:[%s302 + $0x1140] sm:$0xff]
        %v922 = vld [vmem:[%s302 + $0x1148] sm:$0xff]
        %v923 = vld [vmem:[%s302 + $0x1150] sm:$0xff]
        %v924 = vld [vmem:[%s302 + $0x1158] sm:$0xff]
        %v925 = vld [vmem:[%s302 + $0x1160] sm:$0xff]
        %v926 = vld [vmem:[%s302 + $0x1168] sm:$0xff]
        %v927 = vld [vmem:[%s302 + $0x1170] sm:$0xff]
        %v928 = vld [vmem:[%s302 + $0x1178] sm:$0xff]
        %v929 = vld [vmem:[%s302 + $0x1180] sm:$0xff]
        %v930 = vld [vmem:[%s302 + $0x1188] sm:$0xff]
        %v931 = vld [vmem:[%s302 + $0x1190] sm:$0xff]
        %v932 = vld [vmem:[%s302 + $0x1198] sm:$0xff]
        %v933 = vld [vmem:[%s302 + $0x11a0] sm:$0xff]
        %v934 = vld [vmem:[%s302 + $0x11a8] sm:$0xff]
        %v935 = vld [vmem:[%s302 + $0x11b0] sm:$0xff]
        %v936 = vld [vmem:[%s302 + $0x11b8] sm:$0xff]
        %v937 = vld [vmem:[%s302 + $0x11c0] sm:$0xff]
        %v938 = vld [vmem:[%s302 + $0x11c8] sm:$0xff]
        %v939 = vld [vmem:[%s302 + $0x11d0] sm:$0xff]
        %v940 = vld [vmem:[%s302 + $0x11d8] sm:$0xff]
        %v941 = vld [vmem:[%s302 + $0x11e0] sm:$0xff]
        %v942 = vld [vmem:[%s302 + $0x11e8] sm:$0xff]
        %v943 = vld [vmem:[%s302 + $0x11f0] sm:$0xff]
        %v944 = vld [vmem:[%s302 + $0x11f8] sm:$0xff]
        %v945 = vld [vmem:[%s302 + $0x1200] sm:$0xff]
        %v946 = vld [vmem:[%s302 + $0x1208] sm:$0xff]
        %v947 = vld [vmem:[%s302 + $0x1210] sm:$0xff]
        %v948 = vld [vmem:[%s302 + $0x1218] sm:$0xff]
        %v949 = vld [vmem:[%s302 + $0x1220] sm:$0xff]
        %v950 = vld [vmem:[%s302 + $0x1228] sm:$0xff]
        %v951 = vld [vmem:[%s302 + $0x1230] sm:$0xff]
        %v952 = vld [vmem:[%s302 + $0x1238] sm:$0xff]
        %v953 = vld [vmem:[%s302 + $0x1240] sm:$0xff]
        %v954 = vld [vmem:[%s302 + $0x1248] sm:$0xff]
        %v955 = vld [vmem:[%s302 + $0x1250] sm:$0xff]
        %v956 = vld [vmem:[%s302 + $0x1258] sm:$0xff]
        %v957 = vld [vmem:[%s302 + $0x1260] sm:$0xff]
        %v958 = vld [vmem:[%s302 + $0x1268] sm:$0xff]
        %v959 = vld [vmem:[%s302 + $0x1270] sm:$0xff]
        %v960 = vld [vmem:[%s302 + $0x1278] sm:$0xff]
        %v961 = vld [vmem:[%s302 + $0x1280] sm:$0xff]
        %v962 = vld [vmem:[%s302 + $0x1288] sm:$0xff]
        %v963 = vld [vmem:[%s302 + $0x1290] sm:$0xff]
        %v964 = vld [vmem:[%s302 + $0x1298] sm:$0xff]
        %v965 = vld [vmem:[%s302 + $0x12a0] sm:$0xff]
        %v966 = vld [vmem:[%s302 + $0x12a8] sm:$0xff]
        %v967 = vld [vmem:[%s302 + $0x12b0] sm:$0xff]
        %v968 = vld [vmem:[%s302 + $0x12b8] sm:$0xff]
        %v969 = vld [vmem:[%s302 + $0x12c0] sm:$0xff]
        %v970 = vld [vmem:[%s302 + $0x12c8] sm:$0xff]
        %v971 = vld [vmem:[%s302 + $0x12d0] sm:$0xff]
        %v972 = vld [vmem:[%s302 + $0x12d8] sm:$0xff]
        %v973 = vld [vmem:[%s302 + $0x12e0] sm:$0xff]
        %v974 = vld [vmem:[%s302 + $0x12e8] sm:$0xff]
        %v975 = vld [vmem:[%s302 + $0x12f0] sm:$0xff]
        %v976 = vld [vmem:[%s302 + $0x12f8] sm:$0xff]
        %v977 = vld [vmem:[%s302 + $0x1300] sm:$0xff]
        %v978 = vld [vmem:[%s302 + $0x1308] sm:$0xff]
        %v979 = vld [vmem:[%s302 + $0x1310] sm:$0xff]
        %v980 = vld [vmem:[%s302 + $0x1318] sm:$0xff]
        %v981 = vld [vmem:[%s302 + $0x1320] sm:$0xff]
        %v982 = vld [vmem:[%s302 + $0x1328] sm:$0xff]
        %v983 = vld [vmem:[%s302 + $0x1330] sm:$0xff]
        %v984 = vld [vmem:[%s302 + $0x1338] sm:$0xff]
        %v985 = vld [vmem:[%s302 + $0x1340] sm:$0xff]
        %v986 = vld [vmem:[%s302 + $0x1348] sm:$0xff]
        %v987 = vld [vmem:[%s302 + $0x1350] sm:$0xff]
        %v988 = vld [vmem:[%s302 + $0x1358] sm:$0xff]
        %v989 = vld [vmem:[%s302 + $0x1360] sm:$0xff]
        %v990 = vld [vmem:[%s302 + $0x1368] sm:$0xff]
        %v991 = vld [vmem:[%s302 + $0x1370] sm:$0xff]
        %v992 = vld [vmem:[%s302 + $0x1378] sm:$0xff]
        %v993 = vld [vmem:[%s302 + $0x1380] sm:$0xff]
        %v994 = vld [vmem:[%s302 + $0x1388] sm:$0xff]
        %v995 = vld [vmem:[%s302 + $0x1390] sm:$0xff]
        %v996 = vld [vmem:[%s302 + $0x1398] sm:$0xff]
        %v997 = vld [vmem:[%s302 + $0x13a0] sm:$0xff]
        %v998 = vld [vmem:[%s302 + $0x13a8] sm:$0xff]
        %v999 = vld [vmem:[%s302 + $0x13b0] sm:$0xff]
        %v1000 = vld [vmem:[%s302 + $0x13b8] sm:$0xff]
        %v1001 = vld [vmem:[%s302 + $0x13c0] sm:$0xff]
        %v1002 = vld [vmem:[%s302 + $0x13c8] sm:$0xff]
        %v1003 = vld [vmem:[%s302 + $0x13d0] sm:$0xff]
        %v1004 = vld [vmem:[%s302 + $0x13d8] sm:$0xff]
        %v1005 = vld [vmem:[%s302 + $0x13e0] sm:$0xff]
        %v1006 = vld [vmem:[%s302 + $0x13e8] sm:$0xff]
        %v1007 = vld [vmem:[%s302 + $0x13f0] sm:$0xff]
        %v1008 = vld [vmem:[%s302 + $0x13f8] sm:$0xff]
        %v1009 = vld [vmem:[%s302 + $0x1400] sm:$0xff]
        %v1010 = vld [vmem:[%s302 + $0x1408] sm:$0xff]
        %v1011 = vld [vmem:[%s302 + $0x1410] sm:$0xff]
        %v1012 = vld [vmem:[%s302 + $0x1418] sm:$0xff]
        %v1013 = vld [vmem:[%s302 + $0x1420] sm:$0xff]
        %v1014 = vld [vmem:[%s302 + $0x1428] sm:$0xff]
        %v1015 = vld [vmem:[%s302 + $0x1430] sm:$0xff]
        %v1016 = vld [vmem:[%s302 + $0x1438] sm:$0xff]
        %v1017 = vld [vmem:[%s302 + $0x1440] sm:$0xff]
        %v1018 = vld [vmem:[%s302 + $0x1448] sm:$0xff]
        %v1019 = vld [vmem:[%s302 + $0x1450] sm:$0xff]
        %v1020 = vld [vmem:[%s302 + $0x1458] sm:$0xff]
        %v1021 = vld [vmem:[%s302 + $0x1460] sm:$0xff]
        %v1022 = vld [vmem:[%s302 + $0x1468] sm:$0xff]
        %v1023 = vld [vmem:[%s302 + $0x1470] sm:$0xff]
        %v1024 = vld [vmem:[%s302 + $0x1478] sm:$0xff]
        %v1025 = vld [vmem:[%s302 + $0x1480] sm:$0xff]
        %v1026 = vld [vmem:[%s302 + $0x1488] sm:$0xff]
        %v1027 = vld [vmem:[%s302 + $0x1490] sm:$0xff]
        %v1028 = vld [vmem:[%s302 + $0x1498] sm:$0xff]
        %v1029 = vld [vmem:[%s302 + $0x14a0] sm:$0xff]
        %v1030 = vld [vmem:[%s302 + $0x14a8] sm:$0xff]
        %v1031 = vld [vmem:[%s302 + $0x14b0] sm:$0xff]
        %v1032 = vld [vmem:[%s302 + $0x14b8] sm:$0xff]
        %v1033 = vld [vmem:[%s302 + $0x14c0] sm:$0xff]
        %v1034 = vld [vmem:[%s302 + $0x14c8] sm:$0xff]
        %v1035 = vld [vmem:[%s302 + $0x14d0] sm:$0xff]
        %v1036 = vld [vmem:[%s302 + $0x14d8] sm:$0xff]
        %v1037 = vld [vmem:[%s302 + $0x14e0] sm:$0xff]
        %v1038 = vld [vmem:[%s302 + $0x14e8] sm:$0xff]
        %v1039 = vld [vmem:[%s302 + $0x14f0] sm:$0xff]
        %v1040 = vld [vmem:[%s302 + $0x14f8] sm:$0xff]
        %v1041 = vld [vmem:[%s302 + $0x1500] sm:$0xff]
        %v1042 = vld [vmem:[%s302 + $0x1508] sm:$0xff]
        %v1043 = vld [vmem:[%s302 + $0x1510] sm:$0xff]
        %v1044 = vld [vmem:[%s302 + $0x1518] sm:$0xff]
        %v1045 = vld [vmem:[%s302 + $0x1520] sm:$0xff]
        %v1046 = vld [vmem:[%s302 + $0x1528] sm:$0xff]
        %v1047 = vld [vmem:[%s302 + $0x1530] sm:$0xff]
        %v1048 = vld [vmem:[%s302 + $0x1538] sm:$0xff]
        %v1049 = vld [vmem:[%s302 + $0x1540] sm:$0xff]
        %v1050 = vld [vmem:[%s302 + $0x1548] sm:$0xff]
        %v1051 = vld [vmem:[%s302 + $0x1550] sm:$0xff]
        %v1052 = vld [vmem:[%s302 + $0x1558] sm:$0xff]
        %v1053 = vld [vmem:[%s302 + $0x1560] sm:$0xff]
        %v1054 = vld [vmem:[%s302 + $0x1568] sm:$0xff]
        %v1055 = vld [vmem:[%s302 + $0x1570] sm:$0xff]
        %v1056 = vld [vmem:[%s302 + $0x1578] sm:$0xff]
        %v1057 = vld [vmem:[%s302 + $0x1580] sm:$0xff]
        %v1058 = vld [vmem:[%s302 + $0x1588] sm:$0xff]
        %v1059 = vld [vmem:[%s302 + $0x1590] sm:$0xff]
        %v1060 = vld [vmem:[%s302 + $0x1598] sm:$0xff]
        %v1061 = vld [vmem:[%s302 + $0x15a0] sm:$0xff]
        %v1062 = vld [vmem:[%s302 + $0x15a8] sm:$0xff]
        %v1063 = vld [vmem:[%s302 + $0x15b0] sm:$0xff]
        %v1064 = vld [vmem:[%s302 + $0x15b8] sm:$0xff]
        %v1065 = vld [vmem:[%s302 + $0x15c0] sm:$0xff]
        %v1066 = vld [vmem:[%s302 + $0x15c8] sm:$0xff]
        %v1067 = vld [vmem:[%s302 + $0x15d0] sm:$0xff]
        %v1068 = vld [vmem:[%s302 + $0x15d8] sm:$0xff]
        %v1069 = vld [vmem:[%s302 + $0x15e0] sm:$0xff]
        %v1070 = vld [vmem:[%s302 + $0x15e8] sm:$0xff]
        %v1071 = vld [vmem:[%s302 + $0x15f0] sm:$0xff]
        %v1072 = vld [vmem:[%s302 + $0x15f8] sm:$0xff]
        %v1073 = vld [vmem:[%s302 + $0x1600] sm:$0xff]
        %v1074 = vld [vmem:[%s302 + $0x1608] sm:$0xff]
        %v1075 = vld [vmem:[%s302 + $0x1610] sm:$0xff]
        %v1076 = vld [vmem:[%s302 + $0x1618] sm:$0xff]
        %v1077 = vld [vmem:[%s302 + $0x1620] sm:$0xff]
        %v1078 = vld [vmem:[%s302 + $0x1628] sm:$0xff]
        %v1079 = vld [vmem:[%s302 + $0x1630] sm:$0xff]
        %v1080 = vld [vmem:[%s302 + $0x1638] sm:$0xff]
        %v1081 = vld [vmem:[%s302 + $0x1640] sm:$0xff]
        %v1082 = vld [vmem:[%s302 + $0x1648] sm:$0xff]
        %v1083 = vld [vmem:[%s302 + $0x1650] sm:$0xff]
        %v1084 = vld [vmem:[%s302 + $0x1658] sm:$0xff]
        %v1085 = vld [vmem:[%s302 + $0x1660] sm:$0xff]
        %v1086 = vld [vmem:[%s302 + $0x1668] sm:$0xff]
        %v1087 = vld [vmem:[%s302 + $0x1670] sm:$0xff]
        %v1088 = vld [vmem:[%s302 + $0x1678] sm:$0xff]
        %v1089 = vld [vmem:[%s302 + $0x1680] sm:$0xff]
        %v1090 = vld [vmem:[%s302 + $0x1688] sm:$0xff]
        %v1091 = vld [vmem:[%s302 + $0x1690] sm:$0xff]
        %v1092 = vld [vmem:[%s302 + $0x1698] sm:$0xff]
        %v1093 = vld [vmem:[%s302 + $0x16a0] sm:$0xff]
        %v1094 = vld [vmem:[%s302 + $0x16a8] sm:$0xff]
        %v1095 = vld [vmem:[%s302 + $0x16b0] sm:$0xff]
        %v1096 = vld [vmem:[%s302 + $0x16b8] sm:$0xff]
        %v1097 = vld [vmem:[%s302 + $0x16c0] sm:$0xff]
        %v1098 = vld [vmem:[%s302 + $0x16c8] sm:$0xff]
        %v1099 = vld [vmem:[%s302 + $0x16d0] sm:$0xff]
        %v1100 = vld [vmem:[%s302 + $0x16d8] sm:$0xff]
        %v1101 = vld [vmem:[%s302 + $0x16e0] sm:$0xff]
        %v1102 = vld [vmem:[%s302 + $0x16e8] sm:$0xff]
        %v1103 = vld [vmem:[%s302 + $0x16f0] sm:$0xff]
        %v1104 = vld [vmem:[%s302 + $0x16f8] sm:$0xff]
        %v1105 = vld [vmem:[%s302 + $0x1700] sm:$0xff]
        %v1106 = vld [vmem:[%s302 + $0x1708] sm:$0xff]
        %v1107 = vld [vmem:[%s302 + $0x1710] sm:$0xff]
        %v1108 = vld [vmem:[%s302 + $0x1718] sm:$0xff]
        %v1109 = vld [vmem:[%s302 + $0x1720] sm:$0xff]
        %v1110 = vld [vmem:[%s302 + $0x1728] sm:$0xff]
        %v1111 = vld [vmem:[%s302 + $0x1730] sm:$0xff]
        %v1112 = vld [vmem:[%s302 + $0x1738] sm:$0xff]
        %v1113 = vld [vmem:[%s302 + $0x1740] sm:$0xff]
        %v1114 = vld [vmem:[%s302 + $0x1748] sm:$0xff]
        %v1115 = vld [vmem:[%s302 + $0x1750] sm:$0xff]
        %v1116 = vld [vmem:[%s302 + $0x1758] sm:$0xff]
        %v1117 = vld [vmem:[%s302 + $0x1760] sm:$0xff]
        %v1118 = vld [vmem:[%s302 + $0x1768] sm:$0xff]
        %v1119 = vld [vmem:[%s302 + $0x1770] sm:$0xff]
        %v1120 = vld [vmem:[%s302 + $0x1778] sm:$0xff]
        %v1121 = vld [vmem:[%s302 + $0x1780] sm:$0xff]
        %v1122 = vld [vmem:[%s302 + $0x1788] sm:$0xff]
        %v1123 = vld [vmem:[%s302 + $0x1790] sm:$0xff]
        %v1124 = vld [vmem:[%s302 + $0x1798] sm:$0xff]
        %v1125 = vld [vmem:[%s302 + $0x17a0] sm:$0xff]
        %v1126 = vld [vmem:[%s302 + $0x17a8] sm:$0xff]
        %v1127 = vld [vmem:[%s302 + $0x17b0] sm:$0xff]
        %v1128 = vld [vmem:[%s302 + $0x17b8] sm:$0xff]
        %v1129 = vld [vmem:[%s302 + $0x17c0] sm:$0xff]
        %v1130 = vld [vmem:[%s302 + $0x17c8] sm:$0xff]
        %v1131 = vld [vmem:[%s302 + $0x17d0] sm:$0xff]
        %v1132 = vld [vmem:[%s302 + $0x17d8] sm:$0xff]
        %v1133 = vld [vmem:[%s302 + $0x17e0] sm:$0xff]
        %v1134 = vld [vmem:[%s302 + $0x17e8] sm:$0xff]
        %v1135 = vld [vmem:[%s302 + $0x17f0] sm:$0xff]
        %v1136 = vld [vmem:[%s302 + $0x17f8] sm:$0xff]
        %v1137 = vld [vmem:[%s302 + $0x1800] sm:$0xff]
        %v1138 = vld [vmem:[%s302 + $0x1808] sm:$0xff]
        %v1139 = vld [vmem:[%s302 + $0x1810] sm:$0xff]
        %v1140 = vld [vmem:[%s302 + $0x1818] sm:$0xff]
        %v1141 = vld [vmem:[%s302 + $0x1820] sm:$0xff]
        %v1142 = vld [vmem:[%s302 + $0x1828] sm:$0xff]
        %v1143 = vld [vmem:[%s302 + $0x1830] sm:$0xff]
        %v1144 = vld [vmem:[%s302 + $0x1838] sm:$0xff]
        %v1145 = vld [vmem:[%s302 + $0x1840] sm:$0xff]
        %v1146 = vld [vmem:[%s302 + $0x1848] sm:$0xff]
        %v1147 = vld [vmem:[%s302 + $0x1850] sm:$0xff]
        %v1148 = vld [vmem:[%s302 + $0x1858] sm:$0xff]
        %v1149 = vld [vmem:[%s302 + $0x1860] sm:$0xff]
        %v1150 = vld [vmem:[%s302 + $0x1868] sm:$0xff]
        %v1151 = vld [vmem:[%s302 + $0x1870] sm:$0xff]
        %v1152 = vld [vmem:[%s302 + $0x1878] sm:$0xff]
        %v1153 = vld [vmem:[%s302 + $0x1880] sm:$0xff]
        %v1154 = vld [vmem:[%s302 + $0x1888] sm:$0xff]
        %v1155 = vld [vmem:[%s302 + $0x1890] sm:$0xff]
        %v1156 = vld [vmem:[%s302 + $0x1898] sm:$0xff]
        %v1157 = vld [vmem:[%s302 + $0x18a0] sm:$0xff]
        %v1158 = vld [vmem:[%s302 + $0x18a8] sm:$0xff]
        %v1159 = vld [vmem:[%s302 + $0x18b0] sm:$0xff]
        %v1160 = vld [vmem:[%s302 + $0x18b8] sm:$0xff]
        %v1161 = vld [vmem:[%s302 + $0x18c0] sm:$0xff]
        %v1162 = vld [vmem:[%s302 + $0x18c8] sm:$0xff]
        %v1163 = vld [vmem:[%s302 + $0x18d0] sm:$0xff]
        %v1164 = vld [vmem:[%s302 + $0x18d8] sm:$0xff]
        %v1165 = vld [vmem:[%s302 + $0x18e0] sm:$0xff]
        %v1166 = vld [vmem:[%s302 + $0x18e8] sm:$0xff]
        %v1167 = vld [vmem:[%s302 + $0x18f0] sm:$0xff]
        %v1168 = vld [vmem:[%s302 + $0x18f8] sm:$0xff]
        %v1169 = vld [vmem:[%s302 + $0x1900] sm:$0xff]
        %v1170 = vld [vmem:[%s302 + $0x1908] sm:$0xff]
        %v1171 = vld [vmem:[%s302 + $0x1910] sm:$0xff]
        %v1172 = vld [vmem:[%s302 + $0x1918] sm:$0xff]
        %v1173 = vld [vmem:[%s302 + $0x1920] sm:$0xff]
        %v1174 = vld [vmem:[%s302 + $0x1928] sm:$0xff]
        %v1175 = vld [vmem:[%s302 + $0x1930] sm:$0xff]
        %v1176 = vld [vmem:[%s302 + $0x1938] sm:$0xff]
        %v1177 = vld [vmem:[%s302 + $0x1940] sm:$0xff]
        %v1178 = vld [vmem:[%s302 + $0x1948] sm:$0xff]
        %v1179 = vld [vmem:[%s302 + $0x1950] sm:$0xff]
        %v1180 = vld [vmem:[%s302 + $0x1958] sm:$0xff]
        %v1181 = vld [vmem:[%s302 + $0x1960] sm:$0xff]
        %v1182 = vld [vmem:[%s302 + $0x1968] sm:$0xff]
        %v1183 = vld [vmem:[%s302 + $0x1970] sm:$0xff]
        %v1184 = vld [vmem:[%s302 + $0x1978] sm:$0xff]
        %v1185 = vld [vmem:[%s302 + $0x1980] sm:$0xff]
        %v1186 = vld [vmem:[%s302 + $0x1988] sm:$0xff]
        %v1187 = vld [vmem:[%s302 + $0x1990] sm:$0xff]
        %v1188 = vld [vmem:[%s302 + $0x1998] sm:$0xff]
        %v1189 = vld [vmem:[%s302 + $0x19a0] sm:$0xff]
        %v1190 = vld [vmem:[%s302 + $0x19a8] sm:$0xff]
        %v1191 = vld [vmem:[%s302 + $0x19b0] sm:$0xff]
        %v1192 = vld [vmem:[%s302 + $0x19b8] sm:$0xff]
        %v1193 = vld [vmem:[%s302 + $0x19c0] sm:$0xff]
        %v1194 = vld [vmem:[%s302 + $0x19c8] sm:$0xff]
        %v1195 = vld [vmem:[%s302 + $0x19d0] sm:$0xff]
        %v1196 = vld [vmem:[%s302 + $0x19d8] sm:$0xff]
        %v1197 = vld [vmem:[%s302 + $0x19e0] sm:$0xff]
        %v1198 = vld [vmem:[%s302 + $0x19e8] sm:$0xff]
        %v1199 = vld [vmem:[%s302 + $0x19f0] sm:$0xff]
        %v1200 = vld [vmem:[%s302 + $0x19f8] sm:$0xff]
        %v1201 = vld [vmem:[%s302 + $0x1a00] sm:$0xff]
        %v1202 = vld [vmem:[%s302 + $0x1a08] sm:$0xff]
        %v1203 = vld [vmem:[%s302 + $0x1a10] sm:$0xff]
        %v1204 = vld [vmem:[%s302 + $0x1a18] sm:$0xff]
        %v1205 = vld [vmem:[%s302 + $0x1a20] sm:$0xff]
        %v1206 = vld [vmem:[%s302 + $0x1a28] sm:$0xff]
        %v1207 = vld [vmem:[%s302 + $0x1a30] sm:$0xff]
        %v1208 = vld [vmem:[%s302 + $0x1a38] sm:$0xff]
        %v1209 = vld [vmem:[%s302 + $0x1a40] sm:$0xff]
        %v1210 = vld [vmem:[%s302 + $0x1a48] sm:$0xff]
        %v1211 = vld [vmem:[%s302 + $0x1a50] sm:$0xff]
        %v1212 = vld [vmem:[%s302 + $0x1a58] sm:$0xff]
        %v1213 = vld [vmem:[%s302 + $0x1a60] sm:$0xff]
        %v1214 = vld [vmem:[%s302 + $0x1a68] sm:$0xff]
        %v1215 = vld [vmem:[%s302 + $0x1a70] sm:$0xff]
        %v1216 = vld [vmem:[%s302 + $0x1a78] sm:$0xff]
        %v1217 = vld [vmem:[%s302 + $0x1a80] sm:$0xff]
        %v1218 = vld [vmem:[%s302 + $0x1a88] sm:$0xff]
        %v1219 = vld [vmem:[%s302 + $0x1a90] sm:$0xff]
        %v1220 = vld [vmem:[%s302 + $0x1a98] sm:$0xff]
        %v1221 = vld [vmem:[%s302 + $0x1aa0] sm:$0xff]
        %v1222 = vld [vmem:[%s302 + $0x1aa8] sm:$0xff]
        %v1223 = vld [vmem:[%s302 + $0x1ab0] sm:$0xff]
        %v1224 = vld [vmem:[%s302 + $0x1ab8] sm:$0xff]
        %v1225 = vld [vmem:[%s302 + $0x1ac0] sm:$0xff]
        %v1226 = vld [vmem:[%s302 + $0x1ac8] sm:$0xff]
        %v1227 = vld [vmem:[%s302 + $0x1ad0] sm:$0xff]
        %v1228 = vld [vmem:[%s302 + $0x1ad8] sm:$0xff]
        %v1229 = vld [vmem:[%s302 + $0x1ae0] sm:$0xff]
        %v1230 = vld [vmem:[%s302 + $0x1ae8] sm:$0xff]
        %v1231 = vld [vmem:[%s302 + $0x1af0] sm:$0xff]
        %v1232 = vld [vmem:[%s302 + $0x1af8] sm:$0xff]
        %v1233 = vld [vmem:[%s302 + $0x1b00] sm:$0xff]
        %v1234 = vld [vmem:[%s302 + $0x1b08] sm:$0xff]
        %v1235 = vld [vmem:[%s302 + $0x1b10] sm:$0xff]
        %v1236 = vld [vmem:[%s302 + $0x1b18] sm:$0xff]
        %v1237 = vld [vmem:[%s302 + $0x1b20] sm:$0xff]
        %v1238 = vld [vmem:[%s302 + $0x1b28] sm:$0xff]
        %v1239 = vld [vmem:[%s302 + $0x1b30] sm:$0xff]
        %v1240 = vld [vmem:[%s302 + $0x1b38] sm:$0xff]
        %v1241 = vld [vmem:[%s302 + $0x1b40] sm:$0xff]
        %v1242 = vld [vmem:[%s302 + $0x1b48] sm:$0xff]
        %v1243 = vld [vmem:[%s302 + $0x1b50] sm:$0xff]
        %v1244 = vld [vmem:[%s302 + $0x1b58] sm:$0xff]
        %v1245 = vld [vmem:[%s302 + $0x1b60] sm:$0xff]
        %v1246 = vld [vmem:[%s302 + $0x1b68] sm:$0xff]
        %v1247 = vld [vmem:[%s302 + $0x1b70] sm:$0xff]
        %v1248 = vld [vmem:[%s302 + $0x1b78] sm:$0xff]
        %v1249 = vld [vmem:[%s302 + $0x1b80] sm:$0xff]
        %v1250 = vld [vmem:[%s302 + $0x1b88] sm:$0xff]
        %v1251 = vld [vmem:[%s302 + $0x1b90] sm:$0xff]
        %v1252 = vld [vmem:[%s302 + $0x1b98] sm:$0xff]
        %v1253 = vld [vmem:[%s302 + $0x1ba0] sm:$0xff]
        %v1254 = vld [vmem:[%s302 + $0x1ba8] sm:$0xff]
        %v1255 = vld [vmem:[%s302 + $0x1bb0] sm:$0xff]
        %v1256 = vld [vmem:[%s302 + $0x1bb8] sm:$0xff]
        %v1257 = vld [vmem:[%s302 + $0x1bc0] sm:$0xff]
        %v1258 = vld [vmem:[%s302 + $0x1bc8] sm:$0xff]
        %v1259 = vld [vmem:[%s302 + $0x1bd0] sm:$0xff]
        %v1260 = vld [vmem:[%s302 + $0x1bd8] sm:$0xff]
        %v1261 = vld [vmem:[%s302 + $0x1be0] sm:$0xff]
        %v1262 = vld [vmem:[%s302 + $0x1be8] sm:$0xff]
        %v1263 = vld [vmem:[%s302 + $0x1bf0] sm:$0xff]
        %v1264 = vld [vmem:[%s302 + $0x1bf8] sm:$0xff]
        %v1265 = vld [vmem:[%s302 + $0x1c00] sm:$0xff]
        %v1266 = vld [vmem:[%s302 + $0x1c08] sm:$0xff]
        %v1267 = vld [vmem:[%s302 + $0x1c10] sm:$0xff]
        %v1268 = vld [vmem:[%s302 + $0x1c18] sm:$0xff]
        %v1269 = vld [vmem:[%s302 + $0x1c20] sm:$0xff]
        %v1270 = vld [vmem:[%s302 + $0x1c28] sm:$0xff]
        %v1271 = vld [vmem:[%s302 + $0x1c30] sm:$0xff]
        %v1272 = vld [vmem:[%s302 + $0x1c38] sm:$0xff]
        %v1273 = vld [vmem:[%s302 + $0x1c40] sm:$0xff]
        %v1274 = vld [vmem:[%s302 + $0x1c48] sm:$0xff]
        %v1275 = vld [vmem:[%s302 + $0x1c50] sm:$0xff]
        %v1276 = vld [vmem:[%s302 + $0x1c58] sm:$0xff]
        %v1277 = vld [vmem:[%s302 + $0x1c60] sm:$0xff]
        %v1278 = vld [vmem:[%s302 + $0x1c68] sm:$0xff]
        %v1279 = vld [vmem:[%s302 + $0x1c70] sm:$0xff]
        %v1280 = vld [vmem:[%s302 + $0x1c78] sm:$0xff]
        %v1281 = vld [vmem:[%s302 + $0x1c80] sm:$0xff]
        %v1282 = vld [vmem:[%s302 + $0x1c88] sm:$0xff]
        %v1283 = vld [vmem:[%s302 + $0x1c90] sm:$0xff]
        %v1284 = vld [vmem:[%s302 + $0x1c98] sm:$0xff]
        %v1285 = vld [vmem:[%s302 + $0x1ca0] sm:$0xff]
        %v1286 = vld [vmem:[%s302 + $0x1ca8] sm:$0xff]
        %v1287 = vld [vmem:[%s302 + $0x1cb0] sm:$0xff]
        %v1288 = vld [vmem:[%s302 + $0x1cb8] sm:$0xff]
        %v1289 = vld [vmem:[%s302 + $0x1cc0] sm:$0xff]
        %v1290 = vld [vmem:[%s302 + $0x1cc8] sm:$0xff]
        %v1291 = vld [vmem:[%s302 + $0x1cd0] sm:$0xff]
        %v1292 = vld [vmem:[%s302 + $0x1cd8] sm:$0xff]
        %v1293 = vld [vmem:[%s302 + $0x1ce0] sm:$0xff]
        %v1294 = vld [vmem:[%s302 + $0x1ce8] sm:$0xff]
        %v1295 = vld [vmem:[%s302 + $0x1cf0] sm:$0xff]
        %v1296 = vld [vmem:[%s302 + $0x1cf8] sm:$0xff]
        %v1297 = vld [vmem:[%s302 + $0x1d00] sm:$0xff]
        %v1298 = vld [vmem:[%s302 + $0x1d08] sm:$0xff]
        %v1299 = vld [vmem:[%s302 + $0x1d10] sm:$0xff]
        %v1300 = vld [vmem:[%s302 + $0x1d18] sm:$0xff]
        %v1301 = vld [vmem:[%s302 + $0x1d20] sm:$0xff]
        %v1302 = vld [vmem:[%s302 + $0x1d28] sm:$0xff]
        %v1303 = vld [vmem:[%s302 + $0x1d30] sm:$0xff]
        %v1304 = vld [vmem:[%s302 + $0x1d38] sm:$0xff]
        %v1305 = vld [vmem:[%s302 + $0x1d40] sm:$0xff]
        %v1306 = vld [vmem:[%s302 + $0x1d48] sm:$0xff]
        %v1307 = vld [vmem:[%s302 + $0x1d50] sm:$0xff]
        %v1308 = vld [vmem:[%s302 + $0x1d58] sm:$0xff]
        %v1309 = vld [vmem:[%s302 + $0x1d60] sm:$0xff]
        %v1310 = vld [vmem:[%s302 + $0x1d68] sm:$0xff]
        %v1311 = vld [vmem:[%s302 + $0x1d70] sm:$0xff]
        %v1312 = vld [vmem:[%s302 + $0x1d78] sm:$0xff]
        %v1313 = vld [vmem:[%s302 + $0x1d80] sm:$0xff]
        %v1314 = vld [vmem:[%s302 + $0x1d88] sm:$0xff]
        %v1315 = vld [vmem:[%s302 + $0x1d90] sm:$0xff]
        %v1316 = vld [vmem:[%s302 + $0x1d98] sm:$0xff]
        %v1317 = vld [vmem:[%s302 + $0x1da0] sm:$0xff]
        %v1318 = vld [vmem:[%s302 + $0x1da8] sm:$0xff]
        %v1319 = vld [vmem:[%s302 + $0x1db0] sm:$0xff]
        %v1320 = vld [vmem:[%s302 + $0x1db8] sm:$0xff]
        %v1321 = vld [vmem:[%s302 + $0x1dc0] sm:$0xff]
        %v1322 = vld [vmem:[%s302 + $0x1dc8] sm:$0xff]
        %v1323 = vld [vmem:[%s302 + $0x1dd0] sm:$0xff]
        %v1324 = vld [vmem:[%s302 + $0x1dd8] sm:$0xff]
        %v1325 = vld [vmem:[%s302 + $0x1de0] sm:$0xff]
        %v1326 = vld [vmem:[%s302 + $0x1de8] sm:$0xff]
        %v1327 = vld [vmem:[%s302 + $0x1df0] sm:$0xff]
        %v1328 = vld [vmem:[%s302 + $0x1df8] sm:$0xff]
        %v1329 = vld [vmem:[%s302 + $0x1e00] sm:$0xff]
        %v1330 = vld [vmem:[%s302 + $0x1e08] sm:$0xff]
        %v1331 = vld [vmem:[%s302 + $0x1e10] sm:$0xff]
        %v1332 = vld [vmem:[%s302 + $0x1e18] sm:$0xff]
        %v1333 = vld [vmem:[%s302 + $0x1e20] sm:$0xff]
        %v1334 = vld [vmem:[%s302 + $0x1e28] sm:$0xff]
        %v1335 = vld [vmem:[%s302 + $0x1e30] sm:$0xff]
        %v1336 = vld [vmem:[%s302 + $0x1e38] sm:$0xff]
        %v1337 = vld [vmem:[%s302 + $0x1e40] sm:$0xff]
        %v1338 = vld [vmem:[%s302 + $0x1e48] sm:$0xff]
        %v1339 = vld [vmem:[%s302 + $0x1e50] sm:$0xff]
        %v1340 = vld [vmem:[%s302 + $0x1e58] sm:$0xff]
        %v1341 = vld [vmem:[%s302 + $0x1e60] sm:$0xff]
        %v1342 = vld [vmem:[%s302 + $0x1e68] sm:$0xff]
        %v1343 = vld [vmem:[%s302 + $0x1e70] sm:$0xff]
        %v1344 = vld [vmem:[%s302 + $0x1e78] sm:$0xff]
        %v1345 = vld [vmem:[%s302 + $0x1e80] sm:$0xff]
        %v1346 = vld [vmem:[%s302 + $0x1e88] sm:$0xff]
        %v1347 = vld [vmem:[%s302 + $0x1e90] sm:$0xff]
        %v1348 = vld [vmem:[%s302 + $0x1e98] sm:$0xff]
        %v1349 = vld [vmem:[%s302 + $0x1ea0] sm:$0xff]
        %v1350 = vld [vmem:[%s302 + $0x1ea8] sm:$0xff]
        %v1351 = vld [vmem:[%s302 + $0x1eb0] sm:$0xff]
        %v1352 = vld [vmem:[%s302 + $0x1eb8] sm:$0xff]
        %v1353 = vld [vmem:[%s302 + $0x1ec0] sm:$0xff]
        %v1354 = vld [vmem:[%s302 + $0x1ec8] sm:$0xff]
        %v1355 = vld [vmem:[%s302 + $0x1ed0] sm:$0xff]
        %v1356 = vld [vmem:[%s302 + $0x1ed8] sm:$0xff]
        %v1357 = vld [vmem:[%s302 + $0x1ee0] sm:$0xff]
        %v1358 = vld [vmem:[%s302 + $0x1ee8] sm:$0xff]
        %v1359 = vld [vmem:[%s302 + $0x1ef0] sm:$0xff]
        %v1360 = vld [vmem:[%s302 + $0x1ef8] sm:$0xff]
        %v1361 = vld [vmem:[%s302 + $0x1f00] sm:$0xff]
        %v1362 = vld [vmem:[%s302 + $0x1f08] sm:$0xff]
        %v1363 = vld [vmem:[%s302 + $0x1f10] sm:$0xff]
        %v1364 = vld [vmem:[%s302 + $0x1f18] sm:$0xff]
        %v1365 = vld [vmem:[%s302 + $0x1f20] sm:$0xff]
        %v1366 = vld [vmem:[%s302 + $0x1f28] sm:$0xff]
        %v1367 = vld [vmem:[%s302 + $0x1f30] sm:$0xff]
        %v1368 = vld [vmem:[%s302 + $0x1f38] sm:$0xff]
        %v1369 = vld [vmem:[%s302 + $0x1f40] sm:$0xff]
        %v1370 = vld [vmem:[%s302 + $0x1f48] sm:$0xff]
        %v1371 = vld [vmem:[%s302 + $0x1f50] sm:$0xff]
        %v1372 = vld [vmem:[%s302 + $0x1f58] sm:$0xff]
        %v1373 = vld [vmem:[%s302 + $0x1f60] sm:$0xff]
        %v1374 = vld [vmem:[%s302 + $0x1f68] sm:$0xff]
        %v1375 = vld [vmem:[%s302 + $0x1f70] sm:$0xff]
        %v1376 = vld [vmem:[%s302 + $0x1f78] sm:$0xff]
        %v1377 = vld [vmem:[%s302 + $0x1f80] sm:$0xff]
        %v1378 = vld [vmem:[%s302 + $0x1f88] sm:$0xff]
        %v1379 = vld [vmem:[%s302 + $0x1f90] sm:$0xff]
        %v1380 = vld [vmem:[%s302 + $0x1f98] sm:$0xff]
        %v1381 = vld [vmem:[%s302 + $0x1fa0] sm:$0xff]
        %v1382 = vld [vmem:[%s302 + $0x1fa8] sm:$0xff]
        %v1383 = vld [vmem:[%s302 + $0x1fb0] sm:$0xff]
        %v1384 = vld [vmem:[%s302 + $0x1fb8] sm:$0xff]
        %v1385 = vld [vmem:[%s302 + $0x1fc0] sm:$0xff]
        %v1386 = vld [vmem:[%s302 + $0x1fc8] sm:$0xff]
        %v1387 = vld [vmem:[%s302 + $0x1fd0] sm:$0xff]
        %v1388 = vld [vmem:[%s302 + $0x1fd8] sm:$0xff]
        %v1389 = vld [vmem:[%s302 + $0x1fe0] sm:$0xff]
        %v1390 = vld [vmem:[%s302 + $0x1fe8] sm:$0xff]
        %v1391 = vld [vmem:[%s302 + $0x1ff0] sm:$0xff]
        %v1392 = vld [vmem:[%s302 + $0x1ff8] sm:$0xff]
        %v1393 = vld [vmem:[%s311] sm:$0xf]
        %v1395 = vlaneseq
        %v1396 = vshrl.u32 %v1395, 7
        %v1397 = vsub.s32 0, %v1396
        %v1398 = vrot.slane %v1393, %v1397
        %v1399 = vlaneseq
        %v1400 = vshrl.u32 %v1399, 7
        %v1401 = vsub.s32 1, %v1400
        %v1402 = vrot.slane %v1393, %v1401
        %v1403 = vlaneseq
        %v1404 = vshrl.u32 %v1403, 7
        %v1405 = vsub.s32 2, %v1404
        %v1406 = vrot.slane %v1393, %v1405
        %v1407 = vlaneseq
        %v1408 = vshrl.u32 %v1407, 7
        %v1409 = vsub.s32 3, %v1408
        %v1410 = vrot.slane %v1393, %v1409
        %v1419 = vcombine.high %v365, %v365
        %v1421 = vunpack.c.l.s4 1966171168
        %v1422 = vunpack.c.0.s8 %v1421
        %v1423 = vlaneseq
        %v1424 = vshrl.u32 %v1423, 7
        %v1425 = vsub.s32 %v1422, %v1424
        %v1426 = vrot.slane %v365, %v1425
        %v1428 = vunpack.c.l.s4 1966171168
        %v1429 = vunpack.c.0.s8 %v1428
        %v1430 = vlaneseq
        %v1431 = vshrl.u32 %v1430, 7
        %v1432 = vsub.s32 %v1429, %v1431
        %v1433 = vrot.slane %v1419, %v1432
        %v1434 = vcombine.high %v1426, %v1426
        %v1435 = vcombine.high %v1433, %v1433
        %v1437 = vunpack.c.l.s4 1966171168
        %v1438 = vunpack.c.0.s8 %v1437
        %v1439 = vlaneseq
        %v1440 = vshrl.u32 %v1439, 7
        %v1441 = vsub.s32 %v1438, %v1440
        %v1442 = vrot.slane %v1426, %v1441
        %v1444 = vunpack.c.l.s4 1966171168
        %v1445 = vunpack.c.0.s8 %v1444
        %v1446 = vlaneseq
        %v1447 = vshrl.u32 %v1446, 7
        %v1448 = vsub.s32 %v1445, %v1447
        %v1449 = vrot.slane %v1433, %v1448
        %v1451 = vunpack.c.l.s4 1966171168
        %v1452 = vunpack.c.0.s8 %v1451
        %v1453 = vlaneseq
        %v1454 = vshrl.u32 %v1453, 7
        %v1455 = vsub.s32 %v1452, %v1454
        %v1456 = vrot.slane %v1434, %v1455
        %v1458 = vunpack.c.l.s4 1966171168
        %v1459 = vunpack.c.0.s8 %v1458
        %v1460 = vlaneseq
        %v1461 = vshrl.u32 %v1460, 7
        %v1462 = vsub.s32 %v1459, %v1461
        %v1463 = vrot.slane %v1435, %v1462
        %v1464 = vcombine.high %v1442, %v1442
        %v1465 = vcombine.high %v1449, %v1449
        %v1466 = vcombine.high %v1456, %v1456
        %v1467 = vcombine.high %v1463, %v1463
        %v1468 = vcombine.high %v366, %v366
        %v1470 = vunpack.c.l.s4 1966171168
        %v1471 = vunpack.c.0.s8 %v1470
        %v1472 = vlaneseq
        %v1473 = vshrl.u32 %v1472, 7
        %v1474 = vsub.s32 %v1471, %v1473
        %v1475 = vrot.slane %v366, %v1474
        %v1477 = vunpack.c.l.s4 1966171168
        %v1478 = vunpack.c.0.s8 %v1477
        %v1479 = vlaneseq
        %v1480 = vshrl.u32 %v1479, 7
        %v1481 = vsub.s32 %v1478, %v1480
        %v1482 = vrot.slane %v1468, %v1481
        %v1483 = vcombine.high %v1475, %v1475
        %v1484 = vcombine.high %v1482, %v1482
        %v1486 = vunpack.c.l.s4 1966171168
        %v1487 = vunpack.c.0.s8 %v1486
        %v1488 = vlaneseq
        %v1489 = vshrl.u32 %v1488, 7
        %v1490 = vsub.s32 %v1487, %v1489
        %v1491 = vrot.slane %v1475, %v1490
        %v1493 = vunpack.c.l.s4 1966171168
        %v1494 = vunpack.c.0.s8 %v1493
        %v1495 = vlaneseq
        %v1496 = vshrl.u32 %v1495, 7
        %v1497 = vsub.s32 %v1494, %v1496
        %v1498 = vrot.slane %v1482, %v1497
        %v1500 = vunpack.c.l.s4 1966171168
        %v1501 = vunpack.c.0.s8 %v1500
        %v1502 = vlaneseq
        %v1503 = vshrl.u32 %v1502, 7
        %v1504 = vsub.s32 %v1501, %v1503
        %v1505 = vrot.slane %v1483, %v1504
        %v1507 = vunpack.c.l.s4 1966171168
        %v1508 = vunpack.c.0.s8 %v1507
        %v1509 = vlaneseq
        %v1510 = vshrl.u32 %v1509, 7
        %v1511 = vsub.s32 %v1508, %v1510
        %v1512 = vrot.slane %v1484, %v1511
        %v1513 = vcombine.high %v1491, %v1491
        %v1514 = vcombine.high %v1498, %v1498
        %v1515 = vcombine.high %v1505, %v1505
        %v1516 = vcombine.high %v1512, %v1512
        %v1517 = vcombine.high %v367, %v367
        %v1519 = vunpack.c.l.s4 1966171168
        %v1520 = vunpack.c.0.s8 %v1519
        %v1521 = vlaneseq
        %v1522 = vshrl.u32 %v1521, 7
        %v1523 = vsub.s32 %v1520, %v1522
        %v1524 = vrot.slane %v367, %v1523
        %v1526 = vunpack.c.l.s4 1966171168
        %v1527 = vunpack.c.0.s8 %v1526
        %v1528 = vlaneseq
        %v1529 = vshrl.u32 %v1528, 7
        %v1530 = vsub.s32 %v1527, %v1529
        %v1531 = vrot.slane %v1517, %v1530
        %v1532 = vcombine.high %v1524, %v1524
        %v1533 = vcombine.high %v1531, %v1531
        %v1535 = vunpack.c.l.s4 1966171168
        %v1536 = vunpack.c.0.s8 %v1535
        %v1537 = vlaneseq
        %v1538 = vshrl.u32 %v1537, 7
        %v1539 = vsub.s32 %v1536, %v1538
        %v1540 = vrot.slane %v1524, %v1539
        %v1542 = vunpack.c.l.s4 1966171168
        %v1543 = vunpack.c.0.s8 %v1542
        %v1544 = vlaneseq
        %v1545 = vshrl.u32 %v1544, 7
        %v1546 = vsub.s32 %v1543, %v1545
        %v1547 = vrot.slane %v1531, %v1546
        %v1549 = vunpack.c.l.s4 1966171168
        %v1550 = vunpack.c.0.s8 %v1549
        %v1551 = vlaneseq
        %v1552 = vshrl.u32 %v1551, 7
        %v1553 = vsub.s32 %v1550, %v1552
        %v1554 = vrot.slane %v1532, %v1553
        %v1556 = vunpack.c.l.s4 1966171168
        %v1557 = vunpack.c.0.s8 %v1556
        %v1558 = vlaneseq
        %v1559 = vshrl.u32 %v1558, 7
        %v1560 = vsub.s32 %v1557, %v1559
        %v1561 = vrot.slane %v1533, %v1560
        %v1562 = vcombine.high %v1540, %v1540
        %v1563 = vcombine.high %v1547, %v1547
        %v1564 = vcombine.high %v1554, %v1554
        %v1565 = vcombine.high %v1561, %v1561
        %v1566 = vcombine.high %v368, %v368
        %v1568 = vunpack.c.l.s4 1966171168
        %v1569 = vunpack.c.0.s8 %v1568
        %v1570 = vlaneseq
        %v1571 = vshrl.u32 %v1570, 7
        %v1572 = vsub.s32 %v1569, %v1571
        %v1573 = vrot.slane %v368, %v1572
        %v1575 = vunpack.c.l.s4 1966171168
        %v1576 = vunpack.c.0.s8 %v1575
        %v1577 = vlaneseq
        %v1578 = vshrl.u32 %v1577, 7
        %v1579 = vsub.s32 %v1576, %v1578
        %v1580 = vrot.slane %v1566, %v1579
        %v1581 = vcombine.high %v1573, %v1573
        %v1582 = vcombine.high %v1580, %v1580
        %v1584 = vunpack.c.l.s4 1966171168
        %v1585 = vunpack.c.0.s8 %v1584
        %v1586 = vlaneseq
        %v1587 = vshrl.u32 %v1586, 7
        %v1588 = vsub.s32 %v1585, %v1587
        %v1589 = vrot.slane %v1573, %v1588
        %v1591 = vunpack.c.l.s4 1966171168
        %v1592 = vunpack.c.0.s8 %v1591
        %v1593 = vlaneseq
        %v1594 = vshrl.u32 %v1593, 7
        %v1595 = vsub.s32 %v1592, %v1594
        %v1596 = vrot.slane %v1580, %v1595
        %v1598 = vunpack.c.l.s4 1966171168
        %v1599 = vunpack.c.0.s8 %v1598
        %v1600 = vlaneseq
        %v1601 = vshrl.u32 %v1600, 7
        %v1602 = vsub.s32 %v1599, %v1601
        %v1603 = vrot.slane %v1581, %v1602
        %v1605 = vunpack.c.l.s4 1966171168
        %v1606 = vunpack.c.0.s8 %v1605
        %v1607 = vlaneseq
        %v1608 = vshrl.u32 %v1607, 7
        %v1609 = vsub.s32 %v1606, %v1608
        %v1610 = vrot.slane %v1582, %v1609
        %v1611 = vcombine.high %v1589, %v1589
        %v1612 = vcombine.high %v1596, %v1596
        %v1613 = vcombine.high %v1603, %v1603
        %v1614 = vcombine.high %v1610, %v1610
        %v2671 = vunpack.c.l.b16 %v369
        %v2672 = vunpack.c.h.b16 %v369
        %v2673 = vunpack.c.l.b16 %v370
        %v2674 = vunpack.c.h.b16 %v370
        %v2675 = vunpack.c.l.b16 %v371
        %v2676 = vunpack.c.h.b16 %v371
        %v2677 = vunpack.c.l.b16 %v372
        %v2678 = vunpack.c.h.b16 %v372
        %v2679 = vunpack.c.l.b16 %v373
        %v2680 = vunpack.c.h.b16 %v373
        %v2681 = vunpack.c.l.b16 %v374
        %v2682 = vunpack.c.h.b16 %v374
        %v2683 = vunpack.c.l.b16 %v375
        %v2684 = vunpack.c.h.b16 %v375
        %v2685 = vunpack.c.l.b16 %v376
        %v2686 = vunpack.c.h.b16 %v376
        %v2687 = vunpack.c.l.b16 %v377
        %v2688 = vunpack.c.h.b16 %v377
        %v2689 = vunpack.c.l.b16 %v378
        %v2690 = vunpack.c.h.b16 %v378
        %v2691 = vunpack.c.l.b16 %v379
        %v2692 = vunpack.c.h.b16 %v379
        %v2693 = vunpack.c.l.b16 %v380
        %v2694 = vunpack.c.h.b16 %v380
        %v2695 = vunpack.c.l.b16 %v381
        %v2696 = vunpack.c.h.b16 %v381
        %v2697 = vunpack.c.l.b16 %v382
        %v2698 = vunpack.c.h.b16 %v382
        %v2699 = vunpack.c.l.b16 %v383
        %v2700 = vunpack.c.h.b16 %v383
        %v2701 = vunpack.c.l.b16 %v384
        %v2702 = vunpack.c.h.b16 %v384
        %v2703 = vunpack.c.l.b16 %v385
        %v2704 = vunpack.c.h.b16 %v385
        %v2705 = vunpack.c.l.b16 %v386
        %v2706 = vunpack.c.h.b16 %v386
        %v2707 = vunpack.c.l.b16 %v387
        %v2708 = vunpack.c.h.b16 %v387
        %v2709 = vunpack.c.l.b16 %v388
        %v2710 = vunpack.c.h.b16 %v388
        %v2711 = vunpack.c.l.b16 %v389
        %v2712 = vunpack.c.h.b16 %v389
        %v2713 = vunpack.c.l.b16 %v390
        %v2714 = vunpack.c.h.b16 %v390
        %v2715 = vunpack.c.l.b16 %v391
        %v2716 = vunpack.c.h.b16 %v391
        %v2717 = vunpack.c.l.b16 %v392
        %v2718 = vunpack.c.h.b16 %v392
        %v2719 = vunpack.c.l.b16 %v393
        %v2720 = vunpack.c.h.b16 %v393
        %v2721 = vunpack.c.l.b16 %v394
        %v2722 = vunpack.c.h.b16 %v394
        %v2723 = vunpack.c.l.b16 %v395
        %v2724 = vunpack.c.h.b16 %v395
        %v2725 = vunpack.c.l.b16 %v396
        %v2726 = vunpack.c.h.b16 %v396
        %v2727 = vunpack.c.l.b16 %v397
        %v2728 = vunpack.c.h.b16 %v397
        %v2729 = vunpack.c.l.b16 %v398
        %v2730 = vunpack.c.h.b16 %v398
        %v2731 = vunpack.c.l.b16 %v399
        %v2732 = vunpack.c.h.b16 %v399
        %v2733 = vunpack.c.l.b16 %v400
        %v2734 = vunpack.c.h.b16 %v400
        %v2735 = vunpack.c.l.b16 %v401
        %v2736 = vunpack.c.h.b16 %v401
        %v2737 = vunpack.c.l.b16 %v402
        %v2738 = vunpack.c.h.b16 %v402
        %v2739 = vunpack.c.l.b16 %v403
        %v2740 = vunpack.c.h.b16 %v403
        %v2741 = vunpack.c.l.b16 %v404
        %v2742 = vunpack.c.h.b16 %v404
        %v2743 = vunpack.c.l.b16 %v405
        %v2744 = vunpack.c.h.b16 %v405
        %v2745 = vunpack.c.l.b16 %v406
        %v2746 = vunpack.c.h.b16 %v406
        %v2747 = vunpack.c.l.b16 %v407
        %v2748 = vunpack.c.h.b16 %v407
        %v2749 = vunpack.c.l.b16 %v408
        %v2750 = vunpack.c.h.b16 %v408
        %v2751 = vunpack.c.l.b16 %v409
        %v2752 = vunpack.c.h.b16 %v409
        %v2753 = vunpack.c.l.b16 %v410
        %v2754 = vunpack.c.h.b16 %v410
        %v2755 = vunpack.c.l.b16 %v411
        %v2756 = vunpack.c.h.b16 %v411
        %v2757 = vunpack.c.l.b16 %v412
        %v2758 = vunpack.c.h.b16 %v412
        %v2759 = vunpack.c.l.b16 %v413
        %v2760 = vunpack.c.h.b16 %v413
        %v2761 = vunpack.c.l.b16 %v414
        %v2762 = vunpack.c.h.b16 %v414
        %v2763 = vunpack.c.l.b16 %v415
        %v2764 = vunpack.c.h.b16 %v415
        %v2765 = vunpack.c.l.b16 %v416
        %v2766 = vunpack.c.h.b16 %v416
        %v2767 = vunpack.c.l.b16 %v417
        %v2768 = vunpack.c.h.b16 %v417
        %v2769 = vunpack.c.l.b16 %v418
        %v2770 = vunpack.c.h.b16 %v418
        %v2771 = vunpack.c.l.b16 %v419
        %v2772 = vunpack.c.h.b16 %v419
        %v2773 = vunpack.c.l.b16 %v420
        %v2774 = vunpack.c.h.b16 %v420
        %v2775 = vunpack.c.l.b16 %v421
        %v2776 = vunpack.c.h.b16 %v421
        %v2777 = vunpack.c.l.b16 %v422
        %v2778 = vunpack.c.h.b16 %v422
        %v2779 = vunpack.c.l.b16 %v423
        %v2780 = vunpack.c.h.b16 %v423
        %v2781 = vunpack.c.l.b16 %v424
        %v2782 = vunpack.c.h.b16 %v424
        %v2783 = vunpack.c.l.b16 %v425
        %v2784 = vunpack.c.h.b16 %v425
        %v2785 = vunpack.c.l.b16 %v426
        %v2786 = vunpack.c.h.b16 %v426
        %v2787 = vunpack.c.l.b16 %v427
        %v2788 = vunpack.c.h.b16 %v427
        %v2789 = vunpack.c.l.b16 %v428
        %v2790 = vunpack.c.h.b16 %v428
        %v2791 = vunpack.c.l.b16 %v429
        %v2792 = vunpack.c.h.b16 %v429
        %v2793 = vunpack.c.l.b16 %v430
        %v2794 = vunpack.c.h.b16 %v430
        %v2795 = vunpack.c.l.b16 %v431
        %v2796 = vunpack.c.h.b16 %v431
        %v2797 = vunpack.c.l.b16 %v432
        %v2798 = vunpack.c.h.b16 %v432
        %v2799 = vunpack.c.l.b16 %v433
        %v2800 = vunpack.c.h.b16 %v433
        %v2801 = vunpack.c.l.b16 %v434
        %v2802 = vunpack.c.h.b16 %v434
        %v2803 = vunpack.c.l.b16 %v435
        %v2804 = vunpack.c.h.b16 %v435
        %v2805 = vunpack.c.l.b16 %v436
        %v2806 = vunpack.c.h.b16 %v436
        %v2807 = vunpack.c.l.b16 %v437
        %v2808 = vunpack.c.h.b16 %v437
        %v2809 = vunpack.c.l.b16 %v438
        %v2810 = vunpack.c.h.b16 %v438
        %v2811 = vunpack.c.l.b16 %v439
        %v2812 = vunpack.c.h.b16 %v439
        %v2813 = vunpack.c.l.b16 %v440
        %v2814 = vunpack.c.h.b16 %v440
        %v2815 = vunpack.c.l.b16 %v441
        %v2816 = vunpack.c.h.b16 %v441
        %v2817 = vunpack.c.l.b16 %v442
        %v2818 = vunpack.c.h.b16 %v442
        %v2819 = vunpack.c.l.b16 %v443
        %v2820 = vunpack.c.h.b16 %v443
        %v2821 = vunpack.c.l.b16 %v444
        %v2822 = vunpack.c.h.b16 %v444
        %v2823 = vunpack.c.l.b16 %v445
        %v2824 = vunpack.c.h.b16 %v445
        %v2825 = vunpack.c.l.b16 %v446
        %v2826 = vunpack.c.h.b16 %v446
        %v2827 = vunpack.c.l.b16 %v447
        %v2828 = vunpack.c.h.b16 %v447
        %v2829 = vunpack.c.l.b16 %v448
        %v2830 = vunpack.c.h.b16 %v448
        %v2831 = vunpack.c.l.b16 %v449
        %v2832 = vunpack.c.h.b16 %v449
        %v2833 = vunpack.c.l.b16 %v450
        %v2834 = vunpack.c.h.b16 %v450
        %v2835 = vunpack.c.l.b16 %v451
        %v2836 = vunpack.c.h.b16 %v451
        %v2837 = vunpack.c.l.b16 %v452
        %v2838 = vunpack.c.h.b16 %v452
        %v2839 = vunpack.c.l.b16 %v453
        %v2840 = vunpack.c.h.b16 %v453
        %v2841 = vunpack.c.l.b16 %v454
        %v2842 = vunpack.c.h.b16 %v454
        %v2843 = vunpack.c.l.b16 %v455
        %v2844 = vunpack.c.h.b16 %v455
        %v2845 = vunpack.c.l.b16 %v456
        %v2846 = vunpack.c.h.b16 %v456
        %v2847 = vunpack.c.l.b16 %v457
        %v2848 = vunpack.c.h.b16 %v457
        %v2849 = vunpack.c.l.b16 %v458
        %v2850 = vunpack.c.h.b16 %v458
        %v2851 = vunpack.c.l.b16 %v459
        %v2852 = vunpack.c.h.b16 %v459
        %v2853 = vunpack.c.l.b16 %v460
        %v2854 = vunpack.c.h.b16 %v460
        %v2855 = vunpack.c.l.b16 %v461
        %v2856 = vunpack.c.h.b16 %v461
        %v2857 = vunpack.c.l.b16 %v462
        %v2858 = vunpack.c.h.b16 %v462
        %v2859 = vunpack.c.l.b16 %v463
        %v2860 = vunpack.c.h.b16 %v463
        %v2861 = vunpack.c.l.b16 %v464
        %v2862 = vunpack.c.h.b16 %v464
        %v2863 = vunpack.c.l.b16 %v465
        %v2864 = vunpack.c.h.b16 %v465
        %v2865 = vunpack.c.l.b16 %v466
        %v2866 = vunpack.c.h.b16 %v466
        %v2867 = vunpack.c.l.b16 %v467
        %v2868 = vunpack.c.h.b16 %v467
        %v2869 = vunpack.c.l.b16 %v468
        %v2870 = vunpack.c.h.b16 %v468
        %v2871 = vunpack.c.l.b16 %v469
        %v2872 = vunpack.c.h.b16 %v469
        %v2873 = vunpack.c.l.b16 %v470
        %v2874 = vunpack.c.h.b16 %v470
        %v2875 = vunpack.c.l.b16 %v471
        %v2876 = vunpack.c.h.b16 %v471
        %v2877 = vunpack.c.l.b16 %v472
        %v2878 = vunpack.c.h.b16 %v472
        %v2879 = vunpack.c.l.b16 %v473
        %v2880 = vunpack.c.h.b16 %v473
        %v2881 = vunpack.c.l.b16 %v474
        %v2882 = vunpack.c.h.b16 %v474
        %v2883 = vunpack.c.l.b16 %v475
        %v2884 = vunpack.c.h.b16 %v475
        %v2885 = vunpack.c.l.b16 %v476
        %v2886 = vunpack.c.h.b16 %v476
        %v2887 = vunpack.c.l.b16 %v477
        %v2888 = vunpack.c.h.b16 %v477
        %v2889 = vunpack.c.l.b16 %v478
        %v2890 = vunpack.c.h.b16 %v478
        %v2891 = vunpack.c.l.b16 %v479
        %v2892 = vunpack.c.h.b16 %v479
        %v2893 = vunpack.c.l.b16 %v480
        %v2894 = vunpack.c.h.b16 %v480
        %v2895 = vunpack.c.l.b16 %v481
        %v2896 = vunpack.c.h.b16 %v481
        %v2897 = vunpack.c.l.b16 %v482
        %v2898 = vunpack.c.h.b16 %v482
        %v2899 = vunpack.c.l.b16 %v483
        %v2900 = vunpack.c.h.b16 %v483
        %v2901 = vunpack.c.l.b16 %v484
        %v2902 = vunpack.c.h.b16 %v484
        %v2903 = vunpack.c.l.b16 %v485
        %v2904 = vunpack.c.h.b16 %v485
        %v2905 = vunpack.c.l.b16 %v486
        %v2906 = vunpack.c.h.b16 %v486
        %v2907 = vunpack.c.l.b16 %v487
        %v2908 = vunpack.c.h.b16 %v487
        %v2909 = vunpack.c.l.b16 %v488
        %v2910 = vunpack.c.h.b16 %v488
        %v2911 = vunpack.c.l.b16 %v489
        %v2912 = vunpack.c.h.b16 %v489
        %v2913 = vunpack.c.l.b16 %v490
        %v2914 = vunpack.c.h.b16 %v490
        %v2915 = vunpack.c.l.b16 %v491
        %v2916 = vunpack.c.h.b16 %v491
        %v2917 = vunpack.c.l.b16 %v492
        %v2918 = vunpack.c.h.b16 %v492
        %v2919 = vunpack.c.l.b16 %v493
        %v2920 = vunpack.c.h.b16 %v493
        %v2921 = vunpack.c.l.b16 %v494
        %v2922 = vunpack.c.h.b16 %v494
        %v2923 = vunpack.c.l.b16 %v495
        %v2924 = vunpack.c.h.b16 %v495
        %v2925 = vunpack.c.l.b16 %v496
        %v2926 = vunpack.c.h.b16 %v496
        %v2927 = vunpack.c.l.b16 %v497
        %v2928 = vunpack.c.h.b16 %v497
        %v2929 = vunpack.c.l.b16 %v498
        %v2930 = vunpack.c.h.b16 %v498
        %v2931 = vunpack.c.l.b16 %v499
        %v2932 = vunpack.c.h.b16 %v499
        %v2933 = vunpack.c.l.b16 %v500
        %v2934 = vunpack.c.h.b16 %v500
        %v2935 = vunpack.c.l.b16 %v501
        %v2936 = vunpack.c.h.b16 %v501
        %v2937 = vunpack.c.l.b16 %v502
        %v2938 = vunpack.c.h.b16 %v502
        %v2939 = vunpack.c.l.b16 %v503
        %v2940 = vunpack.c.h.b16 %v503
        %v2941 = vunpack.c.l.b16 %v504
        %v2942 = vunpack.c.h.b16 %v504
        %v2943 = vunpack.c.l.b16 %v505
        %v2944 = vunpack.c.h.b16 %v505
        %v2945 = vunpack.c.l.b16 %v506
        %v2946 = vunpack.c.h.b16 %v506
        %v2947 = vunpack.c.l.b16 %v507
        %v2948 = vunpack.c.h.b16 %v507
        %v2949 = vunpack.c.l.b16 %v508
        %v2950 = vunpack.c.h.b16 %v508
        %v2951 = vunpack.c.l.b16 %v509
        %v2952 = vunpack.c.h.b16 %v509
        %v2953 = vunpack.c.l.b16 %v510
        %v2954 = vunpack.c.h.b16 %v510
        %v2955 = vunpack.c.l.b16 %v511
        %v2956 = vunpack.c.h.b16 %v511
        %v2957 = vunpack.c.l.b16 %v512
        %v2958 = vunpack.c.h.b16 %v512
        %v2959 = vunpack.c.l.b16 %v513
        %v2960 = vunpack.c.h.b16 %v513
        %v2961 = vunpack.c.l.b16 %v514
        %v2962 = vunpack.c.h.b16 %v514
        %v2963 = vunpack.c.l.b16 %v515
        %v2964 = vunpack.c.h.b16 %v515
        %v2965 = vunpack.c.l.b16 %v516
        %v2966 = vunpack.c.h.b16 %v516
        %v2967 = vunpack.c.l.b16 %v517
        %v2968 = vunpack.c.h.b16 %v517
        %v2969 = vunpack.c.l.b16 %v518
        %v2970 = vunpack.c.h.b16 %v518
        %v2971 = vunpack.c.l.b16 %v519
        %v2972 = vunpack.c.h.b16 %v519
        %v2973 = vunpack.c.l.b16 %v520
        %v2974 = vunpack.c.h.b16 %v520
        %v2975 = vunpack.c.l.b16 %v521
        %v2976 = vunpack.c.h.b16 %v521
        %v2977 = vunpack.c.l.b16 %v522
        %v2978 = vunpack.c.h.b16 %v522
        %v2979 = vunpack.c.l.b16 %v523
        %v2980 = vunpack.c.h.b16 %v523
        %v2981 = vunpack.c.l.b16 %v524
        %v2982 = vunpack.c.h.b16 %v524
        %v2983 = vunpack.c.l.b16 %v525
        %v2984 = vunpack.c.h.b16 %v525
        %v2985 = vunpack.c.l.b16 %v526
        %v2986 = vunpack.c.h.b16 %v526
        %v2987 = vunpack.c.l.b16 %v527
        %v2988 = vunpack.c.h.b16 %v527
        %v2989 = vunpack.c.l.b16 %v528
        %v2990 = vunpack.c.h.b16 %v528
        %v2991 = vunpack.c.l.b16 %v529
        %v2992 = vunpack.c.h.b16 %v529
        %v2993 = vunpack.c.l.b16 %v530
        %v2994 = vunpack.c.h.b16 %v530
        %v2995 = vunpack.c.l.b16 %v531
        %v2996 = vunpack.c.h.b16 %v531
        %v2997 = vunpack.c.l.b16 %v532
        %v2998 = vunpack.c.h.b16 %v532
        %v2999 = vunpack.c.l.b16 %v533
        %v3000 = vunpack.c.h.b16 %v533
        %v3001 = vunpack.c.l.b16 %v534
        %v3002 = vunpack.c.h.b16 %v534
        %v3003 = vunpack.c.l.b16 %v535
        %v3004 = vunpack.c.h.b16 %v535
        %v3005 = vunpack.c.l.b16 %v536
        %v3006 = vunpack.c.h.b16 %v536
        %v3007 = vunpack.c.l.b16 %v537
        %v3008 = vunpack.c.h.b16 %v537
        %v3009 = vunpack.c.l.b16 %v538
        %v3010 = vunpack.c.h.b16 %v538
        %v3011 = vunpack.c.l.b16 %v539
        %v3012 = vunpack.c.h.b16 %v539
        %v3013 = vunpack.c.l.b16 %v540
        %v3014 = vunpack.c.h.b16 %v540
        %v3015 = vunpack.c.l.b16 %v541
        %v3016 = vunpack.c.h.b16 %v541
        %v3017 = vunpack.c.l.b16 %v542
        %v3018 = vunpack.c.h.b16 %v542
        %v3019 = vunpack.c.l.b16 %v543
        %v3020 = vunpack.c.h.b16 %v543
        %v3021 = vunpack.c.l.b16 %v544
        %v3022 = vunpack.c.h.b16 %v544
        %v3023 = vunpack.c.l.b16 %v545
        %v3024 = vunpack.c.h.b16 %v545
        %v3025 = vunpack.c.l.b16 %v546
        %v3026 = vunpack.c.h.b16 %v546
        %v3027 = vunpack.c.l.b16 %v547
        %v3028 = vunpack.c.h.b16 %v547
        %v3029 = vunpack.c.l.b16 %v548
        %v3030 = vunpack.c.h.b16 %v548
        %v3031 = vunpack.c.l.b16 %v549
        %v3032 = vunpack.c.h.b16 %v549
        %v3033 = vunpack.c.l.b16 %v550
        %v3034 = vunpack.c.h.b16 %v550
        %v3035 = vunpack.c.l.b16 %v551
        %v3036 = vunpack.c.h.b16 %v551
        %v3037 = vunpack.c.l.b16 %v552
        %v3038 = vunpack.c.h.b16 %v552
        %v3039 = vunpack.c.l.b16 %v553
        %v3040 = vunpack.c.h.b16 %v553
        %v3041 = vunpack.c.l.b16 %v554
        %v3042 = vunpack.c.h.b16 %v554
        %v3043 = vunpack.c.l.b16 %v555
        %v3044 = vunpack.c.h.b16 %v555
        %v3045 = vunpack.c.l.b16 %v556
        %v3046 = vunpack.c.h.b16 %v556
        %v3047 = vunpack.c.l.b16 %v557
        %v3048 = vunpack.c.h.b16 %v557
        %v3049 = vunpack.c.l.b16 %v558
        %v3050 = vunpack.c.h.b16 %v558
        %v3051 = vunpack.c.l.b16 %v559
        %v3052 = vunpack.c.h.b16 %v559
        %v3053 = vunpack.c.l.b16 %v560
        %v3054 = vunpack.c.h.b16 %v560
        %v3055 = vunpack.c.l.b16 %v561
        %v3056 = vunpack.c.h.b16 %v561
        %v3057 = vunpack.c.l.b16 %v562
        %v3058 = vunpack.c.h.b16 %v562
        %v3059 = vunpack.c.l.b16 %v563
        %v3060 = vunpack.c.h.b16 %v563
        %v3061 = vunpack.c.l.b16 %v564
        %v3062 = vunpack.c.h.b16 %v564
        %v3063 = vunpack.c.l.b16 %v565
        %v3064 = vunpack.c.h.b16 %v565
        %v3065 = vunpack.c.l.b16 %v566
        %v3066 = vunpack.c.h.b16 %v566
        %v3067 = vunpack.c.l.b16 %v567
        %v3068 = vunpack.c.h.b16 %v567
        %v3069 = vunpack.c.l.b16 %v568
        %v3070 = vunpack.c.h.b16 %v568
        %v3071 = vunpack.c.l.b16 %v569
        %v3072 = vunpack.c.h.b16 %v569
        %v3073 = vunpack.c.l.b16 %v570
        %v3074 = vunpack.c.h.b16 %v570
        %v3075 = vunpack.c.l.b16 %v571
        %v3076 = vunpack.c.h.b16 %v571
        %v3077 = vunpack.c.l.b16 %v572
        %v3078 = vunpack.c.h.b16 %v572
        %v3079 = vunpack.c.l.b16 %v573
        %v3080 = vunpack.c.h.b16 %v573
        %v3081 = vunpack.c.l.b16 %v574
        %v3082 = vunpack.c.h.b16 %v574
        %v3083 = vunpack.c.l.b16 %v575
        %v3084 = vunpack.c.h.b16 %v575
        %v3085 = vunpack.c.l.b16 %v576
        %v3086 = vunpack.c.h.b16 %v576
        %v3087 = vunpack.c.l.b16 %v577
        %v3088 = vunpack.c.h.b16 %v577
        %v3089 = vunpack.c.l.b16 %v578
        %v3090 = vunpack.c.h.b16 %v578
        %v3091 = vunpack.c.l.b16 %v579
        %v3092 = vunpack.c.h.b16 %v579
        %v3093 = vunpack.c.l.b16 %v580
        %v3094 = vunpack.c.h.b16 %v580
        %v3095 = vunpack.c.l.b16 %v581
        %v3096 = vunpack.c.h.b16 %v581
        %v3097 = vunpack.c.l.b16 %v582
        %v3098 = vunpack.c.h.b16 %v582
        %v3099 = vunpack.c.l.b16 %v583
        %v3100 = vunpack.c.h.b16 %v583
        %v3101 = vunpack.c.l.b16 %v584
        %v3102 = vunpack.c.h.b16 %v584
        %v3103 = vunpack.c.l.b16 %v585
        %v3104 = vunpack.c.h.b16 %v585
        %v3105 = vunpack.c.l.b16 %v586
        %v3106 = vunpack.c.h.b16 %v586
        %v3107 = vunpack.c.l.b16 %v587
        %v3108 = vunpack.c.h.b16 %v587
        %v3109 = vunpack.c.l.b16 %v588
        %v3110 = vunpack.c.h.b16 %v588
        %v3111 = vunpack.c.l.b16 %v589
        %v3112 = vunpack.c.h.b16 %v589
        %v3113 = vunpack.c.l.b16 %v590
        %v3114 = vunpack.c.h.b16 %v590
        %v3115 = vunpack.c.l.b16 %v591
        %v3116 = vunpack.c.h.b16 %v591
        %v3117 = vunpack.c.l.b16 %v592
        %v3118 = vunpack.c.h.b16 %v592
        %v3119 = vunpack.c.l.b16 %v593
        %v3120 = vunpack.c.h.b16 %v593
        %v3121 = vunpack.c.l.b16 %v594
        %v3122 = vunpack.c.h.b16 %v594
        %v3123 = vunpack.c.l.b16 %v595
        %v3124 = vunpack.c.h.b16 %v595
        %v3125 = vunpack.c.l.b16 %v596
        %v3126 = vunpack.c.h.b16 %v596
        %v3127 = vunpack.c.l.b16 %v597
        %v3128 = vunpack.c.h.b16 %v597
        %v3129 = vunpack.c.l.b16 %v598
        %v3130 = vunpack.c.h.b16 %v598
        %v3131 = vunpack.c.l.b16 %v599
        %v3132 = vunpack.c.h.b16 %v599
        %v3133 = vunpack.c.l.b16 %v600
        %v3134 = vunpack.c.h.b16 %v600
        %v3135 = vunpack.c.l.b16 %v601
        %v3136 = vunpack.c.h.b16 %v601
        %v3137 = vunpack.c.l.b16 %v602
        %v3138 = vunpack.c.h.b16 %v602
        %v3139 = vunpack.c.l.b16 %v603
        %v3140 = vunpack.c.h.b16 %v603
        %v3141 = vunpack.c.l.b16 %v604
        %v3142 = vunpack.c.h.b16 %v604
        %v3143 = vunpack.c.l.b16 %v605
        %v3144 = vunpack.c.h.b16 %v605
        %v3145 = vunpack.c.l.b16 %v606
        %v3146 = vunpack.c.h.b16 %v606
        %v3147 = vunpack.c.l.b16 %v607
        %v3148 = vunpack.c.h.b16 %v607
        %v3149 = vunpack.c.l.b16 %v608
        %v3150 = vunpack.c.h.b16 %v608
        %v3151 = vunpack.c.l.b16 %v609
        %v3152 = vunpack.c.h.b16 %v609
        %v3153 = vunpack.c.l.b16 %v610
        %v3154 = vunpack.c.h.b16 %v610
        %v3155 = vunpack.c.l.b16 %v611
        %v3156 = vunpack.c.h.b16 %v611
        %v3157 = vunpack.c.l.b16 %v612
        %v3158 = vunpack.c.h.b16 %v612
        %v3159 = vunpack.c.l.b16 %v613
        %v3160 = vunpack.c.h.b16 %v613
        %v3161 = vunpack.c.l.b16 %v614
        %v3162 = vunpack.c.h.b16 %v614
        %v3163 = vunpack.c.l.b16 %v615
        %v3164 = vunpack.c.h.b16 %v615
        %v3165 = vunpack.c.l.b16 %v616
        %v3166 = vunpack.c.h.b16 %v616
        %v3167 = vunpack.c.l.b16 %v617
        %v3168 = vunpack.c.h.b16 %v617
        %v3169 = vunpack.c.l.b16 %v618
        %v3170 = vunpack.c.h.b16 %v618
        %v3171 = vunpack.c.l.b16 %v619
        %v3172 = vunpack.c.h.b16 %v619
        %v3173 = vunpack.c.l.b16 %v620
        %v3174 = vunpack.c.h.b16 %v620
        %v3175 = vunpack.c.l.b16 %v621
        %v3176 = vunpack.c.h.b16 %v621
        %v3177 = vunpack.c.l.b16 %v622
        %v3178 = vunpack.c.h.b16 %v622
        %v3179 = vunpack.c.l.b16 %v623
        %v3180 = vunpack.c.h.b16 %v623
        %v3181 = vunpack.c.l.b16 %v624
        %v3182 = vunpack.c.h.b16 %v624
        %v3183 = vunpack.c.l.b16 %v625
        %v3184 = vunpack.c.h.b16 %v625
        %v3185 = vunpack.c.l.b16 %v626
        %v3186 = vunpack.c.h.b16 %v626
        %v3187 = vunpack.c.l.b16 %v627
        %v3188 = vunpack.c.h.b16 %v627
        %v3189 = vunpack.c.l.b16 %v628
        %v3190 = vunpack.c.h.b16 %v628
        %v3191 = vunpack.c.l.b16 %v629
        %v3192 = vunpack.c.h.b16 %v629
        %v3193 = vunpack.c.l.b16 %v630
        %v3194 = vunpack.c.h.b16 %v630
        %v3195 = vunpack.c.l.b16 %v631
        %v3196 = vunpack.c.h.b16 %v631
        %v3197 = vunpack.c.l.b16 %v632
        %v3198 = vunpack.c.h.b16 %v632
        %v3199 = vunpack.c.l.b16 %v633
        %v3200 = vunpack.c.h.b16 %v633
        %v3201 = vunpack.c.l.b16 %v634
        %v3202 = vunpack.c.h.b16 %v634
        %v3203 = vunpack.c.l.b16 %v635
        %v3204 = vunpack.c.h.b16 %v635
        %v3205 = vunpack.c.l.b16 %v636
        %v3206 = vunpack.c.h.b16 %v636
        %v3207 = vunpack.c.l.b16 %v637
        %v3208 = vunpack.c.h.b16 %v637
        %v3209 = vunpack.c.l.b16 %v638
        %v3210 = vunpack.c.h.b16 %v638
        %v3211 = vunpack.c.l.b16 %v639
        %v3212 = vunpack.c.h.b16 %v639
        %v3213 = vunpack.c.l.b16 %v640
        %v3214 = vunpack.c.h.b16 %v640
        %v3215 = vunpack.c.l.b16 %v641
        %v3216 = vunpack.c.h.b16 %v641
        %v3217 = vunpack.c.l.b16 %v642
        %v3218 = vunpack.c.h.b16 %v642
        %v3219 = vunpack.c.l.b16 %v643
        %v3220 = vunpack.c.h.b16 %v643
        %v3221 = vunpack.c.l.b16 %v644
        %v3222 = vunpack.c.h.b16 %v644
        %v3223 = vunpack.c.l.b16 %v645
        %v3224 = vunpack.c.h.b16 %v645
        %v3225 = vunpack.c.l.b16 %v646
        %v3226 = vunpack.c.h.b16 %v646
        %v3227 = vunpack.c.l.b16 %v647
        %v3228 = vunpack.c.h.b16 %v647
        %v3229 = vunpack.c.l.b16 %v648
        %v3230 = vunpack.c.h.b16 %v648
        %v3231 = vunpack.c.l.b16 %v649
        %v3232 = vunpack.c.h.b16 %v649
        %v3233 = vunpack.c.l.b16 %v650
        %v3234 = vunpack.c.h.b16 %v650
        %v3235 = vunpack.c.l.b16 %v651
        %v3236 = vunpack.c.h.b16 %v651
        %v3237 = vunpack.c.l.b16 %v652
        %v3238 = vunpack.c.h.b16 %v652
        %v3239 = vunpack.c.l.b16 %v653
        %v3240 = vunpack.c.h.b16 %v653
        %v3241 = vunpack.c.l.b16 %v654
        %v3242 = vunpack.c.h.b16 %v654
        %v3243 = vunpack.c.l.b16 %v655
        %v3244 = vunpack.c.h.b16 %v655
        %v3245 = vunpack.c.l.b16 %v656
        %v3246 = vunpack.c.h.b16 %v656
        %v3247 = vunpack.c.l.b16 %v657
        %v3248 = vunpack.c.h.b16 %v657
        %v3249 = vunpack.c.l.b16 %v658
        %v3250 = vunpack.c.h.b16 %v658
        %v3251 = vunpack.c.l.b16 %v659
        %v3252 = vunpack.c.h.b16 %v659
        %v3253 = vunpack.c.l.b16 %v660
        %v3254 = vunpack.c.h.b16 %v660
        %v3255 = vunpack.c.l.b16 %v661
        %v3256 = vunpack.c.h.b16 %v661
        %v3257 = vunpack.c.l.b16 %v662
        %v3258 = vunpack.c.h.b16 %v662
        %v3259 = vunpack.c.l.b16 %v663
        %v3260 = vunpack.c.h.b16 %v663
        %v3261 = vunpack.c.l.b16 %v664
        %v3262 = vunpack.c.h.b16 %v664
        %v3263 = vunpack.c.l.b16 %v665
        %v3264 = vunpack.c.h.b16 %v665
        %v3265 = vunpack.c.l.b16 %v666
        %v3266 = vunpack.c.h.b16 %v666
        %v3267 = vunpack.c.l.b16 %v667
        %v3268 = vunpack.c.h.b16 %v667
        %v3269 = vunpack.c.l.b16 %v668
        %v3270 = vunpack.c.h.b16 %v668
        %v3271 = vunpack.c.l.b16 %v669
        %v3272 = vunpack.c.h.b16 %v669
        %v3273 = vunpack.c.l.b16 %v670
        %v3274 = vunpack.c.h.b16 %v670
        %v3275 = vunpack.c.l.b16 %v671
        %v3276 = vunpack.c.h.b16 %v671
        %v3277 = vunpack.c.l.b16 %v672
        %v3278 = vunpack.c.h.b16 %v672
        %v3279 = vunpack.c.l.b16 %v673
        %v3280 = vunpack.c.h.b16 %v673
        %v3281 = vunpack.c.l.b16 %v674
        %v3282 = vunpack.c.h.b16 %v674
        %v3283 = vunpack.c.l.b16 %v675
        %v3284 = vunpack.c.h.b16 %v675
        %v3285 = vunpack.c.l.b16 %v676
        %v3286 = vunpack.c.h.b16 %v676
        %v3287 = vunpack.c.l.b16 %v677
        %v3288 = vunpack.c.h.b16 %v677
        %v3289 = vunpack.c.l.b16 %v678
        %v3290 = vunpack.c.h.b16 %v678
        %v3291 = vunpack.c.l.b16 %v679
        %v3292 = vunpack.c.h.b16 %v679
        %v3293 = vunpack.c.l.b16 %v680
        %v3294 = vunpack.c.h.b16 %v680
        %v3295 = vunpack.c.l.b16 %v681
        %v3296 = vunpack.c.h.b16 %v681
        %v3297 = vunpack.c.l.b16 %v682
        %v3298 = vunpack.c.h.b16 %v682
        %v3299 = vunpack.c.l.b16 %v683
        %v3300 = vunpack.c.h.b16 %v683
        %v3301 = vunpack.c.l.b16 %v684
        %v3302 = vunpack.c.h.b16 %v684
        %v3303 = vunpack.c.l.b16 %v685
        %v3304 = vunpack.c.h.b16 %v685
        %v3305 = vunpack.c.l.b16 %v686
        %v3306 = vunpack.c.h.b16 %v686
        %v3307 = vunpack.c.l.b16 %v687
        %v3308 = vunpack.c.h.b16 %v687
        %v3309 = vunpack.c.l.b16 %v688
        %v3310 = vunpack.c.h.b16 %v688
        %v3311 = vunpack.c.l.b16 %v689
        %v3312 = vunpack.c.h.b16 %v689
        %v3313 = vunpack.c.l.b16 %v690
        %v3314 = vunpack.c.h.b16 %v690
        %v3315 = vunpack.c.l.b16 %v691
        %v3316 = vunpack.c.h.b16 %v691
        %v3317 = vunpack.c.l.b16 %v692
        %v3318 = vunpack.c.h.b16 %v692
        %v3319 = vunpack.c.l.b16 %v693
        %v3320 = vunpack.c.h.b16 %v693
        %v3321 = vunpack.c.l.b16 %v694
        %v3322 = vunpack.c.h.b16 %v694
        %v3323 = vunpack.c.l.b16 %v695
        %v3324 = vunpack.c.h.b16 %v695
        %v3325 = vunpack.c.l.b16 %v696
        %v3326 = vunpack.c.h.b16 %v696
        %v3327 = vunpack.c.l.b16 %v697
        %v3328 = vunpack.c.h.b16 %v697
        %v3329 = vunpack.c.l.b16 %v698
        %v3330 = vunpack.c.h.b16 %v698
        %v3331 = vunpack.c.l.b16 %v699
        %v3332 = vunpack.c.h.b16 %v699
        %v3333 = vunpack.c.l.b16 %v700
        %v3334 = vunpack.c.h.b16 %v700
        %v3335 = vunpack.c.l.b16 %v701
        %v3336 = vunpack.c.h.b16 %v701
        %v3337 = vunpack.c.l.b16 %v702
        %v3338 = vunpack.c.h.b16 %v702
        %v3339 = vunpack.c.l.b16 %v703
        %v3340 = vunpack.c.h.b16 %v703
        %v3341 = vunpack.c.l.b16 %v704
        %v3342 = vunpack.c.h.b16 %v704
        %v3343 = vunpack.c.l.b16 %v705
        %v3344 = vunpack.c.h.b16 %v705
        %v3345 = vunpack.c.l.b16 %v706
        %v3346 = vunpack.c.h.b16 %v706
        %v3347 = vunpack.c.l.b16 %v707
        %v3348 = vunpack.c.h.b16 %v707
        %v3349 = vunpack.c.l.b16 %v708
        %v3350 = vunpack.c.h.b16 %v708
        %v3351 = vunpack.c.l.b16 %v709
        %v3352 = vunpack.c.h.b16 %v709
        %v3353 = vunpack.c.l.b16 %v710
        %v3354 = vunpack.c.h.b16 %v710
        %v3355 = vunpack.c.l.b16 %v711
        %v3356 = vunpack.c.h.b16 %v711
        %v3357 = vunpack.c.l.b16 %v712
        %v3358 = vunpack.c.h.b16 %v712
        %v3359 = vunpack.c.l.b16 %v713
        %v3360 = vunpack.c.h.b16 %v713
        %v3361 = vunpack.c.l.b16 %v714
        %v3362 = vunpack.c.h.b16 %v714
        %v3363 = vunpack.c.l.b16 %v715
        %v3364 = vunpack.c.h.b16 %v715
        %v3365 = vunpack.c.l.b16 %v716
        %v3366 = vunpack.c.h.b16 %v716
        %v3367 = vunpack.c.l.b16 %v717
        %v3368 = vunpack.c.h.b16 %v717
        %v3369 = vunpack.c.l.b16 %v718
        %v3370 = vunpack.c.h.b16 %v718
        %v3371 = vunpack.c.l.b16 %v719
        %v3372 = vunpack.c.h.b16 %v719
        %v3373 = vunpack.c.l.b16 %v720
        %v3374 = vunpack.c.h.b16 %v720
        %v3375 = vunpack.c.l.b16 %v721
        %v3376 = vunpack.c.h.b16 %v721
        %v3377 = vunpack.c.l.b16 %v722
        %v3378 = vunpack.c.h.b16 %v722
        %v3379 = vunpack.c.l.b16 %v723
        %v3380 = vunpack.c.h.b16 %v723
        %v3381 = vunpack.c.l.b16 %v724
        %v3382 = vunpack.c.h.b16 %v724
        %v3383 = vunpack.c.l.b16 %v725
        %v3384 = vunpack.c.h.b16 %v725
        %v3385 = vunpack.c.l.b16 %v726
        %v3386 = vunpack.c.h.b16 %v726
        %v3387 = vunpack.c.l.b16 %v727
        %v3388 = vunpack.c.h.b16 %v727
        %v3389 = vunpack.c.l.b16 %v728
        %v3390 = vunpack.c.h.b16 %v728
        %v3391 = vunpack.c.l.b16 %v729
        %v3392 = vunpack.c.h.b16 %v729
        %v3393 = vunpack.c.l.b16 %v730
        %v3394 = vunpack.c.h.b16 %v730
        %v3395 = vunpack.c.l.b16 %v731
        %v3396 = vunpack.c.h.b16 %v731
        %v3397 = vunpack.c.l.b16 %v732
        %v3398 = vunpack.c.h.b16 %v732
        %v3399 = vunpack.c.l.b16 %v733
        %v3400 = vunpack.c.h.b16 %v733
        %v3401 = vunpack.c.l.b16 %v734
        %v3402 = vunpack.c.h.b16 %v734
        %v3403 = vunpack.c.l.b16 %v735
        %v3404 = vunpack.c.h.b16 %v735
        %v3405 = vunpack.c.l.b16 %v736
        %v3406 = vunpack.c.h.b16 %v736
        %v3407 = vunpack.c.l.b16 %v737
        %v3408 = vunpack.c.h.b16 %v737
        %v3409 = vunpack.c.l.b16 %v738
        %v3410 = vunpack.c.h.b16 %v738
        %v3411 = vunpack.c.l.b16 %v739
        %v3412 = vunpack.c.h.b16 %v739
        %v3413 = vunpack.c.l.b16 %v740
        %v3414 = vunpack.c.h.b16 %v740
        %v3415 = vunpack.c.l.b16 %v741
        %v3416 = vunpack.c.h.b16 %v741
        %v3417 = vunpack.c.l.b16 %v742
        %v3418 = vunpack.c.h.b16 %v742
        %v3419 = vunpack.c.l.b16 %v743
        %v3420 = vunpack.c.h.b16 %v743
        %v3421 = vunpack.c.l.b16 %v744
        %v3422 = vunpack.c.h.b16 %v744
        %v3423 = vunpack.c.l.b16 %v745
        %v3424 = vunpack.c.h.b16 %v745
        %v3425 = vunpack.c.l.b16 %v746
        %v3426 = vunpack.c.h.b16 %v746
        %v3427 = vunpack.c.l.b16 %v747
        %v3428 = vunpack.c.h.b16 %v747
        %v3429 = vunpack.c.l.b16 %v748
        %v3430 = vunpack.c.h.b16 %v748
        %v3431 = vunpack.c.l.b16 %v749
        %v3432 = vunpack.c.h.b16 %v749
        %v3433 = vunpack.c.l.b16 %v750
        %v3434 = vunpack.c.h.b16 %v750
        %v3435 = vunpack.c.l.b16 %v751
        %v3436 = vunpack.c.h.b16 %v751
        %v3437 = vunpack.c.l.b16 %v752
        %v3438 = vunpack.c.h.b16 %v752
        %v3439 = vunpack.c.l.b16 %v753
        %v3440 = vunpack.c.h.b16 %v753
        %v3441 = vunpack.c.l.b16 %v754
        %v3442 = vunpack.c.h.b16 %v754
        %v3443 = vunpack.c.l.b16 %v755
        %v3444 = vunpack.c.h.b16 %v755
        %v3445 = vunpack.c.l.b16 %v756
        %v3446 = vunpack.c.h.b16 %v756
        %v3447 = vunpack.c.l.b16 %v757
        %v3448 = vunpack.c.h.b16 %v757
        %v3449 = vunpack.c.l.b16 %v758
        %v3450 = vunpack.c.h.b16 %v758
        %v3451 = vunpack.c.l.b16 %v759
        %v3452 = vunpack.c.h.b16 %v759
        %v3453 = vunpack.c.l.b16 %v760
        %v3454 = vunpack.c.h.b16 %v760
        %v3455 = vunpack.c.l.b16 %v761
        %v3456 = vunpack.c.h.b16 %v761
        %v3457 = vunpack.c.l.b16 %v762
        %v3458 = vunpack.c.h.b16 %v762
        %v3459 = vunpack.c.l.b16 %v763
        %v3460 = vunpack.c.h.b16 %v763
        %v3461 = vunpack.c.l.b16 %v764
        %v3462 = vunpack.c.h.b16 %v764
        %v3463 = vunpack.c.l.b16 %v765
        %v3464 = vunpack.c.h.b16 %v765
        %v3465 = vunpack.c.l.b16 %v766
        %v3466 = vunpack.c.h.b16 %v766
        %v3467 = vunpack.c.l.b16 %v767
        %v3468 = vunpack.c.h.b16 %v767
        %v3469 = vunpack.c.l.b16 %v768
        %v3470 = vunpack.c.h.b16 %v768
        %v3471 = vunpack.c.l.b16 %v769
        %v3472 = vunpack.c.h.b16 %v769
        %v3473 = vunpack.c.l.b16 %v770
        %v3474 = vunpack.c.h.b16 %v770
        %v3475 = vunpack.c.l.b16 %v771
        %v3476 = vunpack.c.h.b16 %v771
        %v3477 = vunpack.c.l.b16 %v772
        %v3478 = vunpack.c.h.b16 %v772
        %v3479 = vunpack.c.l.b16 %v773
        %v3480 = vunpack.c.h.b16 %v773
        %v3481 = vunpack.c.l.b16 %v774
        %v3482 = vunpack.c.h.b16 %v774
        %v3483 = vunpack.c.l.b16 %v775
        %v3484 = vunpack.c.h.b16 %v775
        %v3485 = vunpack.c.l.b16 %v776
        %v3486 = vunpack.c.h.b16 %v776
        %v3487 = vunpack.c.l.b16 %v777
        %v3488 = vunpack.c.h.b16 %v777
        %v3489 = vunpack.c.l.b16 %v778
        %v3490 = vunpack.c.h.b16 %v778
        %v3491 = vunpack.c.l.b16 %v779
        %v3492 = vunpack.c.h.b16 %v779
        %v3493 = vunpack.c.l.b16 %v780
        %v3494 = vunpack.c.h.b16 %v780
        %v3495 = vunpack.c.l.b16 %v781
        %v3496 = vunpack.c.h.b16 %v781
        %v3497 = vunpack.c.l.b16 %v782
        %v3498 = vunpack.c.h.b16 %v782
        %v3499 = vunpack.c.l.b16 %v783
        %v3500 = vunpack.c.h.b16 %v783
        %v3501 = vunpack.c.l.b16 %v784
        %v3502 = vunpack.c.h.b16 %v784
        %v3503 = vunpack.c.l.b16 %v785
        %v3504 = vunpack.c.h.b16 %v785
        %v3505 = vunpack.c.l.b16 %v786
        %v3506 = vunpack.c.h.b16 %v786
        %v3507 = vunpack.c.l.b16 %v787
        %v3508 = vunpack.c.h.b16 %v787
        %v3509 = vunpack.c.l.b16 %v788
        %v3510 = vunpack.c.h.b16 %v788
        %v3511 = vunpack.c.l.b16 %v789
        %v3512 = vunpack.c.h.b16 %v789
        %v3513 = vunpack.c.l.b16 %v790
        %v3514 = vunpack.c.h.b16 %v790
        %v3515 = vunpack.c.l.b16 %v791
        %v3516 = vunpack.c.h.b16 %v791
        %v3517 = vunpack.c.l.b16 %v792
        %v3518 = vunpack.c.h.b16 %v792
        %v3519 = vunpack.c.l.b16 %v793
        %v3520 = vunpack.c.h.b16 %v793
        %v3521 = vunpack.c.l.b16 %v794
        %v3522 = vunpack.c.h.b16 %v794
        %v3523 = vunpack.c.l.b16 %v795
        %v3524 = vunpack.c.h.b16 %v795
        %v3525 = vunpack.c.l.b16 %v796
        %v3526 = vunpack.c.h.b16 %v796
        %v3527 = vunpack.c.l.b16 %v797
        %v3528 = vunpack.c.h.b16 %v797
        %v3529 = vunpack.c.l.b16 %v798
        %v3530 = vunpack.c.h.b16 %v798
        %v3531 = vunpack.c.l.b16 %v799
        %v3532 = vunpack.c.h.b16 %v799
        %v3533 = vunpack.c.l.b16 %v800
        %v3534 = vunpack.c.h.b16 %v800
        %v3535 = vunpack.c.l.b16 %v801
        %v3536 = vunpack.c.h.b16 %v801
        %v3537 = vunpack.c.l.b16 %v802
        %v3538 = vunpack.c.h.b16 %v802
        %v3539 = vunpack.c.l.b16 %v803
        %v3540 = vunpack.c.h.b16 %v803
        %v3541 = vunpack.c.l.b16 %v804
        %v3542 = vunpack.c.h.b16 %v804
        %v3543 = vunpack.c.l.b16 %v805
        %v3544 = vunpack.c.h.b16 %v805
        %v3545 = vunpack.c.l.b16 %v806
        %v3546 = vunpack.c.h.b16 %v806
        %v3547 = vunpack.c.l.b16 %v807
        %v3548 = vunpack.c.h.b16 %v807
        %v3549 = vunpack.c.l.b16 %v808
        %v3550 = vunpack.c.h.b16 %v808
        %v3551 = vunpack.c.l.b16 %v809
        %v3552 = vunpack.c.h.b16 %v809
        %v3553 = vunpack.c.l.b16 %v810
        %v3554 = vunpack.c.h.b16 %v810
        %v3555 = vunpack.c.l.b16 %v811
        %v3556 = vunpack.c.h.b16 %v811
        %v3557 = vunpack.c.l.b16 %v812
        %v3558 = vunpack.c.h.b16 %v812
        %v3559 = vunpack.c.l.b16 %v813
        %v3560 = vunpack.c.h.b16 %v813
        %v3561 = vunpack.c.l.b16 %v814
        %v3562 = vunpack.c.h.b16 %v814
        %v3563 = vunpack.c.l.b16 %v815
        %v3564 = vunpack.c.h.b16 %v815
        %v3565 = vunpack.c.l.b16 %v816
        %v3566 = vunpack.c.h.b16 %v816
        %v3567 = vunpack.c.l.b16 %v817
        %v3568 = vunpack.c.h.b16 %v817
        %v3569 = vunpack.c.l.b16 %v818
        %v3570 = vunpack.c.h.b16 %v818
        %v3571 = vunpack.c.l.b16 %v819
        %v3572 = vunpack.c.h.b16 %v819
        %v3573 = vunpack.c.l.b16 %v820
        %v3574 = vunpack.c.h.b16 %v820
        %v3575 = vunpack.c.l.b16 %v821
        %v3576 = vunpack.c.h.b16 %v821
        %v3577 = vunpack.c.l.b16 %v822
        %v3578 = vunpack.c.h.b16 %v822
        %v3579 = vunpack.c.l.b16 %v823
        %v3580 = vunpack.c.h.b16 %v823
        %v3581 = vunpack.c.l.b16 %v824
        %v3582 = vunpack.c.h.b16 %v824
        %v3583 = vunpack.c.l.b16 %v825
        %v3584 = vunpack.c.h.b16 %v825
        %v3585 = vunpack.c.l.b16 %v826
        %v3586 = vunpack.c.h.b16 %v826
        %v3587 = vunpack.c.l.b16 %v827
        %v3588 = vunpack.c.h.b16 %v827
        %v3589 = vunpack.c.l.b16 %v828
        %v3590 = vunpack.c.h.b16 %v828
        %v3591 = vunpack.c.l.b16 %v829
        %v3592 = vunpack.c.h.b16 %v829
        %v3593 = vunpack.c.l.b16 %v830
        %v3594 = vunpack.c.h.b16 %v830
        %v3595 = vunpack.c.l.b16 %v831
        %v3596 = vunpack.c.h.b16 %v831
        %v3597 = vunpack.c.l.b16 %v832
        %v3598 = vunpack.c.h.b16 %v832
        %v3599 = vunpack.c.l.b16 %v833
        %v3600 = vunpack.c.h.b16 %v833
        %v3601 = vunpack.c.l.b16 %v834
        %v3602 = vunpack.c.h.b16 %v834
        %v3603 = vunpack.c.l.b16 %v835
        %v3604 = vunpack.c.h.b16 %v835
        %v3605 = vunpack.c.l.b16 %v836
        %v3606 = vunpack.c.h.b16 %v836
        %v3607 = vunpack.c.l.b16 %v837
        %v3608 = vunpack.c.h.b16 %v837
        %v3609 = vunpack.c.l.b16 %v838
        %v3610 = vunpack.c.h.b16 %v838
        %v3611 = vunpack.c.l.b16 %v839
        %v3612 = vunpack.c.h.b16 %v839
        %v3613 = vunpack.c.l.b16 %v840
        %v3614 = vunpack.c.h.b16 %v840
        %v3615 = vunpack.c.l.b16 %v841
        %v3616 = vunpack.c.h.b16 %v841
        %v3617 = vunpack.c.l.b16 %v842
        %v3618 = vunpack.c.h.b16 %v842
        %v3619 = vunpack.c.l.b16 %v843
        %v3620 = vunpack.c.h.b16 %v843
        %v3621 = vunpack.c.l.b16 %v844
        %v3622 = vunpack.c.h.b16 %v844
        %v3623 = vunpack.c.l.b16 %v845
        %v3624 = vunpack.c.h.b16 %v845
        %v3625 = vunpack.c.l.b16 %v846
        %v3626 = vunpack.c.h.b16 %v846
        %v3627 = vunpack.c.l.b16 %v847
        %v3628 = vunpack.c.h.b16 %v847
        %v3629 = vunpack.c.l.b16 %v848
        %v3630 = vunpack.c.h.b16 %v848
        %v3631 = vunpack.c.l.b16 %v849
        %v3632 = vunpack.c.h.b16 %v849
        %v3633 = vunpack.c.l.b16 %v850
        %v3634 = vunpack.c.h.b16 %v850
        %v3635 = vunpack.c.l.b16 %v851
        %v3636 = vunpack.c.h.b16 %v851
        %v3637 = vunpack.c.l.b16 %v852
        %v3638 = vunpack.c.h.b16 %v852
        %v3639 = vunpack.c.l.b16 %v853
        %v3640 = vunpack.c.h.b16 %v853
        %v3641 = vunpack.c.l.b16 %v854
        %v3642 = vunpack.c.h.b16 %v854
        %v3643 = vunpack.c.l.b16 %v855
        %v3644 = vunpack.c.h.b16 %v855
        %v3645 = vunpack.c.l.b16 %v856
        %v3646 = vunpack.c.h.b16 %v856
        %v3647 = vunpack.c.l.b16 %v857
        %v3648 = vunpack.c.h.b16 %v857
        %v3649 = vunpack.c.l.b16 %v858
        %v3650 = vunpack.c.h.b16 %v858
        %v3651 = vunpack.c.l.b16 %v859
        %v3652 = vunpack.c.h.b16 %v859
        %v3653 = vunpack.c.l.b16 %v860
        %v3654 = vunpack.c.h.b16 %v860
        %v3655 = vunpack.c.l.b16 %v861
        %v3656 = vunpack.c.h.b16 %v861
        %v3657 = vunpack.c.l.b16 %v862
        %v3658 = vunpack.c.h.b16 %v862
        %v3659 = vunpack.c.l.b16 %v863
        %v3660 = vunpack.c.h.b16 %v863
        %v3661 = vunpack.c.l.b16 %v864
        %v3662 = vunpack.c.h.b16 %v864
        %v3663 = vunpack.c.l.b16 %v865
        %v3664 = vunpack.c.h.b16 %v865
        %v3665 = vunpack.c.l.b16 %v866
        %v3666 = vunpack.c.h.b16 %v866
        %v3667 = vunpack.c.l.b16 %v867
        %v3668 = vunpack.c.h.b16 %v867
        %v3669 = vunpack.c.l.b16 %v868
        %v3670 = vunpack.c.h.b16 %v868
        %v3671 = vunpack.c.l.b16 %v869
        %v3672 = vunpack.c.h.b16 %v869
        %v3673 = vunpack.c.l.b16 %v870
        %v3674 = vunpack.c.h.b16 %v870
        %v3675 = vunpack.c.l.b16 %v871
        %v3676 = vunpack.c.h.b16 %v871
        %v3677 = vunpack.c.l.b16 %v872
        %v3678 = vunpack.c.h.b16 %v872
        %v3679 = vunpack.c.l.b16 %v873
        %v3680 = vunpack.c.h.b16 %v873
        %v3681 = vunpack.c.l.b16 %v874
        %v3682 = vunpack.c.h.b16 %v874
        %v3683 = vunpack.c.l.b16 %v875
        %v3684 = vunpack.c.h.b16 %v875
        %v3685 = vunpack.c.l.b16 %v876
        %v3686 = vunpack.c.h.b16 %v876
        %v3687 = vunpack.c.l.b16 %v877
        %v3688 = vunpack.c.h.b16 %v877
        %v3689 = vunpack.c.l.b16 %v878
        %v3690 = vunpack.c.h.b16 %v878
        %v3691 = vunpack.c.l.b16 %v879
        %v3692 = vunpack.c.h.b16 %v879
        %v3693 = vunpack.c.l.b16 %v880
        %v3694 = vunpack.c.h.b16 %v880
        %v3695 = vunpack.c.l.b16 %v881
        %v3696 = vunpack.c.h.b16 %v881
        %v3697 = vunpack.c.l.b16 %v882
        %v3698 = vunpack.c.h.b16 %v882
        %v3699 = vunpack.c.l.b16 %v883
        %v3700 = vunpack.c.h.b16 %v883
        %v3701 = vunpack.c.l.b16 %v884
        %v3702 = vunpack.c.h.b16 %v884
        %v3703 = vunpack.c.l.b16 %v885
        %v3704 = vunpack.c.h.b16 %v885
        %v3705 = vunpack.c.l.b16 %v886
        %v3706 = vunpack.c.h.b16 %v886
        %v3707 = vunpack.c.l.b16 %v887
        %v3708 = vunpack.c.h.b16 %v887
        %v3709 = vunpack.c.l.b16 %v888
        %v3710 = vunpack.c.h.b16 %v888
        %v3711 = vunpack.c.l.b16 %v889
        %v3712 = vunpack.c.h.b16 %v889
        %v3713 = vunpack.c.l.b16 %v890
        %v3714 = vunpack.c.h.b16 %v890
        %v3715 = vunpack.c.l.b16 %v891
        %v3716 = vunpack.c.h.b16 %v891
        %v3717 = vunpack.c.l.b16 %v892
        %v3718 = vunpack.c.h.b16 %v892
        %v3719 = vunpack.c.l.b16 %v893
        %v3720 = vunpack.c.h.b16 %v893
        %v3721 = vunpack.c.l.b16 %v894
        %v3722 = vunpack.c.h.b16 %v894
        %v3723 = vunpack.c.l.b16 %v895
        %v3724 = vunpack.c.h.b16 %v895
        %v3725 = vunpack.c.l.b16 %v896
        %v3726 = vunpack.c.h.b16 %v896
        %v3727 = vunpack.c.l.b16 %v897
        %v3728 = vunpack.c.h.b16 %v897
        %v3729 = vunpack.c.l.b16 %v898
        %v3730 = vunpack.c.h.b16 %v898
        %v3731 = vunpack.c.l.b16 %v899
        %v3732 = vunpack.c.h.b16 %v899
        %v3733 = vunpack.c.l.b16 %v900
        %v3734 = vunpack.c.h.b16 %v900
        %v3735 = vunpack.c.l.b16 %v901
        %v3736 = vunpack.c.h.b16 %v901
        %v3737 = vunpack.c.l.b16 %v902
        %v3738 = vunpack.c.h.b16 %v902
        %v3739 = vunpack.c.l.b16 %v903
        %v3740 = vunpack.c.h.b16 %v903
        %v3741 = vunpack.c.l.b16 %v904
        %v3742 = vunpack.c.h.b16 %v904
        %v3743 = vunpack.c.l.b16 %v905
        %v3744 = vunpack.c.h.b16 %v905
        %v3745 = vunpack.c.l.b16 %v906
        %v3746 = vunpack.c.h.b16 %v906
        %v3747 = vunpack.c.l.b16 %v907
        %v3748 = vunpack.c.h.b16 %v907
        %v3749 = vunpack.c.l.b16 %v908
        %v3750 = vunpack.c.h.b16 %v908
        %v3751 = vunpack.c.l.b16 %v909
        %v3752 = vunpack.c.h.b16 %v909
        %v3753 = vunpack.c.l.b16 %v910
        %v3754 = vunpack.c.h.b16 %v910
        %v3755 = vunpack.c.l.b16 %v911
        %v3756 = vunpack.c.h.b16 %v911
        %v3757 = vunpack.c.l.b16 %v912
        %v3758 = vunpack.c.h.b16 %v912
        %v3759 = vunpack.c.l.b16 %v913
        %v3760 = vunpack.c.h.b16 %v913
        %v3761 = vunpack.c.l.b16 %v914
        %v3762 = vunpack.c.h.b16 %v914
        %v3763 = vunpack.c.l.b16 %v915
        %v3764 = vunpack.c.h.b16 %v915
        %v3765 = vunpack.c.l.b16 %v916
        %v3766 = vunpack.c.h.b16 %v916
        %v3767 = vunpack.c.l.b16 %v917
        %v3768 = vunpack.c.h.b16 %v917
        %v3769 = vunpack.c.l.b16 %v918
        %v3770 = vunpack.c.h.b16 %v918
        %v3771 = vunpack.c.l.b16 %v919
        %v3772 = vunpack.c.h.b16 %v919
        %v3773 = vunpack.c.l.b16 %v920
        %v3774 = vunpack.c.h.b16 %v920
        %v3775 = vunpack.c.l.b16 %v921
        %v3776 = vunpack.c.h.b16 %v921
        %v3777 = vunpack.c.l.b16 %v922
        %v3778 = vunpack.c.h.b16 %v922
        %v3779 = vunpack.c.l.b16 %v923
        %v3780 = vunpack.c.h.b16 %v923
        %v3781 = vunpack.c.l.b16 %v924
        %v3782 = vunpack.c.h.b16 %v924
        %v3783 = vunpack.c.l.b16 %v925
        %v3784 = vunpack.c.h.b16 %v925
        %v3785 = vunpack.c.l.b16 %v926
        %v3786 = vunpack.c.h.b16 %v926
        %v3787 = vunpack.c.l.b16 %v927
        %v3788 = vunpack.c.h.b16 %v927
        %v3789 = vunpack.c.l.b16 %v928
        %v3790 = vunpack.c.h.b16 %v928
        %v3791 = vunpack.c.l.b16 %v929
        %v3792 = vunpack.c.h.b16 %v929
        %v3793 = vunpack.c.l.b16 %v930
        %v3794 = vunpack.c.h.b16 %v930
        %v3795 = vunpack.c.l.b16 %v931
        %v3796 = vunpack.c.h.b16 %v931
        %v3797 = vunpack.c.l.b16 %v932
        %v3798 = vunpack.c.h.b16 %v932
        %v3799 = vunpack.c.l.b16 %v933
        %v3800 = vunpack.c.h.b16 %v933
        %v3801 = vunpack.c.l.b16 %v934
        %v3802 = vunpack.c.h.b16 %v934
        %v3803 = vunpack.c.l.b16 %v935
        %v3804 = vunpack.c.h.b16 %v935
        %v3805 = vunpack.c.l.b16 %v936
        %v3806 = vunpack.c.h.b16 %v936
        %v3807 = vunpack.c.l.b16 %v937
        %v3808 = vunpack.c.h.b16 %v937
        %v3809 = vunpack.c.l.b16 %v938
        %v3810 = vunpack.c.h.b16 %v938
        %v3811 = vunpack.c.l.b16 %v939
        %v3812 = vunpack.c.h.b16 %v939
        %v3813 = vunpack.c.l.b16 %v940
        %v3814 = vunpack.c.h.b16 %v940
        %v3815 = vunpack.c.l.b16 %v941
        %v3816 = vunpack.c.h.b16 %v941
        %v3817 = vunpack.c.l.b16 %v942
        %v3818 = vunpack.c.h.b16 %v942
        %v3819 = vunpack.c.l.b16 %v943
        %v3820 = vunpack.c.h.b16 %v943
        %v3821 = vunpack.c.l.b16 %v944
        %v3822 = vunpack.c.h.b16 %v944
        %v3823 = vunpack.c.l.b16 %v945
        %v3824 = vunpack.c.h.b16 %v945
        %v3825 = vunpack.c.l.b16 %v946
        %v3826 = vunpack.c.h.b16 %v946
        %v3827 = vunpack.c.l.b16 %v947
        %v3828 = vunpack.c.h.b16 %v947
        %v3829 = vunpack.c.l.b16 %v948
        %v3830 = vunpack.c.h.b16 %v948
        %v3831 = vunpack.c.l.b16 %v949
        %v3832 = vunpack.c.h.b16 %v949
        %v3833 = vunpack.c.l.b16 %v950
        %v3834 = vunpack.c.h.b16 %v950
        %v3835 = vunpack.c.l.b16 %v951
        %v3836 = vunpack.c.h.b16 %v951
        %v3837 = vunpack.c.l.b16 %v952
        %v3838 = vunpack.c.h.b16 %v952
        %v3839 = vunpack.c.l.b16 %v953
        %v3840 = vunpack.c.h.b16 %v953
        %v3841 = vunpack.c.l.b16 %v954
        %v3842 = vunpack.c.h.b16 %v954
        %v3843 = vunpack.c.l.b16 %v955
        %v3844 = vunpack.c.h.b16 %v955
        %v3845 = vunpack.c.l.b16 %v956
        %v3846 = vunpack.c.h.b16 %v956
        %v3847 = vunpack.c.l.b16 %v957
        %v3848 = vunpack.c.h.b16 %v957
        %v3849 = vunpack.c.l.b16 %v958
        %v3850 = vunpack.c.h.b16 %v958
        %v3851 = vunpack.c.l.b16 %v959
        %v3852 = vunpack.c.h.b16 %v959
        %v3853 = vunpack.c.l.b16 %v960
        %v3854 = vunpack.c.h.b16 %v960
        %v3855 = vunpack.c.l.b16 %v961
        %v3856 = vunpack.c.h.b16 %v961
        %v3857 = vunpack.c.l.b16 %v962
        %v3858 = vunpack.c.h.b16 %v962
        %v3859 = vunpack.c.l.b16 %v963
        %v3860 = vunpack.c.h.b16 %v963
        %v3861 = vunpack.c.l.b16 %v964
        %v3862 = vunpack.c.h.b16 %v964
        %v3863 = vunpack.c.l.b16 %v965
        %v3864 = vunpack.c.h.b16 %v965
        %v3865 = vunpack.c.l.b16 %v966
        %v3866 = vunpack.c.h.b16 %v966
        %v3867 = vunpack.c.l.b16 %v967
        %v3868 = vunpack.c.h.b16 %v967
        %v3869 = vunpack.c.l.b16 %v968
        %v3870 = vunpack.c.h.b16 %v968
        %v3871 = vunpack.c.l.b16 %v969
        %v3872 = vunpack.c.h.b16 %v969
        %v3873 = vunpack.c.l.b16 %v970
        %v3874 = vunpack.c.h.b16 %v970
        %v3875 = vunpack.c.l.b16 %v971
        %v3876 = vunpack.c.h.b16 %v971
        %v3877 = vunpack.c.l.b16 %v972
        %v3878 = vunpack.c.h.b16 %v972
        %v3879 = vunpack.c.l.b16 %v973
        %v3880 = vunpack.c.h.b16 %v973
        %v3881 = vunpack.c.l.b16 %v974
        %v3882 = vunpack.c.h.b16 %v974
        %v3883 = vunpack.c.l.b16 %v975
        %v3884 = vunpack.c.h.b16 %v975
        %v3885 = vunpack.c.l.b16 %v976
        %v3886 = vunpack.c.h.b16 %v976
        %v3887 = vunpack.c.l.b16 %v977
        %v3888 = vunpack.c.h.b16 %v977
        %v3889 = vunpack.c.l.b16 %v978
        %v3890 = vunpack.c.h.b16 %v978
        %v3891 = vunpack.c.l.b16 %v979
        %v3892 = vunpack.c.h.b16 %v979
        %v3893 = vunpack.c.l.b16 %v980
        %v3894 = vunpack.c.h.b16 %v980
        %v3895 = vunpack.c.l.b16 %v981
        %v3896 = vunpack.c.h.b16 %v981
        %v3897 = vunpack.c.l.b16 %v982
        %v3898 = vunpack.c.h.b16 %v982
        %v3899 = vunpack.c.l.b16 %v983
        %v3900 = vunpack.c.h.b16 %v983
        %v3901 = vunpack.c.l.b16 %v984
        %v3902 = vunpack.c.h.b16 %v984
        %v3903 = vunpack.c.l.b16 %v985
        %v3904 = vunpack.c.h.b16 %v985
        %v3905 = vunpack.c.l.b16 %v986
        %v3906 = vunpack.c.h.b16 %v986
        %v3907 = vunpack.c.l.b16 %v987
        %v3908 = vunpack.c.h.b16 %v987
        %v3909 = vunpack.c.l.b16 %v988
        %v3910 = vunpack.c.h.b16 %v988
        %v3911 = vunpack.c.l.b16 %v989
        %v3912 = vunpack.c.h.b16 %v989
        %v3913 = vunpack.c.l.b16 %v990
        %v3914 = vunpack.c.h.b16 %v990
        %v3915 = vunpack.c.l.b16 %v991
        %v3916 = vunpack.c.h.b16 %v991
        %v3917 = vunpack.c.l.b16 %v992
        %v3918 = vunpack.c.h.b16 %v992
        %v3919 = vunpack.c.l.b16 %v993
        %v3920 = vunpack.c.h.b16 %v993
        %v3921 = vunpack.c.l.b16 %v994
        %v3922 = vunpack.c.h.b16 %v994
        %v3923 = vunpack.c.l.b16 %v995
        %v3924 = vunpack.c.h.b16 %v995
        %v3925 = vunpack.c.l.b16 %v996
        %v3926 = vunpack.c.h.b16 %v996
        %v3927 = vunpack.c.l.b16 %v997
        %v3928 = vunpack.c.h.b16 %v997
        %v3929 = vunpack.c.l.b16 %v998
        %v3930 = vunpack.c.h.b16 %v998
        %v3931 = vunpack.c.l.b16 %v999
        %v3932 = vunpack.c.h.b16 %v999
        %v3933 = vunpack.c.l.b16 %v1000
        %v3934 = vunpack.c.h.b16 %v1000
        %v3935 = vunpack.c.l.b16 %v1001
        %v3936 = vunpack.c.h.b16 %v1001
        %v3937 = vunpack.c.l.b16 %v1002
        %v3938 = vunpack.c.h.b16 %v1002
        %v3939 = vunpack.c.l.b16 %v1003
        %v3940 = vunpack.c.h.b16 %v1003
        %v3941 = vunpack.c.l.b16 %v1004
        %v3942 = vunpack.c.h.b16 %v1004
        %v3943 = vunpack.c.l.b16 %v1005
        %v3944 = vunpack.c.h.b16 %v1005
        %v3945 = vunpack.c.l.b16 %v1006
        %v3946 = vunpack.c.h.b16 %v1006
        %v3947 = vunpack.c.l.b16 %v1007
        %v3948 = vunpack.c.h.b16 %v1007
        %v3949 = vunpack.c.l.b16 %v1008
        %v3950 = vunpack.c.h.b16 %v1008
        %v3951 = vunpack.c.l.b16 %v1009
        %v3952 = vunpack.c.h.b16 %v1009
        %v3953 = vunpack.c.l.b16 %v1010
        %v3954 = vunpack.c.h.b16 %v1010
        %v3955 = vunpack.c.l.b16 %v1011
        %v3956 = vunpack.c.h.b16 %v1011
        %v3957 = vunpack.c.l.b16 %v1012
        %v3958 = vunpack.c.h.b16 %v1012
        %v3959 = vunpack.c.l.b16 %v1013
        %v3960 = vunpack.c.h.b16 %v1013
        %v3961 = vunpack.c.l.b16 %v1014
        %v3962 = vunpack.c.h.b16 %v1014
        %v3963 = vunpack.c.l.b16 %v1015
        %v3964 = vunpack.c.h.b16 %v1015
        %v3965 = vunpack.c.l.b16 %v1016
        %v3966 = vunpack.c.h.b16 %v1016
        %v3967 = vunpack.c.l.b16 %v1017
        %v3968 = vunpack.c.h.b16 %v1017
        %v3969 = vunpack.c.l.b16 %v1018
        %v3970 = vunpack.c.h.b16 %v1018
        %v3971 = vunpack.c.l.b16 %v1019
        %v3972 = vunpack.c.h.b16 %v1019
        %v3973 = vunpack.c.l.b16 %v1020
        %v3974 = vunpack.c.h.b16 %v1020
        %v3975 = vunpack.c.l.b16 %v1021
        %v3976 = vunpack.c.h.b16 %v1021
        %v3977 = vunpack.c.l.b16 %v1022
        %v3978 = vunpack.c.h.b16 %v1022
        %v3979 = vunpack.c.l.b16 %v1023
        %v3980 = vunpack.c.h.b16 %v1023
        %v3981 = vunpack.c.l.b16 %v1024
        %v3982 = vunpack.c.h.b16 %v1024
        %v3983 = vunpack.c.l.b16 %v1025
        %v3984 = vunpack.c.h.b16 %v1025
        %v3985 = vunpack.c.l.b16 %v1026
        %v3986 = vunpack.c.h.b16 %v1026
        %v3987 = vunpack.c.l.b16 %v1027
        %v3988 = vunpack.c.h.b16 %v1027
        %v3989 = vunpack.c.l.b16 %v1028
        %v3990 = vunpack.c.h.b16 %v1028
        %v3991 = vunpack.c.l.b16 %v1029
        %v3992 = vunpack.c.h.b16 %v1029
        %v3993 = vunpack.c.l.b16 %v1030
        %v3994 = vunpack.c.h.b16 %v1030
        %v3995 = vunpack.c.l.b16 %v1031
        %v3996 = vunpack.c.h.b16 %v1031
        %v3997 = vunpack.c.l.b16 %v1032
        %v3998 = vunpack.c.h.b16 %v1032
        %v3999 = vunpack.c.l.b16 %v1033
        %v4000 = vunpack.c.h.b16 %v1033
        %v4001 = vunpack.c.l.b16 %v1034
        %v4002 = vunpack.c.h.b16 %v1034
        %v4003 = vunpack.c.l.b16 %v1035
        %v4004 = vunpack.c.h.b16 %v1035
        %v4005 = vunpack.c.l.b16 %v1036
        %v4006 = vunpack.c.h.b16 %v1036
        %v4007 = vunpack.c.l.b16 %v1037
        %v4008 = vunpack.c.h.b16 %v1037
        %v4009 = vunpack.c.l.b16 %v1038
        %v4010 = vunpack.c.h.b16 %v1038
        %v4011 = vunpack.c.l.b16 %v1039
        %v4012 = vunpack.c.h.b16 %v1039
        %v4013 = vunpack.c.l.b16 %v1040
        %v4014 = vunpack.c.h.b16 %v1040
        %v4015 = vunpack.c.l.b16 %v1041
        %v4016 = vunpack.c.h.b16 %v1041
        %v4017 = vunpack.c.l.b16 %v1042
        %v4018 = vunpack.c.h.b16 %v1042
        %v4019 = vunpack.c.l.b16 %v1043
        %v4020 = vunpack.c.h.b16 %v1043
        %v4021 = vunpack.c.l.b16 %v1044
        %v4022 = vunpack.c.h.b16 %v1044
        %v4023 = vunpack.c.l.b16 %v1045
        %v4024 = vunpack.c.h.b16 %v1045
        %v4025 = vunpack.c.l.b16 %v1046
        %v4026 = vunpack.c.h.b16 %v1046
        %v4027 = vunpack.c.l.b16 %v1047
        %v4028 = vunpack.c.h.b16 %v1047
        %v4029 = vunpack.c.l.b16 %v1048
        %v4030 = vunpack.c.h.b16 %v1048
        %v4031 = vunpack.c.l.b16 %v1049
        %v4032 = vunpack.c.h.b16 %v1049
        %v4033 = vunpack.c.l.b16 %v1050
        %v4034 = vunpack.c.h.b16 %v1050
        %v4035 = vunpack.c.l.b16 %v1051
        %v4036 = vunpack.c.h.b16 %v1051
        %v4037 = vunpack.c.l.b16 %v1052
        %v4038 = vunpack.c.h.b16 %v1052
        %v4039 = vunpack.c.l.b16 %v1053
        %v4040 = vunpack.c.h.b16 %v1053
        %v4041 = vunpack.c.l.b16 %v1054
        %v4042 = vunpack.c.h.b16 %v1054
        %v4043 = vunpack.c.l.b16 %v1055
        %v4044 = vunpack.c.h.b16 %v1055
        %v4045 = vunpack.c.l.b16 %v1056
        %v4046 = vunpack.c.h.b16 %v1056
        %v4047 = vunpack.c.l.b16 %v1057
        %v4048 = vunpack.c.h.b16 %v1057
        %v4049 = vunpack.c.l.b16 %v1058
        %v4050 = vunpack.c.h.b16 %v1058
        %v4051 = vunpack.c.l.b16 %v1059
        %v4052 = vunpack.c.h.b16 %v1059
        %v4053 = vunpack.c.l.b16 %v1060
        %v4054 = vunpack.c.h.b16 %v1060
        %v4055 = vunpack.c.l.b16 %v1061
        %v4056 = vunpack.c.h.b16 %v1061
        %v4057 = vunpack.c.l.b16 %v1062
        %v4058 = vunpack.c.h.b16 %v1062
        %v4059 = vunpack.c.l.b16 %v1063
        %v4060 = vunpack.c.h.b16 %v1063
        %v4061 = vunpack.c.l.b16 %v1064
        %v4062 = vunpack.c.h.b16 %v1064
        %v4063 = vunpack.c.l.b16 %v1065
        %v4064 = vunpack.c.h.b16 %v1065
        %v4065 = vunpack.c.l.b16 %v1066
        %v4066 = vunpack.c.h.b16 %v1066
        %v4067 = vunpack.c.l.b16 %v1067
        %v4068 = vunpack.c.h.b16 %v1067
        %v4069 = vunpack.c.l.b16 %v1068
        %v4070 = vunpack.c.h.b16 %v1068
        %v4071 = vunpack.c.l.b16 %v1069
        %v4072 = vunpack.c.h.b16 %v1069
        %v4073 = vunpack.c.l.b16 %v1070
        %v4074 = vunpack.c.h.b16 %v1070
        %v4075 = vunpack.c.l.b16 %v1071
        %v4076 = vunpack.c.h.b16 %v1071
        %v4077 = vunpack.c.l.b16 %v1072
        %v4078 = vunpack.c.h.b16 %v1072
        %v4079 = vunpack.c.l.b16 %v1073
        %v4080 = vunpack.c.h.b16 %v1073
        %v4081 = vunpack.c.l.b16 %v1074
        %v4082 = vunpack.c.h.b16 %v1074
        %v4083 = vunpack.c.l.b16 %v1075
        %v4084 = vunpack.c.h.b16 %v1075
        %v4085 = vunpack.c.l.b16 %v1076
        %v4086 = vunpack.c.h.b16 %v1076
        %v4087 = vunpack.c.l.b16 %v1077
        %v4088 = vunpack.c.h.b16 %v1077
        %v4089 = vunpack.c.l.b16 %v1078
        %v4090 = vunpack.c.h.b16 %v1078
        %v4091 = vunpack.c.l.b16 %v1079
        %v4092 = vunpack.c.h.b16 %v1079
        %v4093 = vunpack.c.l.b16 %v1080
        %v4094 = vunpack.c.h.b16 %v1080
        %v4095 = vunpack.c.l.b16 %v1081
        %v4096 = vunpack.c.h.b16 %v1081
        %v4097 = vunpack.c.l.b16 %v1082
        %v4098 = vunpack.c.h.b16 %v1082
        %v4099 = vunpack.c.l.b16 %v1083
        %v4100 = vunpack.c.h.b16 %v1083
        %v4101 = vunpack.c.l.b16 %v1084
        %v4102 = vunpack.c.h.b16 %v1084
        %v4103 = vunpack.c.l.b16 %v1085
        %v4104 = vunpack.c.h.b16 %v1085
        %v4105 = vunpack.c.l.b16 %v1086
        %v4106 = vunpack.c.h.b16 %v1086
        %v4107 = vunpack.c.l.b16 %v1087
        %v4108 = vunpack.c.h.b16 %v1087
        %v4109 = vunpack.c.l.b16 %v1088
        %v4110 = vunpack.c.h.b16 %v1088
        %v4111 = vunpack.c.l.b16 %v1089
        %v4112 = vunpack.c.h.b16 %v1089
        %v4113 = vunpack.c.l.b16 %v1090
        %v4114 = vunpack.c.h.b16 %v1090
        %v4115 = vunpack.c.l.b16 %v1091
        %v4116 = vunpack.c.h.b16 %v1091
        %v4117 = vunpack.c.l.b16 %v1092
        %v4118 = vunpack.c.h.b16 %v1092
        %v4119 = vunpack.c.l.b16 %v1093
        %v4120 = vunpack.c.h.b16 %v1093
        %v4121 = vunpack.c.l.b16 %v1094
        %v4122 = vunpack.c.h.b16 %v1094
        %v4123 = vunpack.c.l.b16 %v1095
        %v4124 = vunpack.c.h.b16 %v1095
        %v4125 = vunpack.c.l.b16 %v1096
        %v4126 = vunpack.c.h.b16 %v1096
        %v4127 = vunpack.c.l.b16 %v1097
        %v4128 = vunpack.c.h.b16 %v1097
        %v4129 = vunpack.c.l.b16 %v1098
        %v4130 = vunpack.c.h.b16 %v1098
        %v4131 = vunpack.c.l.b16 %v1099
        %v4132 = vunpack.c.h.b16 %v1099
        %v4133 = vunpack.c.l.b16 %v1100
        %v4134 = vunpack.c.h.b16 %v1100
        %v4135 = vunpack.c.l.b16 %v1101
        %v4136 = vunpack.c.h.b16 %v1101
        %v4137 = vunpack.c.l.b16 %v1102
        %v4138 = vunpack.c.h.b16 %v1102
        %v4139 = vunpack.c.l.b16 %v1103
        %v4140 = vunpack.c.h.b16 %v1103
        %v4141 = vunpack.c.l.b16 %v1104
        %v4142 = vunpack.c.h.b16 %v1104
        %v4143 = vunpack.c.l.b16 %v1105
        %v4144 = vunpack.c.h.b16 %v1105
        %v4145 = vunpack.c.l.b16 %v1106
        %v4146 = vunpack.c.h.b16 %v1106
        %v4147 = vunpack.c.l.b16 %v1107
        %v4148 = vunpack.c.h.b16 %v1107
        %v4149 = vunpack.c.l.b16 %v1108
        %v4150 = vunpack.c.h.b16 %v1108
        %v4151 = vunpack.c.l.b16 %v1109
        %v4152 = vunpack.c.h.b16 %v1109
        %v4153 = vunpack.c.l.b16 %v1110
        %v4154 = vunpack.c.h.b16 %v1110
        %v4155 = vunpack.c.l.b16 %v1111
        %v4156 = vunpack.c.h.b16 %v1111
        %v4157 = vunpack.c.l.b16 %v1112
        %v4158 = vunpack.c.h.b16 %v1112
        %v4159 = vunpack.c.l.b16 %v1113
        %v4160 = vunpack.c.h.b16 %v1113
        %v4161 = vunpack.c.l.b16 %v1114
        %v4162 = vunpack.c.h.b16 %v1114
        %v4163 = vunpack.c.l.b16 %v1115
        %v4164 = vunpack.c.h.b16 %v1115
        %v4165 = vunpack.c.l.b16 %v1116
        %v4166 = vunpack.c.h.b16 %v1116
        %v4167 = vunpack.c.l.b16 %v1117
        %v4168 = vunpack.c.h.b16 %v1117
        %v4169 = vunpack.c.l.b16 %v1118
        %v4170 = vunpack.c.h.b16 %v1118
        %v4171 = vunpack.c.l.b16 %v1119
        %v4172 = vunpack.c.h.b16 %v1119
        %v4173 = vunpack.c.l.b16 %v1120
        %v4174 = vunpack.c.h.b16 %v1120
        %v4175 = vunpack.c.l.b16 %v1121
        %v4176 = vunpack.c.h.b16 %v1121
        %v4177 = vunpack.c.l.b16 %v1122
        %v4178 = vunpack.c.h.b16 %v1122
        %v4179 = vunpack.c.l.b16 %v1123
        %v4180 = vunpack.c.h.b16 %v1123
        %v4181 = vunpack.c.l.b16 %v1124
        %v4182 = vunpack.c.h.b16 %v1124
        %v4183 = vunpack.c.l.b16 %v1125
        %v4184 = vunpack.c.h.b16 %v1125
        %v4185 = vunpack.c.l.b16 %v1126
        %v4186 = vunpack.c.h.b16 %v1126
        %v4187 = vunpack.c.l.b16 %v1127
        %v4188 = vunpack.c.h.b16 %v1127
        %v4189 = vunpack.c.l.b16 %v1128
        %v4190 = vunpack.c.h.b16 %v1128
        %v4191 = vunpack.c.l.b16 %v1129
        %v4192 = vunpack.c.h.b16 %v1129
        %v4193 = vunpack.c.l.b16 %v1130
        %v4194 = vunpack.c.h.b16 %v1130
        %v4195 = vunpack.c.l.b16 %v1131
        %v4196 = vunpack.c.h.b16 %v1131
        %v4197 = vunpack.c.l.b16 %v1132
        %v4198 = vunpack.c.h.b16 %v1132
        %v4199 = vunpack.c.l.b16 %v1133
        %v4200 = vunpack.c.h.b16 %v1133
        %v4201 = vunpack.c.l.b16 %v1134
        %v4202 = vunpack.c.h.b16 %v1134
        %v4203 = vunpack.c.l.b16 %v1135
        %v4204 = vunpack.c.h.b16 %v1135
        %v4205 = vunpack.c.l.b16 %v1136
        %v4206 = vunpack.c.h.b16 %v1136
        %v4207 = vunpack.c.l.b16 %v1137
        %v4208 = vunpack.c.h.b16 %v1137
        %v4209 = vunpack.c.l.b16 %v1138
        %v4210 = vunpack.c.h.b16 %v1138
        %v4211 = vunpack.c.l.b16 %v1139
        %v4212 = vunpack.c.h.b16 %v1139
        %v4213 = vunpack.c.l.b16 %v1140
        %v4214 = vunpack.c.h.b16 %v1140
        %v4215 = vunpack.c.l.b16 %v1141
        %v4216 = vunpack.c.h.b16 %v1141
        %v4217 = vunpack.c.l.b16 %v1142
        %v4218 = vunpack.c.h.b16 %v1142
        %v4219 = vunpack.c.l.b16 %v1143
        %v4220 = vunpack.c.h.b16 %v1143
        %v4221 = vunpack.c.l.b16 %v1144
        %v4222 = vunpack.c.h.b16 %v1144
        %v4223 = vunpack.c.l.b16 %v1145
        %v4224 = vunpack.c.h.b16 %v1145
        %v4225 = vunpack.c.l.b16 %v1146
        %v4226 = vunpack.c.h.b16 %v1146
        %v4227 = vunpack.c.l.b16 %v1147
        %v4228 = vunpack.c.h.b16 %v1147
        %v4229 = vunpack.c.l.b16 %v1148
        %v4230 = vunpack.c.h.b16 %v1148
        %v4231 = vunpack.c.l.b16 %v1149
        %v4232 = vunpack.c.h.b16 %v1149
        %v4233 = vunpack.c.l.b16 %v1150
        %v4234 = vunpack.c.h.b16 %v1150
        %v4235 = vunpack.c.l.b16 %v1151
        %v4236 = vunpack.c.h.b16 %v1151
        %v4237 = vunpack.c.l.b16 %v1152
        %v4238 = vunpack.c.h.b16 %v1152
        %v4239 = vunpack.c.l.b16 %v1153
        %v4240 = vunpack.c.h.b16 %v1153
        %v4241 = vunpack.c.l.b16 %v1154
        %v4242 = vunpack.c.h.b16 %v1154
        %v4243 = vunpack.c.l.b16 %v1155
        %v4244 = vunpack.c.h.b16 %v1155
        %v4245 = vunpack.c.l.b16 %v1156
        %v4246 = vunpack.c.h.b16 %v1156
        %v4247 = vunpack.c.l.b16 %v1157
        %v4248 = vunpack.c.h.b16 %v1157
        %v4249 = vunpack.c.l.b16 %v1158
        %v4250 = vunpack.c.h.b16 %v1158
        %v4251 = vunpack.c.l.b16 %v1159
        %v4252 = vunpack.c.h.b16 %v1159
        %v4253 = vunpack.c.l.b16 %v1160
        %v4254 = vunpack.c.h.b16 %v1160
        %v4255 = vunpack.c.l.b16 %v1161
        %v4256 = vunpack.c.h.b16 %v1161
        %v4257 = vunpack.c.l.b16 %v1162
        %v4258 = vunpack.c.h.b16 %v1162
        %v4259 = vunpack.c.l.b16 %v1163
        %v4260 = vunpack.c.h.b16 %v1163
        %v4261 = vunpack.c.l.b16 %v1164
        %v4262 = vunpack.c.h.b16 %v1164
        %v4263 = vunpack.c.l.b16 %v1165
        %v4264 = vunpack.c.h.b16 %v1165
        %v4265 = vunpack.c.l.b16 %v1166
        %v4266 = vunpack.c.h.b16 %v1166
        %v4267 = vunpack.c.l.b16 %v1167
        %v4268 = vunpack.c.h.b16 %v1167
        %v4269 = vunpack.c.l.b16 %v1168
        %v4270 = vunpack.c.h.b16 %v1168
        %v4271 = vunpack.c.l.b16 %v1169
        %v4272 = vunpack.c.h.b16 %v1169
        %v4273 = vunpack.c.l.b16 %v1170
        %v4274 = vunpack.c.h.b16 %v1170
        %v4275 = vunpack.c.l.b16 %v1171
        %v4276 = vunpack.c.h.b16 %v1171
        %v4277 = vunpack.c.l.b16 %v1172
        %v4278 = vunpack.c.h.b16 %v1172
        %v4279 = vunpack.c.l.b16 %v1173
        %v4280 = vunpack.c.h.b16 %v1173
        %v4281 = vunpack.c.l.b16 %v1174
        %v4282 = vunpack.c.h.b16 %v1174
        %v4283 = vunpack.c.l.b16 %v1175
        %v4284 = vunpack.c.h.b16 %v1175
        %v4285 = vunpack.c.l.b16 %v1176
        %v4286 = vunpack.c.h.b16 %v1176
        %v4287 = vunpack.c.l.b16 %v1177
        %v4288 = vunpack.c.h.b16 %v1177
        %v4289 = vunpack.c.l.b16 %v1178
        %v4290 = vunpack.c.h.b16 %v1178
        %v4291 = vunpack.c.l.b16 %v1179
        %v4292 = vunpack.c.h.b16 %v1179
        %v4293 = vunpack.c.l.b16 %v1180
        %v4294 = vunpack.c.h.b16 %v1180
        %v4295 = vunpack.c.l.b16 %v1181
        %v4296 = vunpack.c.h.b16 %v1181
        %v4297 = vunpack.c.l.b16 %v1182
        %v4298 = vunpack.c.h.b16 %v1182
        %v4299 = vunpack.c.l.b16 %v1183
        %v4300 = vunpack.c.h.b16 %v1183
        %v4301 = vunpack.c.l.b16 %v1184
        %v4302 = vunpack.c.h.b16 %v1184
        %v4303 = vunpack.c.l.b16 %v1185
        %v4304 = vunpack.c.h.b16 %v1185
        %v4305 = vunpack.c.l.b16 %v1186
        %v4306 = vunpack.c.h.b16 %v1186
        %v4307 = vunpack.c.l.b16 %v1187
        %v4308 = vunpack.c.h.b16 %v1187
        %v4309 = vunpack.c.l.b16 %v1188
        %v4310 = vunpack.c.h.b16 %v1188
        %v4311 = vunpack.c.l.b16 %v1189
        %v4312 = vunpack.c.h.b16 %v1189
        %v4313 = vunpack.c.l.b16 %v1190
        %v4314 = vunpack.c.h.b16 %v1190
        %v4315 = vunpack.c.l.b16 %v1191
        %v4316 = vunpack.c.h.b16 %v1191
        %v4317 = vunpack.c.l.b16 %v1192
        %v4318 = vunpack.c.h.b16 %v1192
        %v4319 = vunpack.c.l.b16 %v1193
        %v4320 = vunpack.c.h.b16 %v1193
        %v4321 = vunpack.c.l.b16 %v1194
        %v4322 = vunpack.c.h.b16 %v1194
        %v4323 = vunpack.c.l.b16 %v1195
        %v4324 = vunpack.c.h.b16 %v1195
        %v4325 = vunpack.c.l.b16 %v1196
        %v4326 = vunpack.c.h.b16 %v1196
        %v4327 = vunpack.c.l.b16 %v1197
        %v4328 = vunpack.c.h.b16 %v1197
        %v4329 = vunpack.c.l.b16 %v1198
        %v4330 = vunpack.c.h.b16 %v1198
        %v4331 = vunpack.c.l.b16 %v1199
        %v4332 = vunpack.c.h.b16 %v1199
        %v4333 = vunpack.c.l.b16 %v1200
        %v4334 = vunpack.c.h.b16 %v1200
        %v4335 = vunpack.c.l.b16 %v1201
        %v4336 = vunpack.c.h.b16 %v1201
        %v4337 = vunpack.c.l.b16 %v1202
        %v4338 = vunpack.c.h.b16 %v1202
        %v4339 = vunpack.c.l.b16 %v1203
        %v4340 = vunpack.c.h.b16 %v1203
        %v4341 = vunpack.c.l.b16 %v1204
        %v4342 = vunpack.c.h.b16 %v1204
        %v4343 = vunpack.c.l.b16 %v1205
        %v4344 = vunpack.c.h.b16 %v1205
        %v4345 = vunpack.c.l.b16 %v1206
        %v4346 = vunpack.c.h.b16 %v1206
        %v4347 = vunpack.c.l.b16 %v1207
        %v4348 = vunpack.c.h.b16 %v1207
        %v4349 = vunpack.c.l.b16 %v1208
        %v4350 = vunpack.c.h.b16 %v1208
        %v4351 = vunpack.c.l.b16 %v1209
        %v4352 = vunpack.c.h.b16 %v1209
        %v4353 = vunpack.c.l.b16 %v1210
        %v4354 = vunpack.c.h.b16 %v1210
        %v4355 = vunpack.c.l.b16 %v1211
        %v4356 = vunpack.c.h.b16 %v1211
        %v4357 = vunpack.c.l.b16 %v1212
        %v4358 = vunpack.c.h.b16 %v1212
        %v4359 = vunpack.c.l.b16 %v1213
        %v4360 = vunpack.c.h.b16 %v1213
        %v4361 = vunpack.c.l.b16 %v1214
        %v4362 = vunpack.c.h.b16 %v1214
        %v4363 = vunpack.c.l.b16 %v1215
        %v4364 = vunpack.c.h.b16 %v1215
        %v4365 = vunpack.c.l.b16 %v1216
        %v4366 = vunpack.c.h.b16 %v1216
        %v4367 = vunpack.c.l.b16 %v1217
        %v4368 = vunpack.c.h.b16 %v1217
        %v4369 = vunpack.c.l.b16 %v1218
        %v4370 = vunpack.c.h.b16 %v1218
        %v4371 = vunpack.c.l.b16 %v1219
        %v4372 = vunpack.c.h.b16 %v1219
        %v4373 = vunpack.c.l.b16 %v1220
        %v4374 = vunpack.c.h.b16 %v1220
        %v4375 = vunpack.c.l.b16 %v1221
        %v4376 = vunpack.c.h.b16 %v1221
        %v4377 = vunpack.c.l.b16 %v1222
        %v4378 = vunpack.c.h.b16 %v1222
        %v4379 = vunpack.c.l.b16 %v1223
        %v4380 = vunpack.c.h.b16 %v1223
        %v4381 = vunpack.c.l.b16 %v1224
        %v4382 = vunpack.c.h.b16 %v1224
        %v4383 = vunpack.c.l.b16 %v1225
        %v4384 = vunpack.c.h.b16 %v1225
        %v4385 = vunpack.c.l.b16 %v1226
        %v4386 = vunpack.c.h.b16 %v1226
        %v4387 = vunpack.c.l.b16 %v1227
        %v4388 = vunpack.c.h.b16 %v1227
        %v4389 = vunpack.c.l.b16 %v1228
        %v4390 = vunpack.c.h.b16 %v1228
        %v4391 = vunpack.c.l.b16 %v1229
        %v4392 = vunpack.c.h.b16 %v1229
        %v4393 = vunpack.c.l.b16 %v1230
        %v4394 = vunpack.c.h.b16 %v1230
        %v4395 = vunpack.c.l.b16 %v1231
        %v4396 = vunpack.c.h.b16 %v1231
        %v4397 = vunpack.c.l.b16 %v1232
        %v4398 = vunpack.c.h.b16 %v1232
        %v4399 = vunpack.c.l.b16 %v1233
        %v4400 = vunpack.c.h.b16 %v1233
        %v4401 = vunpack.c.l.b16 %v1234
        %v4402 = vunpack.c.h.b16 %v1234
        %v4403 = vunpack.c.l.b16 %v1235
        %v4404 = vunpack.c.h.b16 %v1235
        %v4405 = vunpack.c.l.b16 %v1236
        %v4406 = vunpack.c.h.b16 %v1236
        %v4407 = vunpack.c.l.b16 %v1237
        %v4408 = vunpack.c.h.b16 %v1237
        %v4409 = vunpack.c.l.b16 %v1238
        %v4410 = vunpack.c.h.b16 %v1238
        %v4411 = vunpack.c.l.b16 %v1239
        %v4412 = vunpack.c.h.b16 %v1239
        %v4413 = vunpack.c.l.b16 %v1240
        %v4414 = vunpack.c.h.b16 %v1240
        %v4415 = vunpack.c.l.b16 %v1241
        %v4416 = vunpack.c.h.b16 %v1241
        %v4417 = vunpack.c.l.b16 %v1242
        %v4418 = vunpack.c.h.b16 %v1242
        %v4419 = vunpack.c.l.b16 %v1243
        %v4420 = vunpack.c.h.b16 %v1243
        %v4421 = vunpack.c.l.b16 %v1244
        %v4422 = vunpack.c.h.b16 %v1244
        %v4423 = vunpack.c.l.b16 %v1245
        %v4424 = vunpack.c.h.b16 %v1245
        %v4425 = vunpack.c.l.b16 %v1246
        %v4426 = vunpack.c.h.b16 %v1246
        %v4427 = vunpack.c.l.b16 %v1247
        %v4428 = vunpack.c.h.b16 %v1247
        %v4429 = vunpack.c.l.b16 %v1248
        %v4430 = vunpack.c.h.b16 %v1248
        %v4431 = vunpack.c.l.b16 %v1249
        %v4432 = vunpack.c.h.b16 %v1249
        %v4433 = vunpack.c.l.b16 %v1250
        %v4434 = vunpack.c.h.b16 %v1250
        %v4435 = vunpack.c.l.b16 %v1251
        %v4436 = vunpack.c.h.b16 %v1251
        %v4437 = vunpack.c.l.b16 %v1252
        %v4438 = vunpack.c.h.b16 %v1252
        %v4439 = vunpack.c.l.b16 %v1253
        %v4440 = vunpack.c.h.b16 %v1253
        %v4441 = vunpack.c.l.b16 %v1254
        %v4442 = vunpack.c.h.b16 %v1254
        %v4443 = vunpack.c.l.b16 %v1255
        %v4444 = vunpack.c.h.b16 %v1255
        %v4445 = vunpack.c.l.b16 %v1256
        %v4446 = vunpack.c.h.b16 %v1256
        %v4447 = vunpack.c.l.b16 %v1257
        %v4448 = vunpack.c.h.b16 %v1257
        %v4449 = vunpack.c.l.b16 %v1258
        %v4450 = vunpack.c.h.b16 %v1258
        %v4451 = vunpack.c.l.b16 %v1259
        %v4452 = vunpack.c.h.b16 %v1259
        %v4453 = vunpack.c.l.b16 %v1260
        %v4454 = vunpack.c.h.b16 %v1260
        %v4455 = vunpack.c.l.b16 %v1261
        %v4456 = vunpack.c.h.b16 %v1261
        %v4457 = vunpack.c.l.b16 %v1262
        %v4458 = vunpack.c.h.b16 %v1262
        %v4459 = vunpack.c.l.b16 %v1263
        %v4460 = vunpack.c.h.b16 %v1263
        %v4461 = vunpack.c.l.b16 %v1264
        %v4462 = vunpack.c.h.b16 %v1264
        %v4463 = vunpack.c.l.b16 %v1265
        %v4464 = vunpack.c.h.b16 %v1265
        %v4465 = vunpack.c.l.b16 %v1266
        %v4466 = vunpack.c.h.b16 %v1266
        %v4467 = vunpack.c.l.b16 %v1267
        %v4468 = vunpack.c.h.b16 %v1267
        %v4469 = vunpack.c.l.b16 %v1268
        %v4470 = vunpack.c.h.b16 %v1268
        %v4471 = vunpack.c.l.b16 %v1269
        %v4472 = vunpack.c.h.b16 %v1269
        %v4473 = vunpack.c.l.b16 %v1270
        %v4474 = vunpack.c.h.b16 %v1270
        %v4475 = vunpack.c.l.b16 %v1271
        %v4476 = vunpack.c.h.b16 %v1271
        %v4477 = vunpack.c.l.b16 %v1272
        %v4478 = vunpack.c.h.b16 %v1272
        %v4479 = vunpack.c.l.b16 %v1273
        %v4480 = vunpack.c.h.b16 %v1273
        %v4481 = vunpack.c.l.b16 %v1274
        %v4482 = vunpack.c.h.b16 %v1274
        %v4483 = vunpack.c.l.b16 %v1275
        %v4484 = vunpack.c.h.b16 %v1275
        %v4485 = vunpack.c.l.b16 %v1276
        %v4486 = vunpack.c.h.b16 %v1276
        %v4487 = vunpack.c.l.b16 %v1277
        %v4488 = vunpack.c.h.b16 %v1277
        %v4489 = vunpack.c.l.b16 %v1278
        %v4490 = vunpack.c.h.b16 %v1278
        %v4491 = vunpack.c.l.b16 %v1279
        %v4492 = vunpack.c.h.b16 %v1279
        %v4493 = vunpack.c.l.b16 %v1280
        %v4494 = vunpack.c.h.b16 %v1280
        %v4495 = vunpack.c.l.b16 %v1281
        %v4496 = vunpack.c.h.b16 %v1281
        %v4497 = vunpack.c.l.b16 %v1282
        %v4498 = vunpack.c.h.b16 %v1282
        %v4499 = vunpack.c.l.b16 %v1283
        %v4500 = vunpack.c.h.b16 %v1283
        %v4501 = vunpack.c.l.b16 %v1284
        %v4502 = vunpack.c.h.b16 %v1284
        %v4503 = vunpack.c.l.b16 %v1285
        %v4504 = vunpack.c.h.b16 %v1285
        %v4505 = vunpack.c.l.b16 %v1286
        %v4506 = vunpack.c.h.b16 %v1286
        %v4507 = vunpack.c.l.b16 %v1287
        %v4508 = vunpack.c.h.b16 %v1287
        %v4509 = vunpack.c.l.b16 %v1288
        %v4510 = vunpack.c.h.b16 %v1288
        %v4511 = vunpack.c.l.b16 %v1289
        %v4512 = vunpack.c.h.b16 %v1289
        %v4513 = vunpack.c.l.b16 %v1290
        %v4514 = vunpack.c.h.b16 %v1290
        %v4515 = vunpack.c.l.b16 %v1291
        %v4516 = vunpack.c.h.b16 %v1291
        %v4517 = vunpack.c.l.b16 %v1292
        %v4518 = vunpack.c.h.b16 %v1292
        %v4519 = vunpack.c.l.b16 %v1293
        %v4520 = vunpack.c.h.b16 %v1293
        %v4521 = vunpack.c.l.b16 %v1294
        %v4522 = vunpack.c.h.b16 %v1294
        %v4523 = vunpack.c.l.b16 %v1295
        %v4524 = vunpack.c.h.b16 %v1295
        %v4525 = vunpack.c.l.b16 %v1296
        %v4526 = vunpack.c.h.b16 %v1296
        %v4527 = vunpack.c.l.b16 %v1297
        %v4528 = vunpack.c.h.b16 %v1297
        %v4529 = vunpack.c.l.b16 %v1298
        %v4530 = vunpack.c.h.b16 %v1298
        %v4531 = vunpack.c.l.b16 %v1299
        %v4532 = vunpack.c.h.b16 %v1299
        %v4533 = vunpack.c.l.b16 %v1300
        %v4534 = vunpack.c.h.b16 %v1300
        %v4535 = vunpack.c.l.b16 %v1301
        %v4536 = vunpack.c.h.b16 %v1301
        %v4537 = vunpack.c.l.b16 %v1302
        %v4538 = vunpack.c.h.b16 %v1302
        %v4539 = vunpack.c.l.b16 %v1303
        %v4540 = vunpack.c.h.b16 %v1303
        %v4541 = vunpack.c.l.b16 %v1304
        %v4542 = vunpack.c.h.b16 %v1304
        %v4543 = vunpack.c.l.b16 %v1305
        %v4544 = vunpack.c.h.b16 %v1305
        %v4545 = vunpack.c.l.b16 %v1306
        %v4546 = vunpack.c.h.b16 %v1306
        %v4547 = vunpack.c.l.b16 %v1307
        %v4548 = vunpack.c.h.b16 %v1307
        %v4549 = vunpack.c.l.b16 %v1308
        %v4550 = vunpack.c.h.b16 %v1308
        %v4551 = vunpack.c.l.b16 %v1309
        %v4552 = vunpack.c.h.b16 %v1309
        %v4553 = vunpack.c.l.b16 %v1310
        %v4554 = vunpack.c.h.b16 %v1310
        %v4555 = vunpack.c.l.b16 %v1311
        %v4556 = vunpack.c.h.b16 %v1311
        %v4557 = vunpack.c.l.b16 %v1312
        %v4558 = vunpack.c.h.b16 %v1312
        %v4559 = vunpack.c.l.b16 %v1313
        %v4560 = vunpack.c.h.b16 %v1313
        %v4561 = vunpack.c.l.b16 %v1314
        %v4562 = vunpack.c.h.b16 %v1314
        %v4563 = vunpack.c.l.b16 %v1315
        %v4564 = vunpack.c.h.b16 %v1315
        %v4565 = vunpack.c.l.b16 %v1316
        %v4566 = vunpack.c.h.b16 %v1316
        %v4567 = vunpack.c.l.b16 %v1317
        %v4568 = vunpack.c.h.b16 %v1317
        %v4569 = vunpack.c.l.b16 %v1318
        %v4570 = vunpack.c.h.b16 %v1318
        %v4571 = vunpack.c.l.b16 %v1319
        %v4572 = vunpack.c.h.b16 %v1319
        %v4573 = vunpack.c.l.b16 %v1320
        %v4574 = vunpack.c.h.b16 %v1320
        %v4575 = vunpack.c.l.b16 %v1321
        %v4576 = vunpack.c.h.b16 %v1321
        %v4577 = vunpack.c.l.b16 %v1322
        %v4578 = vunpack.c.h.b16 %v1322
        %v4579 = vunpack.c.l.b16 %v1323
        %v4580 = vunpack.c.h.b16 %v1323
        %v4581 = vunpack.c.l.b16 %v1324
        %v4582 = vunpack.c.h.b16 %v1324
        %v4583 = vunpack.c.l.b16 %v1325
        %v4584 = vunpack.c.h.b16 %v1325
        %v4585 = vunpack.c.l.b16 %v1326
        %v4586 = vunpack.c.h.b16 %v1326
        %v4587 = vunpack.c.l.b16 %v1327
        %v4588 = vunpack.c.h.b16 %v1327
        %v4589 = vunpack.c.l.b16 %v1328
        %v4590 = vunpack.c.h.b16 %v1328
        %v4591 = vunpack.c.l.b16 %v1329
        %v4592 = vunpack.c.h.b16 %v1329
        %v4593 = vunpack.c.l.b16 %v1330
        %v4594 = vunpack.c.h.b16 %v1330
        %v4595 = vunpack.c.l.b16 %v1331
        %v4596 = vunpack.c.h.b16 %v1331
        %v4597 = vunpack.c.l.b16 %v1332
        %v4598 = vunpack.c.h.b16 %v1332
        %v4599 = vunpack.c.l.b16 %v1333
        %v4600 = vunpack.c.h.b16 %v1333
        %v4601 = vunpack.c.l.b16 %v1334
        %v4602 = vunpack.c.h.b16 %v1334
        %v4603 = vunpack.c.l.b16 %v1335
        %v4604 = vunpack.c.h.b16 %v1335
        %v4605 = vunpack.c.l.b16 %v1336
        %v4606 = vunpack.c.h.b16 %v1336
        %v4607 = vunpack.c.l.b16 %v1337
        %v4608 = vunpack.c.h.b16 %v1337
        %v4609 = vunpack.c.l.b16 %v1338
        %v4610 = vunpack.c.h.b16 %v1338
        %v4611 = vunpack.c.l.b16 %v1339
        %v4612 = vunpack.c.h.b16 %v1339
        %v4613 = vunpack.c.l.b16 %v1340
        %v4614 = vunpack.c.h.b16 %v1340
        %v4615 = vunpack.c.l.b16 %v1341
        %v4616 = vunpack.c.h.b16 %v1341
        %v4617 = vunpack.c.l.b16 %v1342
        %v4618 = vunpack.c.h.b16 %v1342
        %v4619 = vunpack.c.l.b16 %v1343
        %v4620 = vunpack.c.h.b16 %v1343
        %v4621 = vunpack.c.l.b16 %v1344
        %v4622 = vunpack.c.h.b16 %v1344
        %v4623 = vunpack.c.l.b16 %v1345
        %v4624 = vunpack.c.h.b16 %v1345
        %v4625 = vunpack.c.l.b16 %v1346
        %v4626 = vunpack.c.h.b16 %v1346
        %v4627 = vunpack.c.l.b16 %v1347
        %v4628 = vunpack.c.h.b16 %v1347
        %v4629 = vunpack.c.l.b16 %v1348
        %v4630 = vunpack.c.h.b16 %v1348
        %v4631 = vunpack.c.l.b16 %v1349
        %v4632 = vunpack.c.h.b16 %v1349
        %v4633 = vunpack.c.l.b16 %v1350
        %v4634 = vunpack.c.h.b16 %v1350
        %v4635 = vunpack.c.l.b16 %v1351
        %v4636 = vunpack.c.h.b16 %v1351
        %v4637 = vunpack.c.l.b16 %v1352
        %v4638 = vunpack.c.h.b16 %v1352
        %v4639 = vunpack.c.l.b16 %v1353
        %v4640 = vunpack.c.h.b16 %v1353
        %v4641 = vunpack.c.l.b16 %v1354
        %v4642 = vunpack.c.h.b16 %v1354
        %v4643 = vunpack.c.l.b16 %v1355
        %v4644 = vunpack.c.h.b16 %v1355
        %v4645 = vunpack.c.l.b16 %v1356
        %v4646 = vunpack.c.h.b16 %v1356
        %v4647 = vunpack.c.l.b16 %v1357
        %v4648 = vunpack.c.h.b16 %v1357
        %v4649 = vunpack.c.l.b16 %v1358
        %v4650 = vunpack.c.h.b16 %v1358
        %v4651 = vunpack.c.l.b16 %v1359
        %v4652 = vunpack.c.h.b16 %v1359
        %v4653 = vunpack.c.l.b16 %v1360
        %v4654 = vunpack.c.h.b16 %v1360
        %v4655 = vunpack.c.l.b16 %v1361
        %v4656 = vunpack.c.h.b16 %v1361
        %v4657 = vunpack.c.l.b16 %v1362
        %v4658 = vunpack.c.h.b16 %v1362
        %v4659 = vunpack.c.l.b16 %v1363
        %v4660 = vunpack.c.h.b16 %v1363
        %v4661 = vunpack.c.l.b16 %v1364
        %v4662 = vunpack.c.h.b16 %v1364
        %v4663 = vunpack.c.l.b16 %v1365
        %v4664 = vunpack.c.h.b16 %v1365
        %v4665 = vunpack.c.l.b16 %v1366
        %v4666 = vunpack.c.h.b16 %v1366
        %v4667 = vunpack.c.l.b16 %v1367
        %v4668 = vunpack.c.h.b16 %v1367
        %v4669 = vunpack.c.l.b16 %v1368
        %v4670 = vunpack.c.h.b16 %v1368
        %v4671 = vunpack.c.l.b16 %v1369
        %v4672 = vunpack.c.h.b16 %v1369
        %v4673 = vunpack.c.l.b16 %v1370
        %v4674 = vunpack.c.h.b16 %v1370
        %v4675 = vunpack.c.l.b16 %v1371
        %v4676 = vunpack.c.h.b16 %v1371
        %v4677 = vunpack.c.l.b16 %v1372
        %v4678 = vunpack.c.h.b16 %v1372
        %v4679 = vunpack.c.l.b16 %v1373
        %v4680 = vunpack.c.h.b16 %v1373
        %v4681 = vunpack.c.l.b16 %v1374
        %v4682 = vunpack.c.h.b16 %v1374
        %v4683 = vunpack.c.l.b16 %v1375
        %v4684 = vunpack.c.h.b16 %v1375
        %v4685 = vunpack.c.l.b16 %v1376
        %v4686 = vunpack.c.h.b16 %v1376
        %v4687 = vunpack.c.l.b16 %v1377
        %v4688 = vunpack.c.h.b16 %v1377
        %v4689 = vunpack.c.l.b16 %v1378
        %v4690 = vunpack.c.h.b16 %v1378
        %v4691 = vunpack.c.l.b16 %v1379
        %v4692 = vunpack.c.h.b16 %v1379
        %v4693 = vunpack.c.l.b16 %v1380
        %v4694 = vunpack.c.h.b16 %v1380
        %v4695 = vunpack.c.l.b16 %v1381
        %v4696 = vunpack.c.h.b16 %v1381
        %v4697 = vunpack.c.l.b16 %v1382
        %v4698 = vunpack.c.h.b16 %v1382
        %v4699 = vunpack.c.l.b16 %v1383
        %v4700 = vunpack.c.h.b16 %v1383
        %v4701 = vunpack.c.l.b16 %v1384
        %v4702 = vunpack.c.h.b16 %v1384
        %v4703 = vunpack.c.l.b16 %v1385
        %v4704 = vunpack.c.h.b16 %v1385
        %v4705 = vunpack.c.l.b16 %v1386
        %v4706 = vunpack.c.h.b16 %v1386
        %v4707 = vunpack.c.l.b16 %v1387
        %v4708 = vunpack.c.h.b16 %v1387
        %v4709 = vunpack.c.l.b16 %v1388
        %v4710 = vunpack.c.h.b16 %v1388
        %v4711 = vunpack.c.l.b16 %v1389
        %v4712 = vunpack.c.h.b16 %v1389
        %v4713 = vunpack.c.l.b16 %v1390
        %v4714 = vunpack.c.h.b16 %v1390
        %v4715 = vunpack.c.l.b16 %v1391
        %v4716 = vunpack.c.h.b16 %v1391
        %v4717 = vunpack.c.l.b16 %v1392
        %v4718 = vunpack.c.h.b16 %v1392
        %v4719 = vpack.c.b16 %v2675, %v2671
        %v4720 = vpack.c.b16 %v2676, %v2672
        %v4721 = vpack.c.b16 %v2677, %v2673
        %v4722 = vpack.c.b16 %v2678, %v2674
        %v4723 = vpack.c.b16 %v2683, %v2679
        %v4724 = vpack.c.b16 %v2684, %v2680
        %v4725 = vpack.c.b16 %v2685, %v2681
        %v4726 = vpack.c.b16 %v2686, %v2682
        %v4727 = vpack.c.b16 %v2691, %v2687
        %v4728 = vpack.c.b16 %v2692, %v2688
        %v4729 = vpack.c.b16 %v2693, %v2689
        %v4730 = vpack.c.b16 %v2694, %v2690
        %v4731 = vpack.c.b16 %v2699, %v2695
        %v4732 = vpack.c.b16 %v2700, %v2696
        %v4733 = vpack.c.b16 %v2701, %v2697
        %v4734 = vpack.c.b16 %v2702, %v2698
        %v4735 = vpack.c.b16 %v2707, %v2703
        %v4736 = vpack.c.b16 %v2708, %v2704
        %v4737 = vpack.c.b16 %v2709, %v2705
        %v4738 = vpack.c.b16 %v2710, %v2706
        %v4739 = vpack.c.b16 %v2715, %v2711
        %v4740 = vpack.c.b16 %v2716, %v2712
        %v4741 = vpack.c.b16 %v2717, %v2713
        %v4742 = vpack.c.b16 %v2718, %v2714
        %v4743 = vpack.c.b16 %v2723, %v2719
        %v4744 = vpack.c.b16 %v2724, %v2720
        %v4745 = vpack.c.b16 %v2725, %v2721
        %v4746 = vpack.c.b16 %v2726, %v2722
        %v4747 = vpack.c.b16 %v2731, %v2727
        %v4748 = vpack.c.b16 %v2732, %v2728
        %v4749 = vpack.c.b16 %v2733, %v2729
        %v4750 = vpack.c.b16 %v2734, %v2730
        %v4751 = vpack.c.b16 %v2739, %v2735
        %v4752 = vpack.c.b16 %v2740, %v2736
        %v4753 = vpack.c.b16 %v2741, %v2737
        %v4754 = vpack.c.b16 %v2742, %v2738
        %v4755 = vpack.c.b16 %v2747, %v2743
        %v4756 = vpack.c.b16 %v2748, %v2744
        %v4757 = vpack.c.b16 %v2749, %v2745
        %v4758 = vpack.c.b16 %v2750, %v2746
        %v4759 = vpack.c.b16 %v2755, %v2751
        %v4760 = vpack.c.b16 %v2756, %v2752
        %v4761 = vpack.c.b16 %v2757, %v2753
        %v4762 = vpack.c.b16 %v2758, %v2754
        %v4763 = vpack.c.b16 %v2763, %v2759
        %v4764 = vpack.c.b16 %v2764, %v2760
        %v4765 = vpack.c.b16 %v2765, %v2761
        %v4766 = vpack.c.b16 %v2766, %v2762
        %v4767 = vpack.c.b16 %v2771, %v2767
        %v4768 = vpack.c.b16 %v2772, %v2768
        %v4769 = vpack.c.b16 %v2773, %v2769
        %v4770 = vpack.c.b16 %v2774, %v2770
        %v4771 = vpack.c.b16 %v2779, %v2775
        %v4772 = vpack.c.b16 %v2780, %v2776
        %v4773 = vpack.c.b16 %v2781, %v2777
        %v4774 = vpack.c.b16 %v2782, %v2778
        %v4775 = vpack.c.b16 %v2787, %v2783
        %v4776 = vpack.c.b16 %v2788, %v2784
        %v4777 = vpack.c.b16 %v2789, %v2785
        %v4778 = vpack.c.b16 %v2790, %v2786
        %v4779 = vpack.c.b16 %v2795, %v2791
        %v4780 = vpack.c.b16 %v2796, %v2792
        %v4781 = vpack.c.b16 %v2797, %v2793
        %v4782 = vpack.c.b16 %v2798, %v2794
        %v4783 = vpack.c.b16 %v2803, %v2799
        %v4784 = vpack.c.b16 %v2804, %v2800
        %v4785 = vpack.c.b16 %v2805, %v2801
        %v4786 = vpack.c.b16 %v2806, %v2802
        %v4787 = vpack.c.b16 %v2811, %v2807
        %v4788 = vpack.c.b16 %v2812, %v2808
        %v4789 = vpack.c.b16 %v2813, %v2809
        %v4790 = vpack.c.b16 %v2814, %v2810
        %v4791 = vpack.c.b16 %v2819, %v2815
        %v4792 = vpack.c.b16 %v2820, %v2816
        %v4793 = vpack.c.b16 %v2821, %v2817
        %v4794 = vpack.c.b16 %v2822, %v2818
        %v4795 = vpack.c.b16 %v2827, %v2823
        %v4796 = vpack.c.b16 %v2828, %v2824
        %v4797 = vpack.c.b16 %v2829, %v2825
        %v4798 = vpack.c.b16 %v2830, %v2826
        %v4799 = vpack.c.b16 %v2835, %v2831
        %v4800 = vpack.c.b16 %v2836, %v2832
        %v4801 = vpack.c.b16 %v2837, %v2833
        %v4802 = vpack.c.b16 %v2838, %v2834
        %v4803 = vpack.c.b16 %v2843, %v2839
        %v4804 = vpack.c.b16 %v2844, %v2840
        %v4805 = vpack.c.b16 %v2845, %v2841
        %v4806 = vpack.c.b16 %v2846, %v2842
        %v4807 = vpack.c.b16 %v2851, %v2847
        %v4808 = vpack.c.b16 %v2852, %v2848
        %v4809 = vpack.c.b16 %v2853, %v2849
        %v4810 = vpack.c.b16 %v2854, %v2850
        %v4811 = vpack.c.b16 %v2859, %v2855
        %v4812 = vpack.c.b16 %v2860, %v2856
        %v4813 = vpack.c.b16 %v2861, %v2857
        %v4814 = vpack.c.b16 %v2862, %v2858
        %v4815 = vpack.c.b16 %v2867, %v2863
        %v4816 = vpack.c.b16 %v2868, %v2864
        %v4817 = vpack.c.b16 %v2869, %v2865
        %v4818 = vpack.c.b16 %v2870, %v2866
        %v4819 = vpack.c.b16 %v2875, %v2871
        %v4820 = vpack.c.b16 %v2876, %v2872
        %v4821 = vpack.c.b16 %v2877, %v2873
        %v4822 = vpack.c.b16 %v2878, %v2874
        %v4823 = vpack.c.b16 %v2883, %v2879
        %v4824 = vpack.c.b16 %v2884, %v2880
        %v4825 = vpack.c.b16 %v2885, %v2881
        %v4826 = vpack.c.b16 %v2886, %v2882
        %v4827 = vpack.c.b16 %v2891, %v2887
        %v4828 = vpack.c.b16 %v2892, %v2888
        %v4829 = vpack.c.b16 %v2893, %v2889
        %v4830 = vpack.c.b16 %v2894, %v2890
        %v4831 = vpack.c.b16 %v2899, %v2895
        %v4832 = vpack.c.b16 %v2900, %v2896
        %v4833 = vpack.c.b16 %v2901, %v2897
        %v4834 = vpack.c.b16 %v2902, %v2898
        %v4835 = vpack.c.b16 %v2907, %v2903
        %v4836 = vpack.c.b16 %v2908, %v2904
        %v4837 = vpack.c.b16 %v2909, %v2905
        %v4838 = vpack.c.b16 %v2910, %v2906
        %v4839 = vpack.c.b16 %v2915, %v2911
        %v4840 = vpack.c.b16 %v2916, %v2912
        %v4841 = vpack.c.b16 %v2917, %v2913
        %v4842 = vpack.c.b16 %v2918, %v2914
        %v4843 = vpack.c.b16 %v2923, %v2919
        %v4844 = vpack.c.b16 %v2924, %v2920
        %v4845 = vpack.c.b16 %v2925, %v2921
        %v4846 = vpack.c.b16 %v2926, %v2922
        %v4847 = vpack.c.b16 %v2931, %v2927
        %v4848 = vpack.c.b16 %v2932, %v2928
        %v4849 = vpack.c.b16 %v2933, %v2929
        %v4850 = vpack.c.b16 %v2934, %v2930
        %v4851 = vpack.c.b16 %v2939, %v2935
        %v4852 = vpack.c.b16 %v2940, %v2936
        %v4853 = vpack.c.b16 %v2941, %v2937
        %v4854 = vpack.c.b16 %v2942, %v2938
        %v4855 = vpack.c.b16 %v2947, %v2943
        %v4856 = vpack.c.b16 %v2948, %v2944
        %v4857 = vpack.c.b16 %v2949, %v2945
        %v4858 = vpack.c.b16 %v2950, %v2946
        %v4859 = vpack.c.b16 %v2955, %v2951
        %v4860 = vpack.c.b16 %v2956, %v2952
        %v4861 = vpack.c.b16 %v2957, %v2953
        %v4862 = vpack.c.b16 %v2958, %v2954
        %v4863 = vpack.c.b16 %v2963, %v2959
        %v4864 = vpack.c.b16 %v2964, %v2960
        %v4865 = vpack.c.b16 %v2965, %v2961
        %v4866 = vpack.c.b16 %v2966, %v2962
        %v4867 = vpack.c.b16 %v2971, %v2967
        %v4868 = vpack.c.b16 %v2972, %v2968
        %v4869 = vpack.c.b16 %v2973, %v2969
        %v4870 = vpack.c.b16 %v2974, %v2970
        %v4871 = vpack.c.b16 %v2979, %v2975
        %v4872 = vpack.c.b16 %v2980, %v2976
        %v4873 = vpack.c.b16 %v2981, %v2977
        %v4874 = vpack.c.b16 %v2982, %v2978
        %v4875 = vpack.c.b16 %v2987, %v2983
        %v4876 = vpack.c.b16 %v2988, %v2984
        %v4877 = vpack.c.b16 %v2989, %v2985
        %v4878 = vpack.c.b16 %v2990, %v2986
        %v4879 = vpack.c.b16 %v2995, %v2991
        %v4880 = vpack.c.b16 %v2996, %v2992
        %v4881 = vpack.c.b16 %v2997, %v2993
        %v4882 = vpack.c.b16 %v2998, %v2994
        %v4883 = vpack.c.b16 %v3003, %v2999
        %v4884 = vpack.c.b16 %v3004, %v3000
        %v4885 = vpack.c.b16 %v3005, %v3001
        %v4886 = vpack.c.b16 %v3006, %v3002
        %v4887 = vpack.c.b16 %v3011, %v3007
        %v4888 = vpack.c.b16 %v3012, %v3008
        %v4889 = vpack.c.b16 %v3013, %v3009
        %v4890 = vpack.c.b16 %v3014, %v3010
        %v4891 = vpack.c.b16 %v3019, %v3015
        %v4892 = vpack.c.b16 %v3020, %v3016
        %v4893 = vpack.c.b16 %v3021, %v3017
        %v4894 = vpack.c.b16 %v3022, %v3018
        %v4895 = vpack.c.b16 %v3027, %v3023
        %v4896 = vpack.c.b16 %v3028, %v3024
        %v4897 = vpack.c.b16 %v3029, %v3025
        %v4898 = vpack.c.b16 %v3030, %v3026
        %v4899 = vpack.c.b16 %v3035, %v3031
        %v4900 = vpack.c.b16 %v3036, %v3032
        %v4901 = vpack.c.b16 %v3037, %v3033
        %v4902 = vpack.c.b16 %v3038, %v3034
        %v4903 = vpack.c.b16 %v3043, %v3039
        %v4904 = vpack.c.b16 %v3044, %v3040
        %v4905 = vpack.c.b16 %v3045, %v3041
        %v4906 = vpack.c.b16 %v3046, %v3042
        %v4907 = vpack.c.b16 %v3051, %v3047
        %v4908 = vpack.c.b16 %v3052, %v3048
        %v4909 = vpack.c.b16 %v3053, %v3049
        %v4910 = vpack.c.b16 %v3054, %v3050
        %v4911 = vpack.c.b16 %v3059, %v3055
        %v4912 = vpack.c.b16 %v3060, %v3056
        %v4913 = vpack.c.b16 %v3061, %v3057
        %v4914 = vpack.c.b16 %v3062, %v3058
        %v4915 = vpack.c.b16 %v3067, %v3063
        %v4916 = vpack.c.b16 %v3068, %v3064
        %v4917 = vpack.c.b16 %v3069, %v3065
        %v4918 = vpack.c.b16 %v3070, %v3066
        %v4919 = vpack.c.b16 %v3075, %v3071
        %v4920 = vpack.c.b16 %v3076, %v3072
        %v4921 = vpack.c.b16 %v3077, %v3073
        %v4922 = vpack.c.b16 %v3078, %v3074
        %v4923 = vpack.c.b16 %v3083, %v3079
        %v4924 = vpack.c.b16 %v3084, %v3080
        %v4925 = vpack.c.b16 %v3085, %v3081
        %v4926 = vpack.c.b16 %v3086, %v3082
        %v4927 = vpack.c.b16 %v3091, %v3087
        %v4928 = vpack.c.b16 %v3092, %v3088
        %v4929 = vpack.c.b16 %v3093, %v3089
        %v4930 = vpack.c.b16 %v3094, %v3090
        %v4931 = vpack.c.b16 %v3099, %v3095
        %v4932 = vpack.c.b16 %v3100, %v3096
        %v4933 = vpack.c.b16 %v3101, %v3097
        %v4934 = vpack.c.b16 %v3102, %v3098
        %v4935 = vpack.c.b16 %v3107, %v3103
        %v4936 = vpack.c.b16 %v3108, %v3104
        %v4937 = vpack.c.b16 %v3109, %v3105
        %v4938 = vpack.c.b16 %v3110, %v3106
        %v4939 = vpack.c.b16 %v3115, %v3111
        %v4940 = vpack.c.b16 %v3116, %v3112
        %v4941 = vpack.c.b16 %v3117, %v3113
        %v4942 = vpack.c.b16 %v3118, %v3114
        %v4943 = vpack.c.b16 %v3123, %v3119
        %v4944 = vpack.c.b16 %v3124, %v3120
        %v4945 = vpack.c.b16 %v3125, %v3121
        %v4946 = vpack.c.b16 %v3126, %v3122
        %v4947 = vpack.c.b16 %v3131, %v3127
        %v4948 = vpack.c.b16 %v3132, %v3128
        %v4949 = vpack.c.b16 %v3133, %v3129
        %v4950 = vpack.c.b16 %v3134, %v3130
        %v4951 = vpack.c.b16 %v3139, %v3135
        %v4952 = vpack.c.b16 %v3140, %v3136
        %v4953 = vpack.c.b16 %v3141, %v3137
        %v4954 = vpack.c.b16 %v3142, %v3138
        %v4955 = vpack.c.b16 %v3147, %v3143
        %v4956 = vpack.c.b16 %v3148, %v3144
        %v4957 = vpack.c.b16 %v3149, %v3145
        %v4958 = vpack.c.b16 %v3150, %v3146
        %v4959 = vpack.c.b16 %v3155, %v3151
        %v4960 = vpack.c.b16 %v3156, %v3152
        %v4961 = vpack.c.b16 %v3157, %v3153
        %v4962 = vpack.c.b16 %v3158, %v3154
        %v4963 = vpack.c.b16 %v3163, %v3159
        %v4964 = vpack.c.b16 %v3164, %v3160
        %v4965 = vpack.c.b16 %v3165, %v3161
        %v4966 = vpack.c.b16 %v3166, %v3162
        %v4967 = vpack.c.b16 %v3171, %v3167
        %v4968 = vpack.c.b16 %v3172, %v3168
        %v4969 = vpack.c.b16 %v3173, %v3169
        %v4970 = vpack.c.b16 %v3174, %v3170
        %v4971 = vpack.c.b16 %v3179, %v3175
        %v4972 = vpack.c.b16 %v3180, %v3176
        %v4973 = vpack.c.b16 %v3181, %v3177
        %v4974 = vpack.c.b16 %v3182, %v3178
        %v4975 = vpack.c.b16 %v3187, %v3183
        %v4976 = vpack.c.b16 %v3188, %v3184
        %v4977 = vpack.c.b16 %v3189, %v3185
        %v4978 = vpack.c.b16 %v3190, %v3186
        %v4979 = vpack.c.b16 %v3195, %v3191
        %v4980 = vpack.c.b16 %v3196, %v3192
        %v4981 = vpack.c.b16 %v3197, %v3193
        %v4982 = vpack.c.b16 %v3198, %v3194
        %v4983 = vpack.c.b16 %v3203, %v3199
        %v4984 = vpack.c.b16 %v3204, %v3200
        %v4985 = vpack.c.b16 %v3205, %v3201
        %v4986 = vpack.c.b16 %v3206, %v3202
        %v4987 = vpack.c.b16 %v3211, %v3207
        %v4988 = vpack.c.b16 %v3212, %v3208
        %v4989 = vpack.c.b16 %v3213, %v3209
        %v4990 = vpack.c.b16 %v3214, %v3210
        %v4991 = vpack.c.b16 %v3219, %v3215
        %v4992 = vpack.c.b16 %v3220, %v3216
        %v4993 = vpack.c.b16 %v3221, %v3217
        %v4994 = vpack.c.b16 %v3222, %v3218
        %v4995 = vpack.c.b16 %v3227, %v3223
        %v4996 = vpack.c.b16 %v3228, %v3224
        %v4997 = vpack.c.b16 %v3229, %v3225
        %v4998 = vpack.c.b16 %v3230, %v3226
        %v4999 = vpack.c.b16 %v3235, %v3231
        %v5000 = vpack.c.b16 %v3236, %v3232
        %v5001 = vpack.c.b16 %v3237, %v3233
        %v5002 = vpack.c.b16 %v3238, %v3234
        %v5003 = vpack.c.b16 %v3243, %v3239
        %v5004 = vpack.c.b16 %v3244, %v3240
        %v5005 = vpack.c.b16 %v3245, %v3241
        %v5006 = vpack.c.b16 %v3246, %v3242
        %v5007 = vpack.c.b16 %v3251, %v3247
        %v5008 = vpack.c.b16 %v3252, %v3248
        %v5009 = vpack.c.b16 %v3253, %v3249
        %v5010 = vpack.c.b16 %v3254, %v3250
        %v5011 = vpack.c.b16 %v3259, %v3255
        %v5012 = vpack.c.b16 %v3260, %v3256
        %v5013 = vpack.c.b16 %v3261, %v3257
        %v5014 = vpack.c.b16 %v3262, %v3258
        %v5015 = vpack.c.b16 %v3267, %v3263
        %v5016 = vpack.c.b16 %v3268, %v3264
        %v5017 = vpack.c.b16 %v3269, %v3265
        %v5018 = vpack.c.b16 %v3270, %v3266
        %v5019 = vpack.c.b16 %v3275, %v3271
        %v5020 = vpack.c.b16 %v3276, %v3272
        %v5021 = vpack.c.b16 %v3277, %v3273
        %v5022 = vpack.c.b16 %v3278, %v3274
        %v5023 = vpack.c.b16 %v3283, %v3279
        %v5024 = vpack.c.b16 %v3284, %v3280
        %v5025 = vpack.c.b16 %v3285, %v3281
        %v5026 = vpack.c.b16 %v3286, %v3282
        %v5027 = vpack.c.b16 %v3291, %v3287
        %v5028 = vpack.c.b16 %v3292, %v3288
        %v5029 = vpack.c.b16 %v3293, %v3289
        %v5030 = vpack.c.b16 %v3294, %v3290
        %v5031 = vpack.c.b16 %v3299, %v3295
        %v5032 = vpack.c.b16 %v3300, %v3296
        %v5033 = vpack.c.b16 %v3301, %v3297
        %v5034 = vpack.c.b16 %v3302, %v3298
        %v5035 = vpack.c.b16 %v3307, %v3303
        %v5036 = vpack.c.b16 %v3308, %v3304
        %v5037 = vpack.c.b16 %v3309, %v3305
        %v5038 = vpack.c.b16 %v3310, %v3306
        %v5039 = vpack.c.b16 %v3315, %v3311
        %v5040 = vpack.c.b16 %v3316, %v3312
        %v5041 = vpack.c.b16 %v3317, %v3313
        %v5042 = vpack.c.b16 %v3318, %v3314
        %v5043 = vpack.c.b16 %v3323, %v3319
        %v5044 = vpack.c.b16 %v3324, %v3320
        %v5045 = vpack.c.b16 %v3325, %v3321
        %v5046 = vpack.c.b16 %v3326, %v3322
        %v5047 = vpack.c.b16 %v3331, %v3327
        %v5048 = vpack.c.b16 %v3332, %v3328
        %v5049 = vpack.c.b16 %v3333, %v3329
        %v5050 = vpack.c.b16 %v3334, %v3330
        %v5051 = vpack.c.b16 %v3339, %v3335
        %v5052 = vpack.c.b16 %v3340, %v3336
        %v5053 = vpack.c.b16 %v3341, %v3337
        %v5054 = vpack.c.b16 %v3342, %v3338
        %v5055 = vpack.c.b16 %v3347, %v3343
        %v5056 = vpack.c.b16 %v3348, %v3344
        %v5057 = vpack.c.b16 %v3349, %v3345
        %v5058 = vpack.c.b16 %v3350, %v3346
        %v5059 = vpack.c.b16 %v3355, %v3351
        %v5060 = vpack.c.b16 %v3356, %v3352
        %v5061 = vpack.c.b16 %v3357, %v3353
        %v5062 = vpack.c.b16 %v3358, %v3354
        %v5063 = vpack.c.b16 %v3363, %v3359
        %v5064 = vpack.c.b16 %v3364, %v3360
        %v5065 = vpack.c.b16 %v3365, %v3361
        %v5066 = vpack.c.b16 %v3366, %v3362
        %v5067 = vpack.c.b16 %v3371, %v3367
        %v5068 = vpack.c.b16 %v3372, %v3368
        %v5069 = vpack.c.b16 %v3373, %v3369
        %v5070 = vpack.c.b16 %v3374, %v3370
        %v5071 = vpack.c.b16 %v3379, %v3375
        %v5072 = vpack.c.b16 %v3380, %v3376
        %v5073 = vpack.c.b16 %v3381, %v3377
        %v5074 = vpack.c.b16 %v3382, %v3378
        %v5075 = vpack.c.b16 %v3387, %v3383
        %v5076 = vpack.c.b16 %v3388, %v3384
        %v5077 = vpack.c.b16 %v3389, %v3385
        %v5078 = vpack.c.b16 %v3390, %v3386
        %v5079 = vpack.c.b16 %v3395, %v3391
        %v5080 = vpack.c.b16 %v3396, %v3392
        %v5081 = vpack.c.b16 %v3397, %v3393
        %v5082 = vpack.c.b16 %v3398, %v3394
        %v5083 = vpack.c.b16 %v3403, %v3399
        %v5084 = vpack.c.b16 %v3404, %v3400
        %v5085 = vpack.c.b16 %v3405, %v3401
        %v5086 = vpack.c.b16 %v3406, %v3402
        %v5087 = vpack.c.b16 %v3411, %v3407
        %v5088 = vpack.c.b16 %v3412, %v3408
        %v5089 = vpack.c.b16 %v3413, %v3409
        %v5090 = vpack.c.b16 %v3414, %v3410
        %v5091 = vpack.c.b16 %v3419, %v3415
        %v5092 = vpack.c.b16 %v3420, %v3416
        %v5093 = vpack.c.b16 %v3421, %v3417
        %v5094 = vpack.c.b16 %v3422, %v3418
        %v5095 = vpack.c.b16 %v3427, %v3423
        %v5096 = vpack.c.b16 %v3428, %v3424
        %v5097 = vpack.c.b16 %v3429, %v3425
        %v5098 = vpack.c.b16 %v3430, %v3426
        %v5099 = vpack.c.b16 %v3435, %v3431
        %v5100 = vpack.c.b16 %v3436, %v3432
        %v5101 = vpack.c.b16 %v3437, %v3433
        %v5102 = vpack.c.b16 %v3438, %v3434
        %v5103 = vpack.c.b16 %v3443, %v3439
        %v5104 = vpack.c.b16 %v3444, %v3440
        %v5105 = vpack.c.b16 %v3445, %v3441
        %v5106 = vpack.c.b16 %v3446, %v3442
        %v5107 = vpack.c.b16 %v3451, %v3447
        %v5108 = vpack.c.b16 %v3452, %v3448
        %v5109 = vpack.c.b16 %v3453, %v3449
        %v5110 = vpack.c.b16 %v3454, %v3450
        %v5111 = vpack.c.b16 %v3459, %v3455
        %v5112 = vpack.c.b16 %v3460, %v3456
        %v5113 = vpack.c.b16 %v3461, %v3457
        %v5114 = vpack.c.b16 %v3462, %v3458
        %v5115 = vpack.c.b16 %v3467, %v3463
        %v5116 = vpack.c.b16 %v3468, %v3464
        %v5117 = vpack.c.b16 %v3469, %v3465
        %v5118 = vpack.c.b16 %v3470, %v3466
        %v5119 = vpack.c.b16 %v3475, %v3471
        %v5120 = vpack.c.b16 %v3476, %v3472
        %v5121 = vpack.c.b16 %v3477, %v3473
        %v5122 = vpack.c.b16 %v3478, %v3474
        %v5123 = vpack.c.b16 %v3483, %v3479
        %v5124 = vpack.c.b16 %v3484, %v3480
        %v5125 = vpack.c.b16 %v3485, %v3481
        %v5126 = vpack.c.b16 %v3486, %v3482
        %v5127 = vpack.c.b16 %v3491, %v3487
        %v5128 = vpack.c.b16 %v3492, %v3488
        %v5129 = vpack.c.b16 %v3493, %v3489
        %v5130 = vpack.c.b16 %v3494, %v3490
        %v5131 = vpack.c.b16 %v3499, %v3495
        %v5132 = vpack.c.b16 %v3500, %v3496
        %v5133 = vpack.c.b16 %v3501, %v3497
        %v5134 = vpack.c.b16 %v3502, %v3498
        %v5135 = vpack.c.b16 %v3507, %v3503
        %v5136 = vpack.c.b16 %v3508, %v3504
        %v5137 = vpack.c.b16 %v3509, %v3505
        %v5138 = vpack.c.b16 %v3510, %v3506
        %v5139 = vpack.c.b16 %v3515, %v3511
        %v5140 = vpack.c.b16 %v3516, %v3512
        %v5141 = vpack.c.b16 %v3517, %v3513
        %v5142 = vpack.c.b16 %v3518, %v3514
        %v5143 = vpack.c.b16 %v3523, %v3519
        %v5144 = vpack.c.b16 %v3524, %v3520
        %v5145 = vpack.c.b16 %v3525, %v3521
        %v5146 = vpack.c.b16 %v3526, %v3522
        %v5147 = vpack.c.b16 %v3531, %v3527
        %v5148 = vpack.c.b16 %v3532, %v3528
        %v5149 = vpack.c.b16 %v3533, %v3529
        %v5150 = vpack.c.b16 %v3534, %v3530
        %v5151 = vpack.c.b16 %v3539, %v3535
        %v5152 = vpack.c.b16 %v3540, %v3536
        %v5153 = vpack.c.b16 %v3541, %v3537
        %v5154 = vpack.c.b16 %v3542, %v3538
        %v5155 = vpack.c.b16 %v3547, %v3543
        %v5156 = vpack.c.b16 %v3548, %v3544
        %v5157 = vpack.c.b16 %v3549, %v3545
        %v5158 = vpack.c.b16 %v3550, %v3546
        %v5159 = vpack.c.b16 %v3555, %v3551
        %v5160 = vpack.c.b16 %v3556, %v3552
        %v5161 = vpack.c.b16 %v3557, %v3553
        %v5162 = vpack.c.b16 %v3558, %v3554
        %v5163 = vpack.c.b16 %v3563, %v3559
        %v5164 = vpack.c.b16 %v3564, %v3560
        %v5165 = vpack.c.b16 %v3565, %v3561
        %v5166 = vpack.c.b16 %v3566, %v3562
        %v5167 = vpack.c.b16 %v3571, %v3567
        %v5168 = vpack.c.b16 %v3572, %v3568
        %v5169 = vpack.c.b16 %v3573, %v3569
        %v5170 = vpack.c.b16 %v3574, %v3570
        %v5171 = vpack.c.b16 %v3579, %v3575
        %v5172 = vpack.c.b16 %v3580, %v3576
        %v5173 = vpack.c.b16 %v3581, %v3577
        %v5174 = vpack.c.b16 %v3582, %v3578
        %v5175 = vpack.c.b16 %v3587, %v3583
        %v5176 = vpack.c.b16 %v3588, %v3584
        %v5177 = vpack.c.b16 %v3589, %v3585
        %v5178 = vpack.c.b16 %v3590, %v3586
        %v5179 = vpack.c.b16 %v3595, %v3591
        %v5180 = vpack.c.b16 %v3596, %v3592
        %v5181 = vpack.c.b16 %v3597, %v3593
        %v5182 = vpack.c.b16 %v3598, %v3594
        %v5183 = vpack.c.b16 %v3603, %v3599
        %v5184 = vpack.c.b16 %v3604, %v3600
        %v5185 = vpack.c.b16 %v3605, %v3601
        %v5186 = vpack.c.b16 %v3606, %v3602
        %v5187 = vpack.c.b16 %v3611, %v3607
        %v5188 = vpack.c.b16 %v3612, %v3608
        %v5189 = vpack.c.b16 %v3613, %v3609
        %v5190 = vpack.c.b16 %v3614, %v3610
        %v5191 = vpack.c.b16 %v3619, %v3615
        %v5192 = vpack.c.b16 %v3620, %v3616
        %v5193 = vpack.c.b16 %v3621, %v3617
        %v5194 = vpack.c.b16 %v3622, %v3618
        %v5195 = vpack.c.b16 %v3627, %v3623
        %v5196 = vpack.c.b16 %v3628, %v3624
        %v5197 = vpack.c.b16 %v3629, %v3625
        %v5198 = vpack.c.b16 %v3630, %v3626
        %v5199 = vpack.c.b16 %v3635, %v3631
        %v5200 = vpack.c.b16 %v3636, %v3632
        %v5201 = vpack.c.b16 %v3637, %v3633
        %v5202 = vpack.c.b16 %v3638, %v3634
        %v5203 = vpack.c.b16 %v3643, %v3639
        %v5204 = vpack.c.b16 %v3644, %v3640
        %v5205 = vpack.c.b16 %v3645, %v3641
        %v5206 = vpack.c.b16 %v3646, %v3642
        %v5207 = vpack.c.b16 %v3651, %v3647
        %v5208 = vpack.c.b16 %v3652, %v3648
        %v5209 = vpack.c.b16 %v3653, %v3649
        %v5210 = vpack.c.b16 %v3654, %v3650
        %v5211 = vpack.c.b16 %v3659, %v3655
        %v5212 = vpack.c.b16 %v3660, %v3656
        %v5213 = vpack.c.b16 %v3661, %v3657
        %v5214 = vpack.c.b16 %v3662, %v3658
        %v5215 = vpack.c.b16 %v3667, %v3663
        %v5216 = vpack.c.b16 %v3668, %v3664
        %v5217 = vpack.c.b16 %v3669, %v3665
        %v5218 = vpack.c.b16 %v3670, %v3666
        %v5219 = vpack.c.b16 %v3675, %v3671
        %v5220 = vpack.c.b16 %v3676, %v3672
        %v5221 = vpack.c.b16 %v3677, %v3673
        %v5222 = vpack.c.b16 %v3678, %v3674
        %v5223 = vpack.c.b16 %v3683, %v3679
        %v5224 = vpack.c.b16 %v3684, %v3680
        %v5225 = vpack.c.b16 %v3685, %v3681
        %v5226 = vpack.c.b16 %v3686, %v3682
        %v5227 = vpack.c.b16 %v3691, %v3687
        %v5228 = vpack.c.b16 %v3692, %v3688
        %v5229 = vpack.c.b16 %v3693, %v3689
        %v5230 = vpack.c.b16 %v3694, %v3690
        %v5231 = vpack.c.b16 %v3699, %v3695
        %v5232 = vpack.c.b16 %v3700, %v3696
        %v5233 = vpack.c.b16 %v3701, %v3697
        %v5234 = vpack.c.b16 %v3702, %v3698
        %v5235 = vpack.c.b16 %v3707, %v3703
        %v5236 = vpack.c.b16 %v3708, %v3704
        %v5237 = vpack.c.b16 %v3709, %v3705
        %v5238 = vpack.c.b16 %v3710, %v3706
        %v5239 = vpack.c.b16 %v3715, %v3711
        %v5240 = vpack.c.b16 %v3716, %v3712
        %v5241 = vpack.c.b16 %v3717, %v3713
        %v5242 = vpack.c.b16 %v3718, %v3714
        %v5243 = vpack.c.b16 %v3723, %v3719
        %v5244 = vpack.c.b16 %v3724, %v3720
        %v5245 = vpack.c.b16 %v3725, %v3721
        %v5246 = vpack.c.b16 %v3726, %v3722
        %v5247 = vpack.c.b16 %v3731, %v3727
        %v5248 = vpack.c.b16 %v3732, %v3728
        %v5249 = vpack.c.b16 %v3733, %v3729
        %v5250 = vpack.c.b16 %v3734, %v3730
        %v5251 = vpack.c.b16 %v3739, %v3735
        %v5252 = vpack.c.b16 %v3740, %v3736
        %v5253 = vpack.c.b16 %v3741, %v3737
        %v5254 = vpack.c.b16 %v3742, %v3738
        %v5255 = vpack.c.b16 %v3747, %v3743
        %v5256 = vpack.c.b16 %v3748, %v3744
        %v5257 = vpack.c.b16 %v3749, %v3745
        %v5258 = vpack.c.b16 %v3750, %v3746
        %v5259 = vpack.c.b16 %v3755, %v3751
        %v5260 = vpack.c.b16 %v3756, %v3752
        %v5261 = vpack.c.b16 %v3757, %v3753
        %v5262 = vpack.c.b16 %v3758, %v3754
        %v5263 = vpack.c.b16 %v3763, %v3759
        %v5264 = vpack.c.b16 %v3764, %v3760
        %v5265 = vpack.c.b16 %v3765, %v3761
        %v5266 = vpack.c.b16 %v3766, %v3762
        %v5267 = vpack.c.b16 %v3771, %v3767
        %v5268 = vpack.c.b16 %v3772, %v3768
        %v5269 = vpack.c.b16 %v3773, %v3769
        %v5270 = vpack.c.b16 %v3774, %v3770
        %v5271 = vpack.c.b16 %v3779, %v3775
        %v5272 = vpack.c.b16 %v3780, %v3776
        %v5273 = vpack.c.b16 %v3781, %v3777
        %v5274 = vpack.c.b16 %v3782, %v3778
        %v5275 = vpack.c.b16 %v3787, %v3783
        %v5276 = vpack.c.b16 %v3788, %v3784
        %v5277 = vpack.c.b16 %v3789, %v3785
        %v5278 = vpack.c.b16 %v3790, %v3786
        %v5279 = vpack.c.b16 %v3795, %v3791
        %v5280 = vpack.c.b16 %v3796, %v3792
        %v5281 = vpack.c.b16 %v3797, %v3793
        %v5282 = vpack.c.b16 %v3798, %v3794
        %v5283 = vpack.c.b16 %v3803, %v3799
        %v5284 = vpack.c.b16 %v3804, %v3800
        %v5285 = vpack.c.b16 %v3805, %v3801
        %v5286 = vpack.c.b16 %v3806, %v3802
        %v5287 = vpack.c.b16 %v3811, %v3807
        %v5288 = vpack.c.b16 %v3812, %v3808
        %v5289 = vpack.c.b16 %v3813, %v3809
        %v5290 = vpack.c.b16 %v3814, %v3810
        %v5291 = vpack.c.b16 %v3819, %v3815
        %v5292 = vpack.c.b16 %v3820, %v3816
        %v5293 = vpack.c.b16 %v3821, %v3817
        %v5294 = vpack.c.b16 %v3822, %v3818
        %v5295 = vpack.c.b16 %v3827, %v3823
        %v5296 = vpack.c.b16 %v3828, %v3824
        %v5297 = vpack.c.b16 %v3829, %v3825
        %v5298 = vpack.c.b16 %v3830, %v3826
        %v5299 = vpack.c.b16 %v3835, %v3831
        %v5300 = vpack.c.b16 %v3836, %v3832
        %v5301 = vpack.c.b16 %v3837, %v3833
        %v5302 = vpack.c.b16 %v3838, %v3834
        %v5303 = vpack.c.b16 %v3843, %v3839
        %v5304 = vpack.c.b16 %v3844, %v3840
        %v5305 = vpack.c.b16 %v3845, %v3841
        %v5306 = vpack.c.b16 %v3846, %v3842
        %v5307 = vpack.c.b16 %v3851, %v3847
        %v5308 = vpack.c.b16 %v3852, %v3848
        %v5309 = vpack.c.b16 %v3853, %v3849
        %v5310 = vpack.c.b16 %v3854, %v3850
        %v5311 = vpack.c.b16 %v3859, %v3855
        %v5312 = vpack.c.b16 %v3860, %v3856
        %v5313 = vpack.c.b16 %v3861, %v3857
        %v5314 = vpack.c.b16 %v3862, %v3858
        %v5315 = vpack.c.b16 %v3867, %v3863
        %v5316 = vpack.c.b16 %v3868, %v3864
        %v5317 = vpack.c.b16 %v3869, %v3865
        %v5318 = vpack.c.b16 %v3870, %v3866
        %v5319 = vpack.c.b16 %v3875, %v3871
        %v5320 = vpack.c.b16 %v3876, %v3872
        %v5321 = vpack.c.b16 %v3877, %v3873
        %v5322 = vpack.c.b16 %v3878, %v3874
        %v5323 = vpack.c.b16 %v3883, %v3879
        %v5324 = vpack.c.b16 %v3884, %v3880
        %v5325 = vpack.c.b16 %v3885, %v3881
        %v5326 = vpack.c.b16 %v3886, %v3882
        %v5327 = vpack.c.b16 %v3891, %v3887
        %v5328 = vpack.c.b16 %v3892, %v3888
        %v5329 = vpack.c.b16 %v3893, %v3889
        %v5330 = vpack.c.b16 %v3894, %v3890
        %v5331 = vpack.c.b16 %v3899, %v3895
        %v5332 = vpack.c.b16 %v3900, %v3896
        %v5333 = vpack.c.b16 %v3901, %v3897
        %v5334 = vpack.c.b16 %v3902, %v3898
        %v5335 = vpack.c.b16 %v3907, %v3903
        %v5336 = vpack.c.b16 %v3908, %v3904
        %v5337 = vpack.c.b16 %v3909, %v3905
        %v5338 = vpack.c.b16 %v3910, %v3906
        %v5339 = vpack.c.b16 %v3915, %v3911
        %v5340 = vpack.c.b16 %v3916, %v3912
        %v5341 = vpack.c.b16 %v3917, %v3913
        %v5342 = vpack.c.b16 %v3918, %v3914
        %v5343 = vpack.c.b16 %v3923, %v3919
        %v5344 = vpack.c.b16 %v3924, %v3920
        %v5345 = vpack.c.b16 %v3925, %v3921
        %v5346 = vpack.c.b16 %v3926, %v3922
        %v5347 = vpack.c.b16 %v3931, %v3927
        %v5348 = vpack.c.b16 %v3932, %v3928
        %v5349 = vpack.c.b16 %v3933, %v3929
        %v5350 = vpack.c.b16 %v3934, %v3930
        %v5351 = vpack.c.b16 %v3939, %v3935
        %v5352 = vpack.c.b16 %v3940, %v3936
        %v5353 = vpack.c.b16 %v3941, %v3937
        %v5354 = vpack.c.b16 %v3942, %v3938
        %v5355 = vpack.c.b16 %v3947, %v3943
        %v5356 = vpack.c.b16 %v3948, %v3944
        %v5357 = vpack.c.b16 %v3949, %v3945
        %v5358 = vpack.c.b16 %v3950, %v3946
        %v5359 = vpack.c.b16 %v3955, %v3951
        %v5360 = vpack.c.b16 %v3956, %v3952
        %v5361 = vpack.c.b16 %v3957, %v3953
        %v5362 = vpack.c.b16 %v3958, %v3954
        %v5363 = vpack.c.b16 %v3963, %v3959
        %v5364 = vpack.c.b16 %v3964, %v3960
        %v5365 = vpack.c.b16 %v3965, %v3961
        %v5366 = vpack.c.b16 %v3966, %v3962
        %v5367 = vpack.c.b16 %v3971, %v3967
        %v5368 = vpack.c.b16 %v3972, %v3968
        %v5369 = vpack.c.b16 %v3973, %v3969
        %v5370 = vpack.c.b16 %v3974, %v3970
        %v5371 = vpack.c.b16 %v3979, %v3975
        %v5372 = vpack.c.b16 %v3980, %v3976
        %v5373 = vpack.c.b16 %v3981, %v3977
        %v5374 = vpack.c.b16 %v3982, %v3978
        %v5375 = vpack.c.b16 %v3987, %v3983
        %v5376 = vpack.c.b16 %v3988, %v3984
        %v5377 = vpack.c.b16 %v3989, %v3985
        %v5378 = vpack.c.b16 %v3990, %v3986
        %v5379 = vpack.c.b16 %v3995, %v3991
        %v5380 = vpack.c.b16 %v3996, %v3992
        %v5381 = vpack.c.b16 %v3997, %v3993
        %v5382 = vpack.c.b16 %v3998, %v3994
        %v5383 = vpack.c.b16 %v4003, %v3999
        %v5384 = vpack.c.b16 %v4004, %v4000
        %v5385 = vpack.c.b16 %v4005, %v4001
        %v5386 = vpack.c.b16 %v4006, %v4002
        %v5387 = vpack.c.b16 %v4011, %v4007
        %v5388 = vpack.c.b16 %v4012, %v4008
        %v5389 = vpack.c.b16 %v4013, %v4009
        %v5390 = vpack.c.b16 %v4014, %v4010
        %v5391 = vpack.c.b16 %v4019, %v4015
        %v5392 = vpack.c.b16 %v4020, %v4016
        %v5393 = vpack.c.b16 %v4021, %v4017
        %v5394 = vpack.c.b16 %v4022, %v4018
        %v5395 = vpack.c.b16 %v4027, %v4023
        %v5396 = vpack.c.b16 %v4028, %v4024
        %v5397 = vpack.c.b16 %v4029, %v4025
        %v5398 = vpack.c.b16 %v4030, %v4026
        %v5399 = vpack.c.b16 %v4035, %v4031
        %v5400 = vpack.c.b16 %v4036, %v4032
        %v5401 = vpack.c.b16 %v4037, %v4033
        %v5402 = vpack.c.b16 %v4038, %v4034
        %v5403 = vpack.c.b16 %v4043, %v4039
        %v5404 = vpack.c.b16 %v4044, %v4040
        %v5405 = vpack.c.b16 %v4045, %v4041
        %v5406 = vpack.c.b16 %v4046, %v4042
        %v5407 = vpack.c.b16 %v4051, %v4047
        %v5408 = vpack.c.b16 %v4052, %v4048
        %v5409 = vpack.c.b16 %v4053, %v4049
        %v5410 = vpack.c.b16 %v4054, %v4050
        %v5411 = vpack.c.b16 %v4059, %v4055
        %v5412 = vpack.c.b16 %v4060, %v4056
        %v5413 = vpack.c.b16 %v4061, %v4057
        %v5414 = vpack.c.b16 %v4062, %v4058
        %v5415 = vpack.c.b16 %v4067, %v4063
        %v5416 = vpack.c.b16 %v4068, %v4064
        %v5417 = vpack.c.b16 %v4069, %v4065
        %v5418 = vpack.c.b16 %v4070, %v4066
        %v5419 = vpack.c.b16 %v4075, %v4071
        %v5420 = vpack.c.b16 %v4076, %v4072
        %v5421 = vpack.c.b16 %v4077, %v4073
        %v5422 = vpack.c.b16 %v4078, %v4074
        %v5423 = vpack.c.b16 %v4083, %v4079
        %v5424 = vpack.c.b16 %v4084, %v4080
        %v5425 = vpack.c.b16 %v4085, %v4081
        %v5426 = vpack.c.b16 %v4086, %v4082
        %v5427 = vpack.c.b16 %v4091, %v4087
        %v5428 = vpack.c.b16 %v4092, %v4088
        %v5429 = vpack.c.b16 %v4093, %v4089
        %v5430 = vpack.c.b16 %v4094, %v4090
        %v5431 = vpack.c.b16 %v4099, %v4095
        %v5432 = vpack.c.b16 %v4100, %v4096
        %v5433 = vpack.c.b16 %v4101, %v4097
        %v5434 = vpack.c.b16 %v4102, %v4098
        %v5435 = vpack.c.b16 %v4107, %v4103
        %v5436 = vpack.c.b16 %v4108, %v4104
        %v5437 = vpack.c.b16 %v4109, %v4105
        %v5438 = vpack.c.b16 %v4110, %v4106
        %v5439 = vpack.c.b16 %v4115, %v4111
        %v5440 = vpack.c.b16 %v4116, %v4112
        %v5441 = vpack.c.b16 %v4117, %v4113
        %v5442 = vpack.c.b16 %v4118, %v4114
        %v5443 = vpack.c.b16 %v4123, %v4119
        %v5444 = vpack.c.b16 %v4124, %v4120
        %v5445 = vpack.c.b16 %v4125, %v4121
        %v5446 = vpack.c.b16 %v4126, %v4122
        %v5447 = vpack.c.b16 %v4131, %v4127
        %v5448 = vpack.c.b16 %v4132, %v4128
        %v5449 = vpack.c.b16 %v4133, %v4129
        %v5450 = vpack.c.b16 %v4134, %v4130
        %v5451 = vpack.c.b16 %v4139, %v4135
        %v5452 = vpack.c.b16 %v4140, %v4136
        %v5453 = vpack.c.b16 %v4141, %v4137
        %v5454 = vpack.c.b16 %v4142, %v4138
        %v5455 = vpack.c.b16 %v4147, %v4143
        %v5456 = vpack.c.b16 %v4148, %v4144
        %v5457 = vpack.c.b16 %v4149, %v4145
        %v5458 = vpack.c.b16 %v4150, %v4146
        %v5459 = vpack.c.b16 %v4155, %v4151
        %v5460 = vpack.c.b16 %v4156, %v4152
        %v5461 = vpack.c.b16 %v4157, %v4153
        %v5462 = vpack.c.b16 %v4158, %v4154
        %v5463 = vpack.c.b16 %v4163, %v4159
        %v5464 = vpack.c.b16 %v4164, %v4160
        %v5465 = vpack.c.b16 %v4165, %v4161
        %v5466 = vpack.c.b16 %v4166, %v4162
        %v5467 = vpack.c.b16 %v4171, %v4167
        %v5468 = vpack.c.b16 %v4172, %v4168
        %v5469 = vpack.c.b16 %v4173, %v4169
        %v5470 = vpack.c.b16 %v4174, %v4170
        %v5471 = vpack.c.b16 %v4179, %v4175
        %v5472 = vpack.c.b16 %v4180, %v4176
        %v5473 = vpack.c.b16 %v4181, %v4177
        %v5474 = vpack.c.b16 %v4182, %v4178
        %v5475 = vpack.c.b16 %v4187, %v4183
        %v5476 = vpack.c.b16 %v4188, %v4184
        %v5477 = vpack.c.b16 %v4189, %v4185
        %v5478 = vpack.c.b16 %v4190, %v4186
        %v5479 = vpack.c.b16 %v4195, %v4191
        %v5480 = vpack.c.b16 %v4196, %v4192
        %v5481 = vpack.c.b16 %v4197, %v4193
        %v5482 = vpack.c.b16 %v4198, %v4194
        %v5483 = vpack.c.b16 %v4203, %v4199
        %v5484 = vpack.c.b16 %v4204, %v4200
        %v5485 = vpack.c.b16 %v4205, %v4201
        %v5486 = vpack.c.b16 %v4206, %v4202
        %v5487 = vpack.c.b16 %v4211, %v4207
        %v5488 = vpack.c.b16 %v4212, %v4208
        %v5489 = vpack.c.b16 %v4213, %v4209
        %v5490 = vpack.c.b16 %v4214, %v4210
        %v5491 = vpack.c.b16 %v4219, %v4215
        %v5492 = vpack.c.b16 %v4220, %v4216
        %v5493 = vpack.c.b16 %v4221, %v4217
        %v5494 = vpack.c.b16 %v4222, %v4218
        %v5495 = vpack.c.b16 %v4227, %v4223
        %v5496 = vpack.c.b16 %v4228, %v4224
        %v5497 = vpack.c.b16 %v4229, %v4225
        %v5498 = vpack.c.b16 %v4230, %v4226
        %v5499 = vpack.c.b16 %v4235, %v4231
        %v5500 = vpack.c.b16 %v4236, %v4232
        %v5501 = vpack.c.b16 %v4237, %v4233
        %v5502 = vpack.c.b16 %v4238, %v4234
        %v5503 = vpack.c.b16 %v4243, %v4239
        %v5504 = vpack.c.b16 %v4244, %v4240
        %v5505 = vpack.c.b16 %v4245, %v4241
        %v5506 = vpack.c.b16 %v4246, %v4242
        %v5507 = vpack.c.b16 %v4251, %v4247
        %v5508 = vpack.c.b16 %v4252, %v4248
        %v5509 = vpack.c.b16 %v4253, %v4249
        %v5510 = vpack.c.b16 %v4254, %v4250
        %v5511 = vpack.c.b16 %v4259, %v4255
        %v5512 = vpack.c.b16 %v4260, %v4256
        %v5513 = vpack.c.b16 %v4261, %v4257
        %v5514 = vpack.c.b16 %v4262, %v4258
        %v5515 = vpack.c.b16 %v4267, %v4263
        %v5516 = vpack.c.b16 %v4268, %v4264
        %v5517 = vpack.c.b16 %v4269, %v4265
        %v5518 = vpack.c.b16 %v4270, %v4266
        %v5519 = vpack.c.b16 %v4275, %v4271
        %v5520 = vpack.c.b16 %v4276, %v4272
        %v5521 = vpack.c.b16 %v4277, %v4273
        %v5522 = vpack.c.b16 %v4278, %v4274
        %v5523 = vpack.c.b16 %v4283, %v4279
        %v5524 = vpack.c.b16 %v4284, %v4280
        %v5525 = vpack.c.b16 %v4285, %v4281
        %v5526 = vpack.c.b16 %v4286, %v4282
        %v5527 = vpack.c.b16 %v4291, %v4287
        %v5528 = vpack.c.b16 %v4292, %v4288
        %v5529 = vpack.c.b16 %v4293, %v4289
        %v5530 = vpack.c.b16 %v4294, %v4290
        %v5531 = vpack.c.b16 %v4299, %v4295
        %v5532 = vpack.c.b16 %v4300, %v4296
        %v5533 = vpack.c.b16 %v4301, %v4297
        %v5534 = vpack.c.b16 %v4302, %v4298
        %v5535 = vpack.c.b16 %v4307, %v4303
        %v5536 = vpack.c.b16 %v4308, %v4304
        %v5537 = vpack.c.b16 %v4309, %v4305
        %v5538 = vpack.c.b16 %v4310, %v4306
        %v5539 = vpack.c.b16 %v4315, %v4311
        %v5540 = vpack.c.b16 %v4316, %v4312
        %v5541 = vpack.c.b16 %v4317, %v4313
        %v5542 = vpack.c.b16 %v4318, %v4314
        %v5543 = vpack.c.b16 %v4323, %v4319
        %v5544 = vpack.c.b16 %v4324, %v4320
        %v5545 = vpack.c.b16 %v4325, %v4321
        %v5546 = vpack.c.b16 %v4326, %v4322
        %v5547 = vpack.c.b16 %v4331, %v4327
        %v5548 = vpack.c.b16 %v4332, %v4328
        %v5549 = vpack.c.b16 %v4333, %v4329
        %v5550 = vpack.c.b16 %v4334, %v4330
        %v5551 = vpack.c.b16 %v4339, %v4335
        %v5552 = vpack.c.b16 %v4340, %v4336
        %v5553 = vpack.c.b16 %v4341, %v4337
        %v5554 = vpack.c.b16 %v4342, %v4338
        %v5555 = vpack.c.b16 %v4347, %v4343
        %v5556 = vpack.c.b16 %v4348, %v4344
        %v5557 = vpack.c.b16 %v4349, %v4345
        %v5558 = vpack.c.b16 %v4350, %v4346
        %v5559 = vpack.c.b16 %v4355, %v4351
        %v5560 = vpack.c.b16 %v4356, %v4352
        %v5561 = vpack.c.b16 %v4357, %v4353
        %v5562 = vpack.c.b16 %v4358, %v4354
        %v5563 = vpack.c.b16 %v4363, %v4359
        %v5564 = vpack.c.b16 %v4364, %v4360
        %v5565 = vpack.c.b16 %v4365, %v4361
        %v5566 = vpack.c.b16 %v4366, %v4362
        %v5567 = vpack.c.b16 %v4371, %v4367
        %v5568 = vpack.c.b16 %v4372, %v4368
        %v5569 = vpack.c.b16 %v4373, %v4369
        %v5570 = vpack.c.b16 %v4374, %v4370
        %v5571 = vpack.c.b16 %v4379, %v4375
        %v5572 = vpack.c.b16 %v4380, %v4376
        %v5573 = vpack.c.b16 %v4381, %v4377
        %v5574 = vpack.c.b16 %v4382, %v4378
        %v5575 = vpack.c.b16 %v4387, %v4383
        %v5576 = vpack.c.b16 %v4388, %v4384
        %v5577 = vpack.c.b16 %v4389, %v4385
        %v5578 = vpack.c.b16 %v4390, %v4386
        %v5579 = vpack.c.b16 %v4395, %v4391
        %v5580 = vpack.c.b16 %v4396, %v4392
        %v5581 = vpack.c.b16 %v4397, %v4393
        %v5582 = vpack.c.b16 %v4398, %v4394
        %v5583 = vpack.c.b16 %v4403, %v4399
        %v5584 = vpack.c.b16 %v4404, %v4400
        %v5585 = vpack.c.b16 %v4405, %v4401
        %v5586 = vpack.c.b16 %v4406, %v4402
        %v5587 = vpack.c.b16 %v4411, %v4407
        %v5588 = vpack.c.b16 %v4412, %v4408
        %v5589 = vpack.c.b16 %v4413, %v4409
        %v5590 = vpack.c.b16 %v4414, %v4410
        %v5591 = vpack.c.b16 %v4419, %v4415
        %v5592 = vpack.c.b16 %v4420, %v4416
        %v5593 = vpack.c.b16 %v4421, %v4417
        %v5594 = vpack.c.b16 %v4422, %v4418
        %v5595 = vpack.c.b16 %v4427, %v4423
        %v5596 = vpack.c.b16 %v4428, %v4424
        %v5597 = vpack.c.b16 %v4429, %v4425
        %v5598 = vpack.c.b16 %v4430, %v4426
        %v5599 = vpack.c.b16 %v4435, %v4431
        %v5600 = vpack.c.b16 %v4436, %v4432
        %v5601 = vpack.c.b16 %v4437, %v4433
        %v5602 = vpack.c.b16 %v4438, %v4434
        %v5603 = vpack.c.b16 %v4443, %v4439
        %v5604 = vpack.c.b16 %v4444, %v4440
        %v5605 = vpack.c.b16 %v4445, %v4441
        %v5606 = vpack.c.b16 %v4446, %v4442
        %v5607 = vpack.c.b16 %v4451, %v4447
        %v5608 = vpack.c.b16 %v4452, %v4448
        %v5609 = vpack.c.b16 %v4453, %v4449
        %v5610 = vpack.c.b16 %v4454, %v4450
        %v5611 = vpack.c.b16 %v4459, %v4455
        %v5612 = vpack.c.b16 %v4460, %v4456
        %v5613 = vpack.c.b16 %v4461, %v4457
        %v5614 = vpack.c.b16 %v4462, %v4458
        %v5615 = vpack.c.b16 %v4467, %v4463
        %v5616 = vpack.c.b16 %v4468, %v4464
        %v5617 = vpack.c.b16 %v4469, %v4465
        %v5618 = vpack.c.b16 %v4470, %v4466
        %v5619 = vpack.c.b16 %v4475, %v4471
        %v5620 = vpack.c.b16 %v4476, %v4472
        %v5621 = vpack.c.b16 %v4477, %v4473
        %v5622 = vpack.c.b16 %v4478, %v4474
        %v5623 = vpack.c.b16 %v4483, %v4479
        %v5624 = vpack.c.b16 %v4484, %v4480
        %v5625 = vpack.c.b16 %v4485, %v4481
        %v5626 = vpack.c.b16 %v4486, %v4482
        %v5627 = vpack.c.b16 %v4491, %v4487
        %v5628 = vpack.c.b16 %v4492, %v4488
        %v5629 = vpack.c.b16 %v4493, %v4489
        %v5630 = vpack.c.b16 %v4494, %v4490
        %v5631 = vpack.c.b16 %v4499, %v4495
        %v5632 = vpack.c.b16 %v4500, %v4496
        %v5633 = vpack.c.b16 %v4501, %v4497
        %v5634 = vpack.c.b16 %v4502, %v4498
        %v5635 = vpack.c.b16 %v4507, %v4503
        %v5636 = vpack.c.b16 %v4508, %v4504
        %v5637 = vpack.c.b16 %v4509, %v4505
        %v5638 = vpack.c.b16 %v4510, %v4506
        %v5639 = vpack.c.b16 %v4515, %v4511
        %v5640 = vpack.c.b16 %v4516, %v4512
        %v5641 = vpack.c.b16 %v4517, %v4513
        %v5642 = vpack.c.b16 %v4518, %v4514
        %v5643 = vpack.c.b16 %v4523, %v4519
        %v5644 = vpack.c.b16 %v4524, %v4520
        %v5645 = vpack.c.b16 %v4525, %v4521
        %v5646 = vpack.c.b16 %v4526, %v4522
        %v5647 = vpack.c.b16 %v4531, %v4527
        %v5648 = vpack.c.b16 %v4532, %v4528
        %v5649 = vpack.c.b16 %v4533, %v4529
        %v5650 = vpack.c.b16 %v4534, %v4530
        %v5651 = vpack.c.b16 %v4539, %v4535
        %v5652 = vpack.c.b16 %v4540, %v4536
        %v5653 = vpack.c.b16 %v4541, %v4537
        %v5654 = vpack.c.b16 %v4542, %v4538
        %v5655 = vpack.c.b16 %v4547, %v4543
        %v5656 = vpack.c.b16 %v4548, %v4544
        %v5657 = vpack.c.b16 %v4549, %v4545
        %v5658 = vpack.c.b16 %v4550, %v4546
        %v5659 = vpack.c.b16 %v4555, %v4551
        %v5660 = vpack.c.b16 %v4556, %v4552
        %v5661 = vpack.c.b16 %v4557, %v4553
        %v5662 = vpack.c.b16 %v4558, %v4554
        %v5663 = vpack.c.b16 %v4563, %v4559
        %v5664 = vpack.c.b16 %v4564, %v4560
        %v5665 = vpack.c.b16 %v4565, %v4561
        %v5666 = vpack.c.b16 %v4566, %v4562
        %v5667 = vpack.c.b16 %v4571, %v4567
        %v5668 = vpack.c.b16 %v4572, %v4568
        %v5669 = vpack.c.b16 %v4573, %v4569
        %v5670 = vpack.c.b16 %v4574, %v4570
        %v5671 = vpack.c.b16 %v4579, %v4575
        %v5672 = vpack.c.b16 %v4580, %v4576
        %v5673 = vpack.c.b16 %v4581, %v4577
        %v5674 = vpack.c.b16 %v4582, %v4578
        %v5675 = vpack.c.b16 %v4587, %v4583
        %v5676 = vpack.c.b16 %v4588, %v4584
        %v5677 = vpack.c.b16 %v4589, %v4585
        %v5678 = vpack.c.b16 %v4590, %v4586
        %v5679 = vpack.c.b16 %v4595, %v4591
        %v5680 = vpack.c.b16 %v4596, %v4592
        %v5681 = vpack.c.b16 %v4597, %v4593
        %v5682 = vpack.c.b16 %v4598, %v4594
        %v5683 = vpack.c.b16 %v4603, %v4599
        %v5684 = vpack.c.b16 %v4604, %v4600
        %v5685 = vpack.c.b16 %v4605, %v4601
        %v5686 = vpack.c.b16 %v4606, %v4602
        %v5687 = vpack.c.b16 %v4611, %v4607
        %v5688 = vpack.c.b16 %v4612, %v4608
        %v5689 = vpack.c.b16 %v4613, %v4609
        %v5690 = vpack.c.b16 %v4614, %v4610
        %v5691 = vpack.c.b16 %v4619, %v4615
        %v5692 = vpack.c.b16 %v4620, %v4616
        %v5693 = vpack.c.b16 %v4621, %v4617
        %v5694 = vpack.c.b16 %v4622, %v4618
        %v5695 = vpack.c.b16 %v4627, %v4623
        %v5696 = vpack.c.b16 %v4628, %v4624
        %v5697 = vpack.c.b16 %v4629, %v4625
        %v5698 = vpack.c.b16 %v4630, %v4626
        %v5699 = vpack.c.b16 %v4635, %v4631
        %v5700 = vpack.c.b16 %v4636, %v4632
        %v5701 = vpack.c.b16 %v4637, %v4633
        %v5702 = vpack.c.b16 %v4638, %v4634
        %v5703 = vpack.c.b16 %v4643, %v4639
        %v5704 = vpack.c.b16 %v4644, %v4640
        %v5705 = vpack.c.b16 %v4645, %v4641
        %v5706 = vpack.c.b16 %v4646, %v4642
        %v5707 = vpack.c.b16 %v4651, %v4647
        %v5708 = vpack.c.b16 %v4652, %v4648
        %v5709 = vpack.c.b16 %v4653, %v4649
        %v5710 = vpack.c.b16 %v4654, %v4650
        %v5711 = vpack.c.b16 %v4659, %v4655
        %v5712 = vpack.c.b16 %v4660, %v4656
        %v5713 = vpack.c.b16 %v4661, %v4657
        %v5714 = vpack.c.b16 %v4662, %v4658
        %v5715 = vpack.c.b16 %v4667, %v4663
        %v5716 = vpack.c.b16 %v4668, %v4664
        %v5717 = vpack.c.b16 %v4669, %v4665
        %v5718 = vpack.c.b16 %v4670, %v4666
        %v5719 = vpack.c.b16 %v4675, %v4671
        %v5720 = vpack.c.b16 %v4676, %v4672
        %v5721 = vpack.c.b16 %v4677, %v4673
        %v5722 = vpack.c.b16 %v4678, %v4674
        %v5723 = vpack.c.b16 %v4683, %v4679
        %v5724 = vpack.c.b16 %v4684, %v4680
        %v5725 = vpack.c.b16 %v4685, %v4681
        %v5726 = vpack.c.b16 %v4686, %v4682
        %v5727 = vpack.c.b16 %v4691, %v4687
        %v5728 = vpack.c.b16 %v4692, %v4688
        %v5729 = vpack.c.b16 %v4693, %v4689
        %v5730 = vpack.c.b16 %v4694, %v4690
        %v5731 = vpack.c.b16 %v4699, %v4695
        %v5732 = vpack.c.b16 %v4700, %v4696
        %v5733 = vpack.c.b16 %v4701, %v4697
        %v5734 = vpack.c.b16 %v4702, %v4698
        %v5735 = vpack.c.b16 %v4707, %v4703
        %v5736 = vpack.c.b16 %v4708, %v4704
        %v5737 = vpack.c.b16 %v4709, %v4705
        %v5738 = vpack.c.b16 %v4710, %v4706
        %v5739 = vpack.c.b16 %v4715, %v4711
        %v5740 = vpack.c.b16 %v4716, %v4712
        %v5741 = vpack.c.b16 %v4717, %v4713
        %v5742 = vpack.c.b16 %v4718, %v4714
        %6767 = vmatprep.subr.bf16.mxu0 %v4720
        %6768 = vmatpush1.bf16.msra.mxu0 %v4719
        %6769 = vmatprep.subr.bf16.mxu0 %v4724
        %6770 = vmatpush1.bf16.msra.mxu0 %v4723
        %6771 = vmatprep.subr.bf16.mxu0 %v4728
        %6772 = vmatpush1.bf16.msra.mxu0 %v4727
        %6773 = vmatprep.subr.bf16.mxu0 %v4732
        %6774 = vmatpush1.bf16.msra.mxu0 %v4731
        %6775 = vmatprep.subr.bf16.mxu0 %v4736
        %6776 = vmatpush1.bf16.msra.mxu0 %v4735
        %6777 = vmatprep.subr.bf16.mxu0 %v4740
        %6778 = vmatpush1.bf16.msra.mxu0 %v4739
        %6779 = vmatprep.subr.bf16.mxu0 %v4744
        %6780 = vmatpush1.bf16.msra.mxu0 %v4743
        %6781 = vmatprep.subr.bf16.mxu0 %v4748
        %6782 = vmatpush1.bf16.msra.mxu0 %v4747
        %6783 = vmatprep.subr.bf16.mxu0 %v4752
        %6784 = vmatpush1.bf16.msra.mxu0 %v4751
        %6785 = vmatprep.subr.bf16.mxu0 %v4756
        %6786 = vmatpush1.bf16.msra.mxu0 %v4755
        %6787 = vmatprep.subr.bf16.mxu0 %v4760
        %6788 = vmatpush1.bf16.msra.mxu0 %v4759
        %6789 = vmatprep.subr.bf16.mxu0 %v4764
        %6790 = vmatpush1.bf16.msra.mxu0 %v4763
        %6791 = vmatprep.subr.bf16.mxu0 %v4768
        %6792 = vmatpush1.bf16.msra.mxu0 %v4767
        %6793 = vmatprep.subr.bf16.mxu0 %v4772
        %6794 = vmatpush1.bf16.msra.mxu0 %v4771
        %6795 = vmatprep.subr.bf16.mxu0 %v4776
        %6796 = vmatpush1.bf16.msra.mxu0 %v4775
        %6797 = vmatprep.subr.bf16.mxu0 %v4780
        %6798 = vmatpush1.bf16.msra.mxu0 %v4779
        %6799 = vmatprep.mubr.bf16.mxu0 %v1456
        %6800 = vmatmul.mubr.bf16.gmra.mrb[0].mxu0 %v1442
        %v6801 = vpop.f32.mrb[0].mxu0
        %v6802 = vadd.f32 %v1398, %v6801
        %v6803 = vpop.f32.mrb[0].mxu0
        %v6804 = vadd.f32 %v1402, %v6803
        %v6805 = vpop.f32.mrb[0].mxu0
        %v6806 = vpop.f32.mrb[0].mxu0
        %6807 = vdwg.mxu0
        %6808 = vmatprep.subr.bf16.mxu0 %v4784
        %6809 = vmatpush1.bf16.msra.mxu0 %v4783
        %6810 = vmatprep.subr.bf16.mxu0 %v4788
        %6811 = vmatpush1.bf16.msra.mxu0 %v4787
        %6812 = vmatprep.subr.bf16.mxu0 %v4792
        %6813 = vmatpush1.bf16.msra.mxu0 %v4791
        %6814 = vmatprep.subr.bf16.mxu0 %v4796
        %6815 = vmatpush1.bf16.msra.mxu0 %v4795
        %6816 = vmatprep.subr.bf16.mxu0 %v4800
        %6817 = vmatpush1.bf16.msra.mxu0 %v4799
        %6818 = vmatprep.subr.bf16.mxu0 %v4804
        %6819 = vmatpush1.bf16.msra.mxu0 %v4803
        %6820 = vmatprep.subr.bf16.mxu0 %v4808
        %6821 = vmatpush1.bf16.msra.mxu0 %v4807
        %6822 = vmatprep.subr.bf16.mxu0 %v4812
        %6823 = vmatpush1.bf16.msra.mxu0 %v4811
        %6824 = vmatprep.subr.bf16.mxu0 %v4816
        %6825 = vmatpush1.bf16.msra.mxu0 %v4815
        %6826 = vmatprep.subr.bf16.mxu0 %v4820
        %6827 = vmatpush1.bf16.msra.mxu0 %v4819
        %6828 = vmatprep.subr.bf16.mxu0 %v4824
        %6829 = vmatpush1.bf16.msra.mxu0 %v4823
        %6830 = vmatprep.subr.bf16.mxu0 %v4828
        %6831 = vmatpush1.bf16.msra.mxu0 %v4827
        %6832 = vmatprep.subr.bf16.mxu0 %v4832
        %6833 = vmatpush1.bf16.msra.mxu0 %v4831
        %6834 = vmatprep.subr.bf16.mxu0 %v4836
        %6835 = vmatpush1.bf16.msra.mxu0 %v4835
        %6836 = vmatprep.subr.bf16.mxu0 %v4840
        %6837 = vmatpush1.bf16.msra.mxu0 %v4839
        %6838 = vmatprep.subr.bf16.mxu0 %v4844
        %6839 = vmatpush1.bf16.msra.mxu0 %v4843
        %6840 = vmatprep.mubr.bf16.mxu0 %v1466
        %6841 = vmatmul.mubr.bf16.gmra.mrb[0].mxu0 %v1464
        %v6842 = vpop.f32.mrb[0].mxu0
        %v6843 = vadd.f32 %v6802, %v6842
        %v6844 = vpop.f32.mrb[0].mxu0
        %v6845 = vadd.f32 %v6804, %v6844
        %v6846 = vpop.f32.mrb[0].mxu0
        %v6847 = vpop.f32.mrb[0].mxu0
        %6848 = vdwg.mxu0
        %6849 = vmatprep.subr.bf16.mxu0 %v4848
        %6850 = vmatpush1.bf16.msra.mxu0 %v4847
        %6851 = vmatprep.subr.bf16.mxu0 %v4852
        %6852 = vmatpush1.bf16.msra.mxu0 %v4851
        %6853 = vmatprep.subr.bf16.mxu0 %v4856
        %6854 = vmatpush1.bf16.msra.mxu0 %v4855
        %6855 = vmatprep.subr.bf16.mxu0 %v4860
        %6856 = vmatpush1.bf16.msra.mxu0 %v4859
        %6857 = vmatprep.subr.bf16.mxu0 %v4864
        %6858 = vmatpush1.bf16.msra.mxu0 %v4863
        %6859 = vmatprep.subr.bf16.mxu0 %v4868
        %6860 = vmatpush1.bf16.msra.mxu0 %v4867
        %6861 = vmatprep.subr.bf16.mxu0 %v4872
        %6862 = vmatpush1.bf16.msra.mxu0 %v4871
        %6863 = vmatprep.subr.bf16.mxu0 %v4876
        %6864 = vmatpush1.bf16.msra.mxu0 %v4875
        %6865 = vmatprep.subr.bf16.mxu0 %v4880
        %6866 = vmatpush1.bf16.msra.mxu0 %v4879
        %6867 = vmatprep.subr.bf16.mxu0 %v4884
        %6868 = vmatpush1.bf16.msra.mxu0 %v4883
        %6869 = vmatprep.subr.bf16.mxu0 %v4888
        %6870 = vmatpush1.bf16.msra.mxu0 %v4887
        %6871 = vmatprep.subr.bf16.mxu0 %v4892
        %6872 = vmatpush1.bf16.msra.mxu0 %v4891
        %6873 = vmatprep.subr.bf16.mxu0 %v4896
        %6874 = vmatpush1.bf16.msra.mxu0 %v4895
        %6875 = vmatprep.subr.bf16.mxu0 %v4900
        %6876 = vmatpush1.bf16.msra.mxu0 %v4899
        %6877 = vmatprep.subr.bf16.mxu0 %v4904
        %6878 = vmatpush1.bf16.msra.mxu0 %v4903
        %6879 = vmatprep.subr.bf16.mxu0 %v4908
        %6880 = vmatpush1.bf16.msra.mxu0 %v4907
        %6881 = vmatprep.mubr.bf16.mxu0 %v1463
        %6882 = vmatmul.mubr.bf16.gmra.mrb[0].mxu0 %v1449
        %v6883 = vpop.f32.mrb[0].mxu0
        %v6884 = vadd.f32 %v6843, %v6883
        %v6885 = vpop.f32.mrb[0].mxu0
        %v6886 = vadd.f32 %v6845, %v6885
        %v6887 = vpop.f32.mrb[0].mxu0
        %v6888 = vpop.f32.mrb[0].mxu0
        %6889 = vdwg.mxu0
        %6890 = vmatprep.subr.bf16.mxu0 %v4912
        %6891 = vmatpush1.bf16.msra.mxu0 %v4911
        %6892 = vmatprep.subr.bf16.mxu0 %v4916
        %6893 = vmatpush1.bf16.msra.mxu0 %v4915
        %6894 = vmatprep.subr.bf16.mxu0 %v4920
        %6895 = vmatpush1.bf16.msra.mxu0 %v4919
        %6896 = vmatprep.subr.bf16.mxu0 %v4924
        %6897 = vmatpush1.bf16.msra.mxu0 %v4923
        %6898 = vmatprep.subr.bf16.mxu0 %v4928
        %6899 = vmatpush1.bf16.msra.mxu0 %v4927
        %6900 = vmatprep.subr.bf16.mxu0 %v4932
        %6901 = vmatpush1.bf16.msra.mxu0 %v4931
        %6902 = vmatprep.subr.bf16.mxu0 %v4936
        %6903 = vmatpush1.bf16.msra.mxu0 %v4935
        %6904 = vmatprep.subr.bf16.mxu0 %v4940
        %6905 = vmatpush1.bf16.msra.mxu0 %v4939
        %6906 = vmatprep.subr.bf16.mxu0 %v4944
        %6907 = vmatpush1.bf16.msra.mxu0 %v4943
        %6908 = vmatprep.subr.bf16.mxu0 %v4948
        %6909 = vmatpush1.bf16.msra.mxu0 %v4947
        %6910 = vmatprep.subr.bf16.mxu0 %v4952
        %6911 = vmatpush1.bf16.msra.mxu0 %v4951
        %6912 = vmatprep.subr.bf16.mxu0 %v4956
        %6913 = vmatpush1.bf16.msra.mxu0 %v4955
        %6914 = vmatprep.subr.bf16.mxu0 %v4960
        %6915 = vmatpush1.bf16.msra.mxu0 %v4959
        %6916 = vmatprep.subr.bf16.mxu0 %v4964
        %6917 = vmatpush1.bf16.msra.mxu0 %v4963
        %6918 = vmatprep.subr.bf16.mxu0 %v4968
        %6919 = vmatpush1.bf16.msra.mxu0 %v4967
        %6920 = vmatprep.subr.bf16.mxu0 %v4972
        %6921 = vmatpush1.bf16.msra.mxu0 %v4971
        %6922 = vmatprep.mubr.bf16.mxu0 %v1467
        %6923 = vmatmul.mubr.bf16.gmra.mrb[0].mxu0 %v1465
        %v6924 = vpop.f32.mrb[0].mxu0
        %v6925 = vadd.f32 %v6884, %v6924
        %v6926 = vpop.f32.mrb[0].mxu0
        %v6927 = vadd.f32 %v6886, %v6926
        %v6928 = vpop.f32.mrb[0].mxu0
        %v6929 = vpop.f32.mrb[0].mxu0
        %6930 = vdwg.mxu0
        %6931 = vmatprep.subr.bf16.mxu0 %v4976
        %6932 = vmatpush1.bf16.msra.mxu0 %v4975
        %6933 = vmatprep.subr.bf16.mxu0 %v4980
        %6934 = vmatpush1.bf16.msra.mxu0 %v4979
        %6935 = vmatprep.subr.bf16.mxu0 %v4984
        %6936 = vmatpush1.bf16.msra.mxu0 %v4983
        %6937 = vmatprep.subr.bf16.mxu0 %v4988
        %6938 = vmatpush1.bf16.msra.mxu0 %v4987
        %6939 = vmatprep.subr.bf16.mxu0 %v4992
        %6940 = vmatpush1.bf16.msra.mxu0 %v4991
        %6941 = vmatprep.subr.bf16.mxu0 %v4996
        %6942 = vmatpush1.bf16.msra.mxu0 %v4995
        %6943 = vmatprep.subr.bf16.mxu0 %v5000
        %6944 = vmatpush1.bf16.msra.mxu0 %v4999
        %6945 = vmatprep.subr.bf16.mxu0 %v5004
        %6946 = vmatpush1.bf16.msra.mxu0 %v5003
        %6947 = vmatprep.subr.bf16.mxu0 %v5008
        %6948 = vmatpush1.bf16.msra.mxu0 %v5007
        %6949 = vmatprep.subr.bf16.mxu0 %v5012
        %6950 = vmatpush1.bf16.msra.mxu0 %v5011
        %6951 = vmatprep.subr.bf16.mxu0 %v5016
        %6952 = vmatpush1.bf16.msra.mxu0 %v5015
        %6953 = vmatprep.subr.bf16.mxu0 %v5020
        %6954 = vmatpush1.bf16.msra.mxu0 %v5019
        %6955 = vmatprep.subr.bf16.mxu0 %v5024
        %6956 = vmatpush1.bf16.msra.mxu0 %v5023
        %6957 = vmatprep.subr.bf16.mxu0 %v5028
        %6958 = vmatpush1.bf16.msra.mxu0 %v5027
        %6959 = vmatprep.subr.bf16.mxu0 %v5032
        %6960 = vmatpush1.bf16.msra.mxu0 %v5031
        %6961 = vmatprep.subr.bf16.mxu0 %v5036
        %6962 = vmatpush1.bf16.msra.mxu0 %v5035
        %6963 = vmatprep.mubr.bf16.mxu0 %v1505
        %6964 = vmatmul.mubr.bf16.gmra.mrb[0].mxu0 %v1491
        %v6965 = vpop.f32.mrb[0].mxu0
        %v6966 = vadd.f32 %v6925, %v6965
        %v6967 = vpop.f32.mrb[0].mxu0
        %v6968 = vadd.f32 %v6927, %v6967
        %v6969 = vpop.f32.mrb[0].mxu0
        %v6970 = vpop.f32.mrb[0].mxu0
        %6971 = vdwg.mxu0
        %6972 = vmatprep.subr.bf16.mxu0 %v5040
        %6973 = vmatpush1.bf16.msra.mxu0 %v5039
        %6974 = vmatprep.subr.bf16.mxu0 %v5044
        %6975 = vmatpush1.bf16.msra.mxu0 %v5043
        %6976 = vmatprep.subr.bf16.mxu0 %v5048
        %6977 = vmatpush1.bf16.msra.mxu0 %v5047
        %6978 = vmatprep.subr.bf16.mxu0 %v5052
        %6979 = vmatpush1.bf16.msra.mxu0 %v5051
        %6980 = vmatprep.subr.bf16.mxu0 %v5056
        %6981 = vmatpush1.bf16.msra.mxu0 %v5055
        %6982 = vmatprep.subr.bf16.mxu0 %v5060
        %6983 = vmatpush1.bf16.msra.mxu0 %v5059
        %6984 = vmatprep.subr.bf16.mxu0 %v5064
        %6985 = vmatpush1.bf16.msra.mxu0 %v5063
        %6986 = vmatprep.subr.bf16.mxu0 %v5068
        %6987 = vmatpush1.bf16.msra.mxu0 %v5067
        %6988 = vmatprep.subr.bf16.mxu0 %v5072
        %6989 = vmatpush1.bf16.msra.mxu0 %v5071
        %6990 = vmatprep.subr.bf16.mxu0 %v5076
        %6991 = vmatpush1.bf16.msra.mxu0 %v5075
        %6992 = vmatprep.subr.bf16.mxu0 %v5080
        %6993 = vmatpush1.bf16.msra.mxu0 %v5079
        %6994 = vmatprep.subr.bf16.mxu0 %v5084
        %6995 = vmatpush1.bf16.msra.mxu0 %v5083
        %6996 = vmatprep.subr.bf16.mxu0 %v5088
        %6997 = vmatpush1.bf16.msra.mxu0 %v5087
        %6998 = vmatprep.subr.bf16.mxu0 %v5092
        %6999 = vmatpush1.bf16.msra.mxu0 %v5091
        %7000 = vmatprep.subr.bf16.mxu0 %v5096
        %7001 = vmatpush1.bf16.msra.mxu0 %v5095
        %7002 = vmatprep.subr.bf16.mxu0 %v5100
        %7003 = vmatpush1.bf16.msra.mxu0 %v5099
        %7004 = vmatprep.mubr.bf16.mxu0 %v1515
        %7005 = vmatmul.mubr.bf16.gmra.mrb[0].mxu0 %v1513
        %v7006 = vpop.f32.mrb[0].mxu0
        %v7007 = vadd.f32 %v6966, %v7006
        %v7008 = vpop.f32.mrb[0].mxu0
        %v7009 = vadd.f32 %v6968, %v7008
        %v7010 = vpop.f32.mrb[0].mxu0
        %v7011 = vpop.f32.mrb[0].mxu0
        %7012 = vdwg.mxu0
        %7013 = vmatprep.subr.bf16.mxu0 %v5104
        %7014 = vmatpush1.bf16.msra.mxu0 %v5103
        %7015 = vmatprep.subr.bf16.mxu0 %v5108
        %7016 = vmatpush1.bf16.msra.mxu0 %v5107
        %7017 = vmatprep.subr.bf16.mxu0 %v5112
        %7018 = vmatpush1.bf16.msra.mxu0 %v5111
        %7019 = vmatprep.subr.bf16.mxu0 %v5116
        %7020 = vmatpush1.bf16.msra.mxu0 %v5115
        %7021 = vmatprep.subr.bf16.mxu0 %v5120
        %7022 = vmatpush1.bf16.msra.mxu0 %v5119
        %7023 = vmatprep.subr.bf16.mxu0 %v5124
        %7024 = vmatpush1.bf16.msra.mxu0 %v5123
        %7025 = vmatprep.subr.bf16.mxu0 %v5128
        %7026 = vmatpush1.bf16.msra.mxu0 %v5127
        %7027 = vmatprep.subr.bf16.mxu0 %v5132
        %7028 = vmatpush1.bf16.msra.mxu0 %v5131
        %7029 = vmatprep.subr.bf16.mxu0 %v5136
        %7030 = vmatpush1.bf16.msra.mxu0 %v5135
        %7031 = vmatprep.subr.bf16.mxu0 %v5140
        %7032 = vmatpush1.bf16.msra.mxu0 %v5139
        %7033 = vmatprep.subr.bf16.mxu0 %v5144
        %7034 = vmatpush1.bf16.msra.mxu0 %v5143
        %7035 = vmatprep.subr.bf16.mxu0 %v5148
        %7036 = vmatpush1.bf16.msra.mxu0 %v5147
        %7037 = vmatprep.subr.bf16.mxu0 %v5152
        %7038 = vmatpush1.bf16.msra.mxu0 %v5151
        %7039 = vmatprep.subr.bf16.mxu0 %v5156
        %7040 = vmatpush1.bf16.msra.mxu0 %v5155
        %7041 = vmatprep.subr.bf16.mxu0 %v5160
        %7042 = vmatpush1.bf16.msra.mxu0 %v5159
        %7043 = vmatprep.subr.bf16.mxu0 %v5164
        %7044 = vmatpush1.bf16.msra.mxu0 %v5163
        %7045 = vmatprep.mubr.bf16.mxu0 %v1512
        %7046 = vmatmul.mubr.bf16.gmra.mrb[0].mxu0 %v1498
        %v7047 = vpop.f32.mrb[0].mxu0
        %v7048 = vadd.f32 %v7007, %v7047
        %v7049 = vpop.f32.mrb[0].mxu0
        %v7050 = vadd.f32 %v7009, %v7049
        %v7051 = vpop.f32.mrb[0].mxu0
        %v7052 = vpop.f32.mrb[0].mxu0
        %7053 = vdwg.mxu0
        %7054 = vmatprep.subr.bf16.mxu0 %v5168
        %7055 = vmatpush1.bf16.msra.mxu0 %v5167
        %7056 = vmatprep.subr.bf16.mxu0 %v5172
        %7057 = vmatpush1.bf16.msra.mxu0 %v5171
        %7058 = vmatprep.subr.bf16.mxu0 %v5176
        %7059 = vmatpush1.bf16.msra.mxu0 %v5175
        %7060 = vmatprep.subr.bf16.mxu0 %v5180
        %7061 = vmatpush1.bf16.msra.mxu0 %v5179
        %7062 = vmatprep.subr.bf16.mxu0 %v5184
        %7063 = vmatpush1.bf16.msra.mxu0 %v5183
        %7064 = vmatprep.subr.bf16.mxu0 %v5188
        %7065 = vmatpush1.bf16.msra.mxu0 %v5187
        %7066 = vmatprep.subr.bf16.mxu0 %v5192
        %7067 = vmatpush1.bf16.msra.mxu0 %v5191
        %7068 = vmatprep.subr.bf16.mxu0 %v5196
        %7069 = vmatpush1.bf16.msra.mxu0 %v5195
        %7070 = vmatprep.subr.bf16.mxu0 %v5200
        %7071 = vmatpush1.bf16.msra.mxu0 %v5199
        %7072 = vmatprep.subr.bf16.mxu0 %v5204
        %7073 = vmatpush1.bf16.msra.mxu0 %v5203
        %7074 = vmatprep.subr.bf16.mxu0 %v5208
        %7075 = vmatpush1.bf16.msra.mxu0 %v5207
        %7076 = vmatprep.subr.bf16.mxu0 %v5212
        %7077 = vmatpush1.bf16.msra.mxu0 %v5211
        %7078 = vmatprep.subr.bf16.mxu0 %v5216
        %7079 = vmatpush1.bf16.msra.mxu0 %v5215
        %7080 = vmatprep.subr.bf16.mxu0 %v5220
        %7081 = vmatpush1.bf16.msra.mxu0 %v5219
        %7082 = vmatprep.subr.bf16.mxu0 %v5224
        %7083 = vmatpush1.bf16.msra.mxu0 %v5223
        %7084 = vmatprep.subr.bf16.mxu0 %v5228
        %7085 = vmatpush1.bf16.msra.mxu0 %v5227
        %7086 = vmatprep.mubr.bf16.mxu0 %v1516
        %7087 = vmatmul.mubr.bf16.gmra.mrb[0].mxu0 %v1514
        %v7088 = vpop.f32.mrb[0].mxu0
        %v7089 = vadd.f32 %v7048, %v7088
        %v7090 = vpop.f32.mrb[0].mxu0
        %v7091 = vadd.f32 %v7050, %v7090
        %v7092 = vpop.f32.mrb[0].mxu0
        %v7093 = vpop.f32.mrb[0].mxu0
        %7094 = vdwg.mxu0
        %7095 = vmatprep.subr.bf16.mxu0 %v5232
        %7096 = vmatpush1.bf16.msra.mxu0 %v5231
        %7097 = vmatprep.subr.bf16.mxu0 %v5236
        %7098 = vmatpush1.bf16.msra.mxu0 %v5235
        %7099 = vmatprep.subr.bf16.mxu0 %v5240
        %7100 = vmatpush1.bf16.msra.mxu0 %v5239
        %7101 = vmatprep.subr.bf16.mxu0 %v5244
        %7102 = vmatpush1.bf16.msra.mxu0 %v5243
        %7103 = vmatprep.subr.bf16.mxu0 %v5248
        %7104 = vmatpush1.bf16.msra.mxu0 %v5247
        %7105 = vmatprep.subr.bf16.mxu0 %v5252
        %7106 = vmatpush1.bf16.msra.mxu0 %v5251
        %7107 = vmatprep.subr.bf16.mxu0 %v5256
        %7108 = vmatpush1.bf16.msra.mxu0 %v5255
        %7109 = vmatprep.subr.bf16.mxu0 %v5260
        %7110 = vmatpush1.bf16.msra.mxu0 %v5259
        %7111 = vmatprep.subr.bf16.mxu0 %v5264
        %7112 = vmatpush1.bf16.msra.mxu0 %v5263
        %7113 = vmatprep.subr.bf16.mxu0 %v5268
        %7114 = vmatpush1.bf16.msra.mxu0 %v5267
        %7115 = vmatprep.subr.bf16.mxu0 %v5272
        %7116 = vmatpush1.bf16.msra.mxu0 %v5271
        %7117 = vmatprep.subr.bf16.mxu0 %v5276
        %7118 = vmatpush1.bf16.msra.mxu0 %v5275
        %7119 = vmatprep.subr.bf16.mxu0 %v5280
        %7120 = vmatpush1.bf16.msra.mxu0 %v5279
        %7121 = vmatprep.subr.bf16.mxu0 %v5284
        %7122 = vmatpush1.bf16.msra.mxu0 %v5283
        %7123 = vmatprep.subr.bf16.mxu0 %v5288
        %7124 = vmatpush1.bf16.msra.mxu0 %v5287
        %7125 = vmatprep.subr.bf16.mxu0 %v5292
        %7126 = vmatpush1.bf16.msra.mxu0 %v5291
        %7127 = vmatprep.mubr.bf16.mxu0 %v1554
        %7128 = vmatmul.mubr.bf16.gmra.mrb[0].mxu0 %v1540
        %v7129 = vpop.f32.mrb[0].mxu0
        %v7130 = vadd.f32 %v7089, %v7129
        %v7131 = vpop.f32.mrb[0].mxu0
        %v7132 = vadd.f32 %v7091, %v7131
        %v7133 = vpop.f32.mrb[0].mxu0
        %v7134 = vpop.f32.mrb[0].mxu0
        %7135 = vdwg.mxu0
        %7136 = vmatprep.subr.bf16.mxu0 %v5296
        %7137 = vmatpush1.bf16.msra.mxu0 %v5295
        %7138 = vmatprep.subr.bf16.mxu0 %v5300
        %7139 = vmatpush1.bf16.msra.mxu0 %v5299
        %7140 = vmatprep.subr.bf16.mxu0 %v5304
        %7141 = vmatpush1.bf16.msra.mxu0 %v5303
        %7142 = vmatprep.subr.bf16.mxu0 %v5308
        %7143 = vmatpush1.bf16.msra.mxu0 %v5307
        %7144 = vmatprep.subr.bf16.mxu0 %v5312
        %7145 = vmatpush1.bf16.msra.mxu0 %v5311
        %7146 = vmatprep.subr.bf16.mxu0 %v5316
        %7147 = vmatpush1.bf16.msra.mxu0 %v5315
        %7148 = vmatprep.subr.bf16.mxu0 %v5320
        %7149 = vmatpush1.bf16.msra.mxu0 %v5319
        %7150 = vmatprep.subr.bf16.mxu0 %v5324
        %7151 = vmatpush1.bf16.msra.mxu0 %v5323
        %7152 = vmatprep.subr.bf16.mxu0 %v5328
        %7153 = vmatpush1.bf16.msra.mxu0 %v5327
        %7154 = vmatprep.subr.bf16.mxu0 %v5332
        %7155 = vmatpush1.bf16.msra.mxu0 %v5331
        %7156 = vmatprep.subr.bf16.mxu0 %v5336
        %7157 = vmatpush1.bf16.msra.mxu0 %v5335
        %7158 = vmatprep.subr.bf16.mxu0 %v5340
        %7159 = vmatpush1.bf16.msra.mxu0 %v5339
        %7160 = vmatprep.subr.bf16.mxu0 %v5344
        %7161 = vmatpush1.bf16.msra.mxu0 %v5343
        %7162 = vmatprep.subr.bf16.mxu0 %v5348
        %7163 = vmatpush1.bf16.msra.mxu0 %v5347
        %7164 = vmatprep.subr.bf16.mxu0 %v5352
        %7165 = vmatpush1.bf16.msra.mxu0 %v5351
        %7166 = vmatprep.subr.bf16.mxu0 %v5356
        %7167 = vmatpush1.bf16.msra.mxu0 %v5355
        %7168 = vmatprep.mubr.bf16.mxu0 %v1564
        %7169 = vmatmul.mubr.bf16.gmra.mrb[0].mxu0 %v1562
        %v7170 = vpop.f32.mrb[0].mxu0
        %v7171 = vadd.f32 %v7130, %v7170
        %v7172 = vpop.f32.mrb[0].mxu0
        %v7173 = vadd.f32 %v7132, %v7172
        %v7174 = vpop.f32.mrb[0].mxu0
        %v7175 = vpop.f32.mrb[0].mxu0
        %7176 = vdwg.mxu0
        %7177 = vmatprep.subr.bf16.mxu0 %v5360
        %7178 = vmatpush1.bf16.msra.mxu0 %v5359
        %7179 = vmatprep.subr.bf16.mxu0 %v5364
        %7180 = vmatpush1.bf16.msra.mxu0 %v5363
        %7181 = vmatprep.subr.bf16.mxu0 %v5368
        %7182 = vmatpush1.bf16.msra.mxu0 %v5367
        %7183 = vmatprep.subr.bf16.mxu0 %v5372
        %7184 = vmatpush1.bf16.msra.mxu0 %v5371
        %7185 = vmatprep.subr.bf16.mxu0 %v5376
        %7186 = vmatpush1.bf16.msra.mxu0 %v5375
        %7187 = vmatprep.subr.bf16.mxu0 %v5380
        %7188 = vmatpush1.bf16.msra.mxu0 %v5379
        %7189 = vmatprep.subr.bf16.mxu0 %v5384
        %7190 = vmatpush1.bf16.msra.mxu0 %v5383
        %7191 = vmatprep.subr.bf16.mxu0 %v5388
        %7192 = vmatpush1.bf16.msra.mxu0 %v5387
        %7193 = vmatprep.subr.bf16.mxu0 %v5392
        %7194 = vmatpush1.bf16.msra.mxu0 %v5391
        %7195 = vmatprep.subr.bf16.mxu0 %v5396
        %7196 = vmatpush1.bf16.msra.mxu0 %v5395
        %7197 = vmatprep.subr.bf16.mxu0 %v5400
        %7198 = vmatpush1.bf16.msra.mxu0 %v5399
        %7199 = vmatprep.subr.bf16.mxu0 %v5404
        %7200 = vmatpush1.bf16.msra.mxu0 %v5403
        %7201 = vmatprep.subr.bf16.mxu0 %v5408
        %7202 = vmatpush1.bf16.msra.mxu0 %v5407
        %7203 = vmatprep.subr.bf16.mxu0 %v5412
        %7204 = vmatpush1.bf16.msra.mxu0 %v5411
        %7205 = vmatprep.subr.bf16.mxu0 %v5416
        %7206 = vmatpush1.bf16.msra.mxu0 %v5415
        %7207 = vmatprep.subr.bf16.mxu0 %v5420
        %7208 = vmatpush1.bf16.msra.mxu0 %v5419
        %7209 = vmatprep.mubr.bf16.mxu0 %v1561
        %7210 = vmatmul.mubr.bf16.gmra.mrb[0].mxu0 %v1547
        %v7211 = vpop.f32.mrb[0].mxu0
        %v7212 = vadd.f32 %v7171, %v7211
        %v7213 = vpop.f32.mrb[0].mxu0
        %v7214 = vadd.f32 %v7173, %v7213
        %v7215 = vpop.f32.mrb[0].mxu0
        %v7216 = vpop.f32.mrb[0].mxu0
        %7217 = vdwg.mxu0
        %7218 = vmatprep.subr.bf16.mxu0 %v5424
        %7219 = vmatpush1.bf16.msra.mxu0 %v5423
        %7220 = vmatprep.subr.bf16.mxu0 %v5428
        %7221 = vmatpush1.bf16.msra.mxu0 %v5427
        %7222 = vmatprep.subr.bf16.mxu0 %v5432
        %7223 = vmatpush1.bf16.msra.mxu0 %v5431
        %7224 = vmatprep.subr.bf16.mxu0 %v5436
        %7225 = vmatpush1.bf16.msra.mxu0 %v5435
        %7226 = vmatprep.subr.bf16.mxu0 %v5440
        %7227 = vmatpush1.bf16.msra.mxu0 %v5439
        %7228 = vmatprep.subr.bf16.mxu0 %v5444
        %7229 = vmatpush1.bf16.msra.mxu0 %v5443
        %7230 = vmatprep.subr.bf16.mxu0 %v5448
        %7231 = vmatpush1.bf16.msra.mxu0 %v5447
        %7232 = vmatprep.subr.bf16.mxu0 %v5452
        %7233 = vmatpush1.bf16.msra.mxu0 %v5451
        %7234 = vmatprep.subr.bf16.mxu0 %v5456
        %7235 = vmatpush1.bf16.msra.mxu0 %v5455
        %7236 = vmatprep.subr.bf16.mxu0 %v5460
        %7237 = vmatpush1.bf16.msra.mxu0 %v5459
        %7238 = vmatprep.subr.bf16.mxu0 %v5464
        %7239 = vmatpush1.bf16.msra.mxu0 %v5463
        %7240 = vmatprep.subr.bf16.mxu0 %v5468
        %7241 = vmatpush1.bf16.msra.mxu0 %v5467
        %7242 = vmatprep.subr.bf16.mxu0 %v5472
        %7243 = vmatpush1.bf16.msra.mxu0 %v5471
        %7244 = vmatprep.subr.bf16.mxu0 %v5476
        %7245 = vmatpush1.bf16.msra.mxu0 %v5475
        %7246 = vmatprep.subr.bf16.mxu0 %v5480
        %7247 = vmatpush1.bf16.msra.mxu0 %v5479
        %7248 = vmatprep.subr.bf16.mxu0 %v5484
        %7249 = vmatpush1.bf16.msra.mxu0 %v5483
        %7250 = vmatprep.mubr.bf16.mxu0 %v1565
        %7251 = vmatmul.mubr.bf16.gmra.mrb[0].mxu0 %v1563
        %v7252 = vpop.f32.mrb[0].mxu0
        %v7253 = vadd.f32 %v7212, %v7252
        %v7254 = vpop.f32.mrb[0].mxu0
        %v7255 = vadd.f32 %v7214, %v7254
        %v7256 = vpop.f32.mrb[0].mxu0
        %v7257 = vpop.f32.mrb[0].mxu0
        %7258 = vdwg.mxu0
        %7259 = vmatprep.subr.bf16.mxu0 %v5488
        %7260 = vmatpush1.bf16.msra.mxu0 %v5487
        %7261 = vmatprep.subr.bf16.mxu0 %v5492
        %7262 = vmatpush1.bf16.msra.mxu0 %v5491
        %7263 = vmatprep.subr.bf16.mxu0 %v5496
        %7264 = vmatpush1.bf16.msra.mxu0 %v5495
        %7265 = vmatprep.subr.bf16.mxu0 %v5500
        %7266 = vmatpush1.bf16.msra.mxu0 %v5499
        %7267 = vmatprep.subr.bf16.mxu0 %v5504
        %7268 = vmatpush1.bf16.msra.mxu0 %v5503
        %7269 = vmatprep.subr.bf16.mxu0 %v5508
        %7270 = vmatpush1.bf16.msra.mxu0 %v5507
        %7271 = vmatprep.subr.bf16.mxu0 %v5512
        %7272 = vmatpush1.bf16.msra.mxu0 %v5511
        %7273 = vmatprep.subr.bf16.mxu0 %v5516
        %7274 = vmatpush1.bf16.msra.mxu0 %v5515
        %7275 = vmatprep.subr.bf16.mxu0 %v5520
        %7276 = vmatpush1.bf16.msra.mxu0 %v5519
        %7277 = vmatprep.subr.bf16.mxu0 %v5524
        %7278 = vmatpush1.bf16.msra.mxu0 %v5523
        %7279 = vmatprep.subr.bf16.mxu0 %v5528
        %7280 = vmatpush1.bf16.msra.mxu0 %v5527
        %7281 = vmatprep.subr.bf16.mxu0 %v5532
        %7282 = vmatpush1.bf16.msra.mxu0 %v5531
        %7283 = vmatprep.subr.bf16.mxu0 %v5536
        %7284 = vmatpush1.bf16.msra.mxu0 %v5535
        %7285 = vmatprep.subr.bf16.mxu0 %v5540
        %7286 = vmatpush1.bf16.msra.mxu0 %v5539
        %7287 = vmatprep.subr.bf16.mxu0 %v5544
        %7288 = vmatpush1.bf16.msra.mxu0 %v5543
        %7289 = vmatprep.subr.bf16.mxu0 %v5548
        %7290 = vmatpush1.bf16.msra.mxu0 %v5547
        %7291 = vmatprep.mubr.bf16.mxu0 %v1603
        %7292 = vmatmul.mubr.bf16.gmra.mrb[0].mxu0 %v1589
        %v7293 = vpop.f32.mrb[0].mxu0
        %v7294 = vadd.f32 %v7253, %v7293
        %v7295 = vpop.f32.mrb[0].mxu0
        %v7296 = vadd.f32 %v7255, %v7295
        %v7297 = vpop.f32.mrb[0].mxu0
        %v7298 = vpop.f32.mrb[0].mxu0
        %7299 = vdwg.mxu0
        %7300 = vmatprep.subr.bf16.mxu0 %v5552
        %7301 = vmatpush1.bf16.msra.mxu0 %v5551
        %7302 = vmatprep.subr.bf16.mxu0 %v5556
        %7303 = vmatpush1.bf16.msra.mxu0 %v5555
        %7304 = vmatprep.subr.bf16.mxu0 %v5560
        %7305 = vmatpush1.bf16.msra.mxu0 %v5559
        %7306 = vmatprep.subr.bf16.mxu0 %v5564
        %7307 = vmatpush1.bf16.msra.mxu0 %v5563
        %7308 = vmatprep.subr.bf16.mxu0 %v5568
        %7309 = vmatpush1.bf16.msra.mxu0 %v5567
        %7310 = vmatprep.subr.bf16.mxu0 %v5572
        %7311 = vmatpush1.bf16.msra.mxu0 %v5571
        %7312 = vmatprep.subr.bf16.mxu0 %v5576
        %7313 = vmatpush1.bf16.msra.mxu0 %v5575
        %7314 = vmatprep.subr.bf16.mxu0 %v5580
        %7315 = vmatpush1.bf16.msra.mxu0 %v5579
        %7316 = vmatprep.subr.bf16.mxu0 %v5584
        %7317 = vmatpush1.bf16.msra.mxu0 %v5583
        %7318 = vmatprep.subr.bf16.mxu0 %v5588
        %7319 = vmatpush1.bf16.msra.mxu0 %v5587
        %7320 = vmatprep.subr.bf16.mxu0 %v5592
        %7321 = vmatpush1.bf16.msra.mxu0 %v5591
        %7322 = vmatprep.subr.bf16.mxu0 %v5596
        %7323 = vmatpush1.bf16.msra.mxu0 %v5595
        %7324 = vmatprep.subr.bf16.mxu0 %v5600
        %7325 = vmatpush1.bf16.msra.mxu0 %v5599
        %7326 = vmatprep.subr.bf16.mxu0 %v5604
        %7327 = vmatpush1.bf16.msra.mxu0 %v5603
        %7328 = vmatprep.subr.bf16.mxu0 %v5608
        %7329 = vmatpush1.bf16.msra.mxu0 %v5607
        %7330 = vmatprep.subr.bf16.mxu0 %v5612
        %7331 = vmatpush1.bf16.msra.mxu0 %v5611
        %7332 = vmatprep.mubr.bf16.mxu0 %v1613
        %7333 = vmatmul.mubr.bf16.gmra.mrb[0].mxu0 %v1611
        %v7334 = vpop.f32.mrb[0].mxu0
        %v7335 = vadd.f32 %v7294, %v7334
        %v7336 = vpop.f32.mrb[0].mxu0
        %v7337 = vadd.f32 %v7296, %v7336
        %v7338 = vpop.f32.mrb[0].mxu0
        %v7339 = vpop.f32.mrb[0].mxu0
        %7340 = vdwg.mxu0
        %7341 = vmatprep.subr.bf16.mxu0 %v5616
        %7342 = vmatpush1.bf16.msra.mxu0 %v5615
        %7343 = vmatprep.subr.bf16.mxu0 %v5620
        %7344 = vmatpush1.bf16.msra.mxu0 %v5619
        %7345 = vmatprep.subr.bf16.mxu0 %v5624
        %7346 = vmatpush1.bf16.msra.mxu0 %v5623
        %7347 = vmatprep.subr.bf16.mxu0 %v5628
        %7348 = vmatpush1.bf16.msra.mxu0 %v5627
        %7349 = vmatprep.subr.bf16.mxu0 %v5632
        %7350 = vmatpush1.bf16.msra.mxu0 %v5631
        %7351 = vmatprep.subr.bf16.mxu0 %v5636
        %7352 = vmatpush1.bf16.msra.mxu0 %v5635
        %7353 = vmatprep.subr.bf16.mxu0 %v5640
        %7354 = vmatpush1.bf16.msra.mxu0 %v5639
        %7355 = vmatprep.subr.bf16.mxu0 %v5644
        %7356 = vmatpush1.bf16.msra.mxu0 %v5643
        %7357 = vmatprep.subr.bf16.mxu0 %v5648
        %7358 = vmatpush1.bf16.msra.mxu0 %v5647
        %7359 = vmatprep.subr.bf16.mxu0 %v5652
        %7360 = vmatpush1.bf16.msra.mxu0 %v5651
        %7361 = vmatprep.subr.bf16.mxu0 %v5656
        %7362 = vmatpush1.bf16.msra.mxu0 %v5655
        %7363 = vmatprep.subr.bf16.mxu0 %v5660
        %7364 = vmatpush1.bf16.msra.mxu0 %v5659
        %7365 = vmatprep.subr.bf16.mxu0 %v5664
        %7366 = vmatpush1.bf16.msra.mxu0 %v5663
        %7367 = vmatprep.subr.bf16.mxu0 %v5668
        %7368 = vmatpush1.bf16.msra.mxu0 %v5667
        %7369 = vmatprep.subr.bf16.mxu0 %v5672
        %7370 = vmatpush1.bf16.msra.mxu0 %v5671
        %7371 = vmatprep.subr.bf16.mxu0 %v5676
        %7372 = vmatpush1.bf16.msra.mxu0 %v5675
        %7373 = vmatprep.mubr.bf16.mxu0 %v1610
        %7374 = vmatmul.mubr.bf16.gmra.mrb[0].mxu0 %v1596
        %v7375 = vpop.f32.mrb[0].mxu0
        %v7376 = vadd.f32 %v7335, %v7375
        %v7377 = vpop.f32.mrb[0].mxu0
        %v7378 = vadd.f32 %v7337, %v7377
        %v7379 = vpop.f32.mrb[0].mxu0
        %v7380 = vpop.f32.mrb[0].mxu0
        %7381 = vdwg.mxu0
        %7382 = vmatprep.subr.bf16.mxu0 %v5680
        %7383 = vmatpush1.bf16.msra.mxu0 %v5679
        %7384 = vmatprep.subr.bf16.mxu0 %v5684
        %7385 = vmatpush1.bf16.msra.mxu0 %v5683
        %7386 = vmatprep.subr.bf16.mxu0 %v5688
        %7387 = vmatpush1.bf16.msra.mxu0 %v5687
        %7388 = vmatprep.subr.bf16.mxu0 %v5692
        %7389 = vmatpush1.bf16.msra.mxu0 %v5691
        %7390 = vmatprep.subr.bf16.mxu0 %v5696
        %7391 = vmatpush1.bf16.msra.mxu0 %v5695
        %7392 = vmatprep.subr.bf16.mxu0 %v5700
        %7393 = vmatpush1.bf16.msra.mxu0 %v5699
        %7394 = vmatprep.subr.bf16.mxu0 %v5704
        %7395 = vmatpush1.bf16.msra.mxu0 %v5703
        %7396 = vmatprep.subr.bf16.mxu0 %v5708
        %7397 = vmatpush1.bf16.msra.mxu0 %v5707
        %7398 = vmatprep.subr.bf16.mxu0 %v5712
        %7399 = vmatpush1.bf16.msra.mxu0 %v5711
        %7400 = vmatprep.subr.bf16.mxu0 %v5716
        %7401 = vmatpush1.bf16.msra.mxu0 %v5715
        %7402 = vmatprep.subr.bf16.mxu0 %v5720
        %7403 = vmatpush1.bf16.msra.mxu0 %v5719
        %7404 = vmatprep.subr.bf16.mxu0 %v5724
        %7405 = vmatpush1.bf16.msra.mxu0 %v5723
        %7406 = vmatprep.subr.bf16.mxu0 %v5728
        %7407 = vmatpush1.bf16.msra.mxu0 %v5727
        %7408 = vmatprep.subr.bf16.mxu0 %v5732
        %7409 = vmatpush1.bf16.msra.mxu0 %v5731
        %7410 = vmatprep.subr.bf16.mxu0 %v5736
        %7411 = vmatpush1.bf16.msra.mxu0 %v5735
        %7412 = vmatprep.subr.bf16.mxu0 %v5740
        %7413 = vmatpush1.bf16.msra.mxu0 %v5739
        %7414 = vmatprep.mubr.bf16.mxu0 %v1614
        %7415 = vmatmul.mubr.bf16.gmra.mrb[0].mxu0 %v1612
        %v7416 = vpop.f32.mrb[0].mxu0
        %v7417 = vadd.f32 %v7376, %v7416
        %v7418 = vpop.f32.mrb[0].mxu0
        %v7419 = vadd.f32 %v7378, %v7418
        %v7420 = vpop.f32.mrb[0].mxu0
        %v7421 = vpop.f32.mrb[0].mxu0
        %7422 = vdwg.mxu0
        %7423 = vmatprep.subr.bf16.mxu0 %v4722
        %7424 = vmatpush1.bf16.msra.mxu0 %v4721
        %7425 = vmatprep.subr.bf16.mxu0 %v4726
        %7426 = vmatpush1.bf16.msra.mxu0 %v4725
        %7427 = vmatprep.subr.bf16.mxu0 %v4730
        %7428 = vmatpush1.bf16.msra.mxu0 %v4729
        %7429 = vmatprep.subr.bf16.mxu0 %v4734
        %7430 = vmatpush1.bf16.msra.mxu0 %v4733
        %7431 = vmatprep.subr.bf16.mxu0 %v4738
        %7432 = vmatpush1.bf16.msra.mxu0 %v4737
        %7433 = vmatprep.subr.bf16.mxu0 %v4742
        %7434 = vmatpush1.bf16.msra.mxu0 %v4741
        %7435 = vmatprep.subr.bf16.mxu0 %v4746
        %7436 = vmatpush1.bf16.msra.mxu0 %v4745
        %7437 = vmatprep.subr.bf16.mxu0 %v4750
        %7438 = vmatpush1.bf16.msra.mxu0 %v4749
        %7439 = vmatprep.subr.bf16.mxu0 %v4754
        %7440 = vmatpush1.bf16.msra.mxu0 %v4753
        %7441 = vmatprep.subr.bf16.mxu0 %v4758
        %7442 = vmatpush1.bf16.msra.mxu0 %v4757
        %7443 = vmatprep.subr.bf16.mxu0 %v4762
        %7444 = vmatpush1.bf16.msra.mxu0 %v4761
        %7445 = vmatprep.subr.bf16.mxu0 %v4766
        %7446 = vmatpush1.bf16.msra.mxu0 %v4765
        %7447 = vmatprep.subr.bf16.mxu0 %v4770
        %7448 = vmatpush1.bf16.msra.mxu0 %v4769
        %7449 = vmatprep.subr.bf16.mxu0 %v4774
        %7450 = vmatpush1.bf16.msra.mxu0 %v4773
        %7451 = vmatprep.subr.bf16.mxu0 %v4778
        %7452 = vmatpush1.bf16.msra.mxu0 %v4777
        %7453 = vmatprep.subr.bf16.mxu0 %v4782
        %7454 = vmatpush1.bf16.msra.mxu0 %v4781
        %7455 = vmatprep.mubr.bf16.mxu0 %v1456
        %7456 = vmatmul.mubr.bf16.gmra.mrb[0].mxu0 %v1442
        %v7457 = vpop.f32.mrb[0].mxu0
        %v7458 = vadd.f32 %v1406, %v7457
        %v7459 = vpop.f32.mrb[0].mxu0
        %v7460 = vadd.f32 %v1410, %v7459
        %v7461 = vpop.f32.mrb[0].mxu0
        %v7462 = vpop.f32.mrb[0].mxu0
        %7463 = vdwg.mxu0
        %7464 = vmatprep.subr.bf16.mxu0 %v4786
        %7465 = vmatpush1.bf16.msra.mxu0 %v4785
        %7466 = vmatprep.subr.bf16.mxu0 %v4790
        %7467 = vmatpush1.bf16.msra.mxu0 %v4789
        %7468 = vmatprep.subr.bf16.mxu0 %v4794
        %7469 = vmatpush1.bf16.msra.mxu0 %v4793
        %7470 = vmatprep.subr.bf16.mxu0 %v4798
        %7471 = vmatpush1.bf16.msra.mxu0 %v4797
        %7472 = vmatprep.subr.bf16.mxu0 %v4802
        %7473 = vmatpush1.bf16.msra.mxu0 %v4801
        %7474 = vmatprep.subr.bf16.mxu0 %v4806
        %7475 = vmatpush1.bf16.msra.mxu0 %v4805
        %7476 = vmatprep.subr.bf16.mxu0 %v4810
        %7477 = vmatpush1.bf16.msra.mxu0 %v4809
        %7478 = vmatprep.subr.bf16.mxu0 %v4814
        %7479 = vmatpush1.bf16.msra.mxu0 %v4813
        %7480 = vmatprep.subr.bf16.mxu0 %v4818
        %7481 = vmatpush1.bf16.msra.mxu0 %v4817
        %7482 = vmatprep.subr.bf16.mxu0 %v4822
        %7483 = vmatpush1.bf16.msra.mxu0 %v4821
        %7484 = vmatprep.subr.bf16.mxu0 %v4826
        %7485 = vmatpush1.bf16.msra.mxu0 %v4825
        %7486 = vmatprep.subr.bf16.mxu0 %v4830
        %7487 = vmatpush1.bf16.msra.mxu0 %v4829
        %7488 = vmatprep.subr.bf16.mxu0 %v4834
        %7489 = vmatpush1.bf16.msra.mxu0 %v4833
        %7490 = vmatprep.subr.bf16.mxu0 %v4838
        %7491 = vmatpush1.bf16.msra.mxu0 %v4837
        %7492 = vmatprep.subr.bf16.mxu0 %v4842
        %7493 = vmatpush1.bf16.msra.mxu0 %v4841
        %7494 = vmatprep.subr.bf16.mxu0 %v4846
        %7495 = vmatpush1.bf16.msra.mxu0 %v4845
        %7496 = vmatprep.mubr.bf16.mxu0 %v1466
        %7497 = vmatmul.mubr.bf16.gmra.mrb[0].mxu0 %v1464
        %v7498 = vpop.f32.mrb[0].mxu0
        %v7499 = vadd.f32 %v7458, %v7498
        %v7500 = vpop.f32.mrb[0].mxu0
        %v7501 = vadd.f32 %v7460, %v7500
        %v7502 = vpop.f32.mrb[0].mxu0
        %v7503 = vpop.f32.mrb[0].mxu0
        %7504 = vdwg.mxu0
        %7505 = vmatprep.subr.bf16.mxu0 %v4850
        %7506 = vmatpush1.bf16.msra.mxu0 %v4849
        %7507 = vmatprep.subr.bf16.mxu0 %v4854
        %7508 = vmatpush1.bf16.msra.mxu0 %v4853
        %7509 = vmatprep.subr.bf16.mxu0 %v4858
        %7510 = vmatpush1.bf16.msra.mxu0 %v4857
        %7511 = vmatprep.subr.bf16.mxu0 %v4862
        %7512 = vmatpush1.bf16.msra.mxu0 %v4861
        %7513 = vmatprep.subr.bf16.mxu0 %v4866
        %7514 = vmatpush1.bf16.msra.mxu0 %v4865
        %7515 = vmatprep.subr.bf16.mxu0 %v4870
        %7516 = vmatpush1.bf16.msra.mxu0 %v4869
        %7517 = vmatprep.subr.bf16.mxu0 %v4874
        %7518 = vmatpush1.bf16.msra.mxu0 %v4873
        %7519 = vmatprep.subr.bf16.mxu0 %v4878
        %7520 = vmatpush1.bf16.msra.mxu0 %v4877
        %7521 = vmatprep.subr.bf16.mxu0 %v4882
        %7522 = vmatpush1.bf16.msra.mxu0 %v4881
        %7523 = vmatprep.subr.bf16.mxu0 %v4886
        %7524 = vmatpush1.bf16.msra.mxu0 %v4885
        %7525 = vmatprep.subr.bf16.mxu0 %v4890
        %7526 = vmatpush1.bf16.msra.mxu0 %v4889
        %7527 = vmatprep.subr.bf16.mxu0 %v4894
        %7528 = vmatpush1.bf16.msra.mxu0 %v4893
        %7529 = vmatprep.subr.bf16.mxu0 %v4898
        %7530 = vmatpush1.bf16.msra.mxu0 %v4897
        %7531 = vmatprep.subr.bf16.mxu0 %v4902
        %7532 = vmatpush1.bf16.msra.mxu0 %v4901
        %7533 = vmatprep.subr.bf16.mxu0 %v4906
        %7534 = vmatpush1.bf16.msra.mxu0 %v4905
        %7535 = vmatprep.subr.bf16.mxu0 %v4910
        %7536 = vmatpush1.bf16.msra.mxu0 %v4909
        %7537 = vmatprep.mubr.bf16.mxu0 %v1463
        %7538 = vmatmul.mubr.bf16.gmra.mrb[0].mxu0 %v1449
        %v7539 = vpop.f32.mrb[0].mxu0
        %v7540 = vadd.f32 %v7499, %v7539
        %v7541 = vpop.f32.mrb[0].mxu0
        %v7542 = vadd.f32 %v7501, %v7541
        %v7543 = vpop.f32.mrb[0].mxu0
        %v7544 = vpop.f32.mrb[0].mxu0
        %7545 = vdwg.mxu0
        %7546 = vmatprep.subr.bf16.mxu0 %v4914
        %7547 = vmatpush1.bf16.msra.mxu0 %v4913
        %7548 = vmatprep.subr.bf16.mxu0 %v4918
        %7549 = vmatpush1.bf16.msra.mxu0 %v4917
        %7550 = vmatprep.subr.bf16.mxu0 %v4922
        %7551 = vmatpush1.bf16.msra.mxu0 %v4921
        %7552 = vmatprep.subr.bf16.mxu0 %v4926
        %7553 = vmatpush1.bf16.msra.mxu0 %v4925
        %7554 = vmatprep.subr.bf16.mxu0 %v4930
        %7555 = vmatpush1.bf16.msra.mxu0 %v4929
        %7556 = vmatprep.subr.bf16.mxu0 %v4934
        %7557 = vmatpush1.bf16.msra.mxu0 %v4933
        %7558 = vmatprep.subr.bf16.mxu0 %v4938
        %7559 = vmatpush1.bf16.msra.mxu0 %v4937
        %7560 = vmatprep.subr.bf16.mxu0 %v4942
        %7561 = vmatpush1.bf16.msra.mxu0 %v4941
        %7562 = vmatprep.subr.bf16.mxu0 %v4946
        %7563 = vmatpush1.bf16.msra.mxu0 %v4945
        %7564 = vmatprep.subr.bf16.mxu0 %v4950
        %7565 = vmatpush1.bf16.msra.mxu0 %v4949
        %7566 = vmatprep.subr.bf16.mxu0 %v4954
        %7567 = vmatpush1.bf16.msra.mxu0 %v4953
        %7568 = vmatprep.subr.bf16.mxu0 %v4958
        %7569 = vmatpush1.bf16.msra.mxu0 %v4957
        %7570 = vmatprep.subr.bf16.mxu0 %v4962
        %7571 = vmatpush1.bf16.msra.mxu0 %v4961
        %7572 = vmatprep.subr.bf16.mxu0 %v4966
        %7573 = vmatpush1.bf16.msra.mxu0 %v4965
        %7574 = vmatprep.subr.bf16.mxu0 %v4970
        %7575 = vmatpush1.bf16.msra.mxu0 %v4969
        %7576 = vmatprep.subr.bf16.mxu0 %v4974
        %7577 = vmatpush1.bf16.msra.mxu0 %v4973
        %7578 = vmatprep.mubr.bf16.mxu0 %v1467
        %7579 = vmatmul.mubr.bf16.gmra.mrb[0].mxu0 %v1465
        %v7580 = vpop.f32.mrb[0].mxu0
        %v7581 = vadd.f32 %v7540, %v7580
        %v7582 = vpop.f32.mrb[0].mxu0
        %v7583 = vadd.f32 %v7542, %v7582
        %v7584 = vpop.f32.mrb[0].mxu0
        %v7585 = vpop.f32.mrb[0].mxu0
        %7586 = vdwg.mxu0
        %7587 = vmatprep.subr.bf16.mxu0 %v4978
        %7588 = vmatpush1.bf16.msra.mxu0 %v4977
        %7589 = vmatprep.subr.bf16.mxu0 %v4982
        %7590 = vmatpush1.bf16.msra.mxu0 %v4981
        %7591 = vmatprep.subr.bf16.mxu0 %v4986
        %7592 = vmatpush1.bf16.msra.mxu0 %v4985
        %7593 = vmatprep.subr.bf16.mxu0 %v4990
        %7594 = vmatpush1.bf16.msra.mxu0 %v4989
        %7595 = vmatprep.subr.bf16.mxu0 %v4994
        %7596 = vmatpush1.bf16.msra.mxu0 %v4993
        %7597 = vmatprep.subr.bf16.mxu0 %v4998
        %7598 = vmatpush1.bf16.msra.mxu0 %v4997
        %7599 = vmatprep.subr.bf16.mxu0 %v5002
        %7600 = vmatpush1.bf16.msra.mxu0 %v5001
        %7601 = vmatprep.subr.bf16.mxu0 %v5006
        %7602 = vmatpush1.bf16.msra.mxu0 %v5005
        %7603 = vmatprep.subr.bf16.mxu0 %v5010
        %7604 = vmatpush1.bf16.msra.mxu0 %v5009
        %7605 = vmatprep.subr.bf16.mxu0 %v5014
        %7606 = vmatpush1.bf16.msra.mxu0 %v5013
        %7607 = vmatprep.subr.bf16.mxu0 %v5018
        %7608 = vmatpush1.bf16.msra.mxu0 %v5017
        %7609 = vmatprep.subr.bf16.mxu0 %v5022
        %7610 = vmatpush1.bf16.msra.mxu0 %v5021
        %7611 = vmatprep.subr.bf16.mxu0 %v5026
        %7612 = vmatpush1.bf16.msra.mxu0 %v5025
        %7613 = vmatprep.subr.bf16.mxu0 %v5030
        %7614 = vmatpush1.bf16.msra.mxu0 %v5029
        %7615 = vmatprep.subr.bf16.mxu0 %v5034
        %7616 = vmatpush1.bf16.msra.mxu0 %v5033
        %7617 = vmatprep.subr.bf16.mxu0 %v5038
        %7618 = vmatpush1.bf16.msra.mxu0 %v5037
        %7619 = vmatprep.mubr.bf16.mxu0 %v1505
        %7620 = vmatmul.mubr.bf16.gmra.mrb[0].mxu0 %v1491
        %v7621 = vpop.f32.mrb[0].mxu0
        %v7622 = vadd.f32 %v7581, %v7621
        %v7623 = vpop.f32.mrb[0].mxu0
        %v7624 = vadd.f32 %v7583, %v7623
        %v7625 = vpop.f32.mrb[0].mxu0
        %v7626 = vpop.f32.mrb[0].mxu0
        %7627 = vdwg.mxu0
        %7628 = vmatprep.subr.bf16.mxu0 %v5042
        %7629 = vmatpush1.bf16.msra.mxu0 %v5041
        %7630 = vmatprep.subr.bf16.mxu0 %v5046
        %7631 = vmatpush1.bf16.msra.mxu0 %v5045
        %7632 = vmatprep.subr.bf16.mxu0 %v5050
        %7633 = vmatpush1.bf16.msra.mxu0 %v5049
        %7634 = vmatprep.subr.bf16.mxu0 %v5054
        %7635 = vmatpush1.bf16.msra.mxu0 %v5053
        %7636 = vmatprep.subr.bf16.mxu0 %v5058
        %7637 = vmatpush1.bf16.msra.mxu0 %v5057
        %7638 = vmatprep.subr.bf16.mxu0 %v5062
        %7639 = vmatpush1.bf16.msra.mxu0 %v5061
        %7640 = vmatprep.subr.bf16.mxu0 %v5066
        %7641 = vmatpush1.bf16.msra.mxu0 %v5065
        %7642 = vmatprep.subr.bf16.mxu0 %v5070
        %7643 = vmatpush1.bf16.msra.mxu0 %v5069
        %7644 = vmatprep.subr.bf16.mxu0 %v5074
        %7645 = vmatpush1.bf16.msra.mxu0 %v5073
        %7646 = vmatprep.subr.bf16.mxu0 %v5078
        %7647 = vmatpush1.bf16.msra.mxu0 %v5077
        %7648 = vmatprep.subr.bf16.mxu0 %v5082
        %7649 = vmatpush1.bf16.msra.mxu0 %v5081
        %7650 = vmatprep.subr.bf16.mxu0 %v5086
        %7651 = vmatpush1.bf16.msra.mxu0 %v5085
        %7652 = vmatprep.subr.bf16.mxu0 %v5090
        %7653 = vmatpush1.bf16.msra.mxu0 %v5089
        %7654 = vmatprep.subr.bf16.mxu0 %v5094
        %7655 = vmatpush1.bf16.msra.mxu0 %v5093
        %7656 = vmatprep.subr.bf16.mxu0 %v5098
        %7657 = vmatpush1.bf16.msra.mxu0 %v5097
        %7658 = vmatprep.subr.bf16.mxu0 %v5102
        %7659 = vmatpush1.bf16.msra.mxu0 %v5101
        %7660 = vmatprep.mubr.bf16.mxu0 %v1515
        %7661 = vmatmul.mubr.bf16.gmra.mrb[0].mxu0 %v1513
        %v7662 = vpop.f32.mrb[0].mxu0
        %v7663 = vadd.f32 %v7622, %v7662
        %v7664 = vpop.f32.mrb[0].mxu0
        %v7665 = vadd.f32 %v7624, %v7664
        %v7666 = vpop.f32.mrb[0].mxu0
        %v7667 = vpop.f32.mrb[0].mxu0
        %7668 = vdwg.mxu0
        %7669 = vmatprep.subr.bf16.mxu0 %v5106
        %7670 = vmatpush1.bf16.msra.mxu0 %v5105
        %7671 = vmatprep.subr.bf16.mxu0 %v5110
        %7672 = vmatpush1.bf16.msra.mxu0 %v5109
        %7673 = vmatprep.subr.bf16.mxu0 %v5114
        %7674 = vmatpush1.bf16.msra.mxu0 %v5113
        %7675 = vmatprep.subr.bf16.mxu0 %v5118
        %7676 = vmatpush1.bf16.msra.mxu0 %v5117
        %7677 = vmatprep.subr.bf16.mxu0 %v5122
        %7678 = vmatpush1.bf16.msra.mxu0 %v5121
        %7679 = vmatprep.subr.bf16.mxu0 %v5126
        %7680 = vmatpush1.bf16.msra.mxu0 %v5125
        %7681 = vmatprep.subr.bf16.mxu0 %v5130
        %7682 = vmatpush1.bf16.msra.mxu0 %v5129
        %7683 = vmatprep.subr.bf16.mxu0 %v5134
        %7684 = vmatpush1.bf16.msra.mxu0 %v5133
        %7685 = vmatprep.subr.bf16.mxu0 %v5138
        %7686 = vmatpush1.bf16.msra.mxu0 %v5137
        %7687 = vmatprep.subr.bf16.mxu0 %v5142
        %7688 = vmatpush1.bf16.msra.mxu0 %v5141
        %7689 = vmatprep.subr.bf16.mxu0 %v5146
        %7690 = vmatpush1.bf16.msra.mxu0 %v5145
        %7691 = vmatprep.subr.bf16.mxu0 %v5150
        %7692 = vmatpush1.bf16.msra.mxu0 %v5149
        %7693 = vmatprep.subr.bf16.mxu0 %v5154
        %7694 = vmatpush1.bf16.msra.mxu0 %v5153
        %7695 = vmatprep.subr.bf16.mxu0 %v5158
        %7696 = vmatpush1.bf16.msra.mxu0 %v5157
        %7697 = vmatprep.subr.bf16.mxu0 %v5162
        %7698 = vmatpush1.bf16.msra.mxu0 %v5161
        %7699 = vmatprep.subr.bf16.mxu0 %v5166
        %7700 = vmatpush1.bf16.msra.mxu0 %v5165
        %7701 = vmatprep.mubr.bf16.mxu0 %v1512
        %7702 = vmatmul.mubr.bf16.gmra.mrb[0].mxu0 %v1498
        %v7703 = vpop.f32.mrb[0].mxu0
        %v7704 = vadd.f32 %v7663, %v7703
        %v7705 = vpop.f32.mrb[0].mxu0
        %v7706 = vadd.f32 %v7665, %v7705
        %v7707 = vpop.f32.mrb[0].mxu0
        %v7708 = vpop.f32.mrb[0].mxu0
        %7709 = vdwg.mxu0
        %7710 = vmatprep.subr.bf16.mxu0 %v5170
        %7711 = vmatpush1.bf16.msra.mxu0 %v5169
        %7712 = vmatprep.subr.bf16.mxu0 %v5174
        %7713 = vmatpush1.bf16.msra.mxu0 %v5173
        %7714 = vmatprep.subr.bf16.mxu0 %v5178
        %7715 = vmatpush1.bf16.msra.mxu0 %v5177
        %7716 = vmatprep.subr.bf16.mxu0 %v5182
        %7717 = vmatpush1.bf16.msra.mxu0 %v5181
        %7718 = vmatprep.subr.bf16.mxu0 %v5186
        %7719 = vmatpush1.bf16.msra.mxu0 %v5185
        %7720 = vmatprep.subr.bf16.mxu0 %v5190
        %7721 = vmatpush1.bf16.msra.mxu0 %v5189
        %7722 = vmatprep.subr.bf16.mxu0 %v5194
        %7723 = vmatpush1.bf16.msra.mxu0 %v5193
        %7724 = vmatprep.subr.bf16.mxu0 %v5198
        %7725 = vmatpush1.bf16.msra.mxu0 %v5197
        %7726 = vmatprep.subr.bf16.mxu0 %v5202
        %7727 = vmatpush1.bf16.msra.mxu0 %v5201
        %7728 = vmatprep.subr.bf16.mxu0 %v5206
        %7729 = vmatpush1.bf16.msra.mxu0 %v5205
        %7730 = vmatprep.subr.bf16.mxu0 %v5210
        %7731 = vmatpush1.bf16.msra.mxu0 %v5209
        %7732 = vmatprep.subr.bf16.mxu0 %v5214
        %7733 = vmatpush1.bf16.msra.mxu0 %v5213
        %7734 = vmatprep.subr.bf16.mxu0 %v5218
        %7735 = vmatpush1.bf16.msra.mxu0 %v5217
        %7736 = vmatprep.subr.bf16.mxu0 %v5222
        %7737 = vmatpush1.bf16.msra.mxu0 %v5221
        %7738 = vmatprep.subr.bf16.mxu0 %v5226
        %7739 = vmatpush1.bf16.msra.mxu0 %v5225
        %7740 = vmatprep.subr.bf16.mxu0 %v5230
        %7741 = vmatpush1.bf16.msra.mxu0 %v5229
        %7742 = vmatprep.mubr.bf16.mxu0 %v1516
        %7743 = vmatmul.mubr.bf16.gmra.mrb[0].mxu0 %v1514
        %v7744 = vpop.f32.mrb[0].mxu0
        %v7745 = vadd.f32 %v7704, %v7744
        %v7746 = vpop.f32.mrb[0].mxu0
        %v7747 = vadd.f32 %v7706, %v7746
        %v7748 = vpop.f32.mrb[0].mxu0
        %v7749 = vpop.f32.mrb[0].mxu0
        %7750 = vdwg.mxu0
        %7751 = vmatprep.subr.bf16.mxu0 %v5234
        %7752 = vmatpush1.bf16.msra.mxu0 %v5233
        %7753 = vmatprep.subr.bf16.mxu0 %v5238
        %7754 = vmatpush1.bf16.msra.mxu0 %v5237
        %7755 = vmatprep.subr.bf16.mxu0 %v5242
        %7756 = vmatpush1.bf16.msra.mxu0 %v5241
        %7757 = vmatprep.subr.bf16.mxu0 %v5246
        %7758 = vmatpush1.bf16.msra.mxu0 %v5245
        %7759 = vmatprep.subr.bf16.mxu0 %v5250
        %7760 = vmatpush1.bf16.msra.mxu0 %v5249
        %7761 = vmatprep.subr.bf16.mxu0 %v5254
        %7762 = vmatpush1.bf16.msra.mxu0 %v5253
        %7763 = vmatprep.subr.bf16.mxu0 %v5258
        %7764 = vmatpush1.bf16.msra.mxu0 %v5257
        %7765 = vmatprep.subr.bf16.mxu0 %v5262
        %7766 = vmatpush1.bf16.msra.mxu0 %v5261
        %7767 = vmatprep.subr.bf16.mxu0 %v5266
        %7768 = vmatpush1.bf16.msra.mxu0 %v5265
        %7769 = vmatprep.subr.bf16.mxu0 %v5270
        %7770 = vmatpush1.bf16.msra.mxu0 %v5269
        %7771 = vmatprep.subr.bf16.mxu0 %v5274
        %7772 = vmatpush1.bf16.msra.mxu0 %v5273
        %7773 = vmatprep.subr.bf16.mxu0 %v5278
        %7774 = vmatpush1.bf16.msra.mxu0 %v5277
        %7775 = vmatprep.subr.bf16.mxu0 %v5282
        %7776 = vmatpush1.bf16.msra.mxu0 %v5281
        %7777 = vmatprep.subr.bf16.mxu0 %v5286
        %7778 = vmatpush1.bf16.msra.mxu0 %v5285
        %7779 = vmatprep.subr.bf16.mxu0 %v5290
        %7780 = vmatpush1.bf16.msra.mxu0 %v5289
        %7781 = vmatprep.subr.bf16.mxu0 %v5294
        %7782 = vmatpush1.bf16.msra.mxu0 %v5293
        %7783 = vmatprep.mubr.bf16.mxu0 %v1554
        %7784 = vmatmul.mubr.bf16.gmra.mrb[0].mxu0 %v1540
        %v7785 = vpop.f32.mrb[0].mxu0
        %v7786 = vadd.f32 %v7745, %v7785
        %v7787 = vpop.f32.mrb[0].mxu0
        %v7788 = vadd.f32 %v7747, %v7787
        %v7789 = vpop.f32.mrb[0].mxu0
        %v7790 = vpop.f32.mrb[0].mxu0
        %7791 = vdwg.mxu0
        %7792 = vmatprep.subr.bf16.mxu0 %v5298
        %7793 = vmatpush1.bf16.msra.mxu0 %v5297
        %7794 = vmatprep.subr.bf16.mxu0 %v5302
        %7795 = vmatpush1.bf16.msra.mxu0 %v5301
        %7796 = vmatprep.subr.bf16.mxu0 %v5306
        %7797 = vmatpush1.bf16.msra.mxu0 %v5305
        %7798 = vmatprep.subr.bf16.mxu0 %v5310
        %7799 = vmatpush1.bf16.msra.mxu0 %v5309
        %7800 = vmatprep.subr.bf16.mxu0 %v5314
        %7801 = vmatpush1.bf16.msra.mxu0 %v5313
        %7802 = vmatprep.subr.bf16.mxu0 %v5318
        %7803 = vmatpush1.bf16.msra.mxu0 %v5317
        %7804 = vmatprep.subr.bf16.mxu0 %v5322
        %7805 = vmatpush1.bf16.msra.mxu0 %v5321
        %7806 = vmatprep.subr.bf16.mxu0 %v5326
        %7807 = vmatpush1.bf16.msra.mxu0 %v5325
        %7808 = vmatprep.subr.bf16.mxu0 %v5330
        %7809 = vmatpush1.bf16.msra.mxu0 %v5329
        %7810 = vmatprep.subr.bf16.mxu0 %v5334
        %7811 = vmatpush1.bf16.msra.mxu0 %v5333
        %7812 = vmatprep.subr.bf16.mxu0 %v5338
        %7813 = vmatpush1.bf16.msra.mxu0 %v5337
        %7814 = vmatprep.subr.bf16.mxu0 %v5342
        %7815 = vmatpush1.bf16.msra.mxu0 %v5341
        %7816 = vmatprep.subr.bf16.mxu0 %v5346
        %7817 = vmatpush1.bf16.msra.mxu0 %v5345
        %7818 = vmatprep.subr.bf16.mxu0 %v5350
        %7819 = vmatpush1.bf16.msra.mxu0 %v5349
        %7820 = vmatprep.subr.bf16.mxu0 %v5354
        %7821 = vmatpush1.bf16.msra.mxu0 %v5353
        %7822 = vmatprep.subr.bf16.mxu0 %v5358
        %7823 = vmatpush1.bf16.msra.mxu0 %v5357
        %7824 = vmatprep.mubr.bf16.mxu0 %v1564
        %7825 = vmatmul.mubr.bf16.gmra.mrb[0].mxu0 %v1562
        %v7826 = vpop.f32.mrb[0].mxu0
        %v7827 = vadd.f32 %v7786, %v7826
        %v7828 = vpop.f32.mrb[0].mxu0
        %v7829 = vadd.f32 %v7788, %v7828
        %v7830 = vpop.f32.mrb[0].mxu0
        %v7831 = vpop.f32.mrb[0].mxu0
        %7832 = vdwg.mxu0
        %7833 = vmatprep.subr.bf16.mxu0 %v5362
        %7834 = vmatpush1.bf16.msra.mxu0 %v5361
        %7835 = vmatprep.subr.bf16.mxu0 %v5366
        %7836 = vmatpush1.bf16.msra.mxu0 %v5365
        %7837 = vmatprep.subr.bf16.mxu0 %v5370
        %7838 = vmatpush1.bf16.msra.mxu0 %v5369
        %7839 = vmatprep.subr.bf16.mxu0 %v5374
        %7840 = vmatpush1.bf16.msra.mxu0 %v5373
        %7841 = vmatprep.subr.bf16.mxu0 %v5378
        %7842 = vmatpush1.bf16.msra.mxu0 %v5377
        %7843 = vmatprep.subr.bf16.mxu0 %v5382
        %7844 = vmatpush1.bf16.msra.mxu0 %v5381
        %7845 = vmatprep.subr.bf16.mxu0 %v5386
        %7846 = vmatpush1.bf16.msra.mxu0 %v5385
        %7847 = vmatprep.subr.bf16.mxu0 %v5390
        %7848 = vmatpush1.bf16.msra.mxu0 %v5389
        %7849 = vmatprep.subr.bf16.mxu0 %v5394
        %7850 = vmatpush1.bf16.msra.mxu0 %v5393
        %7851 = vmatprep.subr.bf16.mxu0 %v5398
        %7852 = vmatpush1.bf16.msra.mxu0 %v5397
        %7853 = vmatprep.subr.bf16.mxu0 %v5402
        %7854 = vmatpush1.bf16.msra.mxu0 %v5401
        %7855 = vmatprep.subr.bf16.mxu0 %v5406
        %7856 = vmatpush1.bf16.msra.mxu0 %v5405
        %7857 = vmatprep.subr.bf16.mxu0 %v5410
        %7858 = vmatpush1.bf16.msra.mxu0 %v5409
        %7859 = vmatprep.subr.bf16.mxu0 %v5414
        %7860 = vmatpush1.bf16.msra.mxu0 %v5413
        %7861 = vmatprep.subr.bf16.mxu0 %v5418
        %7862 = vmatpush1.bf16.msra.mxu0 %v5417
        %7863 = vmatprep.subr.bf16.mxu0 %v5422
        %7864 = vmatpush1.bf16.msra.mxu0 %v5421
        %7865 = vmatprep.mubr.bf16.mxu0 %v1561
        %7866 = vmatmul.mubr.bf16.gmra.mrb[0].mxu0 %v1547
        %v7867 = vpop.f32.mrb[0].mxu0
        %v7868 = vadd.f32 %v7827, %v7867
        %v7869 = vpop.f32.mrb[0].mxu0
        %v7870 = vadd.f32 %v7829, %v7869
        %v7871 = vpop.f32.mrb[0].mxu0
        %v7872 = vpop.f32.mrb[0].mxu0
        %7873 = vdwg.mxu0
        %7874 = vmatprep.subr.bf16.mxu0 %v5426
        %7875 = vmatpush1.bf16.msra.mxu0 %v5425
        %7876 = vmatprep.subr.bf16.mxu0 %v5430
        %7877 = vmatpush1.bf16.msra.mxu0 %v5429
        %7878 = vmatprep.subr.bf16.mxu0 %v5434
        %7879 = vmatpush1.bf16.msra.mxu0 %v5433
        %7880 = vmatprep.subr.bf16.mxu0 %v5438
        %7881 = vmatpush1.bf16.msra.mxu0 %v5437
        %7882 = vmatprep.subr.bf16.mxu0 %v5442
        %7883 = vmatpush1.bf16.msra.mxu0 %v5441
        %7884 = vmatprep.subr.bf16.mxu0 %v5446
        %7885 = vmatpush1.bf16.msra.mxu0 %v5445
        %7886 = vmatprep.subr.bf16.mxu0 %v5450
        %7887 = vmatpush1.bf16.msra.mxu0 %v5449
        %7888 = vmatprep.subr.bf16.mxu0 %v5454
        %7889 = vmatpush1.bf16.msra.mxu0 %v5453
        %7890 = vmatprep.subr.bf16.mxu0 %v5458
        %7891 = vmatpush1.bf16.msra.mxu0 %v5457
        %7892 = vmatprep.subr.bf16.mxu0 %v5462
        %7893 = vmatpush1.bf16.msra.mxu0 %v5461
        %7894 = vmatprep.subr.bf16.mxu0 %v5466
        %7895 = vmatpush1.bf16.msra.mxu0 %v5465
        %7896 = vmatprep.subr.bf16.mxu0 %v5470
        %7897 = vmatpush1.bf16.msra.mxu0 %v5469
        %7898 = vmatprep.subr.bf16.mxu0 %v5474
        %7899 = vmatpush1.bf16.msra.mxu0 %v5473
        %7900 = vmatprep.subr.bf16.mxu0 %v5478
        %7901 = vmatpush1.bf16.msra.mxu0 %v5477
        %7902 = vmatprep.subr.bf16.mxu0 %v5482
        %7903 = vmatpush1.bf16.msra.mxu0 %v5481
        %7904 = vmatprep.subr.bf16.mxu0 %v5486
        %7905 = vmatpush1.bf16.msra.mxu0 %v5485
        %7906 = vmatprep.mubr.bf16.mxu0 %v1565
        %7907 = vmatmul.mubr.bf16.gmra.mrb[0].mxu0 %v1563
        %v7908 = vpop.f32.mrb[0].mxu0
        %v7909 = vadd.f32 %v7868, %v7908
        %v7910 = vpop.f32.mrb[0].mxu0
        %v7911 = vadd.f32 %v7870, %v7910
        %v7912 = vpop.f32.mrb[0].mxu0
        %v7913 = vpop.f32.mrb[0].mxu0
        %7914 = vdwg.mxu0
        %7915 = vmatprep.subr.bf16.mxu0 %v5490
        %7916 = vmatpush1.bf16.msra.mxu0 %v5489
        %7917 = vmatprep.subr.bf16.mxu0 %v5494
        %7918 = vmatpush1.bf16.msra.mxu0 %v5493
        %7919 = vmatprep.subr.bf16.mxu0 %v5498
        %7920 = vmatpush1.bf16.msra.mxu0 %v5497
        %7921 = vmatprep.subr.bf16.mxu0 %v5502
        %7922 = vmatpush1.bf16.msra.mxu0 %v5501
        %7923 = vmatprep.subr.bf16.mxu0 %v5506
        %7924 = vmatpush1.bf16.msra.mxu0 %v5505
        %7925 = vmatprep.subr.bf16.mxu0 %v5510
        %7926 = vmatpush1.bf16.msra.mxu0 %v5509
        %7927 = vmatprep.subr.bf16.mxu0 %v5514
        %7928 = vmatpush1.bf16.msra.mxu0 %v5513
        %7929 = vmatprep.subr.bf16.mxu0 %v5518
        %7930 = vmatpush1.bf16.msra.mxu0 %v5517
        %7931 = vmatprep.subr.bf16.mxu0 %v5522
        %7932 = vmatpush1.bf16.msra.mxu0 %v5521
        %7933 = vmatprep.subr.bf16.mxu0 %v5526
        %7934 = vmatpush1.bf16.msra.mxu0 %v5525
        %7935 = vmatprep.subr.bf16.mxu0 %v5530
        %7936 = vmatpush1.bf16.msra.mxu0 %v5529
        %7937 = vmatprep.subr.bf16.mxu0 %v5534
        %7938 = vmatpush1.bf16.msra.mxu0 %v5533
        %7939 = vmatprep.subr.bf16.mxu0 %v5538
        %7940 = vmatpush1.bf16.msra.mxu0 %v5537
        %7941 = vmatprep.subr.bf16.mxu0 %v5542
        %7942 = vmatpush1.bf16.msra.mxu0 %v5541
        %7943 = vmatprep.subr.bf16.mxu0 %v5546
        %7944 = vmatpush1.bf16.msra.mxu0 %v5545
        %7945 = vmatprep.subr.bf16.mxu0 %v5550
        %7946 = vmatpush1.bf16.msra.mxu0 %v5549
        %7947 = vmatprep.mubr.bf16.mxu0 %v1603
        %7948 = vmatmul.mubr.bf16.gmra.mrb[0].mxu0 %v1589
        %v7949 = vpop.f32.mrb[0].mxu0
        %v7950 = vadd.f32 %v7909, %v7949
        %v7951 = vpop.f32.mrb[0].mxu0
        %v7952 = vadd.f32 %v7911, %v7951
        %v7953 = vpop.f32.mrb[0].mxu0
        %v7954 = vpop.f32.mrb[0].mxu0
        %7955 = vdwg.mxu0
        %7956 = vmatprep.subr.bf16.mxu0 %v5554
        %7957 = vmatpush1.bf16.msra.mxu0 %v5553
        %7958 = vmatprep.subr.bf16.mxu0 %v5558
        %7959 = vmatpush1.bf16.msra.mxu0 %v5557
        %7960 = vmatprep.subr.bf16.mxu0 %v5562
        %7961 = vmatpush1.bf16.msra.mxu0 %v5561
        %7962 = vmatprep.subr.bf16.mxu0 %v5566
        %7963 = vmatpush1.bf16.msra.mxu0 %v5565
        %7964 = vmatprep.subr.bf16.mxu0 %v5570
        %7965 = vmatpush1.bf16.msra.mxu0 %v5569
        %7966 = vmatprep.subr.bf16.mxu0 %v5574
        %7967 = vmatpush1.bf16.msra.mxu0 %v5573
        %7968 = vmatprep.subr.bf16.mxu0 %v5578
        %7969 = vmatpush1.bf16.msra.mxu0 %v5577
        %7970 = vmatprep.subr.bf16.mxu0 %v5582
        %7971 = vmatpush1.bf16.msra.mxu0 %v5581
        %7972 = vmatprep.subr.bf16.mxu0 %v5586
        %7973 = vmatpush1.bf16.msra.mxu0 %v5585
        %7974 = vmatprep.subr.bf16.mxu0 %v5590
        %7975 = vmatpush1.bf16.msra.mxu0 %v5589
        %7976 = vmatprep.subr.bf16.mxu0 %v5594
        %7977 = vmatpush1.bf16.msra.mxu0 %v5593
        %7978 = vmatprep.subr.bf16.mxu0 %v5598
        %7979 = vmatpush1.bf16.msra.mxu0 %v5597
        %7980 = vmatprep.subr.bf16.mxu0 %v5602
        %7981 = vmatpush1.bf16.msra.mxu0 %v5601
        %7982 = vmatprep.subr.bf16.mxu0 %v5606
        %7983 = vmatpush1.bf16.msra.mxu0 %v5605
        %7984 = vmatprep.subr.bf16.mxu0 %v5610
        %7985 = vmatpush1.bf16.msra.mxu0 %v5609
        %7986 = vmatprep.subr.bf16.mxu0 %v5614
        %7987 = vmatpush1.bf16.msra.mxu0 %v5613
        %7988 = vmatprep.mubr.bf16.mxu0 %v1613
        %7989 = vmatmul.mubr.bf16.gmra.mrb[0].mxu0 %v1611
        %v7990 = vpop.f32.mrb[0].mxu0
        %v7991 = vadd.f32 %v7950, %v7990
        %v7992 = vpop.f32.mrb[0].mxu0
        %v7993 = vadd.f32 %v7952, %v7992
        %v7994 = vpop.f32.mrb[0].mxu0
        %v7995 = vpop.f32.mrb[0].mxu0
        %7996 = vdwg.mxu0
        %7997 = vmatprep.subr.bf16.mxu0 %v5618
        %7998 = vmatpush1.bf16.msra.mxu0 %v5617
        %7999 = vmatprep.subr.bf16.mxu0 %v5622
        %8000 = vmatpush1.bf16.msra.mxu0 %v5621
        %8001 = vmatprep.subr.bf16.mxu0 %v5626
        %8002 = vmatpush1.bf16.msra.mxu0 %v5625
        %8003 = vmatprep.subr.bf16.mxu0 %v5630
        %8004 = vmatpush1.bf16.msra.mxu0 %v5629
        %8005 = vmatprep.subr.bf16.mxu0 %v5634
        %8006 = vmatpush1.bf16.msra.mxu0 %v5633
        %8007 = vmatprep.subr.bf16.mxu0 %v5638
        %8008 = vmatpush1.bf16.msra.mxu0 %v5637
        %8009 = vmatprep.subr.bf16.mxu0 %v5642
        %8010 = vmatpush1.bf16.msra.mxu0 %v5641
        %8011 = vmatprep.subr.bf16.mxu0 %v5646
        %8012 = vmatpush1.bf16.msra.mxu0 %v5645
        %8013 = vmatprep.subr.bf16.mxu0 %v5650
        %8014 = vmatpush1.bf16.msra.mxu0 %v5649
        %8015 = vmatprep.subr.bf16.mxu0 %v5654
        %8016 = vmatpush1.bf16.msra.mxu0 %v5653
        %8017 = vmatprep.subr.bf16.mxu0 %v5658
        %8018 = vmatpush1.bf16.msra.mxu0 %v5657
        %8019 = vmatprep.subr.bf16.mxu0 %v5662
        %8020 = vmatpush1.bf16.msra.mxu0 %v5661
        %8021 = vmatprep.subr.bf16.mxu0 %v5666
        %8022 = vmatpush1.bf16.msra.mxu0 %v5665
        %8023 = vmatprep.subr.bf16.mxu0 %v5670
        %8024 = vmatpush1.bf16.msra.mxu0 %v5669
        %8025 = vmatprep.subr.bf16.mxu0 %v5674
        %8026 = vmatpush1.bf16.msra.mxu0 %v5673
        %8027 = vmatprep.subr.bf16.mxu0 %v5678
        %8028 = vmatpush1.bf16.msra.mxu0 %v5677
        %8029 = vmatprep.mubr.bf16.mxu0 %v1610
        %8030 = vmatmul.mubr.bf16.gmra.mrb[0].mxu0 %v1596
        %v8031 = vpop.f32.mrb[0].mxu0
        %v8032 = vadd.f32 %v7991, %v8031
        %v8033 = vpop.f32.mrb[0].mxu0
        %v8034 = vadd.f32 %v7993, %v8033
        %v8035 = vpop.f32.mrb[0].mxu0
        %v8036 = vpop.f32.mrb[0].mxu0
        %8037 = vdwg.mxu0
        %8038 = vmatprep.subr.bf16.mxu0 %v5682
        %8039 = vmatpush1.bf16.msra.mxu0 %v5681
        %8040 = vmatprep.subr.bf16.mxu0 %v5686
        %8041 = vmatpush1.bf16.msra.mxu0 %v5685
        %8042 = vmatprep.subr.bf16.mxu0 %v5690
        %8043 = vmatpush1.bf16.msra.mxu0 %v5689
        %8044 = vmatprep.subr.bf16.mxu0 %v5694
        %8045 = vmatpush1.bf16.msra.mxu0 %v5693
        %8046 = vmatprep.subr.bf16.mxu0 %v5698
        %8047 = vmatpush1.bf16.msra.mxu0 %v5697
        %8048 = vmatprep.subr.bf16.mxu0 %v5702
        %8049 = vmatpush1.bf16.msra.mxu0 %v5701
        %8050 = vmatprep.subr.bf16.mxu0 %v5706
        %8051 = vmatpush1.bf16.msra.mxu0 %v5705
        %8052 = vmatprep.subr.bf16.mxu0 %v5710
        %8053 = vmatpush1.bf16.msra.mxu0 %v5709
        %8054 = vmatprep.subr.bf16.mxu0 %v5714
        %8055 = vmatpush1.bf16.msra.mxu0 %v5713
        %8056 = vmatprep.subr.bf16.mxu0 %v5718
        %8057 = vmatpush1.bf16.msra.mxu0 %v5717
        %8058 = vmatprep.subr.bf16.mxu0 %v5722
        %8059 = vmatpush1.bf16.msra.mxu0 %v5721
        %8060 = vmatprep.subr.bf16.mxu0 %v5726
        %8061 = vmatpush1.bf16.msra.mxu0 %v5725
        %8062 = vmatprep.subr.bf16.mxu0 %v5730
        %8063 = vmatpush1.bf16.msra.mxu0 %v5729
        %8064 = vmatprep.subr.bf16.mxu0 %v5734
        %8065 = vmatpush1.bf16.msra.mxu0 %v5733
        %8066 = vmatprep.subr.bf16.mxu0 %v5738
        %8067 = vmatpush1.bf16.msra.mxu0 %v5737
        %8068 = vmatprep.subr.bf16.mxu0 %v5742
        %8069 = vmatpush1.bf16.msra.mxu0 %v5741
        %8070 = vmatprep.mubr.bf16.mxu0 %v1614
        %8071 = vmatmul.mubr.bf16.gmra.mrb[0].mxu0 %v1612
        %v8072 = vpop.f32.mrb[0].mxu0
        %v8073 = vadd.f32 %v8032, %v8072
        %v8074 = vpop.f32.mrb[0].mxu0
        %v8075 = vadd.f32 %v8034, %v8074
        %v8076 = vpop.f32.mrb[0].mxu0
        %v8077 = vpop.f32.mrb[0].mxu0
        %8078 = vdwg.mxu0
        %v8079 = vmax.f32 %v7417, 0.0
        %v8080 = vmax.f32 %v7419, 0.0
        %v8081 = vmax.f32 %v8073, 0.0
        %v8082 = vmax.f32 %v8075, 0.0
        %v8083 = vpack.c.bf16 %v8079, %v8079
        %v8084 = vpack.c.bf16 %v8080, %v8080
        %v8085 = vpack.c.bf16 %v8081, %v8081
        %v8086 = vpack.c.bf16 %v8082, %v8082
        %v8087 = vld [vmem:[#allocation11] sm:$0x3]
        %v8088 = vld [vmem:[%s320] sm:$0xf]
        %v8089 = vld [vmem:[%s320 + $0x4] sm:$0xf]
        %v8090 = vld [vmem:[%s320 + $0x8] sm:$0xf]
        %v8091 = vld [vmem:[%s320 + $0xc] sm:$0xf]
        %v8092 = vld [vmem:[%s320 + $0x10] sm:$0xf]
        %v8093 = vld [vmem:[%s320 + $0x14] sm:$0xf]
        %v8094 = vld [vmem:[%s320 + $0x18] sm:$0xf]
        %v8095 = vld [vmem:[%s320 + $0x1c] sm:$0xf]
        %v8096 = vld [vmem:[%s320 + $0x20] sm:$0xf]
        %v8097 = vld [vmem:[%s320 + $0x24] sm:$0xf]
        %v8098 = vld [vmem:[%s320 + $0x28] sm:$0xf]
        %v8099 = vld [vmem:[%s320 + $0x2c] sm:$0xf]
        %v8100 = vld [vmem:[%s320 + $0x30] sm:$0xf]
        %v8101 = vld [vmem:[%s320 + $0x34] sm:$0xf]
        %v8102 = vld [vmem:[%s320 + $0x38] sm:$0xf]
        %v8103 = vld [vmem:[%s320 + $0x3c] sm:$0xf]
        %v8104 = vld [vmem:[%s320 + $0x40] sm:$0xf]
        %v8105 = vld [vmem:[%s320 + $0x44] sm:$0xf]
        %v8106 = vld [vmem:[%s320 + $0x48] sm:$0xf]
        %v8107 = vld [vmem:[%s320 + $0x4c] sm:$0xf]
        %v8108 = vld [vmem:[%s320 + $0x50] sm:$0xf]
        %v8109 = vld [vmem:[%s320 + $0x54] sm:$0xf]
        %v8110 = vld [vmem:[%s320 + $0x58] sm:$0xf]
        %v8111 = vld [vmem:[%s320 + $0x5c] sm:$0xf]
        %v8112 = vld [vmem:[%s320 + $0x60] sm:$0xf]
        %v8113 = vld [vmem:[%s320 + $0x64] sm:$0xf]
        %v8114 = vld [vmem:[%s320 + $0x68] sm:$0xf]
        %v8115 = vld [vmem:[%s320 + $0x6c] sm:$0xf]
        %v8116 = vld [vmem:[%s320 + $0x70] sm:$0xf]
        %v8117 = vld [vmem:[%s320 + $0x74] sm:$0xf]
        %v8118 = vld [vmem:[%s320 + $0x78] sm:$0xf]
        %v8119 = vld [vmem:[%s320 + $0x7c] sm:$0xf]
        %v8120 = vld [vmem:[%s320 + $0x80] sm:$0xf]
        %v8121 = vld [vmem:[%s320 + $0x84] sm:$0xf]
        %v8122 = vld [vmem:[%s320 + $0x88] sm:$0xf]
        %v8123 = vld [vmem:[%s320 + $0x8c] sm:$0xf]
        %v8124 = vld [vmem:[%s320 + $0x90] sm:$0xf]
        %v8125 = vld [vmem:[%s320 + $0x94] sm:$0xf]
        %v8126 = vld [vmem:[%s320 + $0x98] sm:$0xf]
        %v8127 = vld [vmem:[%s320 + $0x9c] sm:$0xf]
        %v8128 = vld [vmem:[%s320 + $0xa0] sm:$0xf]
        %v8129 = vld [vmem:[%s320 + $0xa4] sm:$0xf]
        %v8130 = vld [vmem:[%s320 + $0xa8] sm:$0xf]
        %v8131 = vld [vmem:[%s320 + $0xac] sm:$0xf]
        %v8132 = vld [vmem:[%s320 + $0xb0] sm:$0xf]
        %v8133 = vld [vmem:[%s320 + $0xb4] sm:$0xf]
        %v8134 = vld [vmem:[%s320 + $0xb8] sm:$0xf]
        %v8135 = vld [vmem:[%s320 + $0xbc] sm:$0xf]
        %v8136 = vld [vmem:[%s320 + $0xc0] sm:$0xf]
        %v8137 = vld [vmem:[%s320 + $0xc4] sm:$0xf]
        %v8138 = vld [vmem:[%s320 + $0xc8] sm:$0xf]
        %v8139 = vld [vmem:[%s320 + $0xcc] sm:$0xf]
        %v8140 = vld [vmem:[%s320 + $0xd0] sm:$0xf]
        %v8141 = vld [vmem:[%s320 + $0xd4] sm:$0xf]
        %v8142 = vld [vmem:[%s320 + $0xd8] sm:$0xf]
        %v8143 = vld [vmem:[%s320 + $0xdc] sm:$0xf]
        %v8144 = vld [vmem:[%s320 + $0xe0] sm:$0xf]
        %v8145 = vld [vmem:[%s320 + $0xe4] sm:$0xf]
        %v8146 = vld [vmem:[%s320 + $0xe8] sm:$0xf]
        %v8147 = vld [vmem:[%s320 + $0xec] sm:$0xf]
        %v8148 = vld [vmem:[%s320 + $0xf0] sm:$0xf]
        %v8149 = vld [vmem:[%s320 + $0xf4] sm:$0xf]
        %v8150 = vld [vmem:[%s320 + $0xf8] sm:$0xf]
        %v8151 = vld [vmem:[%s320 + $0xfc] sm:$0xf]
        %v8216 = vunpack.c.l.b16 %v8088
        %v8217 = vunpack.c.l.b16 %v8089
        %v8218 = vunpack.c.l.b16 %v8090
        %v8219 = vunpack.c.l.b16 %v8091
        %v8220 = vunpack.c.l.b16 %v8092
        %v8221 = vunpack.c.l.b16 %v8093
        %v8222 = vunpack.c.l.b16 %v8094
        %v8223 = vunpack.c.l.b16 %v8095
        %v8224 = vunpack.c.l.b16 %v8096
        %v8225 = vunpack.c.l.b16 %v8097
        %v8226 = vunpack.c.l.b16 %v8098
        %v8227 = vunpack.c.l.b16 %v8099
        %v8228 = vunpack.c.l.b16 %v8100
        %v8229 = vunpack.c.l.b16 %v8101
        %v8230 = vunpack.c.l.b16 %v8102
        %v8231 = vunpack.c.l.b16 %v8103
        %v8232 = vunpack.c.l.b16 %v8104
        %v8233 = vunpack.c.l.b16 %v8105
        %v8234 = vunpack.c.l.b16 %v8106
        %v8235 = vunpack.c.l.b16 %v8107
        %v8236 = vunpack.c.l.b16 %v8108
        %v8237 = vunpack.c.l.b16 %v8109
        %v8238 = vunpack.c.l.b16 %v8110
        %v8239 = vunpack.c.l.b16 %v8111
        %v8240 = vunpack.c.l.b16 %v8112
        %v8241 = vunpack.c.l.b16 %v8113
        %v8242 = vunpack.c.l.b16 %v8114
        %v8243 = vunpack.c.l.b16 %v8115
        %v8244 = vunpack.c.l.b16 %v8116
        %v8245 = vunpack.c.l.b16 %v8117
        %v8246 = vunpack.c.l.b16 %v8118
        %v8247 = vunpack.c.l.b16 %v8119
        %v8248 = vunpack.c.l.b16 %v8120
        %v8249 = vunpack.c.l.b16 %v8121
        %v8250 = vunpack.c.l.b16 %v8122
        %v8251 = vunpack.c.l.b16 %v8123
        %v8252 = vunpack.c.l.b16 %v8124
        %v8253 = vunpack.c.l.b16 %v8125
        %v8254 = vunpack.c.l.b16 %v8126
        %v8255 = vunpack.c.l.b16 %v8127
        %v8256 = vunpack.c.l.b16 %v8128
        %v8257 = vunpack.c.l.b16 %v8129
        %v8258 = vunpack.c.l.b16 %v8130
        %v8259 = vunpack.c.l.b16 %v8131
        %v8260 = vunpack.c.l.b16 %v8132
        %v8261 = vunpack.c.l.b16 %v8133
        %v8262 = vunpack.c.l.b16 %v8134
        %v8263 = vunpack.c.l.b16 %v8135
        %v8264 = vunpack.c.l.b16 %v8136
        %v8265 = vunpack.c.l.b16 %v8137
        %v8266 = vunpack.c.l.b16 %v8138
        %v8267 = vunpack.c.l.b16 %v8139
        %v8268 = vunpack.c.l.b16 %v8140
        %v8269 = vunpack.c.l.b16 %v8141
        %v8270 = vunpack.c.l.b16 %v8142
        %v8271 = vunpack.c.l.b16 %v8143
        %v8272 = vunpack.c.l.b16 %v8144
        %v8273 = vunpack.c.l.b16 %v8145
        %v8274 = vunpack.c.l.b16 %v8146
        %v8275 = vunpack.c.l.b16 %v8147
        %v8276 = vunpack.c.l.b16 %v8148
        %v8277 = vunpack.c.l.b16 %v8149
        %v8278 = vunpack.c.l.b16 %v8150
        %v8279 = vunpack.c.l.b16 %v8151
        %v8280 = vpack.c.b16 %v8217, %v8216
        %v8281 = vpack.c.b16 %v8219, %v8218
        %v8282 = vpack.c.b16 %v8221, %v8220
        %v8283 = vpack.c.b16 %v8223, %v8222
        %v8284 = vpack.c.b16 %v8225, %v8224
        %v8285 = vpack.c.b16 %v8227, %v8226
        %v8286 = vpack.c.b16 %v8229, %v8228
        %v8287 = vpack.c.b16 %v8231, %v8230
        %v8288 = vpack.c.b16 %v8233, %v8232
        %v8289 = vpack.c.b16 %v8235, %v8234
        %v8290 = vpack.c.b16 %v8237, %v8236
        %v8291 = vpack.c.b16 %v8239, %v8238
        %v8292 = vpack.c.b16 %v8241, %v8240
        %v8293 = vpack.c.b16 %v8243, %v8242
        %v8294 = vpack.c.b16 %v8245, %v8244
        %v8295 = vpack.c.b16 %v8247, %v8246
        %v8296 = vpack.c.b16 %v8249, %v8248
        %v8297 = vpack.c.b16 %v8251, %v8250
        %v8298 = vpack.c.b16 %v8253, %v8252
        %v8299 = vpack.c.b16 %v8255, %v8254
        %v8300 = vpack.c.b16 %v8257, %v8256
        %v8301 = vpack.c.b16 %v8259, %v8258
        %v8302 = vpack.c.b16 %v8261, %v8260
        %v8303 = vpack.c.b16 %v8263, %v8262
        %v8304 = vpack.c.b16 %v8265, %v8264
        %v8305 = vpack.c.b16 %v8267, %v8266
        %v8306 = vpack.c.b16 %v8269, %v8268
        %v8307 = vpack.c.b16 %v8271, %v8270
        %v8308 = vpack.c.b16 %v8273, %v8272
        %v8309 = vpack.c.b16 %v8275, %v8274
        %v8310 = vpack.c.b16 %v8277, %v8276
        %v8311 = vpack.c.b16 %v8279, %v8278
        %8344 = vmatprep.subr.bf16.mxu0 0
        %8345 = vmatpush1.bf16.msra.mxu0 %v8280
        %8346 = vmatprep.subr.bf16.mxu0 0
        %8347 = vmatpush1.bf16.msra.mxu0 %v8281
        %8348 = vmatprep.subr.bf16.mxu0 0
        %8349 = vmatpush1.bf16.msra.mxu0 %v8282
        %8350 = vmatprep.subr.bf16.mxu0 0
        %8351 = vmatpush1.bf16.msra.mxu0 %v8283
        %8352 = vmatprep.subr.bf16.mxu0 0
        %8353 = vmatpush1.bf16.msra.mxu0 %v8284
        %8354 = vmatprep.subr.bf16.mxu0 0
        %8355 = vmatpush1.bf16.msra.mxu0 %v8285
        %8356 = vmatprep.subr.bf16.mxu0 0
        %8357 = vmatpush1.bf16.msra.mxu0 %v8286
        %8358 = vmatprep.subr.bf16.mxu0 0
        %8359 = vmatpush1.bf16.msra.mxu0 %v8287
        %8360 = vmatprep.subr.bf16.mxu0 0
        %8361 = vmatpush1.bf16.msra.mxu0 %v8288
        %8362 = vmatprep.subr.bf16.mxu0 0
        %8363 = vmatpush1.bf16.msra.mxu0 %v8289
        %8364 = vmatprep.subr.bf16.mxu0 0
        %8365 = vmatpush1.bf16.msra.mxu0 %v8290
        %8366 = vmatprep.subr.bf16.mxu0 0
        %8367 = vmatpush1.bf16.msra.mxu0 %v8291
        %8368 = vmatprep.subr.bf16.mxu0 0
        %8369 = vmatpush1.bf16.msra.mxu0 %v8292
        %8370 = vmatprep.subr.bf16.mxu0 0
        %8371 = vmatpush1.bf16.msra.mxu0 %v8293
        %8372 = vmatprep.subr.bf16.mxu0 0
        %8373 = vmatpush1.bf16.msra.mxu0 %v8294
        %8374 = vmatprep.subr.bf16.mxu0 0
        %8375 = vmatpush1.bf16.msra.mxu0 %v8295
        %8376 = vmatprep.mubr.bf16.mxu0 %v8084
        %8377 = vmatmul.mubr.bf16.gmra.mrb[0].mxu0 %v8083
        %v8378 = vpop.f32.mrb[0].mxu0
        %v8379 = vadd.f32 0.0, %v8378
        %v8380 = vpop.f32.mrb[0].mxu0
        %v8381 = vpop.f32.mrb[0].mxu0
        %v8382 = vpop.f32.mrb[0].mxu0
        %8383 = vdwg.mxu0
        %8384 = vmatprep.subr.bf16.mxu0 0
        %8385 = vmatpush1.bf16.msra.mxu0 %v8296
        %8386 = vmatprep.subr.bf16.mxu0 0
        %8387 = vmatpush1.bf16.msra.mxu0 %v8297
        %8388 = vmatprep.subr.bf16.mxu0 0
        %8389 = vmatpush1.bf16.msra.mxu0 %v8298
        %8390 = vmatprep.subr.bf16.mxu0 0
        %8391 = vmatpush1.bf16.msra.mxu0 %v8299
        %8392 = vmatprep.subr.bf16.mxu0 0
        %8393 = vmatpush1.bf16.msra.mxu0 %v8300
        %8394 = vmatprep.subr.bf16.mxu0 0
        %8395 = vmatpush1.bf16.msra.mxu0 %v8301
        %8396 = vmatprep.subr.bf16.mxu0 0
        %8397 = vmatpush1.bf16.msra.mxu0 %v8302
        %8398 = vmatprep.subr.bf16.mxu0 0
        %8399 = vmatpush1.bf16.msra.mxu0 %v8303
        %8400 = vmatprep.subr.bf16.mxu0 0
        %8401 = vmatpush1.bf16.msra.mxu0 %v8304
        %8402 = vmatprep.subr.bf16.mxu0 0
        %8403 = vmatpush1.bf16.msra.mxu0 %v8305
        %8404 = vmatprep.subr.bf16.mxu0 0
        %8405 = vmatpush1.bf16.msra.mxu0 %v8306
        %8406 = vmatprep.subr.bf16.mxu0 0
        %8407 = vmatpush1.bf16.msra.mxu0 %v8307
        %8408 = vmatprep.subr.bf16.mxu0 0
        %8409 = vmatpush1.bf16.msra.mxu0 %v8308
        %8410 = vmatprep.subr.bf16.mxu0 0
        %8411 = vmatpush1.bf16.msra.mxu0 %v8309
        %8412 = vmatprep.subr.bf16.mxu0 0
        %8413 = vmatpush1.bf16.msra.mxu0 %v8310
        %8414 = vmatprep.subr.bf16.mxu0 0
        %8415 = vmatpush1.bf16.msra.mxu0 %v8311
        %8416 = vmatprep.mubr.bf16.mxu0 %v8086
        %8417 = vmatmul.mubr.bf16.gmra.mrb[0].mxu0 %v8085
        %v8418 = vpop.f32.mrb[0].mxu0
        %v8419 = vadd.f32 %v8379, %v8418
        %v8420 = vpop.f32.mrb[0].mxu0
        %v8421 = vpop.f32.mrb[0].mxu0
        %v8422 = vpop.f32.mrb[0].mxu0
        %8423 = vdwg.mxu0
        %v8424 = vadd.f32 %v8087, %v8419
        %8425 = vst [vmem:[#allocation11] sm:$0x3] %v8424
        %p8426 = scmp.eq.s32.totalorder %s29, 3
        // Predicated region
        $region65: #{tpu_custom_call.1} parent=39 // pred_check
          %p8427 = pneg %p8426
        $region66: #{tpu_custom_call.1} parent=39 // pred_check_branch
          %8429 = sbr.rel (%p8427) target = $region68
        $region67: #{tpu_custom_call.1} parent=39 // pred_region
          %v8430 = vld [vmem:[#allocation11] sm:$0x3]
          %v8431 = vld [vmem:[#allocation10] sm:$0x1]
          %v8433 = vlaneseq
          %v8434 = vshrl.u32 %v8433, 7
          %v8435 = vsub.s32 0, %v8434
          %v8436 = vrot.slane %v8431, %v8435
          %v8438 = vadd.f32 %v8430, %v8436
          %v8439 = vmax.f32 %v8438, 0.0
          %8440 = vst [vmem:[#allocation11] sm:$0x3] %v8439
        $region68: #{tpu_custom_call.1} parent=39 // pred_fallthru
          _
        // Predicated region
        $region69: #{tpu_custom_call.1} parent=39 // pred_check
          %p8441 = pneg %p179
        $region70: #{tpu_custom_call.1} parent=39 // pred_check_branch
          %8443 = sbr.rel (%p8441) target = $region72
        $region71: #{tpu_custom_call.1} parent=39 // pred_region
          %s8445 = ssub.s32 32, 32
          %8446 = vsyncadd [#allocation4], %s8445
          %s8447 = smul.addr %s28, 32
          %s8448 = scalar_lea.hbm %s5, %s8447
          %s8450 = sshll.u32 [#allocation11], 4
          %s8451 = int_to_ptr.vmem [resolvable:$true] %s8450
          %8453 = dma.vmem_to_hbm [thread:$0]  %s8451, 32, %s8448, [#allocation4]
        $region72: #{tpu_custom_call.1} parent=39 // pred_fallthru
          _
        // Predicated region
        $region73: #{tpu_custom_call.1} parent=39 // pred_check
          %p8454 = pneg %p179
        $region74: #{tpu_custom_call.1} parent=39 // pred_check_branch
          %8456 = sbr.rel (%p8454) target = $region76
        $region75: #{tpu_custom_call.1} parent=39 // pred_region
          %8457 = dma.done [#allocation4], 32
        $region76: #{tpu_custom_call.1} parent=39 // pred_fallthru
          _
      $region40: #{tpu_custom_call.1} parent=5 // pred_fallthru
        _
      %p8458 = scmp.le.s32.totalorder 2, %s19
      // Predicated region
      $region77: #{tpu_custom_call.1} parent=5 // pred_check
        %p8459 = pneg %p8458
      $region78: #{tpu_custom_call.1} parent=5 // pred_check_branch
        %8461 = sbr.rel (%p8459) target = $region80
      $region79: #{tpu_custom_call.1} parent=5 // pred_region
        %s8462 = ssub.s32 %s19, 2
      $region80: #{tpu_custom_call.1} parent=5 // pred_fallthru
        _
    $region6: #{tpu_custom_call.1} parent=1 // loop_footer
      %s23 = sadd.s32 1, %s19
    $region7: #{tpu_custom_call.1} parent=1 // loop_footer_branch
      %18 = sbr.rel target = $region3
    $region8: #{tpu_custom_call.1} parent=1 // loop_exit
      _
    %8463 = vsyncpa [#allocation3], 1
    %s8464 = scalar_lea.sflag [#allocation3], 1
    %8465 = vsyncpa %s8464, 1
    %8466 = vsyncpa [#allocation6], 1
    %s8467 = scalar_lea.sflag [#allocation6], 1
    %8468 = vsyncpa %s8467, 1
    %8469 = vsyncpa [#allocation9], 1
    %s8470 = scalar_lea.sflag [#allocation9], 1
    %8471 = vsyncpa %s8470, 1
    %8472 = vsyncpa [#allocation4], 1
    %s8473 = scalar_lea.sflag [#allocation4], 1
    %8474 = vsyncpa %s8473, 1

</llo_original>
